<compile_context>
chip_gen: v7x
topology: tpu7x:2x2x1
jax: 0.10.0
libtpu: 0.0.40
codegen_flags: <defaults>
</compile_context>

<pallas_src>
import math

import jax
import jax.numpy as jnp
from jax.experimental import pallas as pl
from jax.experimental.pallas import tpu as pltpu

IN_DIM = 10
IN_PAD = 16            # pad input features to a full sublane group
HIDDEN = 1024
OUT_DIM = 64
OUT_PAD = 128          # lane-dense embedding width (cols 64..127 are zero)
N_COMPONENTS = 10      # DP truncation level of the synthetic DPGMM head
K_PAD = 128            # lane-dense component axis for the z output
HEAD_IN = 2 * OUT_PAD  # fused head input width: [h, h*h]
BN_EPS = 1e-5
NEG_BIG = -1e30        # "minus infinity" for padded mixture lanes (f32 only)
LOBO_LANE = K_PAD - 1  # lobo (log-evidence) is packed into z lane 127


def _round_up(x, m):
    return (x + m - 1) // m * m


def _choose_tm(n):
    """Batch tile: one tile per view if n<=512, else minimize row padding."""
    if n <= 512:
        return _round_up(max(n, 1), 8)
    best_tm, best_pad = None, None
    for tm in (512, 256):          # prefer larger tile on ties
        pad = _round_up(n, tm) - n
        if best_pad is None or pad < best_pad:
            best_tm, best_pad = tm, pad
    return best_tm


# ----------------------------------------------------------------------------
# Fused kernel: encoder (4 x Linear + folded BN + ReLU) + DPGMM head
# ----------------------------------------------------------------------------
def fused_mvcln_kernel(x_ref,
                       w0_ref, s0_ref, t0_ref,
                       w1_ref, s1_ref, t1_ref,
                       w2_ref, s2_ref, t2_ref,
                       w3_ref, s3_ref, t3_ref,
                       m_ref, c_ref,
                       h_out_ref, z_out_ref):
    def layer(h, w_ref, s_ref, t_ref, out_dtype):
        # bf16 MXU matmul, f32 accumulation; BN folded into (scale, shift).
        acc = jnp.dot(h, w_ref[...], preferred_element_type=jnp.float32)
        act = jnp.maximum(acc * s_ref[...] + t_ref[...], 0.0)
        return act.astype(out_dtype)

    h = x_ref[...].astype(jnp.bfloat16)                 # (TM, IN_PAD)
    h = layer(h, w0_ref, s0_ref, t0_ref, jnp.bfloat16)  # (TM, HIDDEN) bf16
    h = layer(h, w1_ref, s1_ref, t1_ref, jnp.bfloat16)  # (TM, HIDDEN) bf16
    h = layer(h, w2_ref, s2_ref, t2_ref, jnp.bfloat16)  # (TM, HIDDEN) bf16
    h = layer(h, w3_ref, s3_ref, t3_ref, jnp.float32)   # (TM, OUT_PAD) f32
    h_out_ref[...] = h                                  # pad cols 64..127 are 0

    # DPGMM head as ONE matmul:
    #   log N(h|mu_k,var_k) + log pi_k = [h, h*h] @ M + c_k
    # with M = [[ (mu*inv_var).T ], [ -0.5*inv_var.T ]],
    #      c_k = log pi_k - 0.5*sum_d(mu^2*inv_var + logvar + log2pi).
    # Padded K lanes carry c = -1e30 -> exp underflows to exactly 0 (f32).
    hm = jnp.concatenate([h, h * h], axis=-1).astype(jnp.bfloat16)  # (TM, 256)
    logits = jnp.dot(hm, m_ref[...], preferred_element_type=jnp.float32) + c_ref[...]
    mx = jnp.max(logits, axis=-1, keepdims=True)
    e = jnp.exp(logits - mx)
    s = jnp.sum(e, axis=-1, keepdims=True)
    z = e / s                                           # exact normalization
    lobo = mx + jnp.log(s)                              # logsumexp evidence
    col = jax.lax.broadcasted_iota(jnp.int32, z.shape, 1)
    # Pack lobo into the otherwise-zero lane 127 of z (saves a 3rd output).
    z_out_ref[...] = jnp.where(col == LOBO_LANE, lobo, z)


# ----------------------------------------------------------------------------
# Wrappers
# ----------------------------------------------------------------------------
def mvcln_forward_padded(x0, x1, params):
    """Fast path: returns padded, lane-dense (2, npad, 128) outputs."""
    (w0, s0, t0, w1, s1, t1, w2, s2, t2, w3, s3, t3, m, c) = params
    n = x0.shape[0]
    tm = _choose_tm(n)
    npad = _round_up(n, tm)

    # Single (2, npad, IN_PAD) input buffer; padded rows/cols are zero.
    x = jnp.zeros((2, npad, IN_PAD), jnp.float32)
    x = jax.lax.dynamic_update_slice(x, x0.astype(jnp.float32)[None], (0, 0, 0))
    x = jax.lax.dynamic_update_slice(x, x1.astype(jnp.float32)[None], (1, 0, 0))

    grid = (2, npad // tm)
    tiled = lambda v, i: (v, i, 0)          # per-(view, batch-tile) blocks
    view_resident = lambda v, i: (v, 0, 0)  # per-view weights, batch-resident
    shared = lambda v, i: (0, 0)            # DPGMM params shared by both views

    in_specs = [
        pl.BlockSpec((None, tm, IN_PAD), tiled),
        pl.BlockSpec((None, IN_PAD, HIDDEN), view_resident),
        pl.BlockSpec((None, 1, HIDDEN), view_resident),
        pl.BlockSpec((None, 1, HIDDEN), view_resident),
        pl.BlockSpec((None, HIDDEN, HIDDEN), view_resident),
        pl.BlockSpec((None, 1, HIDDEN), view_resident),
        pl.BlockSpec((None, 1, HIDDEN), view_resident),
        pl.BlockSpec((None, HIDDEN, HIDDEN), view_resident),
        pl.BlockSpec((None, 1, HIDDEN), view_resident),
        pl.BlockSpec((None, 1, HIDDEN), view_resident),
        pl.BlockSpec((None, HIDDEN, OUT_PAD), view_resident),
        pl.BlockSpec((None, 1, OUT_PAD), view_resident),
        pl.BlockSpec((None, 1, OUT_PAD), view_resident),
        pl.BlockSpec((HEAD_IN, K_PAD), shared),
        pl.BlockSpec((1, K_PAD), shared),
    ]
    out_specs = (
        pl.BlockSpec((None, tm, OUT_PAD), tiled),
        pl.BlockSpec((None, tm, K_PAD), tiled),
    )
    out_shape = (
        jax.ShapeDtypeStruct((2, npad, OUT_PAD), jnp.float32),
        jax.ShapeDtypeStruct((2, npad, K_PAD), jnp.float32),
    )

    h_all, z_all = pl.pallas_call(
        fused_mvcln_kernel,
        out_shape=out_shape,
        grid_spec=pltpu.PrefetchScalarGridSpec(
            num_scalar_prefetch=0,
            grid=grid,
            in_specs=in_specs,
            out_specs=out_specs),
        compiler_params=pltpu.CompilerParams(
            dimension_semantics=("parallel", "arbitrary"),
            vmem_limit_bytes=32 << 20),
    )(x, w0, s0, t0, w1, s1, t1, w2, s2, t2, w3, s3, t3, m, c)
    return h_all, z_all


def mvcln_forward(x0, x1, params):
    """Module-compatible interface: (h0, h1, LOBO0, LOBO1, z0, z1)."""
    n = x0.shape[0]
    h_all, z_all = mvcln_forward_padded(x0, x1, params)
    h0 = h_all[0, :n, :OUT_DIM]
    h1 = h_all[1, :n, :OUT_DIM]
    lobo0 = z_all[0, :n, LOBO_LANE:LOBO_LANE + 1]
    lobo1 = z_all[1, :n, LOBO_LANE:LOBO_LANE + 1]
    z0 = z_all[0, :n, :N_COMPONENTS]
    z1 = z_all[1, :n, :N_COMPONENTS]
    return h0, h1, lobo0, lobo1, z0, z1


# ----------------------------------------------------------------------------
# Deterministic synthetic parameters (PyTorch-style init, BN folded, padded)
# ----------------------------------------------------------------------------
def make_encoder_view_params(key):
    dims = [(IN_DIM, HIDDEN, IN_PAD, HIDDEN),
            (HIDDEN, HIDDEN, HIDDEN, HIDDEN),
            (HIDDEN, HIDDEN, HIDDEN, HIDDEN),
            (HIDDEN, OUT_DIM, HIDDEN, OUT_PAD)]
    ws, ss, ts = [], [], []
    for fan_in, fan_out, pad_in, pad_out in dims:
        key, kw, kb = jax.random.split(key, 3)
        bound = 1.0 / math.sqrt(fan_in)
        w = jax.random.uniform(kw, (fan_in, fan_out), jnp.float32, -bound, bound)
        bias = jax.random.uniform(kb, (fan_out,), jnp.float32, -bound, bound)
        # BatchNorm1d (eval): running_mean=0, running_var=1, gamma=1, beta=0
        gamma = jnp.ones((fan_out,), jnp.float32)
        beta = jnp.zeros((fan_out,), jnp.float32)
        run_mean = jnp.zeros((fan_out,), jnp.float32)
        run_var = jnp.ones((fan_out,), jnp.float32)
        scale = gamma / jnp.sqrt(run_var + BN_EPS)
        shift = (bias - run_mean) * scale + beta
        w_pad = jnp.zeros((pad_in, pad_out), jnp.float32).at[:fan_in, :fan_out].set(w)
        s_pad = jnp.ones((1, pad_out), jnp.float32).at[0, :fan_out].set(scale)
        t_pad = jnp.zeros((1, pad_out), jnp.float32).at[0, :fan_out].set(shift)
        ws.append(w_pad.astype(jnp.bfloat16))   # bf16 weights for the MXU
        ss.append(s_pad)                        # f32 folded-BN scale
        ts.append(t_pad)                        # f32 folded-BN shift (incl. bias)
    return ws, ss, ts


def make_params(key):
    k_e0, k_e1, k_g = jax.random.split(key, 3)
    ws0, ss0, ts0 = make_encoder_view_params(k_e0)
    ws1, ss1, ts1 = make_encoder_view_params(k_e1)
    stacked = []
    for layer in range(4):
        stacked += [jnp.stack([ws0[layer], ws1[layer]]),
                    jnp.stack([ss0[layer], ss1[layer]]),
                    jnp.stack([ts0[layer], ts1[layer]])]

    # Synthetic DPGMM head parameters (shared by both views), fused into one
    # matmul: logits = [h, h*h] @ M + c.
    kmu, kv, kp = jax.random.split(k_g, 3)
    mu = 0.1 * jax.random.normal(kmu, (N_COMPONENTS, OUT_DIM), jnp.float32)
    logvar = 0.01 * jax.random.normal(kv, (N_COMPONENTS, OUT_DIM), jnp.float32)
    logpi = jax.nn.log_softmax(jax.random.normal(kp, (N_COMPONENTS,), jnp.float32))
    inv_var = jnp.exp(-logvar)
    log2pi = math.log(2.0 * math.pi)
    a = (mu * inv_var).T                                                  # (D, K)
    bneg = (-0.5 * inv_var).T                                             # (D, K)
    c = logpi - 0.5 * jnp.sum(mu * mu * inv_var + logvar + log2pi, axis=-1)  # (K,)
    m = jnp.zeros((HEAD_IN, K_PAD), jnp.float32)
    m = m.at[:OUT_DIM, :N_COMPONENTS].set(a)
    m = m.at[OUT_PAD:OUT_PAD + OUT_DIM, :N_COMPONENTS].set(bneg)
    c_pad = jnp.full((1, K_PAD), NEG_BIG, jnp.float32).at[0, :N_COMPONENTS].set(c)
    stacked += [m.astype(jnp.bfloat16), c_pad]
    return tuple(stacked)


if __name__ == "__main__":
    key = jax.random.PRNGKey(0)
    kx0, kx1, kparams = jax.random.split(key, 3)

    batch = 8
    x0 = jax.random.normal(kx0, (batch, IN_DIM), jnp.float32)
    x1 = jax.random.normal(kx1, (batch, IN_DIM), jnp.float32)
    params = make_params(kparams)

    fwd = jax.jit(mvcln_forward)
    outs = jax.block_until_ready(fwd(x0, x1, params))
    h0, h1, lobo0, lobo1, z0, z1 = outs

    assert h0.shape == (batch, OUT_DIM) and h1.shape == (batch, OUT_DIM)
    assert lobo0.shape == (batch, 1) and lobo1.shape == (batch, 1)
    assert z0.shape == (batch, N_COMPONENTS) and z1.shape == (batch, N_COMPONENTS)
    finite = (jnp.all(jnp.isfinite(h0)) & jnp.all(jnp.isfinite(h1)) &
              jnp.all(jnp.isfinite(lobo0)) & jnp.all(jnp.isfinite(lobo1)) &
              jnp.all(jnp.isfinite(z0)) & jnp.all(jnp.isfinite(z1)))
    assert bool(finite)
    # responsibilities are a softmax (exact division) -> rows sum to 1
    assert bool(jnp.all(jnp.abs(jnp.sum(z0, axis=-1) - 1.0) < 1e-3))
    assert bool(jnp.all(jnp.abs(jnp.sum(z1, axis=-1) - 1.0) < 1e-3))
    # embeddings are post-ReLU -> non-negative
    assert bool(jnp.all(h0 >= 0.0) & jnp.all(h1 >= 0.0))
    print("KERNEL_OK")
</pallas_src>

<mosaic_0001>
module attributes {stable_mosaic.version = 11 : i64} {
  func.func @fused_mvcln_kernel(%arg0: i32, %arg1: i32, %arg2: memref<1x8x16xf32, #tpu.memory_space<vmem>>, %arg3: memref<1x16x1024xbf16, #tpu.memory_space<vmem>>, %arg4: memref<1x1x1024xf32, #tpu.memory_space<vmem>>, %arg5: memref<1x1x1024xf32, #tpu.memory_space<vmem>>, %arg6: memref<1x1024x1024xbf16, #tpu.memory_space<vmem>>, %arg7: memref<1x1x1024xf32, #tpu.memory_space<vmem>>, %arg8: memref<1x1x1024xf32, #tpu.memory_space<vmem>>, %arg9: memref<1x1024x1024xbf16, #tpu.memory_space<vmem>>, %arg10: memref<1x1x1024xf32, #tpu.memory_space<vmem>>, %arg11: memref<1x1x1024xf32, #tpu.memory_space<vmem>>, %arg12: memref<1x1024x128xbf16, #tpu.memory_space<vmem>>, %arg13: memref<1x1x128xf32, #tpu.memory_space<vmem>>, %arg14: memref<1x1x128xf32, #tpu.memory_space<vmem>>, %arg15: memref<256x128xbf16, #tpu.memory_space<vmem>>, %arg16: memref<1x128xf32, #tpu.memory_space<vmem>>, %arg17: memref<1x8x128xf32, #tpu.memory_space<vmem>>, %arg18: memref<1x8x128xf32, #tpu.memory_space<vmem>>) attributes {dimension_semantics = [#tpu.dimension_semantics<parallel>, #tpu.dimension_semantics<arbitrary>], iteration_bounds = array<i64: 2, 1>, scalar_prefetch = 0 : i64, scratch_operands = 0 : i64, tpu.core_type = #tpu.core_type<tc>, window_params = [{transform_indices = @transform_0, window_bounds = array<i64: 1, 8, 16>}, {transform_indices = @transform_1, window_bounds = array<i64: 1, 16, 1024>}, {transform_indices = @transform_2, window_bounds = array<i64: 1, 1, 1024>}, {transform_indices = @transform_3, window_bounds = array<i64: 1, 1, 1024>}, {transform_indices = @transform_4, window_bounds = array<i64: 1, 1024, 1024>}, {transform_indices = @transform_5, window_bounds = array<i64: 1, 1, 1024>}, {transform_indices = @transform_6, window_bounds = array<i64: 1, 1, 1024>}, {transform_indices = @transform_7, window_bounds = array<i64: 1, 1024, 1024>}, {transform_indices = @transform_8, window_bounds = array<i64: 1, 1, 1024>}, {transform_indices = @transform_9, window_bounds = array<i64: 1, 1, 1024>}, {transform_indices = @transform_10, window_bounds = array<i64: 1, 1024, 128>}, {transform_indices = @transform_11, window_bounds = array<i64: 1, 1, 128>}, {transform_indices = @transform_12, window_bounds = array<i64: 1, 1, 128>}, {pipeline_mode = #tpu.pipeline_mode<synchronous>, transform_indices = @transform_13, window_bounds = array<i64: 256, 128>}, {pipeline_mode = #tpu.pipeline_mode<synchronous>, transform_indices = @transform_14, window_bounds = array<i64: 1, 128>}, {transform_indices = @transform_15, window_bounds = array<i64: 1, 8, 128>}, {transform_indices = @transform_16, window_bounds = array<i64: 1, 8, 128>}]} {
    %c0 = arith.constant 0 : index
    %c0_0 = arith.constant 0 : index
    %c0_1 = arith.constant 0 : index
    %0 = vector.load %arg2[%c0, %c0_0, %c0_1] : memref<1x8x16xf32, #tpu.memory_space<vmem>>, vector<1x8x16xf32>
    %1 = vector.shape_cast %0 : vector<1x8x16xf32> to vector<8x16xf32>
    %2 = arith.truncf %1 : vector<8x16xf32> to vector<8x16xbf16>
    %c0_2 = arith.constant 0 : index
    %c0_3 = arith.constant 0 : index
    %c0_4 = arith.constant 0 : index
    %3 = vector.load %arg3[%c0_2, %c0_3, %c0_4] : memref<1x16x1024xbf16, #tpu.memory_space<vmem>>, vector<1x16x1024xbf16>
    %4 = vector.shape_cast %3 : vector<1x16x1024xbf16> to vector<16x1024xbf16>
    %cst = arith.constant dense<0.000000e+00> : vector<8x1024xf32>
    %5 = tpu.matmul %2, %4, %cst {dimension_numbers = #tpu.dot_dimension_numbers<[1], [0], [0], [1], [0, 0, 1, 1], [], []>} : vector<8x16xbf16>, vector<16x1024xbf16>, vector<8x1024xf32> -> vector<8x1024xf32>
    %c0_5 = arith.constant 0 : index
    %c0_6 = arith.constant 0 : index
    %c0_7 = arith.constant 0 : index
    %6 = vector.load %arg4[%c0_5, %c0_6, %c0_7] : memref<1x1x1024xf32, #tpu.memory_space<vmem>>, vector<1x1x1024xf32>
    %7 = vector.shape_cast %6 : vector<1x1x1024xf32> to vector<1x1024xf32>
    %8 = vector.broadcast %7 : vector<1x1024xf32> to vector<8x1024xf32>
    %9 = arith.mulf %5, %8 : vector<8x1024xf32>
    %c0_8 = arith.constant 0 : index
    %c0_9 = arith.constant 0 : index
    %c0_10 = arith.constant 0 : index
    %10 = vector.load %arg5[%c0_8, %c0_9, %c0_10] : memref<1x1x1024xf32, #tpu.memory_space<vmem>>, vector<1x1x1024xf32>
    %11 = vector.shape_cast %10 : vector<1x1x1024xf32> to vector<1x1024xf32>
    %12 = vector.broadcast %11 : vector<1x1024xf32> to vector<8x1024xf32>
    %13 = arith.addf %9, %12 : vector<8x1024xf32>
    %cst_11 = arith.constant 0.000000e+00 : f32
    %14 = vector.broadcast %cst_11 : f32 to vector<8x1024xf32>
    %15 = arith.maximumf %13, %14 : vector<8x1024xf32>
    %16 = arith.truncf %15 : vector<8x1024xf32> to vector<8x1024xbf16>
    %c0_12 = arith.constant 0 : index
    %c0_13 = arith.constant 0 : index
    %c0_14 = arith.constant 0 : index
    %17 = vector.load %arg6[%c0_12, %c0_13, %c0_14] : memref<1x1024x1024xbf16, #tpu.memory_space<vmem>>, vector<1x1024x1024xbf16>
    %18 = vector.shape_cast %17 : vector<1x1024x1024xbf16> to vector<1024x1024xbf16>
    %cst_15 = arith.constant dense<0.000000e+00> : vector<8x1024xf32>
    %19 = tpu.matmul %16, %18, %cst_15 {dimension_numbers = #tpu.dot_dimension_numbers<[1], [0], [0], [1], [0, 0, 1, 1], [], []>} : vector<8x1024xbf16>, vector<1024x1024xbf16>, vector<8x1024xf32> -> vector<8x1024xf32>
    %c0_16 = arith.constant 0 : index
    %c0_17 = arith.constant 0 : index
    %c0_18 = arith.constant 0 : index
    %20 = vector.load %arg7[%c0_16, %c0_17, %c0_18] : memref<1x1x1024xf32, #tpu.memory_space<vmem>>, vector<1x1x1024xf32>
    %21 = vector.shape_cast %20 : vector<1x1x1024xf32> to vector<1x1024xf32>
    %22 = vector.broadcast %21 : vector<1x1024xf32> to vector<8x1024xf32>
    %23 = arith.mulf %19, %22 : vector<8x1024xf32>
    %c0_19 = arith.constant 0 : index
    %c0_20 = arith.constant 0 : index
    %c0_21 = arith.constant 0 : index
    %24 = vector.load %arg8[%c0_19, %c0_20, %c0_21] : memref<1x1x1024xf32, #tpu.memory_space<vmem>>, vector<1x1x1024xf32>
    %25 = vector.shape_cast %24 : vector<1x1x1024xf32> to vector<1x1024xf32>
    %26 = vector.broadcast %25 : vector<1x1024xf32> to vector<8x1024xf32>
    %27 = arith.addf %23, %26 : vector<8x1024xf32>
    %cst_22 = arith.constant 0.000000e+00 : f32
    %28 = vector.broadcast %cst_22 : f32 to vector<8x1024xf32>
    %29 = arith.maximumf %27, %28 : vector<8x1024xf32>
    %30 = arith.truncf %29 : vector<8x1024xf32> to vector<8x1024xbf16>
    %c0_23 = arith.constant 0 : index
    %c0_24 = arith.constant 0 : index
    %c0_25 = arith.constant 0 : index
    %31 = vector.load %arg9[%c0_23, %c0_24, %c0_25] : memref<1x1024x1024xbf16, #tpu.memory_space<vmem>>, vector<1x1024x1024xbf16>
    %32 = vector.shape_cast %31 : vector<1x1024x1024xbf16> to vector<1024x1024xbf16>
    %cst_26 = arith.constant dense<0.000000e+00> : vector<8x1024xf32>
    %33 = tpu.matmul %30, %32, %cst_26 {dimension_numbers = #tpu.dot_dimension_numbers<[1], [0], [0], [1], [0, 0, 1, 1], [], []>} : vector<8x1024xbf16>, vector<1024x1024xbf16>, vector<8x1024xf32> -> vector<8x1024xf32>
    %c0_27 = arith.constant 0 : index
    %c0_28 = arith.constant 0 : index
    %c0_29 = arith.constant 0 : index
    %34 = vector.load %arg10[%c0_27, %c0_28, %c0_29] : memref<1x1x1024xf32, #tpu.memory_space<vmem>>, vector<1x1x1024xf32>
    %35 = vector.shape_cast %34 : vector<1x1x1024xf32> to vector<1x1024xf32>
    %36 = vector.broadcast %35 : vector<1x1024xf32> to vector<8x1024xf32>
    %37 = arith.mulf %33, %36 : vector<8x1024xf32>
    %c0_30 = arith.constant 0 : index
    %c0_31 = arith.constant 0 : index
    %c0_32 = arith.constant 0 : index
    %38 = vector.load %arg11[%c0_30, %c0_31, %c0_32] : memref<1x1x1024xf32, #tpu.memory_space<vmem>>, vector<1x1x1024xf32>
    %39 = vector.shape_cast %38 : vector<1x1x1024xf32> to vector<1x1024xf32>
    %40 = vector.broadcast %39 : vector<1x1024xf32> to vector<8x1024xf32>
    %41 = arith.addf %37, %40 : vector<8x1024xf32>
    %cst_33 = arith.constant 0.000000e+00 : f32
    %42 = vector.broadcast %cst_33 : f32 to vector<8x1024xf32>
    %43 = arith.maximumf %41, %42 : vector<8x1024xf32>
    %44 = arith.truncf %43 : vector<8x1024xf32> to vector<8x1024xbf16>
    %c0_34 = arith.constant 0 : index
    %c0_35 = arith.constant 0 : index
    %c0_36 = arith.constant 0 : index
    %45 = vector.load %arg12[%c0_34, %c0_35, %c0_36] : memref<1x1024x128xbf16, #tpu.memory_space<vmem>>, vector<1x1024x128xbf16>
    %46 = vector.shape_cast %45 : vector<1x1024x128xbf16> to vector<1024x128xbf16>
    %cst_37 = arith.constant dense<0.000000e+00> : vector<8x128xf32>
    %47 = tpu.matmul %44, %46, %cst_37 {dimension_numbers = #tpu.dot_dimension_numbers<[1], [0], [0], [1], [0, 0, 1, 1], [], []>} : vector<8x1024xbf16>, vector<1024x128xbf16>, vector<8x128xf32> -> vector<8x128xf32>
    %c0_38 = arith.constant 0 : index
    %c0_39 = arith.constant 0 : index
    %c0_40 = arith.constant 0 : index
    %48 = vector.load %arg13[%c0_38, %c0_39, %c0_40] : memref<1x1x128xf32, #tpu.memory_space<vmem>>, vector<1x1x128xf32>
    %49 = vector.shape_cast %48 : vector<1x1x128xf32> to vector<1x128xf32>
    %50 = vector.broadcast %49 : vector<1x128xf32> to vector<8x128xf32>
    %51 = arith.mulf %47, %50 : vector<8x128xf32>
    %c0_41 = arith.constant 0 : index
    %c0_42 = arith.constant 0 : index
    %c0_43 = arith.constant 0 : index
    %52 = vector.load %arg14[%c0_41, %c0_42, %c0_43] : memref<1x1x128xf32, #tpu.memory_space<vmem>>, vector<1x1x128xf32>
    %53 = vector.shape_cast %52 : vector<1x1x128xf32> to vector<1x128xf32>
    %54 = vector.broadcast %53 : vector<1x128xf32> to vector<8x128xf32>
    %55 = arith.addf %51, %54 : vector<8x128xf32>
    %cst_44 = arith.constant 0.000000e+00 : f32
    %56 = vector.broadcast %cst_44 : f32 to vector<8x128xf32>
    %57 = arith.maximumf %55, %56 : vector<8x128xf32>
    %c0_45 = arith.constant 0 : index
    %c0_46 = arith.constant 0 : index
    %c0_47 = arith.constant 0 : index
    %58 = vector.load %arg17[%c0_45, %c0_46, %c0_47] : memref<1x8x128xf32, #tpu.memory_space<vmem>>, vector<1x8x128xf32>
    %59 = vector.shape_cast %58 : vector<1x8x128xf32> to vector<8x128xf32>
    %60 = vector.shape_cast %57 : vector<8x128xf32> to vector<1x8x128xf32>
    tpu.vector_store %arg17[%c0_45, %c0_46, %c0_47], %60 {strides = array<i32>} : memref<1x8x128xf32, #tpu.memory_space<vmem>>, vector<1x8x128xf32>,
    %61 = arith.mulf %57, %57 : vector<8x128xf32>
    %62 = tpu.concatenate %57, %61 in 1 : vector<8x128xf32>, vector<8x128xf32> -> vector<8x256xf32>
    %63 = arith.truncf %62 : vector<8x256xf32> to vector<8x256xbf16>
    %c0_48 = arith.constant 0 : index
    %c0_49 = arith.constant 0 : index
    %64 = vector.load %arg15[%c0_48, %c0_49] : memref<256x128xbf16, #tpu.memory_space<vmem>>, vector<256x128xbf16>
    %cst_50 = arith.constant dense<0.000000e+00> : vector<8x128xf32>
    %65 = tpu.matmul %63, %64, %cst_50 {dimension_numbers = #tpu.dot_dimension_numbers<[1], [0], [0], [1], [0, 0, 1, 1], [], []>} : vector<8x256xbf16>, vector<256x128xbf16>, vector<8x128xf32> -> vector<8x128xf32>
    %c0_51 = arith.constant 0 : index
    %c0_52 = arith.constant 0 : index
    %66 = vector.load %arg16[%c0_51, %c0_52] : memref<1x128xf32, #tpu.memory_space<vmem>>, vector<1x128xf32>
    %67 = vector.broadcast %66 : vector<1x128xf32> to vector<8x128xf32>
    %68 = arith.addf %65, %67 : vector<8x128xf32>
    %cst_53 = arith.constant dense<0xFF800000> : vector<8xf32>
    %69 = vector.multi_reduction <maximumf>, %68, %cst_53 [1] : vector<8x128xf32> to vector<8xf32>
    %70 = vector.shape_cast %69 : vector<8xf32> to vector<8x1xf32>
    %71 = vector.broadcast %70 : vector<8x1xf32> to vector<8x128xf32>
    %72 = arith.subf %68, %71 : vector<8x128xf32>
    %73 = math.exp %72 : vector<8x128xf32>
    %cst_54 = arith.constant dense<0.000000e+00> : vector<8xf32>
    %74 = vector.multi_reduction <add>, %73, %cst_54 [1] : vector<8x128xf32> to vector<8xf32>
    %75 = vector.shape_cast %74 : vector<8xf32> to vector<8x1xf32>
    %76 = vector.broadcast %75 : vector<8x1xf32> to vector<8x128xf32>
    %77 = arith.divf %73, %76 : vector<8x128xf32>
    %78 = math.log %75 : vector<8x1xf32>
    %79 = arith.addf %70, %78 : vector<8x1xf32>
    %80 = tpu.iota {dimensions = array<i32: 1>} : vector<8x128xi32>
    %c127_i32 = arith.constant 127 : i32
    %81 = vector.broadcast %c127_i32 : i32 to vector<8x128xi32>
    %82 = arith.cmpi eq, %80, %81 : vector<8x128xi32>
    %83 = vector.shape_cast %79 : vector<8x1xf32> to vector<8x1xf32>
    %84 = vector.broadcast %83 : vector<8x1xf32> to vector<8x128xf32>
    %85 = arith.select %82, %84, %77 : vector<8x128xi1>, vector<8x128xf32>
    %c0_55 = arith.constant 0 : index
    %c0_56 = arith.constant 0 : index
    %c0_57 = arith.constant 0 : index
    %86 = vector.load %arg18[%c0_55, %c0_56, %c0_57] : memref<1x8x128xf32, #tpu.memory_space<vmem>>, vector<1x8x128xf32>
    %87 = vector.shape_cast %86 : vector<1x8x128xf32> to vector<8x128xf32>
    %88 = vector.shape_cast %85 : vector<8x128xf32> to vector<1x8x128xf32>
    tpu.vector_store %arg18[%c0_55, %c0_56, %c0_57], %88 {strides = array<i32>} : memref<1x8x128xf32, #tpu.memory_space<vmem>>, vector<1x8x128xf32>,
    return
  }
  func.func @transform_0(%arg0: i32, %arg1: i32) -> (i32, i32, i32) {
    %c0_i32 = arith.constant 0 : i32
    %c0_i32_0 = arith.constant 0 : i32
    return %arg0, %arg1, %c0_i32 : i32, i32, i32
  }
  func.func @transform_1(%arg0: i32, %arg1: i32) -> (i32, i32, i32) {
    %c0_i32 = arith.constant 0 : i32
    %c0_i32_0 = arith.constant 0 : i32
    %c0_i32_1 = arith.constant 0 : i32
    return %arg0, %c0_i32, %c0_i32_0 : i32, i32, i32
  }
  func.func @transform_2(%arg0: i32, %arg1: i32) -> (i32, i32, i32) {
    %c0_i32 = arith.constant 0 : i32
    %c0_i32_0 = arith.constant 0 : i32
    %c0_i32_1 = arith.constant 0 : i32
    return %arg0, %c0_i32, %c0_i32_0 : i32, i32, i32
  }
  func.func @transform_3(%arg0: i32, %arg1: i32) -> (i32, i32, i32) {
    %c0_i32 = arith.constant 0 : i32
    %c0_i32_0 = arith.constant 0 : i32
    %c0_i32_1 = arith.constant 0 : i32
    return %arg0, %c0_i32, %c0_i32_0 : i32, i32, i32
  }
  func.func @transform_4(%arg0: i32, %arg1: i32) -> (i32, i32, i32) {
    %c0_i32 = arith.constant 0 : i32
    %c0_i32_0 = arith.constant 0 : i32
    %c0_i32_1 = arith.constant 0 : i32
    return %arg0, %c0_i32, %c0_i32_0 : i32, i32, i32
  }
  func.func @transform_5(%arg0: i32, %arg1: i32) -> (i32, i32, i32) {
    %c0_i32 = arith.constant 0 : i32
    %c0_i32_0 = arith.constant 0 : i32
    %c0_i32_1 = arith.constant 0 : i32
    return %arg0, %c0_i32, %c0_i32_0 : i32, i32, i32
  }
  func.func @transform_6(%arg0: i32, %arg1: i32) -> (i32, i32, i32) {
    %c0_i32 = arith.constant 0 : i32
    %c0_i32_0 = arith.constant 0 : i32
    %c0_i32_1 = arith.constant 0 : i32
    return %arg0, %c0_i32, %c0_i32_0 : i32, i32, i32
  }
  func.func @transform_7(%arg0: i32, %arg1: i32) -> (i32, i32, i32) {
    %c0_i32 = arith.constant 0 : i32
    %c0_i32_0 = arith.constant 0 : i32
    %c0_i32_1 = arith.constant 0 : i32
    return %arg0, %c0_i32, %c0_i32_0 : i32, i32, i32
  }
  func.func @transform_8(%arg0: i32, %arg1: i32) -> (i32, i32, i32) {
    %c0_i32 = arith.constant 0 : i32
    %c0_i32_0 = arith.constant 0 : i32
    %c0_i32_1 = arith.constant 0 : i32
    return %arg0, %c0_i32, %c0_i32_0 : i32, i32, i32
  }
  func.func @transform_9(%arg0: i32, %arg1: i32) -> (i32, i32, i32) {
    %c0_i32 = arith.constant 0 : i32
    %c0_i32_0 = arith.constant 0 : i32
    %c0_i32_1 = arith.constant 0 : i32
    return %arg0, %c0_i32, %c0_i32_0 : i32, i32, i32
  }
  func.func @transform_10(%arg0: i32, %arg1: i32) -> (i32, i32, i32) {
    %c0_i32 = arith.constant 0 : i32
    %c0_i32_0 = arith.constant 0 : i32
    %c0_i32_1 = arith.constant 0 : i32
    return %arg0, %c0_i32, %c0_i32_0 : i32, i32, i32
  }
  func.func @transform_11(%arg0: i32, %arg1: i32) -> (i32, i32, i32) {
    %c0_i32 = arith.constant 0 : i32
    %c0_i32_0 = arith.constant 0 : i32
    %c0_i32_1 = arith.constant 0 : i32
    return %arg0, %c0_i32, %c0_i32_0 : i32, i32, i32
  }
  func.func @transform_12(%arg0: i32, %arg1: i32) -> (i32, i32, i32) {
    %c0_i32 = arith.constant 0 : i32
    %c0_i32_0 = arith.constant 0 : i32
    %c0_i32_1 = arith.constant 0 : i32
    return %arg0, %c0_i32, %c0_i32_0 : i32, i32, i32
  }
  func.func @transform_13(%arg0: i32, %arg1: i32) -> (i32, i32) {
    %c0_i32 = arith.constant 0 : i32
    %c0_i32_0 = arith.constant 0 : i32
    %c0_i32_1 = arith.constant 0 : i32
    return %c0_i32, %c0_i32_0 : i32, i32
  }
  func.func @transform_14(%arg0: i32, %arg1: i32) -> (i32, i32) {
    %c0_i32 = arith.constant 0 : i32
    %c0_i32_0 = arith.constant 0 : i32
    %c0_i32_1 = arith.constant 0 : i32
    return %c0_i32, %c0_i32_0 : i32, i32
  }
  func.func @transform_15(%arg0: i32, %arg1: i32) -> (i32, i32, i32) {
    %c0_i32 = arith.constant 0 : i32
    %c0_i32_0 = arith.constant 0 : i32
    return %arg0, %arg1, %c0_i32 : i32, i32, i32
  }
  func.func @transform_16(%arg0: i32, %arg1: i32) -> (i32, i32, i32) {
    %c0_i32 = arith.constant 0 : i32
    %c0_i32_0 = arith.constant 0 : i32
    return %arg0, %arg1, %c0_i32 : i32, i32, i32
  }
}

</mosaic_0001>

<llo_original>
// kernel: mvcln_forward.1
$region0: #{mvcln_forward.1}
  #allocation0 [shape = 'u32[]', space=smem, size = 0x4, offset = 0x4, fixed_abs, tag = 'smem constant byte address 0x4 - core index']
  #allocation1 [shape = 'u32[144,128]{1,0:T(1,128)}', space=vmem, size = 0x12000, scoped, tag = 'internal scratch']
  %s0 = inlined_call_operand.vmem [shape: f32[2,8,16], index: 0, kind: input, shape index: {}]
  %s1 = inlined_call_operand.hbm [shape: bf16[2,16,1024], index: 1, kind: input, shape index: {}]
  %s2 = inlined_call_operand.hbm [shape: f32[2,1,1024], index: 2, kind: input, shape index: {}]
  %s3 = inlined_call_operand.hbm [shape: f32[2,1,1024], index: 3, kind: input, shape index: {}]
  %s4 = inlined_call_operand.hbm [shape: bf16[2,1024,1024], index: 4, kind: input, shape index: {}]
  %s5 = inlined_call_operand.hbm [shape: f32[2,1,1024], index: 5, kind: input, shape index: {}]
  %s6 = inlined_call_operand.hbm [shape: f32[2,1,1024], index: 6, kind: input, shape index: {}]
  %s7 = inlined_call_operand.hbm [shape: bf16[2,1024,1024], index: 7, kind: input, shape index: {}]
  %s8 = inlined_call_operand.hbm [shape: f32[2,1,1024], index: 8, kind: input, shape index: {}]
  %s9 = inlined_call_operand.hbm [shape: f32[2,1,1024], index: 9, kind: input, shape index: {}]
  %s10 = inlined_call_operand.hbm [shape: bf16[2,1024,128], index: 10, kind: input, shape index: {}]
  %s11 = inlined_call_operand.hbm [shape: f32[2,1,128], index: 11, kind: input, shape index: {}]
  %s12 = inlined_call_operand.hbm [shape: f32[2,1,128], index: 12, kind: input, shape index: {}]
  %s13 = inlined_call_operand.hbm [shape: bf16[256,128], index: 13, kind: input, shape index: {}]
  %s14 = inlined_call_operand.hbm [shape: f32[1,128], index: 14, kind: input, shape index: {}]
  %s15 = inlined_call_operand.vmem [shape: f32[2,8,128], index: 15, kind: output, shape index: {0}]
  %s16 = inlined_call_operand.vmem [shape: f32[2,8,128], index: 16, kind: output, shape index: {1}]
  %17 = xla_tuple %s15, %s16
  %s18 = sld [smem:[#allocation0]]
  $region157: #{mvcln_forward.1} parent=0
    _
  %s20 = ssub.s32 1, %s18
  %s21 = scalar_select 0, %s20, %s18
  $region1: #{mvcln_forward.1} parent=0
    #allocation2 [shape = 'u8[65536]{0}', space=vmem, size = 0x10000, scoped, tag = 'input window, operand 1']
    #allocation3 [shape = 's32[2]{0}', space=sflag, size = 0x8, scoped, tag = 'scoped memory for mvcln_forward.1']
    #allocation4 [shape = 'u8[8192]{0}', space=vmem, size = 0x2000, scoped, tag = 'input window, operand 2']
    #allocation5 [shape = 's32[2]{0}', space=sflag, size = 0x8, scoped, tag = 'scoped memory for mvcln_forward.1']
    #allocation6 [shape = 'u8[8192]{0}', space=vmem, size = 0x2000, scoped, tag = 'input window, operand 3']
    #allocation7 [shape = 'u8[4194304]{0}', space=vmem, size = 0x400000, scoped, tag = 'input window, operand 4']
    #allocation8 [shape = 's32[2]{0}', space=sflag, size = 0x8, scoped, tag = 'scoped memory for mvcln_forward.1']
    #allocation9 [shape = 'u8[8192]{0}', space=vmem, size = 0x2000, scoped, tag = 'input window, operand 5']
    #allocation10 [shape = 'u8[8192]{0}', space=vmem, size = 0x2000, scoped, tag = 'input window, operand 6']
    #allocation11 [shape = 's32[2]{0}', space=sflag, size = 0x8, scoped, tag = 'scoped memory for mvcln_forward.1']
    #allocation12 [shape = 'u8[4194304]{0}', space=vmem, size = 0x400000, scoped, tag = 'input window, operand 7']
    #allocation13 [shape = 'u8[8192]{0}', space=vmem, size = 0x2000, scoped, tag = 'input window, operand 8']
    #allocation14 [shape = 's32[2]{0}', space=sflag, size = 0x8, scoped, tag = 'scoped memory for mvcln_forward.1']
    #allocation15 [shape = 'u8[8192]{0}', space=vmem, size = 0x2000, scoped, tag = 'input window, operand 9']
    #allocation16 [shape = 'u8[524288]{0}', space=vmem, size = 0x80000, scoped, tag = 'input window, operand 10']
    #allocation17 [shape = 's32[2]{0}', space=sflag, size = 0x8, scoped, tag = 'scoped memory for mvcln_forward.1']
    #allocation18 [shape = 'u8[1024]{0}', space=vmem, size = 0x400, scoped, tag = 'input window, operand 11']
    #allocation19 [shape = 'u8[1024]{0}', space=vmem, size = 0x400, scoped, tag = 'input window, operand 12']
    #allocation20 [shape = 's32[2]{0}', space=sflag, size = 0x8, scoped, tag = 'scoped memory for mvcln_forward.1']
    #allocation21 [shape = 'u8[65536]{0}', space=vmem, size = 0x10000, scoped, tag = 'input window, operand 13, single buffered']
    #allocation22 [shape = 'u8[512]{0}', space=vmem, size = 0x400, scoped, tag = 'input window, operand 14, single buffered']
    #allocation23 [shape = 's32[1]{0}', space=sflag, size = 0x4, scoped, tag = 'scoped memory for mvcln_forward.1']
    %22 = vsyncpa [#allocation3], 0
    %s23 = scalar_lea.sflag [#allocation3], 1
    %24 = vsyncpa %s23, 0
    %25 = vsyncpa [#allocation5], 0
    %s26 = scalar_lea.sflag [#allocation5], 1
    %27 = vsyncpa %s26, 0
    %28 = vsyncpa [#allocation8], 0
    %s29 = scalar_lea.sflag [#allocation8], 1
    %30 = vsyncpa %s29, 0
    %31 = vsyncpa [#allocation11], 0
    %s32 = scalar_lea.sflag [#allocation11], 1
    %33 = vsyncpa %s32, 0
    %34 = vsyncpa [#allocation14], 0
    %s35 = scalar_lea.sflag [#allocation14], 1
    %36 = vsyncpa %s35, 0
    %37 = vsyncpa [#allocation17], 0
    %s38 = scalar_lea.sflag [#allocation17], 1
    %39 = vsyncpa %s38, 0
    %40 = vsyncpa [#allocation20], 0
    %s41 = scalar_lea.sflag [#allocation20], 1
    %42 = vsyncpa %s41, 0
    %43 = vsyncpa [#allocation23], 0
    loop: start=0, step=1, limit=4
    $region2: #{mvcln_forward.1} parent=1 // loop_pre_header
      _
    $region3: #{mvcln_forward.1} parent=1 // loop_header
      %s45 = sphi 0, %s49
      %p46 = scmp.ge.s32.totalorder %s45, 4
      %s52 = sphi 0, %s64
      %s53 = sphi 0, %s60
      %s54 = sphi 0, %s52
      %s55 = sphi 0, %s53
      %s56 = sphi 0, %s54
      %s57 = sphi 0, %s55
      %s69 = sphi 0, %s71
      %s72 = sphi 0, %s69
      %s73 = sphi 0, %s72
      %s89 = sphi 0, %s73
      %s95 = sphi 0, %s97
      %s98 = sphi 0, %s95
      %s99 = sphi 0, %s98
      %s115 = sphi 0, %s99
      %s121 = sphi 0, %s123
      %s124 = sphi 0, %s121
      %s125 = sphi 0, %s124
      %s141 = sphi 0, %s125
      %s147 = sphi 0, %s149
      %s150 = sphi 0, %s147
      %s151 = sphi 0, %s150
      %s167 = sphi 0, %s151
      %s173 = sphi 0, %s175
      %s176 = sphi 0, %s173
      %s177 = sphi 0, %s176
      %s193 = sphi 0, %s177
      %s199 = sphi 0, %s201
      %s202 = sphi 0, %s199
      %s203 = sphi 0, %s202
      %s219 = sphi 0, %s203
      %s225 = sphi 0, %s227
      %s228 = sphi 0, %s225
      %s229 = sphi 0, %s228
      %s245 = sphi 0, %s229
      %s251 = sphi 0, %s253
      %s254 = sphi 0, %s251
      %s255 = sphi 0, %s254
      %s271 = sphi 0, %s255
      %s277 = sphi 0, %s279
      %s280 = sphi 0, %s277
      %s281 = sphi 0, %s280
      %s297 = sphi 0, %s281
      %s303 = sphi 0, %s305
      %s306 = sphi 0, %s303
      %s307 = sphi 0, %s306
      %s323 = sphi 0, %s307
      %s329 = sphi 0, %s331
      %s332 = sphi 0, %s329
      %s333 = sphi 0, %s332
      %s349 = sphi 0, %s333
      %s355 = sphi 0, %s357
      %s358 = sphi 0, %s355
      %s359 = sphi 0, %s358
      %s375 = sphi 0, %s359
      %s381 = sphi 0, %s383
      %s384 = sphi 0, %s381
      %s385 = sphi 0, %s384
      %s401 = sphi 0, %s385
      %s405 = sphi 0, %s405
      %s407 = sphi 0, %s405
      %s408 = sphi 0, %s407
      %s422 = sphi 0, %s408
      %s426 = sphi 0, %s426
      %s428 = sphi 0, %s426
      %s429 = sphi 0, %s428
      %s443 = sphi 0, %s429
      %s451 = sphi 0, %s453
      %s454 = sphi 0, %s451
      %s455 = sphi 0, %s454
      %s471 = sphi 0, %s455
      %s479 = sphi 0, %s481
      %s482 = sphi 0, %s479
      %s483 = sphi 0, %s482
      %s499 = sphi 0, %s483
    $region4: #{mvcln_forward.1} parent=1 // loop_header_branch
      %48 = sbr.rel (%p46) target = $region8
    $region5: #{mvcln_forward.1} parent=1 // loop_body
      %s50 = ssub.s32 %s45, 1
      %s51 = ssub.s32 %s45, 2
      %s58 = sadd.s32 1, %s53
      %p59 = scmp.ge.s32.totalorder %s58, 1
      %s60 = scalar_select %p59, 0, %s58
      %s61 = sadd.s32 1, %s52
      %s62 = scalar_select %p59, %s61, %s52
      %p63 = scmp.ge.s32.totalorder %s62, 2
      %s64 = scalar_select %p63, 0, %s62
      %s65 = ssub.s32 %s52, %s64
      %s66 = ssub.s32 %s53, %s60
      %s67 = sor.u32 %s65, %s66
      %p68 = scmp.eq.s32.totalorder %s67, 0
      %s70 = sadd.s32 %s69, 1
      %s71 = scalar_select %p68, %s69, %s70
      %p74 = pneg %p68
      %p75 = scmp.eq.s32.totalorder %s45, 1
      %p76 = por %p74, %p75
      %p77 = scmp.ne.s32.totalorder %s69, %s72
      %p78 = scmp.eq.s32.totalorder %s45, 0
      %p79 = por %p77, %p78
      %p80 = scmp.ne.s32.totalorder %s69, %s72
      %p81 = scmp.eq.s32.totalorder %s50, 1
      %p82 = por %p80, %p81
      %p83 = scmp.ne.s32.totalorder %s72, %s73
      %p84 = scmp.eq.s32.totalorder %s50, 0
      %p85 = por %p83, %p84
      %p86 = scmp.ne.s32.totalorder %s72, %s73
      %p87 = scmp.eq.s32.totalorder %s51, 1
      %p88 = por %p86, %p87
      %p90 = scmp.ne.s32.totalorder %s73, %s89
      %p91 = scmp.eq.s32.totalorder %s51, 0
      %p92 = por %p90, %p91
      %s93 = ssub.s32 %s52, %s64
      %p94 = scmp.eq.s32.totalorder %s93, 0
      %s96 = sadd.s32 %s95, 1
      %s97 = scalar_select %p94, %s95, %s96
      %p100 = pneg %p94
      %p101 = scmp.eq.s32.totalorder %s45, 1
      %p102 = por %p100, %p101
      %p103 = scmp.ne.s32.totalorder %s95, %s98
      %p104 = scmp.eq.s32.totalorder %s45, 0
      %p105 = por %p103, %p104
      %p106 = scmp.ne.s32.totalorder %s95, %s98
      %p107 = scmp.eq.s32.totalorder %s50, 1
      %p108 = por %p106, %p107
      %p109 = scmp.ne.s32.totalorder %s98, %s99
      %p110 = scmp.eq.s32.totalorder %s50, 0
      %p111 = por %p109, %p110
      %p112 = scmp.ne.s32.totalorder %s98, %s99
      %p113 = scmp.eq.s32.totalorder %s51, 1
      %p114 = por %p112, %p113
      %p116 = scmp.ne.s32.totalorder %s99, %s115
      %p117 = scmp.eq.s32.totalorder %s51, 0
      %p118 = por %p116, %p117
      %s119 = ssub.s32 %s52, %s64
      %p120 = scmp.eq.s32.totalorder %s119, 0
      %s122 = sadd.s32 %s121, 1
      %s123 = scalar_select %p120, %s121, %s122
      %p126 = pneg %p120
      %p127 = scmp.eq.s32.totalorder %s45, 1
      %p128 = por %p126, %p127
      %p129 = scmp.ne.s32.totalorder %s121, %s124
      %p130 = scmp.eq.s32.totalorder %s45, 0
      %p131 = por %p129, %p130
      %p132 = scmp.ne.s32.totalorder %s121, %s124
      %p133 = scmp.eq.s32.totalorder %s50, 1
      %p134 = por %p132, %p133
      %p135 = scmp.ne.s32.totalorder %s124, %s125
      %p136 = scmp.eq.s32.totalorder %s50, 0
      %p137 = por %p135, %p136
      %p138 = scmp.ne.s32.totalorder %s124, %s125
      %p139 = scmp.eq.s32.totalorder %s51, 1
      %p140 = por %p138, %p139
      %p142 = scmp.ne.s32.totalorder %s125, %s141
      %p143 = scmp.eq.s32.totalorder %s51, 0
      %p144 = por %p142, %p143
      %s145 = ssub.s32 %s52, %s64
      %p146 = scmp.eq.s32.totalorder %s145, 0
      %s148 = sadd.s32 %s147, 1
      %s149 = scalar_select %p146, %s147, %s148
      %p152 = pneg %p146
      %p153 = scmp.eq.s32.totalorder %s45, 1
      %p154 = por %p152, %p153
      %p155 = scmp.ne.s32.totalorder %s147, %s150
      %p156 = scmp.eq.s32.totalorder %s45, 0
      %p157 = por %p155, %p156
      %p158 = scmp.ne.s32.totalorder %s147, %s150
      %p159 = scmp.eq.s32.totalorder %s50, 1
      %p160 = por %p158, %p159
      %p161 = scmp.ne.s32.totalorder %s150, %s151
      %p162 = scmp.eq.s32.totalorder %s50, 0
      %p163 = por %p161, %p162
      %p164 = scmp.ne.s32.totalorder %s150, %s151
      %p165 = scmp.eq.s32.totalorder %s51, 1
      %p166 = por %p164, %p165
      %p168 = scmp.ne.s32.totalorder %s151, %s167
      %p169 = scmp.eq.s32.totalorder %s51, 0
      %p170 = por %p168, %p169
      %s171 = ssub.s32 %s52, %s64
      %p172 = scmp.eq.s32.totalorder %s171, 0
      %s174 = sadd.s32 %s173, 1
      %s175 = scalar_select %p172, %s173, %s174
      %p178 = pneg %p172
      %p179 = scmp.eq.s32.totalorder %s45, 1
      %p180 = por %p178, %p179
      %p181 = scmp.ne.s32.totalorder %s173, %s176
      %p182 = scmp.eq.s32.totalorder %s45, 0
      %p183 = por %p181, %p182
      %p184 = scmp.ne.s32.totalorder %s173, %s176
      %p185 = scmp.eq.s32.totalorder %s50, 1
      %p186 = por %p184, %p185
      %p187 = scmp.ne.s32.totalorder %s176, %s177
      %p188 = scmp.eq.s32.totalorder %s50, 0
      %p189 = por %p187, %p188
      %p190 = scmp.ne.s32.totalorder %s176, %s177
      %p191 = scmp.eq.s32.totalorder %s51, 1
      %p192 = por %p190, %p191
      %p194 = scmp.ne.s32.totalorder %s177, %s193
      %p195 = scmp.eq.s32.totalorder %s51, 0
      %p196 = por %p194, %p195
      %s197 = ssub.s32 %s52, %s64
      %p198 = scmp.eq.s32.totalorder %s197, 0
      %s200 = sadd.s32 %s199, 1
      %s201 = scalar_select %p198, %s199, %s200
      %p204 = pneg %p198
      %p205 = scmp.eq.s32.totalorder %s45, 1
      %p206 = por %p204, %p205
      %p207 = scmp.ne.s32.totalorder %s199, %s202
      %p208 = scmp.eq.s32.totalorder %s45, 0
      %p209 = por %p207, %p208
      %p210 = scmp.ne.s32.totalorder %s199, %s202
      %p211 = scmp.eq.s32.totalorder %s50, 1
      %p212 = por %p210, %p211
      %p213 = scmp.ne.s32.totalorder %s202, %s203
      %p214 = scmp.eq.s32.totalorder %s50, 0
      %p215 = por %p213, %p214
      %p216 = scmp.ne.s32.totalorder %s202, %s203
      %p217 = scmp.eq.s32.totalorder %s51, 1
      %p218 = por %p216, %p217
      %p220 = scmp.ne.s32.totalorder %s203, %s219
      %p221 = scmp.eq.s32.totalorder %s51, 0
      %p222 = por %p220, %p221
      %s223 = ssub.s32 %s52, %s64
      %p224 = scmp.eq.s32.totalorder %s223, 0
      %s226 = sadd.s32 %s225, 1
      %s227 = scalar_select %p224, %s225, %s226
      %p230 = pneg %p224
      %p231 = scmp.eq.s32.totalorder %s45, 1
      %p232 = por %p230, %p231
      %p233 = scmp.ne.s32.totalorder %s225, %s228
      %p234 = scmp.eq.s32.totalorder %s45, 0
      %p235 = por %p233, %p234
      %p236 = scmp.ne.s32.totalorder %s225, %s228
      %p237 = scmp.eq.s32.totalorder %s50, 1
      %p238 = por %p236, %p237
      %p239 = scmp.ne.s32.totalorder %s228, %s229
      %p240 = scmp.eq.s32.totalorder %s50, 0
      %p241 = por %p239, %p240
      %p242 = scmp.ne.s32.totalorder %s228, %s229
      %p243 = scmp.eq.s32.totalorder %s51, 1
      %p244 = por %p242, %p243
      %p246 = scmp.ne.s32.totalorder %s229, %s245
      %p247 = scmp.eq.s32.totalorder %s51, 0
      %p248 = por %p246, %p247
      %s249 = ssub.s32 %s52, %s64
      %p250 = scmp.eq.s32.totalorder %s249, 0
      %s252 = sadd.s32 %s251, 1
      %s253 = scalar_select %p250, %s251, %s252
      %p256 = pneg %p250
      %p257 = scmp.eq.s32.totalorder %s45, 1
      %p258 = por %p256, %p257
      %p259 = scmp.ne.s32.totalorder %s251, %s254
      %p260 = scmp.eq.s32.totalorder %s45, 0
      %p261 = por %p259, %p260
      %p262 = scmp.ne.s32.totalorder %s251, %s254
      %p263 = scmp.eq.s32.totalorder %s50, 1
      %p264 = por %p262, %p263
      %p265 = scmp.ne.s32.totalorder %s254, %s255
      %p266 = scmp.eq.s32.totalorder %s50, 0
      %p267 = por %p265, %p266
      %p268 = scmp.ne.s32.totalorder %s254, %s255
      %p269 = scmp.eq.s32.totalorder %s51, 1
      %p270 = por %p268, %p269
      %p272 = scmp.ne.s32.totalorder %s255, %s271
      %p273 = scmp.eq.s32.totalorder %s51, 0
      %p274 = por %p272, %p273
      %s275 = ssub.s32 %s52, %s64
      %p276 = scmp.eq.s32.totalorder %s275, 0
      %s278 = sadd.s32 %s277, 1
      %s279 = scalar_select %p276, %s277, %s278
      %p282 = pneg %p276
      %p283 = scmp.eq.s32.totalorder %s45, 1
      %p284 = por %p282, %p283
      %p285 = scmp.ne.s32.totalorder %s277, %s280
      %p286 = scmp.eq.s32.totalorder %s45, 0
      %p287 = por %p285, %p286
      %p288 = scmp.ne.s32.totalorder %s277, %s280
      %p289 = scmp.eq.s32.totalorder %s50, 1
      %p290 = por %p288, %p289
      %p291 = scmp.ne.s32.totalorder %s280, %s281
      %p292 = scmp.eq.s32.totalorder %s50, 0
      %p293 = por %p291, %p292
      %p294 = scmp.ne.s32.totalorder %s280, %s281
      %p295 = scmp.eq.s32.totalorder %s51, 1
      %p296 = por %p294, %p295
      %p298 = scmp.ne.s32.totalorder %s281, %s297
      %p299 = scmp.eq.s32.totalorder %s51, 0
      %p300 = por %p298, %p299
      %s301 = ssub.s32 %s52, %s64
      %p302 = scmp.eq.s32.totalorder %s301, 0
      %s304 = sadd.s32 %s303, 1
      %s305 = scalar_select %p302, %s303, %s304
      %p308 = pneg %p302
      %p309 = scmp.eq.s32.totalorder %s45, 1
      %p310 = por %p308, %p309
      %p311 = scmp.ne.s32.totalorder %s303, %s306
      %p312 = scmp.eq.s32.totalorder %s45, 0
      %p313 = por %p311, %p312
      %p314 = scmp.ne.s32.totalorder %s303, %s306
      %p315 = scmp.eq.s32.totalorder %s50, 1
      %p316 = por %p314, %p315
      %p317 = scmp.ne.s32.totalorder %s306, %s307
      %p318 = scmp.eq.s32.totalorder %s50, 0
      %p319 = por %p317, %p318
      %p320 = scmp.ne.s32.totalorder %s306, %s307
      %p321 = scmp.eq.s32.totalorder %s51, 1
      %p322 = por %p320, %p321
      %p324 = scmp.ne.s32.totalorder %s307, %s323
      %p325 = scmp.eq.s32.totalorder %s51, 0
      %p326 = por %p324, %p325
      %s327 = ssub.s32 %s52, %s64
      %p328 = scmp.eq.s32.totalorder %s327, 0
      %s330 = sadd.s32 %s329, 1
      %s331 = scalar_select %p328, %s329, %s330
      %p334 = pneg %p328
      %p335 = scmp.eq.s32.totalorder %s45, 1
      %p336 = por %p334, %p335
      %p337 = scmp.ne.s32.totalorder %s329, %s332
      %p338 = scmp.eq.s32.totalorder %s45, 0
      %p339 = por %p337, %p338
      %p340 = scmp.ne.s32.totalorder %s329, %s332
      %p341 = scmp.eq.s32.totalorder %s50, 1
      %p342 = por %p340, %p341
      %p343 = scmp.ne.s32.totalorder %s332, %s333
      %p344 = scmp.eq.s32.totalorder %s50, 0
      %p345 = por %p343, %p344
      %p346 = scmp.ne.s32.totalorder %s332, %s333
      %p347 = scmp.eq.s32.totalorder %s51, 1
      %p348 = por %p346, %p347
      %p350 = scmp.ne.s32.totalorder %s333, %s349
      %p351 = scmp.eq.s32.totalorder %s51, 0
      %p352 = por %p350, %p351
      %s353 = ssub.s32 %s52, %s64
      %p354 = scmp.eq.s32.totalorder %s353, 0
      %s356 = sadd.s32 %s355, 1
      %s357 = scalar_select %p354, %s355, %s356
      %p360 = pneg %p354
      %p361 = scmp.eq.s32.totalorder %s45, 1
      %p362 = por %p360, %p361
      %p363 = scmp.ne.s32.totalorder %s355, %s358
      %p364 = scmp.eq.s32.totalorder %s45, 0
      %p365 = por %p363, %p364
      %p366 = scmp.ne.s32.totalorder %s355, %s358
      %p367 = scmp.eq.s32.totalorder %s50, 1
      %p368 = por %p366, %p367
      %p369 = scmp.ne.s32.totalorder %s358, %s359
      %p370 = scmp.eq.s32.totalorder %s50, 0
      %p371 = por %p369, %p370
      %p372 = scmp.ne.s32.totalorder %s358, %s359
      %p373 = scmp.eq.s32.totalorder %s51, 1
      %p374 = por %p372, %p373
      %p376 = scmp.ne.s32.totalorder %s359, %s375
      %p377 = scmp.eq.s32.totalorder %s51, 0
      %p378 = por %p376, %p377
      %s379 = ssub.s32 %s52, %s64
      %p380 = scmp.eq.s32.totalorder %s379, 0
      %s382 = sadd.s32 %s381, 1
      %s383 = scalar_select %p380, %s381, %s382
      %p386 = pneg %p380
      %p387 = scmp.eq.s32.totalorder %s45, 1
      %p388 = por %p386, %p387
      %p389 = scmp.ne.s32.totalorder %s381, %s384
      %p390 = scmp.eq.s32.totalorder %s45, 0
      %p391 = por %p389, %p390
      %p392 = scmp.ne.s32.totalorder %s381, %s384
      %p393 = scmp.eq.s32.totalorder %s50, 1
      %p394 = por %p392, %p393
      %p395 = scmp.ne.s32.totalorder %s384, %s385
      %p396 = scmp.eq.s32.totalorder %s50, 0
      %p397 = por %p395, %p396
      %p398 = scmp.ne.s32.totalorder %s384, %s385
      %p399 = scmp.eq.s32.totalorder %s51, 1
      %p400 = por %p398, %p399
      %p402 = scmp.ne.s32.totalorder %s385, %s401
      %p403 = scmp.eq.s32.totalorder %s51, 0
      %p404 = por %p402, %p403
      %s406 = sadd.s32 %s405, 1
      %p409 = scmp.eq.s32.totalorder %s45, 1
      %p410 = scmp.ne.s32.totalorder %s405, %s407
      %p411 = scmp.eq.s32.totalorder %s45, 0
      %p412 = por %p410, %p411
      %p413 = scmp.ne.s32.totalorder %s405, %s407
      %p414 = scmp.eq.s32.totalorder %s50, 1
      %p415 = por %p413, %p414
      %p416 = scmp.ne.s32.totalorder %s407, %s408
      %p417 = scmp.eq.s32.totalorder %s50, 0
      %p418 = por %p416, %p417
      %p419 = scmp.ne.s32.totalorder %s407, %s408
      %p420 = scmp.eq.s32.totalorder %s51, 1
      %p421 = por %p419, %p420
      %p423 = scmp.ne.s32.totalorder %s408, %s422
      %p424 = scmp.eq.s32.totalorder %s51, 0
      %p425 = por %p423, %p424
      %s427 = sadd.s32 %s426, 1
      %p430 = scmp.eq.s32.totalorder %s45, 1
      %p431 = scmp.ne.s32.totalorder %s426, %s428
      %p432 = scmp.eq.s32.totalorder %s45, 0
      %p433 = por %p431, %p432
      %p434 = scmp.ne.s32.totalorder %s426, %s428
      %p435 = scmp.eq.s32.totalorder %s50, 1
      %p436 = por %p434, %p435
      %p437 = scmp.ne.s32.totalorder %s428, %s429
      %p438 = scmp.eq.s32.totalorder %s50, 0
      %p439 = por %p437, %p438
      %p440 = scmp.ne.s32.totalorder %s428, %s429
      %p441 = scmp.eq.s32.totalorder %s51, 1
      %p442 = por %p440, %p441
      %p444 = scmp.ne.s32.totalorder %s429, %s443
      %p445 = scmp.eq.s32.totalorder %s51, 0
      %p446 = por %p444, %p445
      %s447 = ssub.s32 %s52, %s64
      %s448 = ssub.s32 %s53, %s60
      %s449 = sor.u32 %s447, %s448
      %p450 = scmp.eq.s32.totalorder %s449, 0
      %s452 = sadd.s32 %s451, 1
      %s453 = scalar_select %p450, %s451, %s452
      %p456 = pneg %p450
      %p457 = scmp.eq.s32.totalorder %s45, 1
      %p458 = por %p456, %p457
      %p459 = scmp.ne.s32.totalorder %s451, %s454
      %p460 = scmp.eq.s32.totalorder %s45, 0
      %p461 = por %p459, %p460
      %p462 = scmp.ne.s32.totalorder %s451, %s454
      %p463 = scmp.eq.s32.totalorder %s50, 1
      %p464 = por %p462, %p463
      %p465 = scmp.ne.s32.totalorder %s454, %s455
      %p466 = scmp.eq.s32.totalorder %s50, 0
      %p467 = por %p465, %p466
      %p468 = scmp.ne.s32.totalorder %s454, %s455
      %p469 = scmp.eq.s32.totalorder %s51, 1
      %p470 = por %p468, %p469
      %p472 = scmp.ne.s32.totalorder %s455, %s471
      %p473 = scmp.eq.s32.totalorder %s51, 0
      %p474 = por %p472, %p473
      %s475 = ssub.s32 %s52, %s64
      %s476 = ssub.s32 %s53, %s60
      %s477 = sor.u32 %s475, %s476
      %p478 = scmp.eq.s32.totalorder %s477, 0
      %s480 = sadd.s32 %s479, 1
      %s481 = scalar_select %p478, %s479, %s480
      %p484 = pneg %p478
      %p485 = scmp.eq.s32.totalorder %s45, 1
      %p486 = por %p484, %p485
      %p487 = scmp.ne.s32.totalorder %s479, %s482
      %p488 = scmp.eq.s32.totalorder %s45, 0
      %p489 = por %p487, %p488
      %p490 = scmp.ne.s32.totalorder %s479, %s482
      %p491 = scmp.eq.s32.totalorder %s50, 1
      %p492 = por %p490, %p491
      %p493 = scmp.ne.s32.totalorder %s482, %s483
      %p494 = scmp.eq.s32.totalorder %s50, 0
      %p495 = por %p493, %p494
      %p496 = scmp.ne.s32.totalorder %s482, %s483
      %p497 = scmp.eq.s32.totalorder %s51, 1
      %p498 = por %p496, %p497
      %p500 = scmp.ne.s32.totalorder %s483, %s499
      %p501 = scmp.eq.s32.totalorder %s51, 0
      %p502 = por %p500, %p501
      %p503 = scmp.le.s32.totalorder 1, %s45
      %p504 = scmp.lt.s32.totalorder %s45, 3
      %p505 = pnand %p503, %p504
      %p506 = pneg %p505
      // Predicated region
      $region9: #{mvcln_forward.1} parent=5 // pred_check
        _
      $region10: #{mvcln_forward.1} parent=5 // pred_check_branch
        %508 = sbr.rel (%p505) target = $region12
      $region11: #{mvcln_forward.1} parent=5 // pred_region
        %s509 = ssub.s32 %s45, 1
        // Predicated region
        $region13: #{mvcln_forward.1} parent=11 // pred_check
          %p510 = pneg %p418
        $region14: #{mvcln_forward.1} parent=11 // pred_check_branch
          %512 = sbr.rel (%p510) target = $region16
        $region15: #{mvcln_forward.1} parent=11 // pred_region
          %s514 = ssub.s32 2048, 2048
          %515 = vsyncadd [#allocation20], %s514
          %s516 = sshll.u32 [#allocation21], 4
          %s517 = int_to_ptr.vmem [resolvable:$true] %s516
          %522 = dma.hbm_to_vmem [thread:$0]  %s13, 2048, %s517, [#allocation20], 64, 64, 4
        $region16: #{mvcln_forward.1} parent=11 // pred_fallthru
          _
        // Predicated region
        $region17: #{mvcln_forward.1} parent=11 // pred_check
          %p523 = pneg %p439
        $region18: #{mvcln_forward.1} parent=11 // pred_check_branch
          %525 = sbr.rel (%p523) target = $region20
        $region19: #{mvcln_forward.1} parent=11 // pred_region
          %s527 = ssub.s32 16, 16
          %528 = vsyncadd [#allocation23], %s527
          %s530 = sshll.u32 [#allocation22], 4
          %s531 = int_to_ptr.vmem [resolvable:$true] %s530
          %533 = dma.hbm_to_vmem [thread:$0]  %s14, 16, %s531, [#allocation23]
        $region20: #{mvcln_forward.1} parent=11 // pred_fallthru
          _
      $region12: #{mvcln_forward.1} parent=5 // pred_fallthru
        _
      %p534 = scmp.lt.s32.totalorder %s45, 2
      // Predicated region
      $region21: #{mvcln_forward.1} parent=5 // pred_check
        %p535 = pneg %p534
      $region22: #{mvcln_forward.1} parent=5 // pred_check_branch
        %537 = sbr.rel (%p535) target = $region24
      $region23: #{mvcln_forward.1} parent=5 // pred_region
        // Predicated region
        $region25: #{mvcln_forward.1} parent=23 // pred_check
          %p538 = pneg %p79
        $region26: #{mvcln_forward.1} parent=23 // pred_check_branch
          %540 = sbr.rel (%p538) target = $region28
        $region27: #{mvcln_forward.1} parent=23 // pred_region
          %p541 = scmp.lt.s32.totalorder %s52, 1
          %s542 = scalar_select %p541, %s52, 1
          %p543 = scmp.lt.s32.totalorder %s53, 0
          %s544 = scalar_select %p543, %s53, 0
          %s545 = sadd.s32 %s544, %s542
          %s546 = smul.addr %s545, 8
          %s547 = scalar_lea.vmem %s0, %s546
        $region28: #{mvcln_forward.1} parent=23 // pred_fallthru
          _
        // Predicated region
        $region29: #{mvcln_forward.1} parent=23 // pred_check
          %p548 = pneg %p105
        $region30: #{mvcln_forward.1} parent=23 // pred_check_branch
          %550 = sbr.rel (%p548) target = $region32
        $region31: #{mvcln_forward.1} parent=23 // pred_region
          %s551 = sand.u32 %s95, 1
          %s552 = scalar_lea.sflag [#allocation3], %s551
          %s553 = sand.u32 %s95, 1
          %s554 = smul.addr %s553, 64
          %s555 = scalar_lea.vmem [#allocation2], %s554
          %s557 = ssub.s32 1024, 1024
          %558 = vsyncadd %s552, %s557
          %s559 = smul.addr %s52, 16
          %s560 = smul.addr %s559, 64
          %s561 = scalar_lea.hbm %s1, %s560
          %s562 = sshll.u32 %s555, 4
          %s563 = int_to_ptr.vmem [resolvable:$true] %s562
          %568 = dma.hbm_to_vmem [thread:$0]  %s561, 1024, %s563, %s552, 512, 512, 32
        $region32: #{mvcln_forward.1} parent=23 // pred_fallthru
          _
        // Predicated region
        $region33: #{mvcln_forward.1} parent=23 // pred_check
          %p569 = pneg %p131
        $region34: #{mvcln_forward.1} parent=23 // pred_check_branch
          %571 = sbr.rel (%p569) target = $region36
        $region35: #{mvcln_forward.1} parent=23 // pred_region
          %s572 = sand.u32 %s45, 1
          %s573 = scalar_lea.sflag [#allocation5], %s572
          %s574 = sand.u32 %s121, 1
          %s575 = smul.addr %s574, 8
          %s576 = scalar_lea.vmem [#allocation4], %s575
          %s578 = ssub.s32 128, 128
          %579 = vsyncadd %s573, %s578
          %s580 = smul.addr %s52, 8
          %s581 = smul.addr %s580, 16
          %s582 = scalar_lea.hbm %s2, %s581
          %s584 = sshll.u32 %s576, 4
          %s585 = int_to_ptr.vmem [resolvable:$true] %s584
          %587 = dma.hbm_to_vmem [thread:$0]  %s582, 128, %s585, %s573
        $region36: #{mvcln_forward.1} parent=23 // pred_fallthru
          _
        // Predicated region
        $region37: #{mvcln_forward.1} parent=23 // pred_check
          %p588 = pneg %p157
        $region38: #{mvcln_forward.1} parent=23 // pred_check_branch
          %590 = sbr.rel (%p588) target = $region40
        $region39: #{mvcln_forward.1} parent=23 // pred_region
          %s591 = sand.u32 %s45, 1
          %s592 = scalar_lea.sflag [#allocation5], %s591
          %s593 = sand.u32 %s147, 1
          %s594 = smul.addr %s593, 8
          %s595 = scalar_lea.vmem [#allocation6], %s594
          %s597 = ssub.s32 128, 128
          %598 = vsyncadd %s592, %s597
          %s599 = smul.addr %s52, 8
          %s600 = smul.addr %s599, 16
          %s601 = scalar_lea.hbm %s3, %s600
          %s603 = sshll.u32 %s595, 4
          %s604 = int_to_ptr.vmem [resolvable:$true] %s603
          %606 = dma.hbm_to_vmem [thread:$0]  %s601, 128, %s604, %s592
        $region40: #{mvcln_forward.1} parent=23 // pred_fallthru
          _
        // Predicated region
        $region41: #{mvcln_forward.1} parent=23 // pred_check
          %p607 = pneg %p183
        $region42: #{mvcln_forward.1} parent=23 // pred_check_branch
          %609 = sbr.rel (%p607) target = $region44
        $region43: #{mvcln_forward.1} parent=23 // pred_region
          %s610 = sand.u32 %s45, 1
          %s611 = scalar_lea.sflag [#allocation8], %s610
          %s612 = sand.u32 %s173, 1
          %s613 = smul.addr %s612, 4096
          %s614 = scalar_lea.vmem [#allocation7], %s613
          %s616 = ssub.s32 65536, 65536
          %617 = vsyncadd %s611, %s616
          %s618 = smul.addr %s52, 1024
          %s619 = smul.addr %s618, 64
          %s620 = scalar_lea.hbm %s4, %s619
          %s621 = sshll.u32 %s614, 4
          %s622 = int_to_ptr.vmem [resolvable:$true] %s621
          %627 = dma.hbm_to_vmem [thread:$0]  %s620, 65536, %s622, %s611, 512, 512, 32
        $region44: #{mvcln_forward.1} parent=23 // pred_fallthru
          _
        // Predicated region
        $region45: #{mvcln_forward.1} parent=23 // pred_check
          %p628 = pneg %p209
        $region46: #{mvcln_forward.1} parent=23 // pred_check_branch
          %630 = sbr.rel (%p628) target = $region48
        $region47: #{mvcln_forward.1} parent=23 // pred_region
          %s631 = sand.u32 %s45, 1
          %s632 = scalar_lea.sflag [#allocation8], %s631
          %s633 = sand.u32 %s199, 1
          %s634 = smul.addr %s633, 8
          %s635 = scalar_lea.vmem [#allocation9], %s634
          %s637 = ssub.s32 128, 128
          %638 = vsyncadd %s632, %s637
          %s639 = smul.addr %s52, 8
          %s640 = smul.addr %s639, 16
          %s641 = scalar_lea.hbm %s5, %s640
          %s643 = sshll.u32 %s635, 4
          %s644 = int_to_ptr.vmem [resolvable:$true] %s643
          %646 = dma.hbm_to_vmem [thread:$0]  %s641, 128, %s644, %s632
        $region48: #{mvcln_forward.1} parent=23 // pred_fallthru
          _
        // Predicated region
        $region49: #{mvcln_forward.1} parent=23 // pred_check
          %p647 = pneg %p235
        $region50: #{mvcln_forward.1} parent=23 // pred_check_branch
          %649 = sbr.rel (%p647) target = $region52
        $region51: #{mvcln_forward.1} parent=23 // pred_region
          %s650 = sand.u32 %s45, 1
          %s651 = scalar_lea.sflag [#allocation11], %s650
          %s652 = sand.u32 %s225, 1
          %s653 = smul.addr %s652, 8
          %s654 = scalar_lea.vmem [#allocation10], %s653
          %s656 = ssub.s32 128, 128
          %657 = vsyncadd %s651, %s656
          %s658 = smul.addr %s52, 8
          %s659 = smul.addr %s658, 16
          %s660 = scalar_lea.hbm %s6, %s659
          %s662 = sshll.u32 %s654, 4
          %s663 = int_to_ptr.vmem [resolvable:$true] %s662
          %665 = dma.hbm_to_vmem [thread:$0]  %s660, 128, %s663, %s651
        $region52: #{mvcln_forward.1} parent=23 // pred_fallthru
          _
        // Predicated region
        $region53: #{mvcln_forward.1} parent=23 // pred_check
          %p666 = pneg %p261
        $region54: #{mvcln_forward.1} parent=23 // pred_check_branch
          %668 = sbr.rel (%p666) target = $region56
        $region55: #{mvcln_forward.1} parent=23 // pred_region
          %s669 = sand.u32 %s45, 1
          %s670 = scalar_lea.sflag [#allocation11], %s669
          %s671 = sand.u32 %s251, 1
          %s672 = smul.addr %s671, 4096
          %s673 = scalar_lea.vmem [#allocation12], %s672
          %s675 = ssub.s32 65536, 65536
          %676 = vsyncadd %s670, %s675
          %s677 = smul.addr %s52, 1024
          %s678 = smul.addr %s677, 64
          %s679 = scalar_lea.hbm %s7, %s678
          %s680 = sshll.u32 %s673, 4
          %s681 = int_to_ptr.vmem [resolvable:$true] %s680
          %686 = dma.hbm_to_vmem [thread:$0]  %s679, 65536, %s681, %s670, 512, 512, 32
        $region56: #{mvcln_forward.1} parent=23 // pred_fallthru
          _
        // Predicated region
        $region57: #{mvcln_forward.1} parent=23 // pred_check
          %p687 = pneg %p287
        $region58: #{mvcln_forward.1} parent=23 // pred_check_branch
          %689 = sbr.rel (%p687) target = $region60
        $region59: #{mvcln_forward.1} parent=23 // pred_region
          %s690 = sand.u32 %s45, 1
          %s691 = scalar_lea.sflag [#allocation14], %s690
          %s692 = sand.u32 %s277, 1
          %s693 = smul.addr %s692, 8
          %s694 = scalar_lea.vmem [#allocation13], %s693
          %s696 = ssub.s32 128, 128
          %697 = vsyncadd %s691, %s696
          %s698 = smul.addr %s52, 8
          %s699 = smul.addr %s698, 16
          %s700 = scalar_lea.hbm %s8, %s699
          %s702 = sshll.u32 %s694, 4
          %s703 = int_to_ptr.vmem [resolvable:$true] %s702
          %705 = dma.hbm_to_vmem [thread:$0]  %s700, 128, %s703, %s691
        $region60: #{mvcln_forward.1} parent=23 // pred_fallthru
          _
        // Predicated region
        $region61: #{mvcln_forward.1} parent=23 // pred_check
          %p706 = pneg %p313
        $region62: #{mvcln_forward.1} parent=23 // pred_check_branch
          %708 = sbr.rel (%p706) target = $region64
        $region63: #{mvcln_forward.1} parent=23 // pred_region
          %s709 = sand.u32 %s45, 1
          %s710 = scalar_lea.sflag [#allocation14], %s709
          %s711 = sand.u32 %s303, 1
          %s712 = smul.addr %s711, 8
          %s713 = scalar_lea.vmem [#allocation15], %s712
          %s715 = ssub.s32 128, 128
          %716 = vsyncadd %s710, %s715
          %s717 = smul.addr %s52, 8
          %s718 = smul.addr %s717, 16
          %s719 = scalar_lea.hbm %s9, %s718
          %s721 = sshll.u32 %s713, 4
          %s722 = int_to_ptr.vmem [resolvable:$true] %s721
          %724 = dma.hbm_to_vmem [thread:$0]  %s719, 128, %s722, %s710
        $region64: #{mvcln_forward.1} parent=23 // pred_fallthru
          _
        // Predicated region
        $region65: #{mvcln_forward.1} parent=23 // pred_check
          %p725 = pneg %p339
        $region66: #{mvcln_forward.1} parent=23 // pred_check_branch
          %727 = sbr.rel (%p725) target = $region68
        $region67: #{mvcln_forward.1} parent=23 // pred_region
          %s728 = sand.u32 %s45, 1
          %s729 = scalar_lea.sflag [#allocation17], %s728
          %s730 = sand.u32 %s329, 1
          %s731 = smul.addr %s730, 512
          %s732 = scalar_lea.vmem [#allocation16], %s731
          %s734 = ssub.s32 8192, 8192
          %735 = vsyncadd %s729, %s734
          %s736 = smul.addr %s52, 128
          %s737 = smul.addr %s736, 64
          %s738 = scalar_lea.hbm %s10, %s737
          %s739 = sshll.u32 %s732, 4
          %s740 = int_to_ptr.vmem [resolvable:$true] %s739
          %745 = dma.hbm_to_vmem [thread:$0]  %s738, 8192, %s740, %s729, 64, 64, 4
        $region68: #{mvcln_forward.1} parent=23 // pred_fallthru
          _
        // Predicated region
        $region69: #{mvcln_forward.1} parent=23 // pred_check
          %p746 = pneg %p365
        $region70: #{mvcln_forward.1} parent=23 // pred_check_branch
          %748 = sbr.rel (%p746) target = $region72
        $region71: #{mvcln_forward.1} parent=23 // pred_region
          %s749 = sand.u32 %s45, 1
          %s750 = scalar_lea.sflag [#allocation17], %s749
          %s751 = sand.u32 %s355, 1
          %s752 = scalar_lea.vmem [#allocation18], %s751
          %s754 = ssub.s32 16, 16
          %755 = vsyncadd %s750, %s754
          %s756 = smul.addr %s52, 16
          %s757 = scalar_lea.hbm %s11, %s756
          %s759 = sshll.u32 %s752, 4
          %s760 = int_to_ptr.vmem [resolvable:$true] %s759
          %762 = dma.hbm_to_vmem [thread:$0]  %s757, 16, %s760, %s750
        $region72: #{mvcln_forward.1} parent=23 // pred_fallthru
          _
        // Predicated region
        $region73: #{mvcln_forward.1} parent=23 // pred_check
          %p763 = pneg %p391
        $region74: #{mvcln_forward.1} parent=23 // pred_check_branch
          %765 = sbr.rel (%p763) target = $region76
        $region75: #{mvcln_forward.1} parent=23 // pred_region
          %s766 = sand.u32 %s45, 1
          %s767 = scalar_lea.sflag [#allocation20], %s766
          %s768 = sand.u32 %s381, 1
          %s769 = scalar_lea.vmem [#allocation19], %s768
          %s771 = ssub.s32 16, 16
          %772 = vsyncadd %s767, %s771
          %s773 = smul.addr %s52, 16
          %s774 = scalar_lea.hbm %s12, %s773
          %s776 = sshll.u32 %s769, 4
          %s777 = int_to_ptr.vmem [resolvable:$true] %s776
          %779 = dma.hbm_to_vmem [thread:$0]  %s774, 16, %s777, %s767
        $region76: #{mvcln_forward.1} parent=23 // pred_fallthru
          _
      $region24: #{mvcln_forward.1} parent=5 // pred_fallthru
        _
      %p780 = scmp.le.s32.totalorder 1, %s45
      %p781 = scmp.lt.s32.totalorder %s45, 3
      %p782 = pnand %p780, %p781
      %p783 = pneg %p782
      // Predicated region
      $region77: #{mvcln_forward.1} parent=5 // pred_check
        _
      $region78: #{mvcln_forward.1} parent=5 // pred_check_branch
        %785 = sbr.rel (%p782) target = $region80
      $region79: #{mvcln_forward.1} parent=5 // pred_region
        %s786 = ssub.s32 %s45, 1
        %s787 = sand.u32 %s98, 1
        %s788 = scalar_lea.sflag [#allocation3], %s787
        %s789 = sand.u32 %s98, 1
        %s790 = smul.addr %s789, 64
        %s791 = scalar_lea.vmem [#allocation2], %s790
        // Predicated region
        $region81: #{mvcln_forward.1} parent=79 // pred_check
          %p792 = pneg %p111
        $region82: #{mvcln_forward.1} parent=79 // pred_check_branch
          %794 = sbr.rel (%p792) target = $region84
        $region83: #{mvcln_forward.1} parent=79 // pred_region
          %795 = dma.done %s788, 1024
        $region84: #{mvcln_forward.1} parent=79 // pred_fallthru
          _
        %s796 = sand.u32 %s50, 1
        %s797 = scalar_lea.sflag [#allocation5], %s796
        %s798 = sand.u32 %s124, 1
        %s799 = smul.addr %s798, 8
        %s800 = scalar_lea.vmem [#allocation4], %s799
        // Predicated region
        $region85: #{mvcln_forward.1} parent=79 // pred_check
          %p801 = pneg %p137
        $region86: #{mvcln_forward.1} parent=79 // pred_check_branch
          %803 = sbr.rel (%p801) target = $region88
        $region87: #{mvcln_forward.1} parent=79 // pred_region
          %804 = dma.done %s797, 128
        $region88: #{mvcln_forward.1} parent=79 // pred_fallthru
          _
        %s805 = sand.u32 %s50, 1
        %s806 = scalar_lea.sflag [#allocation5], %s805
        %s807 = sand.u32 %s150, 1
        %s808 = smul.addr %s807, 8
        %s809 = scalar_lea.vmem [#allocation6], %s808
        // Predicated region
        $region89: #{mvcln_forward.1} parent=79 // pred_check
          %p810 = pneg %p163
        $region90: #{mvcln_forward.1} parent=79 // pred_check_branch
          %812 = sbr.rel (%p810) target = $region92
        $region91: #{mvcln_forward.1} parent=79 // pred_region
          %813 = dma.done %s806, 128
        $region92: #{mvcln_forward.1} parent=79 // pred_fallthru
          _
        %s814 = sand.u32 %s50, 1
        %s815 = scalar_lea.sflag [#allocation8], %s814
        %s816 = sand.u32 %s176, 1
        %s817 = smul.addr %s816, 4096
        %s818 = scalar_lea.vmem [#allocation7], %s817
        // Predicated region
        $region93: #{mvcln_forward.1} parent=79 // pred_check
          %p819 = pneg %p189
        $region94: #{mvcln_forward.1} parent=79 // pred_check_branch
          %821 = sbr.rel (%p819) target = $region96
        $region95: #{mvcln_forward.1} parent=79 // pred_region
          %822 = dma.done %s815, 65536
        $region96: #{mvcln_forward.1} parent=79 // pred_fallthru
          _
        %s823 = sand.u32 %s50, 1
        %s824 = scalar_lea.sflag [#allocation8], %s823
        %s825 = sand.u32 %s202, 1
        %s826 = smul.addr %s825, 8
        %s827 = scalar_lea.vmem [#allocation9], %s826
        // Predicated region
        $region97: #{mvcln_forward.1} parent=79 // pred_check
          %p828 = pneg %p215
        $region98: #{mvcln_forward.1} parent=79 // pred_check_branch
          %830 = sbr.rel (%p828) target = $region100
        $region99: #{mvcln_forward.1} parent=79 // pred_region
          %831 = dma.done %s824, 128
        $region100: #{mvcln_forward.1} parent=79 // pred_fallthru
          _
        %s832 = sand.u32 %s50, 1
        %s833 = scalar_lea.sflag [#allocation11], %s832
        %s834 = sand.u32 %s228, 1
        %s835 = smul.addr %s834, 8
        %s836 = scalar_lea.vmem [#allocation10], %s835
        // Predicated region
        $region101: #{mvcln_forward.1} parent=79 // pred_check
          %p837 = pneg %p241
        $region102: #{mvcln_forward.1} parent=79 // pred_check_branch
          %839 = sbr.rel (%p837) target = $region104
        $region103: #{mvcln_forward.1} parent=79 // pred_region
          %840 = dma.done %s833, 128
        $region104: #{mvcln_forward.1} parent=79 // pred_fallthru
          _
        %s841 = sand.u32 %s50, 1
        %s842 = scalar_lea.sflag [#allocation11], %s841
        %s843 = sand.u32 %s254, 1
        %s844 = smul.addr %s843, 4096
        %s845 = scalar_lea.vmem [#allocation12], %s844
        // Predicated region
        $region105: #{mvcln_forward.1} parent=79 // pred_check
          %p846 = pneg %p267
        $region106: #{mvcln_forward.1} parent=79 // pred_check_branch
          %848 = sbr.rel (%p846) target = $region108
        $region107: #{mvcln_forward.1} parent=79 // pred_region
          %849 = dma.done %s842, 65536
        $region108: #{mvcln_forward.1} parent=79 // pred_fallthru
          _
        %s850 = sand.u32 %s50, 1
        %s851 = scalar_lea.sflag [#allocation14], %s850
        %s852 = sand.u32 %s280, 1
        %s853 = smul.addr %s852, 8
        %s854 = scalar_lea.vmem [#allocation13], %s853
        // Predicated region
        $region109: #{mvcln_forward.1} parent=79 // pred_check
          %p855 = pneg %p293
        $region110: #{mvcln_forward.1} parent=79 // pred_check_branch
          %857 = sbr.rel (%p855) target = $region112
        $region111: #{mvcln_forward.1} parent=79 // pred_region
          %858 = dma.done %s851, 128
        $region112: #{mvcln_forward.1} parent=79 // pred_fallthru
          _
        %s859 = sand.u32 %s50, 1
        %s860 = scalar_lea.sflag [#allocation14], %s859
        %s861 = sand.u32 %s306, 1
        %s862 = smul.addr %s861, 8
        %s863 = scalar_lea.vmem [#allocation15], %s862
        // Predicated region
        $region113: #{mvcln_forward.1} parent=79 // pred_check
          %p864 = pneg %p319
        $region114: #{mvcln_forward.1} parent=79 // pred_check_branch
          %866 = sbr.rel (%p864) target = $region116
        $region115: #{mvcln_forward.1} parent=79 // pred_region
          %867 = dma.done %s860, 128
        $region116: #{mvcln_forward.1} parent=79 // pred_fallthru
          _
        %s868 = sand.u32 %s50, 1
        %s869 = scalar_lea.sflag [#allocation17], %s868
        %s870 = sand.u32 %s332, 1
        %s871 = smul.addr %s870, 512
        %s872 = scalar_lea.vmem [#allocation16], %s871
        // Predicated region
        $region117: #{mvcln_forward.1} parent=79 // pred_check
          %p873 = pneg %p345
        $region118: #{mvcln_forward.1} parent=79 // pred_check_branch
          %875 = sbr.rel (%p873) target = $region120
        $region119: #{mvcln_forward.1} parent=79 // pred_region
          %876 = dma.done %s869, 8192
        $region120: #{mvcln_forward.1} parent=79 // pred_fallthru
          _
        %s877 = sand.u32 %s50, 1
        %s878 = scalar_lea.sflag [#allocation17], %s877
        %s879 = sand.u32 %s358, 1
        %s880 = scalar_lea.vmem [#allocation18], %s879
        // Predicated region
        $region121: #{mvcln_forward.1} parent=79 // pred_check
          %p881 = pneg %p371
        $region122: #{mvcln_forward.1} parent=79 // pred_check_branch
          %883 = sbr.rel (%p881) target = $region124
        $region123: #{mvcln_forward.1} parent=79 // pred_region
          %884 = dma.done %s878, 16
        $region124: #{mvcln_forward.1} parent=79 // pred_fallthru
          _
        %s885 = sand.u32 %s50, 1
        %s886 = scalar_lea.sflag [#allocation20], %s885
        %s887 = sand.u32 %s384, 1
        %s888 = scalar_lea.vmem [#allocation19], %s887
        // Predicated region
        $region125: #{mvcln_forward.1} parent=79 // pred_check
          %p889 = pneg %p397
        $region126: #{mvcln_forward.1} parent=79 // pred_check_branch
          %891 = sbr.rel (%p889) target = $region128
        $region127: #{mvcln_forward.1} parent=79 // pred_region
          %892 = dma.done %s886, 16
        $region128: #{mvcln_forward.1} parent=79 // pred_fallthru
          _
        // Predicated region
        $region129: #{mvcln_forward.1} parent=79 // pred_check
          %p893 = pneg %p418
        $region130: #{mvcln_forward.1} parent=79 // pred_check_branch
          %895 = sbr.rel (%p893) target = $region132
        $region131: #{mvcln_forward.1} parent=79 // pred_region
          %896 = dma.done [#allocation20], 2048
        $region132: #{mvcln_forward.1} parent=79 // pred_fallthru
          _
        // Predicated region
        $region133: #{mvcln_forward.1} parent=79 // pred_check
          %p897 = pneg %p439
        $region134: #{mvcln_forward.1} parent=79 // pred_check_branch
          %899 = sbr.rel (%p897) target = $region136
        $region135: #{mvcln_forward.1} parent=79 // pred_region
          %900 = dma.done [#allocation23], 16
        $region136: #{mvcln_forward.1} parent=79 // pred_fallthru
          _
        %p901 = scmp.lt.s32.totalorder %s54, 1
        %s902 = scalar_select %p901, %s54, 1
        %p903 = scmp.lt.s32.totalorder %s55, 0
        %s904 = scalar_select %p903, %s55, 0
        %s905 = sadd.s32 %s904, %s902
        %s906 = smul.addr %s905, 8
        %s907 = scalar_lea.vmem %s0, %s906
        %p908 = pneg %p85
        %p909 = pneg %p82
        %s910 = sand.u32 %s98, 1
        %s911 = scalar_lea.sflag [#allocation3], %s910
        %s912 = sand.u32 %s98, 1
        %s913 = smul.addr %s912, 64
        %s914 = scalar_lea.vmem [#allocation2], %s913
        %p915 = pneg %p111
        %p916 = pneg %p108
        %s917 = sand.u32 %s50, 1
        %s918 = scalar_lea.sflag [#allocation5], %s917
        %s919 = sand.u32 %s124, 1
        %s920 = smul.addr %s919, 8
        %s921 = scalar_lea.vmem [#allocation4], %s920
        %p922 = pneg %p137
        %p923 = pneg %p134
        %s924 = sand.u32 %s50, 1
        %s925 = scalar_lea.sflag [#allocation5], %s924
        %s926 = sand.u32 %s150, 1
        %s927 = smul.addr %s926, 8
        %s928 = scalar_lea.vmem [#allocation6], %s927
        %p929 = pneg %p163
        %p930 = pneg %p160
        %s931 = sand.u32 %s50, 1
        %s932 = scalar_lea.sflag [#allocation8], %s931
        %s933 = sand.u32 %s176, 1
        %s934 = smul.addr %s933, 4096
        %s935 = scalar_lea.vmem [#allocation7], %s934
        %p936 = pneg %p189
        %p937 = pneg %p186
        %s938 = sand.u32 %s50, 1
        %s939 = scalar_lea.sflag [#allocation8], %s938
        %s940 = sand.u32 %s202, 1
        %s941 = smul.addr %s940, 8
        %s942 = scalar_lea.vmem [#allocation9], %s941
        %p943 = pneg %p215
        %p944 = pneg %p212
        %s945 = sand.u32 %s50, 1
        %s946 = scalar_lea.sflag [#allocation11], %s945
        %s947 = sand.u32 %s228, 1
        %s948 = smul.addr %s947, 8
        %s949 = scalar_lea.vmem [#allocation10], %s948
        %p950 = pneg %p241
        %p951 = pneg %p238
        %s952 = sand.u32 %s50, 1
        %s953 = scalar_lea.sflag [#allocation11], %s952
        %s954 = sand.u32 %s254, 1
        %s955 = smul.addr %s954, 4096
        %s956 = scalar_lea.vmem [#allocation12], %s955
        %p957 = pneg %p267
        %p958 = pneg %p264
        %s959 = sand.u32 %s50, 1
        %s960 = scalar_lea.sflag [#allocation14], %s959
        %s961 = sand.u32 %s280, 1
        %s962 = smul.addr %s961, 8
        %s963 = scalar_lea.vmem [#allocation13], %s962
        %p964 = pneg %p293
        %p965 = pneg %p290
        %s966 = sand.u32 %s50, 1
        %s967 = scalar_lea.sflag [#allocation14], %s966
        %s968 = sand.u32 %s306, 1
        %s969 = smul.addr %s968, 8
        %s970 = scalar_lea.vmem [#allocation15], %s969
        %p971 = pneg %p319
        %p972 = pneg %p316
        %s973 = sand.u32 %s50, 1
        %s974 = scalar_lea.sflag [#allocation17], %s973
        %s975 = sand.u32 %s332, 1
        %s976 = smul.addr %s975, 512
        %s977 = scalar_lea.vmem [#allocation16], %s976
        %p978 = pneg %p345
        %p979 = pneg %p342
        %s980 = sand.u32 %s50, 1
        %s981 = scalar_lea.sflag [#allocation17], %s980
        %s982 = sand.u32 %s358, 1
        %s983 = scalar_lea.vmem [#allocation18], %s982
        %p984 = pneg %p371
        %p985 = pneg %p368
        %s986 = sand.u32 %s50, 1
        %s987 = scalar_lea.sflag [#allocation20], %s986
        %s988 = sand.u32 %s384, 1
        %s989 = scalar_lea.vmem [#allocation19], %s988
        %p990 = pneg %p397
        %p991 = pneg %p394
        %p992 = pneg %p418
        %p993 = pneg %p415
        %p994 = pneg %p439
        %p995 = pneg %p436
        %p996 = pneg %p467
        %p997 = pneg %p464
        %p998 = scmp.lt.s32.totalorder %s54, 1
        %s999 = scalar_select %p998, %s54, 1
        %p1000 = scmp.lt.s32.totalorder %s55, 0
        %s1001 = scalar_select %p1000, %s55, 0
        %s1002 = sadd.s32 %s1001, %s999
        %s1003 = smul.addr %s1002, 8
        %s1004 = scalar_lea.vmem %s15, %s1003
        %p1005 = pneg %p495
        %p1006 = pneg %p492
        %p1007 = scmp.lt.s32.totalorder %s54, 1
        %s1008 = scalar_select %p1007, %s54, 1
        %p1009 = scmp.lt.s32.totalorder %s55, 0
        %s1010 = scalar_select %p1009, %s55, 0
        %s1011 = sadd.s32 %s1010, %s1008
        %s1012 = smul.addr %s1011, 8
        %s1013 = scalar_lea.vmem %s16, %s1012
        %p1014 = scmp.lt.s32.totalorder %s54, 1
        %s1015 = scalar_select %p1014, %s54, 1
        %p1016 = scmp.lt.s32.totalorder %s55, 0
        %s1017 = scalar_select %p1016, %s55, 0
        %s1018 = sadd.s32 %s1017, %s1015
        %s1019 = smul.addr %s1018, 8
        %s1020 = scalar_lea.vmem %s0, %s1019
        %p1021 = scmp.lt.s32.totalorder %s54, 1
        %s1022 = scalar_select %p1021, %s54, 1
        %p1023 = scmp.lt.s32.totalorder %s55, 0
        %s1024 = scalar_select %p1023, %s55, 0
        %s1025 = sadd.s32 %s1024, %s1022
        %s1026 = smul.addr %s1025, 8
        %s1027 = scalar_lea.vmem %s15, %s1026
        %p1028 = scmp.lt.s32.totalorder %s54, 1
        %s1029 = scalar_select %p1028, %s54, 1
        %p1030 = scmp.lt.s32.totalorder %s55, 0
        %s1031 = scalar_select %p1030, %s55, 0
        %s1032 = sadd.s32 %s1031, %s1029
        %s1033 = smul.addr %s1032, 8
        %s1034 = scalar_lea.vmem %s16, %s1033
        %v1036 = vld [vmem:[%s1020] sm:$0xff]
        %v1037 = vpack.c.bf16 %v1036, %v1036
        %v1038 = vld [vmem:[%s791] sm:$0xff]
        %v1039 = vld [vmem:[%s791 + $0x8] sm:$0xff]
        %v1040 = vld [vmem:[%s791 + $0x10] sm:$0xff]
        %v1041 = vld [vmem:[%s791 + $0x18] sm:$0xff]
        %v1042 = vld [vmem:[%s791 + $0x20] sm:$0xff]
        %v1043 = vld [vmem:[%s791 + $0x28] sm:$0xff]
        %v1044 = vld [vmem:[%s791 + $0x30] sm:$0xff]
        %v1045 = vld [vmem:[%s791 + $0x38] sm:$0xff]
        %v1054 = vunpack.c.l.b16 %v1038
        %v1055 = vunpack.c.h.b16 %v1038
        %v1056 = vunpack.c.l.b16 %v1039
        %v1057 = vunpack.c.h.b16 %v1039
        %v1058 = vunpack.c.l.b16 %v1040
        %v1059 = vunpack.c.h.b16 %v1040
        %v1060 = vunpack.c.l.b16 %v1041
        %v1061 = vunpack.c.h.b16 %v1041
        %v1062 = vunpack.c.l.b16 %v1042
        %v1063 = vunpack.c.h.b16 %v1042
        %v1064 = vunpack.c.l.b16 %v1043
        %v1065 = vunpack.c.h.b16 %v1043
        %v1066 = vunpack.c.l.b16 %v1044
        %v1067 = vunpack.c.h.b16 %v1044
        %v1068 = vunpack.c.l.b16 %v1045
        %v1069 = vunpack.c.h.b16 %v1045
        %v1070 = vpack.c.b16 %v1062, %v1054
        %v1071 = vpack.c.b16 %v1063, %v1055
        %v1072 = vpack.c.b16 %v1064, %v1056
        %v1073 = vpack.c.b16 %v1065, %v1057
        %v1074 = vpack.c.b16 %v1066, %v1058
        %v1075 = vpack.c.b16 %v1067, %v1059
        %v1076 = vpack.c.b16 %v1068, %v1060
        %v1077 = vpack.c.b16 %v1069, %v1061
        %vm1086 = vcmask 130048
        %v1088 = vsel %vm1086, %v1037, 0
        %1090 = vmatprep.subr.bf16.mxu0 %v1071
        %1091 = vmatpush1.bf16.msra.mxu0 %v1070
        %1092 = vmatprep.subr.bf16.mxu0 0
        %1093 = vmatpush1.bf16.msra.mxu0 0
        %1094 = vmatprep.subr.bf16.mxu0 0
        %1095 = vmatpush1.bf16.msra.mxu0 0
        %1096 = vmatprep.subr.bf16.mxu0 0
        %1097 = vmatpush1.bf16.msra.mxu0 0
        %1098 = vmatprep.subr.bf16.mxu0 0
        %1099 = vmatpush1.bf16.msra.mxu0 0
        %1100 = vmatprep.subr.bf16.mxu0 0
        %1101 = vmatpush1.bf16.msra.mxu0 0
        %1102 = vmatprep.subr.bf16.mxu0 0
        %1103 = vmatpush1.bf16.msra.mxu0 0
        %1104 = vmatprep.subr.bf16.mxu0 0
        %1105 = vmatpush1.bf16.msra.mxu0 0
        %1106 = vmatprep.subr.bf16.mxu0 0
        %1107 = vmatpush1.bf16.msra.mxu0 0
        %1108 = vmatprep.subr.bf16.mxu0 0
        %1109 = vmatpush1.bf16.msra.mxu0 0
        %1110 = vmatprep.subr.bf16.mxu0 0
        %1111 = vmatpush1.bf16.msra.mxu0 0
        %1112 = vmatprep.subr.bf16.mxu0 0
        %1113 = vmatpush1.bf16.msra.mxu0 0
        %1114 = vmatprep.subr.bf16.mxu0 0
        %1115 = vmatpush1.bf16.msra.mxu0 0
        %1116 = vmatprep.subr.bf16.mxu0 0
        %1117 = vmatpush1.bf16.msra.mxu0 0
        %1118 = vmatprep.subr.bf16.mxu0 0
        %1119 = vmatpush1.bf16.msra.mxu0 0
        %1120 = vmatprep.subr.bf16.mxu0 0
        %1121 = vmatpush1.bf16.msra.mxu0 0
        %1122 = vmatprep.mubr.bf16.mxu0 0
        %1123 = vmatmul.mubr.bf16.gmra.mrb[0].mxu0 %v1088
        %v1124 = vpop.f32.mrb[0].mxu0
        %v1125 = vadd.f32 0.0, %v1124
        %v1126 = vpop.f32.mrb[0].mxu0
        %v1127 = vadd.f32 0.0, %v1126
        %v1128 = vpop.f32.mrb[0].mxu0
        %v1129 = vpop.f32.mrb[0].mxu0
        %1130 = vdwg.mxu0
        %1131 = vmatprep.subr.bf16.mxu0 %v1073
        %1132 = vmatpush1.bf16.msra.mxu0 %v1072
        %1133 = vmatprep.subr.bf16.mxu0 0
        %1134 = vmatpush1.bf16.msra.mxu0 0
        %1135 = vmatprep.subr.bf16.mxu0 0
        %1136 = vmatpush1.bf16.msra.mxu0 0
        %1137 = vmatprep.subr.bf16.mxu0 0
        %1138 = vmatpush1.bf16.msra.mxu0 0
        %1139 = vmatprep.subr.bf16.mxu0 0
        %1140 = vmatpush1.bf16.msra.mxu0 0
        %1141 = vmatprep.subr.bf16.mxu0 0
        %1142 = vmatpush1.bf16.msra.mxu0 0
        %1143 = vmatprep.subr.bf16.mxu0 0
        %1144 = vmatpush1.bf16.msra.mxu0 0
        %1145 = vmatprep.subr.bf16.mxu0 0
        %1146 = vmatpush1.bf16.msra.mxu0 0
        %1147 = vmatprep.subr.bf16.mxu0 0
        %1148 = vmatpush1.bf16.msra.mxu0 0
        %1149 = vmatprep.subr.bf16.mxu0 0
        %1150 = vmatpush1.bf16.msra.mxu0 0
        %1151 = vmatprep.subr.bf16.mxu0 0
        %1152 = vmatpush1.bf16.msra.mxu0 0
        %1153 = vmatprep.subr.bf16.mxu0 0
        %1154 = vmatpush1.bf16.msra.mxu0 0
        %1155 = vmatprep.subr.bf16.mxu0 0
        %1156 = vmatpush1.bf16.msra.mxu0 0
        %1157 = vmatprep.subr.bf16.mxu0 0
        %1158 = vmatpush1.bf16.msra.mxu0 0
        %1159 = vmatprep.subr.bf16.mxu0 0
        %1160 = vmatpush1.bf16.msra.mxu0 0
        %1161 = vmatprep.subr.bf16.mxu0 0
        %1162 = vmatpush1.bf16.msra.mxu0 0
        %1163 = vmatprep.mubr.bf16.mxu0 0
        %1164 = vmatmul.mubr.bf16.gmra.mrb[0].mxu0 %v1088
        %v1165 = vpop.f32.mrb[0].mxu0
        %v1166 = vadd.f32 0.0, %v1165
        %v1167 = vpop.f32.mrb[0].mxu0
        %v1168 = vadd.f32 0.0, %v1167
        %v1169 = vpop.f32.mrb[0].mxu0
        %v1170 = vpop.f32.mrb[0].mxu0
        %1171 = vdwg.mxu0
        %1172 = vmatprep.subr.bf16.mxu0 %v1075
        %1173 = vmatpush1.bf16.msra.mxu0 %v1074
        %1174 = vmatprep.subr.bf16.mxu0 0
        %1175 = vmatpush1.bf16.msra.mxu0 0
        %1176 = vmatprep.subr.bf16.mxu0 0
        %1177 = vmatpush1.bf16.msra.mxu0 0
        %1178 = vmatprep.subr.bf16.mxu0 0
        %1179 = vmatpush1.bf16.msra.mxu0 0
        %1180 = vmatprep.subr.bf16.mxu0 0
        %1181 = vmatpush1.bf16.msra.mxu0 0
        %1182 = vmatprep.subr.bf16.mxu0 0
        %1183 = vmatpush1.bf16.msra.mxu0 0
        %1184 = vmatprep.subr.bf16.mxu0 0
        %1185 = vmatpush1.bf16.msra.mxu0 0
        %1186 = vmatprep.subr.bf16.mxu0 0
        %1187 = vmatpush1.bf16.msra.mxu0 0
        %1188 = vmatprep.subr.bf16.mxu0 0
        %1189 = vmatpush1.bf16.msra.mxu0 0
        %1190 = vmatprep.subr.bf16.mxu0 0
        %1191 = vmatpush1.bf16.msra.mxu0 0
        %1192 = vmatprep.subr.bf16.mxu0 0
        %1193 = vmatpush1.bf16.msra.mxu0 0
        %1194 = vmatprep.subr.bf16.mxu0 0
        %1195 = vmatpush1.bf16.msra.mxu0 0
        %1196 = vmatprep.subr.bf16.mxu0 0
        %1197 = vmatpush1.bf16.msra.mxu0 0
        %1198 = vmatprep.subr.bf16.mxu0 0
        %1199 = vmatpush1.bf16.msra.mxu0 0
        %1200 = vmatprep.subr.bf16.mxu0 0
        %1201 = vmatpush1.bf16.msra.mxu0 0
        %1202 = vmatprep.subr.bf16.mxu0 0
        %1203 = vmatpush1.bf16.msra.mxu0 0
        %1204 = vmatprep.mubr.bf16.mxu0 0
        %1205 = vmatmul.mubr.bf16.gmra.mrb[0].mxu0 %v1088
        %v1206 = vpop.f32.mrb[0].mxu0
        %v1207 = vadd.f32 0.0, %v1206
        %v1208 = vpop.f32.mrb[0].mxu0
        %v1209 = vadd.f32 0.0, %v1208
        %v1210 = vpop.f32.mrb[0].mxu0
        %v1211 = vpop.f32.mrb[0].mxu0
        %1212 = vdwg.mxu0
        %1213 = vmatprep.subr.bf16.mxu0 %v1077
        %1214 = vmatpush1.bf16.msra.mxu0 %v1076
        %1215 = vmatprep.subr.bf16.mxu0 0
        %1216 = vmatpush1.bf16.msra.mxu0 0
        %1217 = vmatprep.subr.bf16.mxu0 0
        %1218 = vmatpush1.bf16.msra.mxu0 0
        %1219 = vmatprep.subr.bf16.mxu0 0
        %1220 = vmatpush1.bf16.msra.mxu0 0
        %1221 = vmatprep.subr.bf16.mxu0 0
        %1222 = vmatpush1.bf16.msra.mxu0 0
        %1223 = vmatprep.subr.bf16.mxu0 0
        %1224 = vmatpush1.bf16.msra.mxu0 0
        %1225 = vmatprep.subr.bf16.mxu0 0
        %1226 = vmatpush1.bf16.msra.mxu0 0
        %1227 = vmatprep.subr.bf16.mxu0 0
        %1228 = vmatpush1.bf16.msra.mxu0 0
        %1229 = vmatprep.subr.bf16.mxu0 0
        %1230 = vmatpush1.bf16.msra.mxu0 0
        %1231 = vmatprep.subr.bf16.mxu0 0
        %1232 = vmatpush1.bf16.msra.mxu0 0
        %1233 = vmatprep.subr.bf16.mxu0 0
        %1234 = vmatpush1.bf16.msra.mxu0 0
        %1235 = vmatprep.subr.bf16.mxu0 0
        %1236 = vmatpush1.bf16.msra.mxu0 0
        %1237 = vmatprep.subr.bf16.mxu0 0
        %1238 = vmatpush1.bf16.msra.mxu0 0
        %1239 = vmatprep.subr.bf16.mxu0 0
        %1240 = vmatpush1.bf16.msra.mxu0 0
        %1241 = vmatprep.subr.bf16.mxu0 0
        %1242 = vmatpush1.bf16.msra.mxu0 0
        %1243 = vmatprep.subr.bf16.mxu0 0
        %1244 = vmatpush1.bf16.msra.mxu0 0
        %1245 = vmatprep.mubr.bf16.mxu0 0
        %1246 = vmatmul.mubr.bf16.gmra.mrb[0].mxu0 %v1088
        %v1247 = vpop.f32.mrb[0].mxu0
        %v1248 = vadd.f32 0.0, %v1247
        %v1249 = vpop.f32.mrb[0].mxu0
        %v1250 = vadd.f32 0.0, %v1249
        %v1251 = vpop.f32.mrb[0].mxu0
        %v1252 = vpop.f32.mrb[0].mxu0
        %1253 = vdwg.mxu0
        %v1254 = vld [vmem:[%s800] sm:$0xff]
        %v1256 = vlaneseq
        %v1257 = vshrl.u32 %v1256, 7
        %v1258 = vsub.s32 0, %v1257
        %v1259 = vrot.slane %v1254, %v1258
        %v1260 = vlaneseq
        %v1261 = vshrl.u32 %v1260, 7
        %v1262 = vsub.s32 1, %v1261
        %v1263 = vrot.slane %v1254, %v1262
        %v1264 = vlaneseq
        %v1265 = vshrl.u32 %v1264, 7
        %v1266 = vsub.s32 2, %v1265
        %v1267 = vrot.slane %v1254, %v1266
        %v1268 = vlaneseq
        %v1269 = vshrl.u32 %v1268, 7
        %v1270 = vsub.s32 3, %v1269
        %v1271 = vrot.slane %v1254, %v1270
        %v1272 = vlaneseq
        %v1273 = vshrl.u32 %v1272, 7
        %v1274 = vsub.s32 4, %v1273
        %v1275 = vrot.slane %v1254, %v1274
        %v1276 = vlaneseq
        %v1277 = vshrl.u32 %v1276, 7
        %v1278 = vsub.s32 5, %v1277
        %v1279 = vrot.slane %v1254, %v1278
        %v1280 = vlaneseq
        %v1281 = vshrl.u32 %v1280, 7
        %v1282 = vsub.s32 6, %v1281
        %v1283 = vrot.slane %v1254, %v1282
        %v1284 = vlaneseq
        %v1285 = vshrl.u32 %v1284, 7
        %v1286 = vsub.s32 7, %v1285
        %v1287 = vrot.slane %v1254, %v1286
        %v1296 = vmul.f32 %v1125, %v1259
        %v1297 = vmul.f32 %v1127, %v1263
        %v1298 = vmul.f32 %v1166, %v1267
        %v1299 = vmul.f32 %v1168, %v1271
        %v1300 = vmul.f32 %v1207, %v1275
        %v1301 = vmul.f32 %v1209, %v1279
        %v1302 = vmul.f32 %v1248, %v1283
        %v1303 = vmul.f32 %v1250, %v1287
        %v1304 = vld [vmem:[%s809] sm:$0xff]
        %v1306 = vlaneseq
        %v1307 = vshrl.u32 %v1306, 7
        %v1308 = vsub.s32 0, %v1307
        %v1309 = vrot.slane %v1304, %v1308
        %v1310 = vlaneseq
        %v1311 = vshrl.u32 %v1310, 7
        %v1312 = vsub.s32 1, %v1311
        %v1313 = vrot.slane %v1304, %v1312
        %v1314 = vlaneseq
        %v1315 = vshrl.u32 %v1314, 7
        %v1316 = vsub.s32 2, %v1315
        %v1317 = vrot.slane %v1304, %v1316
        %v1318 = vlaneseq
        %v1319 = vshrl.u32 %v1318, 7
        %v1320 = vsub.s32 3, %v1319
        %v1321 = vrot.slane %v1304, %v1320
        %v1322 = vlaneseq
        %v1323 = vshrl.u32 %v1322, 7
        %v1324 = vsub.s32 4, %v1323
        %v1325 = vrot.slane %v1304, %v1324
        %v1326 = vlaneseq
        %v1327 = vshrl.u32 %v1326, 7
        %v1328 = vsub.s32 5, %v1327
        %v1329 = vrot.slane %v1304, %v1328
        %v1330 = vlaneseq
        %v1331 = vshrl.u32 %v1330, 7
        %v1332 = vsub.s32 6, %v1331
        %v1333 = vrot.slane %v1304, %v1332
        %v1334 = vlaneseq
        %v1335 = vshrl.u32 %v1334, 7
        %v1336 = vsub.s32 7, %v1335
        %v1337 = vrot.slane %v1304, %v1336
        %v1346 = vadd.f32 %v1296, %v1309
        %v1347 = vadd.f32 %v1297, %v1313
        %v1348 = vadd.f32 %v1298, %v1317
        %v1349 = vadd.f32 %v1299, %v1321
        %v1350 = vadd.f32 %v1300, %v1325
        %v1351 = vadd.f32 %v1301, %v1329
        %v1352 = vadd.f32 %v1302, %v1333
        %v1353 = vadd.f32 %v1303, %v1337
        %v1354 = vmax.f32 %v1346, 0.0
        %v1355 = vmax.f32 %v1347, 0.0
        %v1356 = vmax.f32 %v1348, 0.0
        %v1357 = vmax.f32 %v1349, 0.0
        %v1358 = vmax.f32 %v1350, 0.0
        %v1359 = vmax.f32 %v1351, 0.0
        %v1360 = vmax.f32 %v1352, 0.0
        %v1361 = vmax.f32 %v1353, 0.0
        %v1362 = vpack.c.bf16 %v1354, %v1354
        %v1363 = vpack.c.bf16 %v1355, %v1355
        %v1364 = vpack.c.bf16 %v1356, %v1356
        %v1365 = vpack.c.bf16 %v1357, %v1357
        %v1366 = vpack.c.bf16 %v1358, %v1358
        %v1367 = vpack.c.bf16 %v1359, %v1359
        %v1368 = vpack.c.bf16 %v1360, %v1360
        %v1369 = vpack.c.bf16 %v1361, %v1361
        %v1370 = vld [vmem:[%s818] sm:$0xff]
        %v1371 = vld [vmem:[%s818 + $0x8] sm:$0xff]
        %v1372 = vld [vmem:[%s818 + $0x10] sm:$0xff]
        %v1373 = vld [vmem:[%s818 + $0x18] sm:$0xff]
        %v1374 = vld [vmem:[%s818 + $0x20] sm:$0xff]
        %v1375 = vld [vmem:[%s818 + $0x28] sm:$0xff]
        %v1376 = vld [vmem:[%s818 + $0x30] sm:$0xff]
        %v1377 = vld [vmem:[%s818 + $0x38] sm:$0xff]
        %v1378 = vld [vmem:[%s818 + $0x40] sm:$0xff]
        %v1379 = vld [vmem:[%s818 + $0x48] sm:$0xff]
        %v1380 = vld [vmem:[%s818 + $0x50] sm:$0xff]
        %v1381 = vld [vmem:[%s818 + $0x58] sm:$0xff]
        %v1382 = vld [vmem:[%s818 + $0x60] sm:$0xff]
        %v1383 = vld [vmem:[%s818 + $0x68] sm:$0xff]
        %v1384 = vld [vmem:[%s818 + $0x70] sm:$0xff]
        %v1385 = vld [vmem:[%s818 + $0x78] sm:$0xff]
        %v1386 = vld [vmem:[%s818 + $0x80] sm:$0xff]
        %v1387 = vld [vmem:[%s818 + $0x88] sm:$0xff]
        %v1388 = vld [vmem:[%s818 + $0x90] sm:$0xff]
        %v1389 = vld [vmem:[%s818 + $0x98] sm:$0xff]
        %v1390 = vld [vmem:[%s818 + $0xa0] sm:$0xff]
        %v1391 = vld [vmem:[%s818 + $0xa8] sm:$0xff]
        %v1392 = vld [vmem:[%s818 + $0xb0] sm:$0xff]
        %v1393 = vld [vmem:[%s818 + $0xb8] sm:$0xff]
        %v1394 = vld [vmem:[%s818 + $0xc0] sm:$0xff]
        %v1395 = vld [vmem:[%s818 + $0xc8] sm:$0xff]
        %v1396 = vld [vmem:[%s818 + $0xd0] sm:$0xff]
        %v1397 = vld [vmem:[%s818 + $0xd8] sm:$0xff]
        %v1398 = vld [vmem:[%s818 + $0xe0] sm:$0xff]
        %v1399 = vld [vmem:[%s818 + $0xe8] sm:$0xff]
        %v1400 = vld [vmem:[%s818 + $0xf0] sm:$0xff]
        %v1401 = vld [vmem:[%s818 + $0xf8] sm:$0xff]
        %v1402 = vld [vmem:[%s818 + $0x100] sm:$0xff]
        %v1403 = vld [vmem:[%s818 + $0x108] sm:$0xff]
        %v1404 = vld [vmem:[%s818 + $0x110] sm:$0xff]
        %v1405 = vld [vmem:[%s818 + $0x118] sm:$0xff]
        %v1406 = vld [vmem:[%s818 + $0x120] sm:$0xff]
        %v1407 = vld [vmem:[%s818 + $0x128] sm:$0xff]
        %v1408 = vld [vmem:[%s818 + $0x130] sm:$0xff]
        %v1409 = vld [vmem:[%s818 + $0x138] sm:$0xff]
        %v1410 = vld [vmem:[%s818 + $0x140] sm:$0xff]
        %v1411 = vld [vmem:[%s818 + $0x148] sm:$0xff]
        %v1412 = vld [vmem:[%s818 + $0x150] sm:$0xff]
        %v1413 = vld [vmem:[%s818 + $0x158] sm:$0xff]
        %v1414 = vld [vmem:[%s818 + $0x160] sm:$0xff]
        %v1415 = vld [vmem:[%s818 + $0x168] sm:$0xff]
        %v1416 = vld [vmem:[%s818 + $0x170] sm:$0xff]
        %v1417 = vld [vmem:[%s818 + $0x178] sm:$0xff]
        %v1418 = vld [vmem:[%s818 + $0x180] sm:$0xff]
        %v1419 = vld [vmem:[%s818 + $0x188] sm:$0xff]
        %v1420 = vld [vmem:[%s818 + $0x190] sm:$0xff]
        %v1421 = vld [vmem:[%s818 + $0x198] sm:$0xff]
        %v1422 = vld [vmem:[%s818 + $0x1a0] sm:$0xff]
        %v1423 = vld [vmem:[%s818 + $0x1a8] sm:$0xff]
        %v1424 = vld [vmem:[%s818 + $0x1b0] sm:$0xff]
        %v1425 = vld [vmem:[%s818 + $0x1b8] sm:$0xff]
        %v1426 = vld [vmem:[%s818 + $0x1c0] sm:$0xff]
        %v1427 = vld [vmem:[%s818 + $0x1c8] sm:$0xff]
        %v1428 = vld [vmem:[%s818 + $0x1d0] sm:$0xff]
        %v1429 = vld [vmem:[%s818 + $0x1d8] sm:$0xff]
        %v1430 = vld [vmem:[%s818 + $0x1e0] sm:$0xff]
        %v1431 = vld [vmem:[%s818 + $0x1e8] sm:$0xff]
        %v1432 = vld [vmem:[%s818 + $0x1f0] sm:$0xff]
        %v1433 = vld [vmem:[%s818 + $0x1f8] sm:$0xff]
        %v1434 = vld [vmem:[%s818 + $0x200] sm:$0xff]
        %v1435 = vld [vmem:[%s818 + $0x208] sm:$0xff]
        %v1436 = vld [vmem:[%s818 + $0x210] sm:$0xff]
        %v1437 = vld [vmem:[%s818 + $0x218] sm:$0xff]
        %v1438 = vld [vmem:[%s818 + $0x220] sm:$0xff]
        %v1439 = vld [vmem:[%s818 + $0x228] sm:$0xff]
        %v1440 = vld [vmem:[%s818 + $0x230] sm:$0xff]
        %v1441 = vld [vmem:[%s818 + $0x238] sm:$0xff]
        %v1442 = vld [vmem:[%s818 + $0x240] sm:$0xff]
        %v1443 = vld [vmem:[%s818 + $0x248] sm:$0xff]
        %v1444 = vld [vmem:[%s818 + $0x250] sm:$0xff]
        %v1445 = vld [vmem:[%s818 + $0x258] sm:$0xff]
        %v1446 = vld [vmem:[%s818 + $0x260] sm:$0xff]
        %v1447 = vld [vmem:[%s818 + $0x268] sm:$0xff]
        %v1448 = vld [vmem:[%s818 + $0x270] sm:$0xff]
        %v1449 = vld [vmem:[%s818 + $0x278] sm:$0xff]
        %v1450 = vld [vmem:[%s818 + $0x280] sm:$0xff]
        %v1451 = vld [vmem:[%s818 + $0x288] sm:$0xff]
        %v1452 = vld [vmem:[%s818 + $0x290] sm:$0xff]
        %v1453 = vld [vmem:[%s818 + $0x298] sm:$0xff]
        %v1454 = vld [vmem:[%s818 + $0x2a0] sm:$0xff]
        %v1455 = vld [vmem:[%s818 + $0x2a8] sm:$0xff]
        %v1456 = vld [vmem:[%s818 + $0x2b0] sm:$0xff]
        %v1457 = vld [vmem:[%s818 + $0x2b8] sm:$0xff]
        %v1458 = vld [vmem:[%s818 + $0x2c0] sm:$0xff]
        %v1459 = vld [vmem:[%s818 + $0x2c8] sm:$0xff]
        %v1460 = vld [vmem:[%s818 + $0x2d0] sm:$0xff]
        %v1461 = vld [vmem:[%s818 + $0x2d8] sm:$0xff]
        %v1462 = vld [vmem:[%s818 + $0x2e0] sm:$0xff]
        %v1463 = vld [vmem:[%s818 + $0x2e8] sm:$0xff]
        %v1464 = vld [vmem:[%s818 + $0x2f0] sm:$0xff]
        %v1465 = vld [vmem:[%s818 + $0x2f8] sm:$0xff]
        %v1466 = vld [vmem:[%s818 + $0x300] sm:$0xff]
        %v1467 = vld [vmem:[%s818 + $0x308] sm:$0xff]
        %v1468 = vld [vmem:[%s818 + $0x310] sm:$0xff]
        %v1469 = vld [vmem:[%s818 + $0x318] sm:$0xff]
        %v1470 = vld [vmem:[%s818 + $0x320] sm:$0xff]
        %v1471 = vld [vmem:[%s818 + $0x328] sm:$0xff]
        %v1472 = vld [vmem:[%s818 + $0x330] sm:$0xff]
        %v1473 = vld [vmem:[%s818 + $0x338] sm:$0xff]
        %v1474 = vld [vmem:[%s818 + $0x340] sm:$0xff]
        %v1475 = vld [vmem:[%s818 + $0x348] sm:$0xff]
        %v1476 = vld [vmem:[%s818 + $0x350] sm:$0xff]
        %v1477 = vld [vmem:[%s818 + $0x358] sm:$0xff]
        %v1478 = vld [vmem:[%s818 + $0x360] sm:$0xff]
        %v1479 = vld [vmem:[%s818 + $0x368] sm:$0xff]
        %v1480 = vld [vmem:[%s818 + $0x370] sm:$0xff]
        %v1481 = vld [vmem:[%s818 + $0x378] sm:$0xff]
        %v1482 = vld [vmem:[%s818 + $0x380] sm:$0xff]
        %v1483 = vld [vmem:[%s818 + $0x388] sm:$0xff]
        %v1484 = vld [vmem:[%s818 + $0x390] sm:$0xff]
        %v1485 = vld [vmem:[%s818 + $0x398] sm:$0xff]
        %v1486 = vld [vmem:[%s818 + $0x3a0] sm:$0xff]
        %v1487 = vld [vmem:[%s818 + $0x3a8] sm:$0xff]
        %v1488 = vld [vmem:[%s818 + $0x3b0] sm:$0xff]
        %v1489 = vld [vmem:[%s818 + $0x3b8] sm:$0xff]
        %v1490 = vld [vmem:[%s818 + $0x3c0] sm:$0xff]
        %v1491 = vld [vmem:[%s818 + $0x3c8] sm:$0xff]
        %v1492 = vld [vmem:[%s818 + $0x3d0] sm:$0xff]
        %v1493 = vld [vmem:[%s818 + $0x3d8] sm:$0xff]
        %v1494 = vld [vmem:[%s818 + $0x3e0] sm:$0xff]
        %v1495 = vld [vmem:[%s818 + $0x3e8] sm:$0xff]
        %v1496 = vld [vmem:[%s818 + $0x3f0] sm:$0xff]
        %v1497 = vld [vmem:[%s818 + $0x3f8] sm:$0xff]
        %v1498 = vld [vmem:[%s818 + $0x400] sm:$0xff]
        %v1499 = vld [vmem:[%s818 + $0x408] sm:$0xff]
        %v1500 = vld [vmem:[%s818 + $0x410] sm:$0xff]
        %v1501 = vld [vmem:[%s818 + $0x418] sm:$0xff]
        %v1502 = vld [vmem:[%s818 + $0x420] sm:$0xff]
        %v1503 = vld [vmem:[%s818 + $0x428] sm:$0xff]
        %v1504 = vld [vmem:[%s818 + $0x430] sm:$0xff]
        %v1505 = vld [vmem:[%s818 + $0x438] sm:$0xff]
        %v1506 = vld [vmem:[%s818 + $0x440] sm:$0xff]
        %v1507 = vld [vmem:[%s818 + $0x448] sm:$0xff]
        %v1508 = vld [vmem:[%s818 + $0x450] sm:$0xff]
        %v1509 = vld [vmem:[%s818 + $0x458] sm:$0xff]
        %v1510 = vld [vmem:[%s818 + $0x460] sm:$0xff]
        %v1511 = vld [vmem:[%s818 + $0x468] sm:$0xff]
        %v1512 = vld [vmem:[%s818 + $0x470] sm:$0xff]
        %v1513 = vld [vmem:[%s818 + $0x478] sm:$0xff]
        %v1514 = vld [vmem:[%s818 + $0x480] sm:$0xff]
        %v1515 = vld [vmem:[%s818 + $0x488] sm:$0xff]
        %v1516 = vld [vmem:[%s818 + $0x490] sm:$0xff]
        %v1517 = vld [vmem:[%s818 + $0x498] sm:$0xff]
        %v1518 = vld [vmem:[%s818 + $0x4a0] sm:$0xff]
        %v1519 = vld [vmem:[%s818 + $0x4a8] sm:$0xff]
        %v1520 = vld [vmem:[%s818 + $0x4b0] sm:$0xff]
        %v1521 = vld [vmem:[%s818 + $0x4b8] sm:$0xff]
        %v1522 = vld [vmem:[%s818 + $0x4c0] sm:$0xff]
        %v1523 = vld [vmem:[%s818 + $0x4c8] sm:$0xff]
        %v1524 = vld [vmem:[%s818 + $0x4d0] sm:$0xff]
        %v1525 = vld [vmem:[%s818 + $0x4d8] sm:$0xff]
        %v1526 = vld [vmem:[%s818 + $0x4e0] sm:$0xff]
        %v1527 = vld [vmem:[%s818 + $0x4e8] sm:$0xff]
        %v1528 = vld [vmem:[%s818 + $0x4f0] sm:$0xff]
        %v1529 = vld [vmem:[%s818 + $0x4f8] sm:$0xff]
        %v1530 = vld [vmem:[%s818 + $0x500] sm:$0xff]
        %v1531 = vld [vmem:[%s818 + $0x508] sm:$0xff]
        %v1532 = vld [vmem:[%s818 + $0x510] sm:$0xff]
        %v1533 = vld [vmem:[%s818 + $0x518] sm:$0xff]
        %v1534 = vld [vmem:[%s818 + $0x520] sm:$0xff]
        %v1535 = vld [vmem:[%s818 + $0x528] sm:$0xff]
        %v1536 = vld [vmem:[%s818 + $0x530] sm:$0xff]
        %v1537 = vld [vmem:[%s818 + $0x538] sm:$0xff]
        %v1538 = vld [vmem:[%s818 + $0x540] sm:$0xff]
        %v1539 = vld [vmem:[%s818 + $0x548] sm:$0xff]
        %v1540 = vld [vmem:[%s818 + $0x550] sm:$0xff]
        %v1541 = vld [vmem:[%s818 + $0x558] sm:$0xff]
        %v1542 = vld [vmem:[%s818 + $0x560] sm:$0xff]
        %v1543 = vld [vmem:[%s818 + $0x568] sm:$0xff]
        %v1544 = vld [vmem:[%s818 + $0x570] sm:$0xff]
        %v1545 = vld [vmem:[%s818 + $0x578] sm:$0xff]
        %v1546 = vld [vmem:[%s818 + $0x580] sm:$0xff]
        %v1547 = vld [vmem:[%s818 + $0x588] sm:$0xff]
        %v1548 = vld [vmem:[%s818 + $0x590] sm:$0xff]
        %v1549 = vld [vmem:[%s818 + $0x598] sm:$0xff]
        %v1550 = vld [vmem:[%s818 + $0x5a0] sm:$0xff]
        %v1551 = vld [vmem:[%s818 + $0x5a8] sm:$0xff]
        %v1552 = vld [vmem:[%s818 + $0x5b0] sm:$0xff]
        %v1553 = vld [vmem:[%s818 + $0x5b8] sm:$0xff]
        %v1554 = vld [vmem:[%s818 + $0x5c0] sm:$0xff]
        %v1555 = vld [vmem:[%s818 + $0x5c8] sm:$0xff]
        %v1556 = vld [vmem:[%s818 + $0x5d0] sm:$0xff]
        %v1557 = vld [vmem:[%s818 + $0x5d8] sm:$0xff]
        %v1558 = vld [vmem:[%s818 + $0x5e0] sm:$0xff]
        %v1559 = vld [vmem:[%s818 + $0x5e8] sm:$0xff]
        %v1560 = vld [vmem:[%s818 + $0x5f0] sm:$0xff]
        %v1561 = vld [vmem:[%s818 + $0x5f8] sm:$0xff]
        %v1562 = vld [vmem:[%s818 + $0x600] sm:$0xff]
        %v1563 = vld [vmem:[%s818 + $0x608] sm:$0xff]
        %v1564 = vld [vmem:[%s818 + $0x610] sm:$0xff]
        %v1565 = vld [vmem:[%s818 + $0x618] sm:$0xff]
        %v1566 = vld [vmem:[%s818 + $0x620] sm:$0xff]
        %v1567 = vld [vmem:[%s818 + $0x628] sm:$0xff]
        %v1568 = vld [vmem:[%s818 + $0x630] sm:$0xff]
        %v1569 = vld [vmem:[%s818 + $0x638] sm:$0xff]
        %v1570 = vld [vmem:[%s818 + $0x640] sm:$0xff]
        %v1571 = vld [vmem:[%s818 + $0x648] sm:$0xff]
        %v1572 = vld [vmem:[%s818 + $0x650] sm:$0xff]
        %v1573 = vld [vmem:[%s818 + $0x658] sm:$0xff]
        %v1574 = vld [vmem:[%s818 + $0x660] sm:$0xff]
        %v1575 = vld [vmem:[%s818 + $0x668] sm:$0xff]
        %v1576 = vld [vmem:[%s818 + $0x670] sm:$0xff]
        %v1577 = vld [vmem:[%s818 + $0x678] sm:$0xff]
        %v1578 = vld [vmem:[%s818 + $0x680] sm:$0xff]
        %v1579 = vld [vmem:[%s818 + $0x688] sm:$0xff]
        %v1580 = vld [vmem:[%s818 + $0x690] sm:$0xff]
        %v1581 = vld [vmem:[%s818 + $0x698] sm:$0xff]
        %v1582 = vld [vmem:[%s818 + $0x6a0] sm:$0xff]
        %v1583 = vld [vmem:[%s818 + $0x6a8] sm:$0xff]
        %v1584 = vld [vmem:[%s818 + $0x6b0] sm:$0xff]
        %v1585 = vld [vmem:[%s818 + $0x6b8] sm:$0xff]
        %v1586 = vld [vmem:[%s818 + $0x6c0] sm:$0xff]
        %v1587 = vld [vmem:[%s818 + $0x6c8] sm:$0xff]
        %v1588 = vld [vmem:[%s818 + $0x6d0] sm:$0xff]
        %v1589 = vld [vmem:[%s818 + $0x6d8] sm:$0xff]
        %v1590 = vld [vmem:[%s818 + $0x6e0] sm:$0xff]
        %v1591 = vld [vmem:[%s818 + $0x6e8] sm:$0xff]
        %v1592 = vld [vmem:[%s818 + $0x6f0] sm:$0xff]
        %v1593 = vld [vmem:[%s818 + $0x6f8] sm:$0xff]
        %v1594 = vld [vmem:[%s818 + $0x700] sm:$0xff]
        %v1595 = vld [vmem:[%s818 + $0x708] sm:$0xff]
        %v1596 = vld [vmem:[%s818 + $0x710] sm:$0xff]
        %v1597 = vld [vmem:[%s818 + $0x718] sm:$0xff]
        %v1598 = vld [vmem:[%s818 + $0x720] sm:$0xff]
        %v1599 = vld [vmem:[%s818 + $0x728] sm:$0xff]
        %v1600 = vld [vmem:[%s818 + $0x730] sm:$0xff]
        %v1601 = vld [vmem:[%s818 + $0x738] sm:$0xff]
        %v1602 = vld [vmem:[%s818 + $0x740] sm:$0xff]
        %v1603 = vld [vmem:[%s818 + $0x748] sm:$0xff]
        %v1604 = vld [vmem:[%s818 + $0x750] sm:$0xff]
        %v1605 = vld [vmem:[%s818 + $0x758] sm:$0xff]
        %v1606 = vld [vmem:[%s818 + $0x760] sm:$0xff]
        %v1607 = vld [vmem:[%s818 + $0x768] sm:$0xff]
        %v1608 = vld [vmem:[%s818 + $0x770] sm:$0xff]
        %v1609 = vld [vmem:[%s818 + $0x778] sm:$0xff]
        %v1610 = vld [vmem:[%s818 + $0x780] sm:$0xff]
        %v1611 = vld [vmem:[%s818 + $0x788] sm:$0xff]
        %v1612 = vld [vmem:[%s818 + $0x790] sm:$0xff]
        %v1613 = vld [vmem:[%s818 + $0x798] sm:$0xff]
        %v1614 = vld [vmem:[%s818 + $0x7a0] sm:$0xff]
        %v1615 = vld [vmem:[%s818 + $0x7a8] sm:$0xff]
        %v1616 = vld [vmem:[%s818 + $0x7b0] sm:$0xff]
        %v1617 = vld [vmem:[%s818 + $0x7b8] sm:$0xff]
        %v1618 = vld [vmem:[%s818 + $0x7c0] sm:$0xff]
        %v1619 = vld [vmem:[%s818 + $0x7c8] sm:$0xff]
        %v1620 = vld [vmem:[%s818 + $0x7d0] sm:$0xff]
        %v1621 = vld [vmem:[%s818 + $0x7d8] sm:$0xff]
        %v1622 = vld [vmem:[%s818 + $0x7e0] sm:$0xff]
        %v1623 = vld [vmem:[%s818 + $0x7e8] sm:$0xff]
        %v1624 = vld [vmem:[%s818 + $0x7f0] sm:$0xff]
        %v1625 = vld [vmem:[%s818 + $0x7f8] sm:$0xff]
        %v1626 = vld [vmem:[%s818 + $0x800] sm:$0xff]
        %v1627 = vld [vmem:[%s818 + $0x808] sm:$0xff]
        %v1628 = vld [vmem:[%s818 + $0x810] sm:$0xff]
        %v1629 = vld [vmem:[%s818 + $0x818] sm:$0xff]
        %v1630 = vld [vmem:[%s818 + $0x820] sm:$0xff]
        %v1631 = vld [vmem:[%s818 + $0x828] sm:$0xff]
        %v1632 = vld [vmem:[%s818 + $0x830] sm:$0xff]
        %v1633 = vld [vmem:[%s818 + $0x838] sm:$0xff]
        %v1634 = vld [vmem:[%s818 + $0x840] sm:$0xff]
        %v1635 = vld [vmem:[%s818 + $0x848] sm:$0xff]
        %v1636 = vld [vmem:[%s818 + $0x850] sm:$0xff]
        %v1637 = vld [vmem:[%s818 + $0x858] sm:$0xff]
        %v1638 = vld [vmem:[%s818 + $0x860] sm:$0xff]
        %v1639 = vld [vmem:[%s818 + $0x868] sm:$0xff]
        %v1640 = vld [vmem:[%s818 + $0x870] sm:$0xff]
        %v1641 = vld [vmem:[%s818 + $0x878] sm:$0xff]
        %v1642 = vld [vmem:[%s818 + $0x880] sm:$0xff]
        %v1643 = vld [vmem:[%s818 + $0x888] sm:$0xff]
        %v1644 = vld [vmem:[%s818 + $0x890] sm:$0xff]
        %v1645 = vld [vmem:[%s818 + $0x898] sm:$0xff]
        %v1646 = vld [vmem:[%s818 + $0x8a0] sm:$0xff]
        %v1647 = vld [vmem:[%s818 + $0x8a8] sm:$0xff]
        %v1648 = vld [vmem:[%s818 + $0x8b0] sm:$0xff]
        %v1649 = vld [vmem:[%s818 + $0x8b8] sm:$0xff]
        %v1650 = vld [vmem:[%s818 + $0x8c0] sm:$0xff]
        %v1651 = vld [vmem:[%s818 + $0x8c8] sm:$0xff]
        %v1652 = vld [vmem:[%s818 + $0x8d0] sm:$0xff]
        %v1653 = vld [vmem:[%s818 + $0x8d8] sm:$0xff]
        %v1654 = vld [vmem:[%s818 + $0x8e0] sm:$0xff]
        %v1655 = vld [vmem:[%s818 + $0x8e8] sm:$0xff]
        %v1656 = vld [vmem:[%s818 + $0x8f0] sm:$0xff]
        %v1657 = vld [vmem:[%s818 + $0x8f8] sm:$0xff]
        %v1658 = vld [vmem:[%s818 + $0x900] sm:$0xff]
        %v1659 = vld [vmem:[%s818 + $0x908] sm:$0xff]
        %v1660 = vld [vmem:[%s818 + $0x910] sm:$0xff]
        %v1661 = vld [vmem:[%s818 + $0x918] sm:$0xff]
        %v1662 = vld [vmem:[%s818 + $0x920] sm:$0xff]
        %v1663 = vld [vmem:[%s818 + $0x928] sm:$0xff]
        %v1664 = vld [vmem:[%s818 + $0x930] sm:$0xff]
        %v1665 = vld [vmem:[%s818 + $0x938] sm:$0xff]
        %v1666 = vld [vmem:[%s818 + $0x940] sm:$0xff]
        %v1667 = vld [vmem:[%s818 + $0x948] sm:$0xff]
        %v1668 = vld [vmem:[%s818 + $0x950] sm:$0xff]
        %v1669 = vld [vmem:[%s818 + $0x958] sm:$0xff]
        %v1670 = vld [vmem:[%s818 + $0x960] sm:$0xff]
        %v1671 = vld [vmem:[%s818 + $0x968] sm:$0xff]
        %v1672 = vld [vmem:[%s818 + $0x970] sm:$0xff]
        %v1673 = vld [vmem:[%s818 + $0x978] sm:$0xff]
        %v1674 = vld [vmem:[%s818 + $0x980] sm:$0xff]
        %v1675 = vld [vmem:[%s818 + $0x988] sm:$0xff]
        %v1676 = vld [vmem:[%s818 + $0x990] sm:$0xff]
        %v1677 = vld [vmem:[%s818 + $0x998] sm:$0xff]
        %v1678 = vld [vmem:[%s818 + $0x9a0] sm:$0xff]
        %v1679 = vld [vmem:[%s818 + $0x9a8] sm:$0xff]
        %v1680 = vld [vmem:[%s818 + $0x9b0] sm:$0xff]
        %v1681 = vld [vmem:[%s818 + $0x9b8] sm:$0xff]
        %v1682 = vld [vmem:[%s818 + $0x9c0] sm:$0xff]
        %v1683 = vld [vmem:[%s818 + $0x9c8] sm:$0xff]
        %v1684 = vld [vmem:[%s818 + $0x9d0] sm:$0xff]
        %v1685 = vld [vmem:[%s818 + $0x9d8] sm:$0xff]
        %v1686 = vld [vmem:[%s818 + $0x9e0] sm:$0xff]
        %v1687 = vld [vmem:[%s818 + $0x9e8] sm:$0xff]
        %v1688 = vld [vmem:[%s818 + $0x9f0] sm:$0xff]
        %v1689 = vld [vmem:[%s818 + $0x9f8] sm:$0xff]
        %v1690 = vld [vmem:[%s818 + $0xa00] sm:$0xff]
        %v1691 = vld [vmem:[%s818 + $0xa08] sm:$0xff]
        %v1692 = vld [vmem:[%s818 + $0xa10] sm:$0xff]
        %v1693 = vld [vmem:[%s818 + $0xa18] sm:$0xff]
        %v1694 = vld [vmem:[%s818 + $0xa20] sm:$0xff]
        %v1695 = vld [vmem:[%s818 + $0xa28] sm:$0xff]
        %v1696 = vld [vmem:[%s818 + $0xa30] sm:$0xff]
        %v1697 = vld [vmem:[%s818 + $0xa38] sm:$0xff]
        %v1698 = vld [vmem:[%s818 + $0xa40] sm:$0xff]
        %v1699 = vld [vmem:[%s818 + $0xa48] sm:$0xff]
        %v1700 = vld [vmem:[%s818 + $0xa50] sm:$0xff]
        %v1701 = vld [vmem:[%s818 + $0xa58] sm:$0xff]
        %v1702 = vld [vmem:[%s818 + $0xa60] sm:$0xff]
        %v1703 = vld [vmem:[%s818 + $0xa68] sm:$0xff]
        %v1704 = vld [vmem:[%s818 + $0xa70] sm:$0xff]
        %v1705 = vld [vmem:[%s818 + $0xa78] sm:$0xff]
        %v1706 = vld [vmem:[%s818 + $0xa80] sm:$0xff]
        %v1707 = vld [vmem:[%s818 + $0xa88] sm:$0xff]
        %v1708 = vld [vmem:[%s818 + $0xa90] sm:$0xff]
        %v1709 = vld [vmem:[%s818 + $0xa98] sm:$0xff]
        %v1710 = vld [vmem:[%s818 + $0xaa0] sm:$0xff]
        %v1711 = vld [vmem:[%s818 + $0xaa8] sm:$0xff]
        %v1712 = vld [vmem:[%s818 + $0xab0] sm:$0xff]
        %v1713 = vld [vmem:[%s818 + $0xab8] sm:$0xff]
        %v1714 = vld [vmem:[%s818 + $0xac0] sm:$0xff]
        %v1715 = vld [vmem:[%s818 + $0xac8] sm:$0xff]
        %v1716 = vld [vmem:[%s818 + $0xad0] sm:$0xff]
        %v1717 = vld [vmem:[%s818 + $0xad8] sm:$0xff]
        %v1718 = vld [vmem:[%s818 + $0xae0] sm:$0xff]
        %v1719 = vld [vmem:[%s818 + $0xae8] sm:$0xff]
        %v1720 = vld [vmem:[%s818 + $0xaf0] sm:$0xff]
        %v1721 = vld [vmem:[%s818 + $0xaf8] sm:$0xff]
        %v1722 = vld [vmem:[%s818 + $0xb00] sm:$0xff]
        %v1723 = vld [vmem:[%s818 + $0xb08] sm:$0xff]
        %v1724 = vld [vmem:[%s818 + $0xb10] sm:$0xff]
        %v1725 = vld [vmem:[%s818 + $0xb18] sm:$0xff]
        %v1726 = vld [vmem:[%s818 + $0xb20] sm:$0xff]
        %v1727 = vld [vmem:[%s818 + $0xb28] sm:$0xff]
        %v1728 = vld [vmem:[%s818 + $0xb30] sm:$0xff]
        %v1729 = vld [vmem:[%s818 + $0xb38] sm:$0xff]
        %v1730 = vld [vmem:[%s818 + $0xb40] sm:$0xff]
        %v1731 = vld [vmem:[%s818 + $0xb48] sm:$0xff]
        %v1732 = vld [vmem:[%s818 + $0xb50] sm:$0xff]
        %v1733 = vld [vmem:[%s818 + $0xb58] sm:$0xff]
        %v1734 = vld [vmem:[%s818 + $0xb60] sm:$0xff]
        %v1735 = vld [vmem:[%s818 + $0xb68] sm:$0xff]
        %v1736 = vld [vmem:[%s818 + $0xb70] sm:$0xff]
        %v1737 = vld [vmem:[%s818 + $0xb78] sm:$0xff]
        %v1738 = vld [vmem:[%s818 + $0xb80] sm:$0xff]
        %v1739 = vld [vmem:[%s818 + $0xb88] sm:$0xff]
        %v1740 = vld [vmem:[%s818 + $0xb90] sm:$0xff]
        %v1741 = vld [vmem:[%s818 + $0xb98] sm:$0xff]
        %v1742 = vld [vmem:[%s818 + $0xba0] sm:$0xff]
        %v1743 = vld [vmem:[%s818 + $0xba8] sm:$0xff]
        %v1744 = vld [vmem:[%s818 + $0xbb0] sm:$0xff]
        %v1745 = vld [vmem:[%s818 + $0xbb8] sm:$0xff]
        %v1746 = vld [vmem:[%s818 + $0xbc0] sm:$0xff]
        %v1747 = vld [vmem:[%s818 + $0xbc8] sm:$0xff]
        %v1748 = vld [vmem:[%s818 + $0xbd0] sm:$0xff]
        %v1749 = vld [vmem:[%s818 + $0xbd8] sm:$0xff]
        %v1750 = vld [vmem:[%s818 + $0xbe0] sm:$0xff]
        %v1751 = vld [vmem:[%s818 + $0xbe8] sm:$0xff]
        %v1752 = vld [vmem:[%s818 + $0xbf0] sm:$0xff]
        %v1753 = vld [vmem:[%s818 + $0xbf8] sm:$0xff]
        %v1754 = vld [vmem:[%s818 + $0xc00] sm:$0xff]
        %v1755 = vld [vmem:[%s818 + $0xc08] sm:$0xff]
        %v1756 = vld [vmem:[%s818 + $0xc10] sm:$0xff]
        %v1757 = vld [vmem:[%s818 + $0xc18] sm:$0xff]
        %v1758 = vld [vmem:[%s818 + $0xc20] sm:$0xff]
        %v1759 = vld [vmem:[%s818 + $0xc28] sm:$0xff]
        %v1760 = vld [vmem:[%s818 + $0xc30] sm:$0xff]
        %v1761 = vld [vmem:[%s818 + $0xc38] sm:$0xff]
        %v1762 = vld [vmem:[%s818 + $0xc40] sm:$0xff]
        %v1763 = vld [vmem:[%s818 + $0xc48] sm:$0xff]
        %v1764 = vld [vmem:[%s818 + $0xc50] sm:$0xff]
        %v1765 = vld [vmem:[%s818 + $0xc58] sm:$0xff]
        %v1766 = vld [vmem:[%s818 + $0xc60] sm:$0xff]
        %v1767 = vld [vmem:[%s818 + $0xc68] sm:$0xff]
        %v1768 = vld [vmem:[%s818 + $0xc70] sm:$0xff]
        %v1769 = vld [vmem:[%s818 + $0xc78] sm:$0xff]
        %v1770 = vld [vmem:[%s818 + $0xc80] sm:$0xff]
        %v1771 = vld [vmem:[%s818 + $0xc88] sm:$0xff]
        %v1772 = vld [vmem:[%s818 + $0xc90] sm:$0xff]
        %v1773 = vld [vmem:[%s818 + $0xc98] sm:$0xff]
        %v1774 = vld [vmem:[%s818 + $0xca0] sm:$0xff]
        %v1775 = vld [vmem:[%s818 + $0xca8] sm:$0xff]
        %v1776 = vld [vmem:[%s818 + $0xcb0] sm:$0xff]
        %v1777 = vld [vmem:[%s818 + $0xcb8] sm:$0xff]
        %v1778 = vld [vmem:[%s818 + $0xcc0] sm:$0xff]
        %v1779 = vld [vmem:[%s818 + $0xcc8] sm:$0xff]
        %v1780 = vld [vmem:[%s818 + $0xcd0] sm:$0xff]
        %v1781 = vld [vmem:[%s818 + $0xcd8] sm:$0xff]
        %v1782 = vld [vmem:[%s818 + $0xce0] sm:$0xff]
        %v1783 = vld [vmem:[%s818 + $0xce8] sm:$0xff]
        %v1784 = vld [vmem:[%s818 + $0xcf0] sm:$0xff]
        %v1785 = vld [vmem:[%s818 + $0xcf8] sm:$0xff]
        %v1786 = vld [vmem:[%s818 + $0xd00] sm:$0xff]
        %v1787 = vld [vmem:[%s818 + $0xd08] sm:$0xff]
        %v1788 = vld [vmem:[%s818 + $0xd10] sm:$0xff]
        %v1789 = vld [vmem:[%s818 + $0xd18] sm:$0xff]
        %v1790 = vld [vmem:[%s818 + $0xd20] sm:$0xff]
        %v1791 = vld [vmem:[%s818 + $0xd28] sm:$0xff]
        %v1792 = vld [vmem:[%s818 + $0xd30] sm:$0xff]
        %v1793 = vld [vmem:[%s818 + $0xd38] sm:$0xff]
        %v1794 = vld [vmem:[%s818 + $0xd40] sm:$0xff]
        %v1795 = vld [vmem:[%s818 + $0xd48] sm:$0xff]
        %v1796 = vld [vmem:[%s818 + $0xd50] sm:$0xff]
        %v1797 = vld [vmem:[%s818 + $0xd58] sm:$0xff]
        %v1798 = vld [vmem:[%s818 + $0xd60] sm:$0xff]
        %v1799 = vld [vmem:[%s818 + $0xd68] sm:$0xff]
        %v1800 = vld [vmem:[%s818 + $0xd70] sm:$0xff]
        %v1801 = vld [vmem:[%s818 + $0xd78] sm:$0xff]
        %v1802 = vld [vmem:[%s818 + $0xd80] sm:$0xff]
        %v1803 = vld [vmem:[%s818 + $0xd88] sm:$0xff]
        %v1804 = vld [vmem:[%s818 + $0xd90] sm:$0xff]
        %v1805 = vld [vmem:[%s818 + $0xd98] sm:$0xff]
        %v1806 = vld [vmem:[%s818 + $0xda0] sm:$0xff]
        %v1807 = vld [vmem:[%s818 + $0xda8] sm:$0xff]
        %v1808 = vld [vmem:[%s818 + $0xdb0] sm:$0xff]
        %v1809 = vld [vmem:[%s818 + $0xdb8] sm:$0xff]
        %v1810 = vld [vmem:[%s818 + $0xdc0] sm:$0xff]
        %v1811 = vld [vmem:[%s818 + $0xdc8] sm:$0xff]
        %v1812 = vld [vmem:[%s818 + $0xdd0] sm:$0xff]
        %v1813 = vld [vmem:[%s818 + $0xdd8] sm:$0xff]
        %v1814 = vld [vmem:[%s818 + $0xde0] sm:$0xff]
        %v1815 = vld [vmem:[%s818 + $0xde8] sm:$0xff]
        %v1816 = vld [vmem:[%s818 + $0xdf0] sm:$0xff]
        %v1817 = vld [vmem:[%s818 + $0xdf8] sm:$0xff]
        %v1818 = vld [vmem:[%s818 + $0xe00] sm:$0xff]
        %v1819 = vld [vmem:[%s818 + $0xe08] sm:$0xff]
        %v1820 = vld [vmem:[%s818 + $0xe10] sm:$0xff]
        %v1821 = vld [vmem:[%s818 + $0xe18] sm:$0xff]
        %v1822 = vld [vmem:[%s818 + $0xe20] sm:$0xff]
        %v1823 = vld [vmem:[%s818 + $0xe28] sm:$0xff]
        %v1824 = vld [vmem:[%s818 + $0xe30] sm:$0xff]
        %v1825 = vld [vmem:[%s818 + $0xe38] sm:$0xff]
        %v1826 = vld [vmem:[%s818 + $0xe40] sm:$0xff]
        %v1827 = vld [vmem:[%s818 + $0xe48] sm:$0xff]
        %v1828 = vld [vmem:[%s818 + $0xe50] sm:$0xff]
        %v1829 = vld [vmem:[%s818 + $0xe58] sm:$0xff]
        %v1830 = vld [vmem:[%s818 + $0xe60] sm:$0xff]
        %v1831 = vld [vmem:[%s818 + $0xe68] sm:$0xff]
        %v1832 = vld [vmem:[%s818 + $0xe70] sm:$0xff]
        %v1833 = vld [vmem:[%s818 + $0xe78] sm:$0xff]
        %v1834 = vld [vmem:[%s818 + $0xe80] sm:$0xff]
        %v1835 = vld [vmem:[%s818 + $0xe88] sm:$0xff]
        %v1836 = vld [vmem:[%s818 + $0xe90] sm:$0xff]
        %v1837 = vld [vmem:[%s818 + $0xe98] sm:$0xff]
        %v1838 = vld [vmem:[%s818 + $0xea0] sm:$0xff]
        %v1839 = vld [vmem:[%s818 + $0xea8] sm:$0xff]
        %v1840 = vld [vmem:[%s818 + $0xeb0] sm:$0xff]
        %v1841 = vld [vmem:[%s818 + $0xeb8] sm:$0xff]
        %v1842 = vld [vmem:[%s818 + $0xec0] sm:$0xff]
        %v1843 = vld [vmem:[%s818 + $0xec8] sm:$0xff]
        %v1844 = vld [vmem:[%s818 + $0xed0] sm:$0xff]
        %v1845 = vld [vmem:[%s818 + $0xed8] sm:$0xff]
        %v1846 = vld [vmem:[%s818 + $0xee0] sm:$0xff]
        %v1847 = vld [vmem:[%s818 + $0xee8] sm:$0xff]
        %v1848 = vld [vmem:[%s818 + $0xef0] sm:$0xff]
        %v1849 = vld [vmem:[%s818 + $0xef8] sm:$0xff]
        %v1850 = vld [vmem:[%s818 + $0xf00] sm:$0xff]
        %v1851 = vld [vmem:[%s818 + $0xf08] sm:$0xff]
        %v1852 = vld [vmem:[%s818 + $0xf10] sm:$0xff]
        %v1853 = vld [vmem:[%s818 + $0xf18] sm:$0xff]
        %v1854 = vld [vmem:[%s818 + $0xf20] sm:$0xff]
        %v1855 = vld [vmem:[%s818 + $0xf28] sm:$0xff]
        %v1856 = vld [vmem:[%s818 + $0xf30] sm:$0xff]
        %v1857 = vld [vmem:[%s818 + $0xf38] sm:$0xff]
        %v1858 = vld [vmem:[%s818 + $0xf40] sm:$0xff]
        %v1859 = vld [vmem:[%s818 + $0xf48] sm:$0xff]
        %v1860 = vld [vmem:[%s818 + $0xf50] sm:$0xff]
        %v1861 = vld [vmem:[%s818 + $0xf58] sm:$0xff]
        %v1862 = vld [vmem:[%s818 + $0xf60] sm:$0xff]
        %v1863 = vld [vmem:[%s818 + $0xf68] sm:$0xff]
        %v1864 = vld [vmem:[%s818 + $0xf70] sm:$0xff]
        %v1865 = vld [vmem:[%s818 + $0xf78] sm:$0xff]
        %v1866 = vld [vmem:[%s818 + $0xf80] sm:$0xff]
        %v1867 = vld [vmem:[%s818 + $0xf88] sm:$0xff]
        %v1868 = vld [vmem:[%s818 + $0xf90] sm:$0xff]
        %v1869 = vld [vmem:[%s818 + $0xf98] sm:$0xff]
        %v1870 = vld [vmem:[%s818 + $0xfa0] sm:$0xff]
        %v1871 = vld [vmem:[%s818 + $0xfa8] sm:$0xff]
        %v1872 = vld [vmem:[%s818 + $0xfb0] sm:$0xff]
        %v1873 = vld [vmem:[%s818 + $0xfb8] sm:$0xff]
        %v1874 = vld [vmem:[%s818 + $0xfc0] sm:$0xff]
        %v1875 = vld [vmem:[%s818 + $0xfc8] sm:$0xff]
        %v1876 = vld [vmem:[%s818 + $0xfd0] sm:$0xff]
        %v1877 = vld [vmem:[%s818 + $0xfd8] sm:$0xff]
        %v1878 = vld [vmem:[%s818 + $0xfe0] sm:$0xff]
        %v1879 = vld [vmem:[%s818 + $0xfe8] sm:$0xff]
        %v1880 = vld [vmem:[%s818 + $0xff0] sm:$0xff]
        %v1881 = vld [vmem:[%s818 + $0xff8] sm:$0xff]
        %v2394 = vunpack.c.l.b16 %v1370
        %v2395 = vunpack.c.h.b16 %v1370
        %v2396 = vunpack.c.l.b16 %v1371
        %v2397 = vunpack.c.h.b16 %v1371
        %v2398 = vunpack.c.l.b16 %v1372
        %v2399 = vunpack.c.h.b16 %v1372
        %v2400 = vunpack.c.l.b16 %v1373
        %v2401 = vunpack.c.h.b16 %v1373
        %v2402 = vunpack.c.l.b16 %v1374
        %v2403 = vunpack.c.h.b16 %v1374
        %v2404 = vunpack.c.l.b16 %v1375
        %v2405 = vunpack.c.h.b16 %v1375
        %v2406 = vunpack.c.l.b16 %v1376
        %v2407 = vunpack.c.h.b16 %v1376
        %v2408 = vunpack.c.l.b16 %v1377
        %v2409 = vunpack.c.h.b16 %v1377
        %v2410 = vunpack.c.l.b16 %v1378
        %v2411 = vunpack.c.h.b16 %v1378
        %v2412 = vunpack.c.l.b16 %v1379
        %v2413 = vunpack.c.h.b16 %v1379
        %v2414 = vunpack.c.l.b16 %v1380
        %v2415 = vunpack.c.h.b16 %v1380
        %v2416 = vunpack.c.l.b16 %v1381
        %v2417 = vunpack.c.h.b16 %v1381
        %v2418 = vunpack.c.l.b16 %v1382
        %v2419 = vunpack.c.h.b16 %v1382
        %v2420 = vunpack.c.l.b16 %v1383
        %v2421 = vunpack.c.h.b16 %v1383
        %v2422 = vunpack.c.l.b16 %v1384
        %v2423 = vunpack.c.h.b16 %v1384
        %v2424 = vunpack.c.l.b16 %v1385
        %v2425 = vunpack.c.h.b16 %v1385
        %v2426 = vunpack.c.l.b16 %v1386
        %v2427 = vunpack.c.h.b16 %v1386
        %v2428 = vunpack.c.l.b16 %v1387
        %v2429 = vunpack.c.h.b16 %v1387
        %v2430 = vunpack.c.l.b16 %v1388
        %v2431 = vunpack.c.h.b16 %v1388
        %v2432 = vunpack.c.l.b16 %v1389
        %v2433 = vunpack.c.h.b16 %v1389
        %v2434 = vunpack.c.l.b16 %v1390
        %v2435 = vunpack.c.h.b16 %v1390
        %v2436 = vunpack.c.l.b16 %v1391
        %v2437 = vunpack.c.h.b16 %v1391
        %v2438 = vunpack.c.l.b16 %v1392
        %v2439 = vunpack.c.h.b16 %v1392
        %v2440 = vunpack.c.l.b16 %v1393
        %v2441 = vunpack.c.h.b16 %v1393
        %v2442 = vunpack.c.l.b16 %v1394
        %v2443 = vunpack.c.h.b16 %v1394
        %v2444 = vunpack.c.l.b16 %v1395
        %v2445 = vunpack.c.h.b16 %v1395
        %v2446 = vunpack.c.l.b16 %v1396
        %v2447 = vunpack.c.h.b16 %v1396
        %v2448 = vunpack.c.l.b16 %v1397
        %v2449 = vunpack.c.h.b16 %v1397
        %v2450 = vunpack.c.l.b16 %v1398
        %v2451 = vunpack.c.h.b16 %v1398
        %v2452 = vunpack.c.l.b16 %v1399
        %v2453 = vunpack.c.h.b16 %v1399
        %v2454 = vunpack.c.l.b16 %v1400
        %v2455 = vunpack.c.h.b16 %v1400
        %v2456 = vunpack.c.l.b16 %v1401
        %v2457 = vunpack.c.h.b16 %v1401
        %v2458 = vunpack.c.l.b16 %v1402
        %v2459 = vunpack.c.h.b16 %v1402
        %v2460 = vunpack.c.l.b16 %v1403
        %v2461 = vunpack.c.h.b16 %v1403
        %v2462 = vunpack.c.l.b16 %v1404
        %v2463 = vunpack.c.h.b16 %v1404
        %v2464 = vunpack.c.l.b16 %v1405
        %v2465 = vunpack.c.h.b16 %v1405
        %v2466 = vunpack.c.l.b16 %v1406
        %v2467 = vunpack.c.h.b16 %v1406
        %v2468 = vunpack.c.l.b16 %v1407
        %v2469 = vunpack.c.h.b16 %v1407
        %v2470 = vunpack.c.l.b16 %v1408
        %v2471 = vunpack.c.h.b16 %v1408
        %v2472 = vunpack.c.l.b16 %v1409
        %v2473 = vunpack.c.h.b16 %v1409
        %v2474 = vunpack.c.l.b16 %v1410
        %v2475 = vunpack.c.h.b16 %v1410
        %v2476 = vunpack.c.l.b16 %v1411
        %v2477 = vunpack.c.h.b16 %v1411
        %v2478 = vunpack.c.l.b16 %v1412
        %v2479 = vunpack.c.h.b16 %v1412
        %v2480 = vunpack.c.l.b16 %v1413
        %v2481 = vunpack.c.h.b16 %v1413
        %v2482 = vunpack.c.l.b16 %v1414
        %v2483 = vunpack.c.h.b16 %v1414
        %v2484 = vunpack.c.l.b16 %v1415
        %v2485 = vunpack.c.h.b16 %v1415
        %v2486 = vunpack.c.l.b16 %v1416
        %v2487 = vunpack.c.h.b16 %v1416
        %v2488 = vunpack.c.l.b16 %v1417
        %v2489 = vunpack.c.h.b16 %v1417
        %v2490 = vunpack.c.l.b16 %v1418
        %v2491 = vunpack.c.h.b16 %v1418
        %v2492 = vunpack.c.l.b16 %v1419
        %v2493 = vunpack.c.h.b16 %v1419
        %v2494 = vunpack.c.l.b16 %v1420
        %v2495 = vunpack.c.h.b16 %v1420
        %v2496 = vunpack.c.l.b16 %v1421
        %v2497 = vunpack.c.h.b16 %v1421
        %v2498 = vunpack.c.l.b16 %v1422
        %v2499 = vunpack.c.h.b16 %v1422
        %v2500 = vunpack.c.l.b16 %v1423
        %v2501 = vunpack.c.h.b16 %v1423
        %v2502 = vunpack.c.l.b16 %v1424
        %v2503 = vunpack.c.h.b16 %v1424
        %v2504 = vunpack.c.l.b16 %v1425
        %v2505 = vunpack.c.h.b16 %v1425
        %v2506 = vunpack.c.l.b16 %v1426
        %v2507 = vunpack.c.h.b16 %v1426
        %v2508 = vunpack.c.l.b16 %v1427
        %v2509 = vunpack.c.h.b16 %v1427
        %v2510 = vunpack.c.l.b16 %v1428
        %v2511 = vunpack.c.h.b16 %v1428
        %v2512 = vunpack.c.l.b16 %v1429
        %v2513 = vunpack.c.h.b16 %v1429
        %v2514 = vunpack.c.l.b16 %v1430
        %v2515 = vunpack.c.h.b16 %v1430
        %v2516 = vunpack.c.l.b16 %v1431
        %v2517 = vunpack.c.h.b16 %v1431
        %v2518 = vunpack.c.l.b16 %v1432
        %v2519 = vunpack.c.h.b16 %v1432
        %v2520 = vunpack.c.l.b16 %v1433
        %v2521 = vunpack.c.h.b16 %v1433
        %v2522 = vunpack.c.l.b16 %v1434
        %v2523 = vunpack.c.h.b16 %v1434
        %v2524 = vunpack.c.l.b16 %v1435
        %v2525 = vunpack.c.h.b16 %v1435
        %v2526 = vunpack.c.l.b16 %v1436
        %v2527 = vunpack.c.h.b16 %v1436
        %v2528 = vunpack.c.l.b16 %v1437
        %v2529 = vunpack.c.h.b16 %v1437
        %v2530 = vunpack.c.l.b16 %v1438
        %v2531 = vunpack.c.h.b16 %v1438
        %v2532 = vunpack.c.l.b16 %v1439
        %v2533 = vunpack.c.h.b16 %v1439
        %v2534 = vunpack.c.l.b16 %v1440
        %v2535 = vunpack.c.h.b16 %v1440
        %v2536 = vunpack.c.l.b16 %v1441
        %v2537 = vunpack.c.h.b16 %v1441
        %v2538 = vunpack.c.l.b16 %v1442
        %v2539 = vunpack.c.h.b16 %v1442
        %v2540 = vunpack.c.l.b16 %v1443
        %v2541 = vunpack.c.h.b16 %v1443
        %v2542 = vunpack.c.l.b16 %v1444
        %v2543 = vunpack.c.h.b16 %v1444
        %v2544 = vunpack.c.l.b16 %v1445
        %v2545 = vunpack.c.h.b16 %v1445
        %v2546 = vunpack.c.l.b16 %v1446
        %v2547 = vunpack.c.h.b16 %v1446
        %v2548 = vunpack.c.l.b16 %v1447
        %v2549 = vunpack.c.h.b16 %v1447
        %v2550 = vunpack.c.l.b16 %v1448
        %v2551 = vunpack.c.h.b16 %v1448
        %v2552 = vunpack.c.l.b16 %v1449
        %v2553 = vunpack.c.h.b16 %v1449
        %v2554 = vunpack.c.l.b16 %v1450
        %v2555 = vunpack.c.h.b16 %v1450
        %v2556 = vunpack.c.l.b16 %v1451
        %v2557 = vunpack.c.h.b16 %v1451
        %v2558 = vunpack.c.l.b16 %v1452
        %v2559 = vunpack.c.h.b16 %v1452
        %v2560 = vunpack.c.l.b16 %v1453
        %v2561 = vunpack.c.h.b16 %v1453
        %v2562 = vunpack.c.l.b16 %v1454
        %v2563 = vunpack.c.h.b16 %v1454
        %v2564 = vunpack.c.l.b16 %v1455
        %v2565 = vunpack.c.h.b16 %v1455
        %v2566 = vunpack.c.l.b16 %v1456
        %v2567 = vunpack.c.h.b16 %v1456
        %v2568 = vunpack.c.l.b16 %v1457
        %v2569 = vunpack.c.h.b16 %v1457
        %v2570 = vunpack.c.l.b16 %v1458
        %v2571 = vunpack.c.h.b16 %v1458
        %v2572 = vunpack.c.l.b16 %v1459
        %v2573 = vunpack.c.h.b16 %v1459
        %v2574 = vunpack.c.l.b16 %v1460
        %v2575 = vunpack.c.h.b16 %v1460
        %v2576 = vunpack.c.l.b16 %v1461
        %v2577 = vunpack.c.h.b16 %v1461
        %v2578 = vunpack.c.l.b16 %v1462
        %v2579 = vunpack.c.h.b16 %v1462
        %v2580 = vunpack.c.l.b16 %v1463
        %v2581 = vunpack.c.h.b16 %v1463
        %v2582 = vunpack.c.l.b16 %v1464
        %v2583 = vunpack.c.h.b16 %v1464
        %v2584 = vunpack.c.l.b16 %v1465
        %v2585 = vunpack.c.h.b16 %v1465
        %v2586 = vunpack.c.l.b16 %v1466
        %v2587 = vunpack.c.h.b16 %v1466
        %v2588 = vunpack.c.l.b16 %v1467
        %v2589 = vunpack.c.h.b16 %v1467
        %v2590 = vunpack.c.l.b16 %v1468
        %v2591 = vunpack.c.h.b16 %v1468
        %v2592 = vunpack.c.l.b16 %v1469
        %v2593 = vunpack.c.h.b16 %v1469
        %v2594 = vunpack.c.l.b16 %v1470
        %v2595 = vunpack.c.h.b16 %v1470
        %v2596 = vunpack.c.l.b16 %v1471
        %v2597 = vunpack.c.h.b16 %v1471
        %v2598 = vunpack.c.l.b16 %v1472
        %v2599 = vunpack.c.h.b16 %v1472
        %v2600 = vunpack.c.l.b16 %v1473
        %v2601 = vunpack.c.h.b16 %v1473
        %v2602 = vunpack.c.l.b16 %v1474
        %v2603 = vunpack.c.h.b16 %v1474
        %v2604 = vunpack.c.l.b16 %v1475
        %v2605 = vunpack.c.h.b16 %v1475
        %v2606 = vunpack.c.l.b16 %v1476
        %v2607 = vunpack.c.h.b16 %v1476
        %v2608 = vunpack.c.l.b16 %v1477
        %v2609 = vunpack.c.h.b16 %v1477
        %v2610 = vunpack.c.l.b16 %v1478
        %v2611 = vunpack.c.h.b16 %v1478
        %v2612 = vunpack.c.l.b16 %v1479
        %v2613 = vunpack.c.h.b16 %v1479
        %v2614 = vunpack.c.l.b16 %v1480
        %v2615 = vunpack.c.h.b16 %v1480
        %v2616 = vunpack.c.l.b16 %v1481
        %v2617 = vunpack.c.h.b16 %v1481
        %v2618 = vunpack.c.l.b16 %v1482
        %v2619 = vunpack.c.h.b16 %v1482
        %v2620 = vunpack.c.l.b16 %v1483
        %v2621 = vunpack.c.h.b16 %v1483
        %v2622 = vunpack.c.l.b16 %v1484
        %v2623 = vunpack.c.h.b16 %v1484
        %v2624 = vunpack.c.l.b16 %v1485
        %v2625 = vunpack.c.h.b16 %v1485
        %v2626 = vunpack.c.l.b16 %v1486
        %v2627 = vunpack.c.h.b16 %v1486
        %v2628 = vunpack.c.l.b16 %v1487
        %v2629 = vunpack.c.h.b16 %v1487
        %v2630 = vunpack.c.l.b16 %v1488
        %v2631 = vunpack.c.h.b16 %v1488
        %v2632 = vunpack.c.l.b16 %v1489
        %v2633 = vunpack.c.h.b16 %v1489
        %v2634 = vunpack.c.l.b16 %v1490
        %v2635 = vunpack.c.h.b16 %v1490
        %v2636 = vunpack.c.l.b16 %v1491
        %v2637 = vunpack.c.h.b16 %v1491
        %v2638 = vunpack.c.l.b16 %v1492
        %v2639 = vunpack.c.h.b16 %v1492
        %v2640 = vunpack.c.l.b16 %v1493
        %v2641 = vunpack.c.h.b16 %v1493
        %v2642 = vunpack.c.l.b16 %v1494
        %v2643 = vunpack.c.h.b16 %v1494
        %v2644 = vunpack.c.l.b16 %v1495
        %v2645 = vunpack.c.h.b16 %v1495
        %v2646 = vunpack.c.l.b16 %v1496
        %v2647 = vunpack.c.h.b16 %v1496
        %v2648 = vunpack.c.l.b16 %v1497
        %v2649 = vunpack.c.h.b16 %v1497
        %v2650 = vunpack.c.l.b16 %v1498
        %v2651 = vunpack.c.h.b16 %v1498
        %v2652 = vunpack.c.l.b16 %v1499
        %v2653 = vunpack.c.h.b16 %v1499
        %v2654 = vunpack.c.l.b16 %v1500
        %v2655 = vunpack.c.h.b16 %v1500
        %v2656 = vunpack.c.l.b16 %v1501
        %v2657 = vunpack.c.h.b16 %v1501
        %v2658 = vunpack.c.l.b16 %v1502
        %v2659 = vunpack.c.h.b16 %v1502
        %v2660 = vunpack.c.l.b16 %v1503
        %v2661 = vunpack.c.h.b16 %v1503
        %v2662 = vunpack.c.l.b16 %v1504
        %v2663 = vunpack.c.h.b16 %v1504
        %v2664 = vunpack.c.l.b16 %v1505
        %v2665 = vunpack.c.h.b16 %v1505
        %v2666 = vunpack.c.l.b16 %v1506
        %v2667 = vunpack.c.h.b16 %v1506
        %v2668 = vunpack.c.l.b16 %v1507
        %v2669 = vunpack.c.h.b16 %v1507
        %v2670 = vunpack.c.l.b16 %v1508
        %v2671 = vunpack.c.h.b16 %v1508
        %v2672 = vunpack.c.l.b16 %v1509
        %v2673 = vunpack.c.h.b16 %v1509
        %v2674 = vunpack.c.l.b16 %v1510
        %v2675 = vunpack.c.h.b16 %v1510
        %v2676 = vunpack.c.l.b16 %v1511
        %v2677 = vunpack.c.h.b16 %v1511
        %v2678 = vunpack.c.l.b16 %v1512
        %v2679 = vunpack.c.h.b16 %v1512
        %v2680 = vunpack.c.l.b16 %v1513
        %v2681 = vunpack.c.h.b16 %v1513
        %v2682 = vunpack.c.l.b16 %v1514
        %v2683 = vunpack.c.h.b16 %v1514
        %v2684 = vunpack.c.l.b16 %v1515
        %v2685 = vunpack.c.h.b16 %v1515
        %v2686 = vunpack.c.l.b16 %v1516
        %v2687 = vunpack.c.h.b16 %v1516
        %v2688 = vunpack.c.l.b16 %v1517
        %v2689 = vunpack.c.h.b16 %v1517
        %v2690 = vunpack.c.l.b16 %v1518
        %v2691 = vunpack.c.h.b16 %v1518
        %v2692 = vunpack.c.l.b16 %v1519
        %v2693 = vunpack.c.h.b16 %v1519
        %v2694 = vunpack.c.l.b16 %v1520
        %v2695 = vunpack.c.h.b16 %v1520
        %v2696 = vunpack.c.l.b16 %v1521
        %v2697 = vunpack.c.h.b16 %v1521
        %v2698 = vunpack.c.l.b16 %v1522
        %v2699 = vunpack.c.h.b16 %v1522
        %v2700 = vunpack.c.l.b16 %v1523
        %v2701 = vunpack.c.h.b16 %v1523
        %v2702 = vunpack.c.l.b16 %v1524
        %v2703 = vunpack.c.h.b16 %v1524
        %v2704 = vunpack.c.l.b16 %v1525
        %v2705 = vunpack.c.h.b16 %v1525
        %v2706 = vunpack.c.l.b16 %v1526
        %v2707 = vunpack.c.h.b16 %v1526
        %v2708 = vunpack.c.l.b16 %v1527
        %v2709 = vunpack.c.h.b16 %v1527
        %v2710 = vunpack.c.l.b16 %v1528
        %v2711 = vunpack.c.h.b16 %v1528
        %v2712 = vunpack.c.l.b16 %v1529
        %v2713 = vunpack.c.h.b16 %v1529
        %v2714 = vunpack.c.l.b16 %v1530
        %v2715 = vunpack.c.h.b16 %v1530
        %v2716 = vunpack.c.l.b16 %v1531
        %v2717 = vunpack.c.h.b16 %v1531
        %v2718 = vunpack.c.l.b16 %v1532
        %v2719 = vunpack.c.h.b16 %v1532
        %v2720 = vunpack.c.l.b16 %v1533
        %v2721 = vunpack.c.h.b16 %v1533
        %v2722 = vunpack.c.l.b16 %v1534
        %v2723 = vunpack.c.h.b16 %v1534
        %v2724 = vunpack.c.l.b16 %v1535
        %v2725 = vunpack.c.h.b16 %v1535
        %v2726 = vunpack.c.l.b16 %v1536
        %v2727 = vunpack.c.h.b16 %v1536
        %v2728 = vunpack.c.l.b16 %v1537
        %v2729 = vunpack.c.h.b16 %v1537
        %v2730 = vunpack.c.l.b16 %v1538
        %v2731 = vunpack.c.h.b16 %v1538
        %v2732 = vunpack.c.l.b16 %v1539
        %v2733 = vunpack.c.h.b16 %v1539
        %v2734 = vunpack.c.l.b16 %v1540
        %v2735 = vunpack.c.h.b16 %v1540
        %v2736 = vunpack.c.l.b16 %v1541
        %v2737 = vunpack.c.h.b16 %v1541
        %v2738 = vunpack.c.l.b16 %v1542
        %v2739 = vunpack.c.h.b16 %v1542
        %v2740 = vunpack.c.l.b16 %v1543
        %v2741 = vunpack.c.h.b16 %v1543
        %v2742 = vunpack.c.l.b16 %v1544
        %v2743 = vunpack.c.h.b16 %v1544
        %v2744 = vunpack.c.l.b16 %v1545
        %v2745 = vunpack.c.h.b16 %v1545
        %v2746 = vunpack.c.l.b16 %v1546
        %v2747 = vunpack.c.h.b16 %v1546
        %v2748 = vunpack.c.l.b16 %v1547
        %v2749 = vunpack.c.h.b16 %v1547
        %v2750 = vunpack.c.l.b16 %v1548
        %v2751 = vunpack.c.h.b16 %v1548
        %v2752 = vunpack.c.l.b16 %v1549
        %v2753 = vunpack.c.h.b16 %v1549
        %v2754 = vunpack.c.l.b16 %v1550
        %v2755 = vunpack.c.h.b16 %v1550
        %v2756 = vunpack.c.l.b16 %v1551
        %v2757 = vunpack.c.h.b16 %v1551
        %v2758 = vunpack.c.l.b16 %v1552
        %v2759 = vunpack.c.h.b16 %v1552
        %v2760 = vunpack.c.l.b16 %v1553
        %v2761 = vunpack.c.h.b16 %v1553
        %v2762 = vunpack.c.l.b16 %v1554
        %v2763 = vunpack.c.h.b16 %v1554
        %v2764 = vunpack.c.l.b16 %v1555
        %v2765 = vunpack.c.h.b16 %v1555
        %v2766 = vunpack.c.l.b16 %v1556
        %v2767 = vunpack.c.h.b16 %v1556
        %v2768 = vunpack.c.l.b16 %v1557
        %v2769 = vunpack.c.h.b16 %v1557
        %v2770 = vunpack.c.l.b16 %v1558
        %v2771 = vunpack.c.h.b16 %v1558
        %v2772 = vunpack.c.l.b16 %v1559
        %v2773 = vunpack.c.h.b16 %v1559
        %v2774 = vunpack.c.l.b16 %v1560
        %v2775 = vunpack.c.h.b16 %v1560
        %v2776 = vunpack.c.l.b16 %v1561
        %v2777 = vunpack.c.h.b16 %v1561
        %v2778 = vunpack.c.l.b16 %v1562
        %v2779 = vunpack.c.h.b16 %v1562
        %v2780 = vunpack.c.l.b16 %v1563
        %v2781 = vunpack.c.h.b16 %v1563
        %v2782 = vunpack.c.l.b16 %v1564
        %v2783 = vunpack.c.h.b16 %v1564
        %v2784 = vunpack.c.l.b16 %v1565
        %v2785 = vunpack.c.h.b16 %v1565
        %v2786 = vunpack.c.l.b16 %v1566
        %v2787 = vunpack.c.h.b16 %v1566
        %v2788 = vunpack.c.l.b16 %v1567
        %v2789 = vunpack.c.h.b16 %v1567
        %v2790 = vunpack.c.l.b16 %v1568
        %v2791 = vunpack.c.h.b16 %v1568
        %v2792 = vunpack.c.l.b16 %v1569
        %v2793 = vunpack.c.h.b16 %v1569
        %v2794 = vunpack.c.l.b16 %v1570
        %v2795 = vunpack.c.h.b16 %v1570
        %v2796 = vunpack.c.l.b16 %v1571
        %v2797 = vunpack.c.h.b16 %v1571
        %v2798 = vunpack.c.l.b16 %v1572
        %v2799 = vunpack.c.h.b16 %v1572
        %v2800 = vunpack.c.l.b16 %v1573
        %v2801 = vunpack.c.h.b16 %v1573
        %v2802 = vunpack.c.l.b16 %v1574
        %v2803 = vunpack.c.h.b16 %v1574
        %v2804 = vunpack.c.l.b16 %v1575
        %v2805 = vunpack.c.h.b16 %v1575
        %v2806 = vunpack.c.l.b16 %v1576
        %v2807 = vunpack.c.h.b16 %v1576
        %v2808 = vunpack.c.l.b16 %v1577
        %v2809 = vunpack.c.h.b16 %v1577
        %v2810 = vunpack.c.l.b16 %v1578
        %v2811 = vunpack.c.h.b16 %v1578
        %v2812 = vunpack.c.l.b16 %v1579
        %v2813 = vunpack.c.h.b16 %v1579
        %v2814 = vunpack.c.l.b16 %v1580
        %v2815 = vunpack.c.h.b16 %v1580
        %v2816 = vunpack.c.l.b16 %v1581
        %v2817 = vunpack.c.h.b16 %v1581
        %v2818 = vunpack.c.l.b16 %v1582
        %v2819 = vunpack.c.h.b16 %v1582
        %v2820 = vunpack.c.l.b16 %v1583
        %v2821 = vunpack.c.h.b16 %v1583
        %v2822 = vunpack.c.l.b16 %v1584
        %v2823 = vunpack.c.h.b16 %v1584
        %v2824 = vunpack.c.l.b16 %v1585
        %v2825 = vunpack.c.h.b16 %v1585
        %v2826 = vunpack.c.l.b16 %v1586
        %v2827 = vunpack.c.h.b16 %v1586
        %v2828 = vunpack.c.l.b16 %v1587
        %v2829 = vunpack.c.h.b16 %v1587
        %v2830 = vunpack.c.l.b16 %v1588
        %v2831 = vunpack.c.h.b16 %v1588
        %v2832 = vunpack.c.l.b16 %v1589
        %v2833 = vunpack.c.h.b16 %v1589
        %v2834 = vunpack.c.l.b16 %v1590
        %v2835 = vunpack.c.h.b16 %v1590
        %v2836 = vunpack.c.l.b16 %v1591
        %v2837 = vunpack.c.h.b16 %v1591
        %v2838 = vunpack.c.l.b16 %v1592
        %v2839 = vunpack.c.h.b16 %v1592
        %v2840 = vunpack.c.l.b16 %v1593
        %v2841 = vunpack.c.h.b16 %v1593
        %v2842 = vunpack.c.l.b16 %v1594
        %v2843 = vunpack.c.h.b16 %v1594
        %v2844 = vunpack.c.l.b16 %v1595
        %v2845 = vunpack.c.h.b16 %v1595
        %v2846 = vunpack.c.l.b16 %v1596
        %v2847 = vunpack.c.h.b16 %v1596
        %v2848 = vunpack.c.l.b16 %v1597
        %v2849 = vunpack.c.h.b16 %v1597
        %v2850 = vunpack.c.l.b16 %v1598
        %v2851 = vunpack.c.h.b16 %v1598
        %v2852 = vunpack.c.l.b16 %v1599
        %v2853 = vunpack.c.h.b16 %v1599
        %v2854 = vunpack.c.l.b16 %v1600
        %v2855 = vunpack.c.h.b16 %v1600
        %v2856 = vunpack.c.l.b16 %v1601
        %v2857 = vunpack.c.h.b16 %v1601
        %v2858 = vunpack.c.l.b16 %v1602
        %v2859 = vunpack.c.h.b16 %v1602
        %v2860 = vunpack.c.l.b16 %v1603
        %v2861 = vunpack.c.h.b16 %v1603
        %v2862 = vunpack.c.l.b16 %v1604
        %v2863 = vunpack.c.h.b16 %v1604
        %v2864 = vunpack.c.l.b16 %v1605
        %v2865 = vunpack.c.h.b16 %v1605
        %v2866 = vunpack.c.l.b16 %v1606
        %v2867 = vunpack.c.h.b16 %v1606
        %v2868 = vunpack.c.l.b16 %v1607
        %v2869 = vunpack.c.h.b16 %v1607
        %v2870 = vunpack.c.l.b16 %v1608
        %v2871 = vunpack.c.h.b16 %v1608
        %v2872 = vunpack.c.l.b16 %v1609
        %v2873 = vunpack.c.h.b16 %v1609
        %v2874 = vunpack.c.l.b16 %v1610
        %v2875 = vunpack.c.h.b16 %v1610
        %v2876 = vunpack.c.l.b16 %v1611
        %v2877 = vunpack.c.h.b16 %v1611
        %v2878 = vunpack.c.l.b16 %v1612
        %v2879 = vunpack.c.h.b16 %v1612
        %v2880 = vunpack.c.l.b16 %v1613
        %v2881 = vunpack.c.h.b16 %v1613
        %v2882 = vunpack.c.l.b16 %v1614
        %v2883 = vunpack.c.h.b16 %v1614
        %v2884 = vunpack.c.l.b16 %v1615
        %v2885 = vunpack.c.h.b16 %v1615
        %v2886 = vunpack.c.l.b16 %v1616
        %v2887 = vunpack.c.h.b16 %v1616
        %v2888 = vunpack.c.l.b16 %v1617
        %v2889 = vunpack.c.h.b16 %v1617
        %v2890 = vunpack.c.l.b16 %v1618
        %v2891 = vunpack.c.h.b16 %v1618
        %v2892 = vunpack.c.l.b16 %v1619
        %v2893 = vunpack.c.h.b16 %v1619
        %v2894 = vunpack.c.l.b16 %v1620
        %v2895 = vunpack.c.h.b16 %v1620
        %v2896 = vunpack.c.l.b16 %v1621
        %v2897 = vunpack.c.h.b16 %v1621
        %v2898 = vunpack.c.l.b16 %v1622
        %v2899 = vunpack.c.h.b16 %v1622
        %v2900 = vunpack.c.l.b16 %v1623
        %v2901 = vunpack.c.h.b16 %v1623
        %v2902 = vunpack.c.l.b16 %v1624
        %v2903 = vunpack.c.h.b16 %v1624
        %v2904 = vunpack.c.l.b16 %v1625
        %v2905 = vunpack.c.h.b16 %v1625
        %v2906 = vunpack.c.l.b16 %v1626
        %v2907 = vunpack.c.h.b16 %v1626
        %v2908 = vunpack.c.l.b16 %v1627
        %v2909 = vunpack.c.h.b16 %v1627
        %v2910 = vunpack.c.l.b16 %v1628
        %v2911 = vunpack.c.h.b16 %v1628
        %v2912 = vunpack.c.l.b16 %v1629
        %v2913 = vunpack.c.h.b16 %v1629
        %v2914 = vunpack.c.l.b16 %v1630
        %v2915 = vunpack.c.h.b16 %v1630
        %v2916 = vunpack.c.l.b16 %v1631
        %v2917 = vunpack.c.h.b16 %v1631
        %v2918 = vunpack.c.l.b16 %v1632
        %v2919 = vunpack.c.h.b16 %v1632
        %v2920 = vunpack.c.l.b16 %v1633
        %v2921 = vunpack.c.h.b16 %v1633
        %v2922 = vunpack.c.l.b16 %v1634
        %v2923 = vunpack.c.h.b16 %v1634
        %v2924 = vunpack.c.l.b16 %v1635
        %v2925 = vunpack.c.h.b16 %v1635
        %v2926 = vunpack.c.l.b16 %v1636
        %v2927 = vunpack.c.h.b16 %v1636
        %v2928 = vunpack.c.l.b16 %v1637
        %v2929 = vunpack.c.h.b16 %v1637
        %v2930 = vunpack.c.l.b16 %v1638
        %v2931 = vunpack.c.h.b16 %v1638
        %v2932 = vunpack.c.l.b16 %v1639
        %v2933 = vunpack.c.h.b16 %v1639
        %v2934 = vunpack.c.l.b16 %v1640
        %v2935 = vunpack.c.h.b16 %v1640
        %v2936 = vunpack.c.l.b16 %v1641
        %v2937 = vunpack.c.h.b16 %v1641
        %v2938 = vunpack.c.l.b16 %v1642
        %v2939 = vunpack.c.h.b16 %v1642
        %v2940 = vunpack.c.l.b16 %v1643
        %v2941 = vunpack.c.h.b16 %v1643
        %v2942 = vunpack.c.l.b16 %v1644
        %v2943 = vunpack.c.h.b16 %v1644
        %v2944 = vunpack.c.l.b16 %v1645
        %v2945 = vunpack.c.h.b16 %v1645
        %v2946 = vunpack.c.l.b16 %v1646
        %v2947 = vunpack.c.h.b16 %v1646
        %v2948 = vunpack.c.l.b16 %v1647
        %v2949 = vunpack.c.h.b16 %v1647
        %v2950 = vunpack.c.l.b16 %v1648
        %v2951 = vunpack.c.h.b16 %v1648
        %v2952 = vunpack.c.l.b16 %v1649
        %v2953 = vunpack.c.h.b16 %v1649
        %v2954 = vunpack.c.l.b16 %v1650
        %v2955 = vunpack.c.h.b16 %v1650
        %v2956 = vunpack.c.l.b16 %v1651
        %v2957 = vunpack.c.h.b16 %v1651
        %v2958 = vunpack.c.l.b16 %v1652
        %v2959 = vunpack.c.h.b16 %v1652
        %v2960 = vunpack.c.l.b16 %v1653
        %v2961 = vunpack.c.h.b16 %v1653
        %v2962 = vunpack.c.l.b16 %v1654
        %v2963 = vunpack.c.h.b16 %v1654
        %v2964 = vunpack.c.l.b16 %v1655
        %v2965 = vunpack.c.h.b16 %v1655
        %v2966 = vunpack.c.l.b16 %v1656
        %v2967 = vunpack.c.h.b16 %v1656
        %v2968 = vunpack.c.l.b16 %v1657
        %v2969 = vunpack.c.h.b16 %v1657
        %v2970 = vunpack.c.l.b16 %v1658
        %v2971 = vunpack.c.h.b16 %v1658
        %v2972 = vunpack.c.l.b16 %v1659
        %v2973 = vunpack.c.h.b16 %v1659
        %v2974 = vunpack.c.l.b16 %v1660
        %v2975 = vunpack.c.h.b16 %v1660
        %v2976 = vunpack.c.l.b16 %v1661
        %v2977 = vunpack.c.h.b16 %v1661
        %v2978 = vunpack.c.l.b16 %v1662
        %v2979 = vunpack.c.h.b16 %v1662
        %v2980 = vunpack.c.l.b16 %v1663
        %v2981 = vunpack.c.h.b16 %v1663
        %v2982 = vunpack.c.l.b16 %v1664
        %v2983 = vunpack.c.h.b16 %v1664
        %v2984 = vunpack.c.l.b16 %v1665
        %v2985 = vunpack.c.h.b16 %v1665
        %v2986 = vunpack.c.l.b16 %v1666
        %v2987 = vunpack.c.h.b16 %v1666
        %v2988 = vunpack.c.l.b16 %v1667
        %v2989 = vunpack.c.h.b16 %v1667
        %v2990 = vunpack.c.l.b16 %v1668
        %v2991 = vunpack.c.h.b16 %v1668
        %v2992 = vunpack.c.l.b16 %v1669
        %v2993 = vunpack.c.h.b16 %v1669
        %v2994 = vunpack.c.l.b16 %v1670
        %v2995 = vunpack.c.h.b16 %v1670
        %v2996 = vunpack.c.l.b16 %v1671
        %v2997 = vunpack.c.h.b16 %v1671
        %v2998 = vunpack.c.l.b16 %v1672
        %v2999 = vunpack.c.h.b16 %v1672
        %v3000 = vunpack.c.l.b16 %v1673
        %v3001 = vunpack.c.h.b16 %v1673
        %v3002 = vunpack.c.l.b16 %v1674
        %v3003 = vunpack.c.h.b16 %v1674
        %v3004 = vunpack.c.l.b16 %v1675
        %v3005 = vunpack.c.h.b16 %v1675
        %v3006 = vunpack.c.l.b16 %v1676
        %v3007 = vunpack.c.h.b16 %v1676
        %v3008 = vunpack.c.l.b16 %v1677
        %v3009 = vunpack.c.h.b16 %v1677
        %v3010 = vunpack.c.l.b16 %v1678
        %v3011 = vunpack.c.h.b16 %v1678
        %v3012 = vunpack.c.l.b16 %v1679
        %v3013 = vunpack.c.h.b16 %v1679
        %v3014 = vunpack.c.l.b16 %v1680
        %v3015 = vunpack.c.h.b16 %v1680
        %v3016 = vunpack.c.l.b16 %v1681
        %v3017 = vunpack.c.h.b16 %v1681
        %v3018 = vunpack.c.l.b16 %v1682
        %v3019 = vunpack.c.h.b16 %v1682
        %v3020 = vunpack.c.l.b16 %v1683
        %v3021 = vunpack.c.h.b16 %v1683
        %v3022 = vunpack.c.l.b16 %v1684
        %v3023 = vunpack.c.h.b16 %v1684
        %v3024 = vunpack.c.l.b16 %v1685
        %v3025 = vunpack.c.h.b16 %v1685
        %v3026 = vunpack.c.l.b16 %v1686
        %v3027 = vunpack.c.h.b16 %v1686
        %v3028 = vunpack.c.l.b16 %v1687
        %v3029 = vunpack.c.h.b16 %v1687
        %v3030 = vunpack.c.l.b16 %v1688
        %v3031 = vunpack.c.h.b16 %v1688
        %v3032 = vunpack.c.l.b16 %v1689
        %v3033 = vunpack.c.h.b16 %v1689
        %v3034 = vunpack.c.l.b16 %v1690
        %v3035 = vunpack.c.h.b16 %v1690
        %v3036 = vunpack.c.l.b16 %v1691
        %v3037 = vunpack.c.h.b16 %v1691
        %v3038 = vunpack.c.l.b16 %v1692
        %v3039 = vunpack.c.h.b16 %v1692
        %v3040 = vunpack.c.l.b16 %v1693
        %v3041 = vunpack.c.h.b16 %v1693
        %v3042 = vunpack.c.l.b16 %v1694
        %v3043 = vunpack.c.h.b16 %v1694
        %v3044 = vunpack.c.l.b16 %v1695
        %v3045 = vunpack.c.h.b16 %v1695
        %v3046 = vunpack.c.l.b16 %v1696
        %v3047 = vunpack.c.h.b16 %v1696
        %v3048 = vunpack.c.l.b16 %v1697
        %v3049 = vunpack.c.h.b16 %v1697
        %v3050 = vunpack.c.l.b16 %v1698
        %v3051 = vunpack.c.h.b16 %v1698
        %v3052 = vunpack.c.l.b16 %v1699
        %v3053 = vunpack.c.h.b16 %v1699
        %v3054 = vunpack.c.l.b16 %v1700
        %v3055 = vunpack.c.h.b16 %v1700
        %v3056 = vunpack.c.l.b16 %v1701
        %v3057 = vunpack.c.h.b16 %v1701
        %v3058 = vunpack.c.l.b16 %v1702
        %v3059 = vunpack.c.h.b16 %v1702
        %v3060 = vunpack.c.l.b16 %v1703
        %v3061 = vunpack.c.h.b16 %v1703
        %v3062 = vunpack.c.l.b16 %v1704
        %v3063 = vunpack.c.h.b16 %v1704
        %v3064 = vunpack.c.l.b16 %v1705
        %v3065 = vunpack.c.h.b16 %v1705
        %v3066 = vunpack.c.l.b16 %v1706
        %v3067 = vunpack.c.h.b16 %v1706
        %v3068 = vunpack.c.l.b16 %v1707
        %v3069 = vunpack.c.h.b16 %v1707
        %v3070 = vunpack.c.l.b16 %v1708
        %v3071 = vunpack.c.h.b16 %v1708
        %v3072 = vunpack.c.l.b16 %v1709
        %v3073 = vunpack.c.h.b16 %v1709
        %v3074 = vunpack.c.l.b16 %v1710
        %v3075 = vunpack.c.h.b16 %v1710
        %v3076 = vunpack.c.l.b16 %v1711
        %v3077 = vunpack.c.h.b16 %v1711
        %v3078 = vunpack.c.l.b16 %v1712
        %v3079 = vunpack.c.h.b16 %v1712
        %v3080 = vunpack.c.l.b16 %v1713
        %v3081 = vunpack.c.h.b16 %v1713
        %v3082 = vunpack.c.l.b16 %v1714
        %v3083 = vunpack.c.h.b16 %v1714
        %v3084 = vunpack.c.l.b16 %v1715
        %v3085 = vunpack.c.h.b16 %v1715
        %v3086 = vunpack.c.l.b16 %v1716
        %v3087 = vunpack.c.h.b16 %v1716
        %v3088 = vunpack.c.l.b16 %v1717
        %v3089 = vunpack.c.h.b16 %v1717
        %v3090 = vunpack.c.l.b16 %v1718
        %v3091 = vunpack.c.h.b16 %v1718
        %v3092 = vunpack.c.l.b16 %v1719
        %v3093 = vunpack.c.h.b16 %v1719
        %v3094 = vunpack.c.l.b16 %v1720
        %v3095 = vunpack.c.h.b16 %v1720
        %v3096 = vunpack.c.l.b16 %v1721
        %v3097 = vunpack.c.h.b16 %v1721
        %v3098 = vunpack.c.l.b16 %v1722
        %v3099 = vunpack.c.h.b16 %v1722
        %v3100 = vunpack.c.l.b16 %v1723
        %v3101 = vunpack.c.h.b16 %v1723
        %v3102 = vunpack.c.l.b16 %v1724
        %v3103 = vunpack.c.h.b16 %v1724
        %v3104 = vunpack.c.l.b16 %v1725
        %v3105 = vunpack.c.h.b16 %v1725
        %v3106 = vunpack.c.l.b16 %v1726
        %v3107 = vunpack.c.h.b16 %v1726
        %v3108 = vunpack.c.l.b16 %v1727
        %v3109 = vunpack.c.h.b16 %v1727
        %v3110 = vunpack.c.l.b16 %v1728
        %v3111 = vunpack.c.h.b16 %v1728
        %v3112 = vunpack.c.l.b16 %v1729
        %v3113 = vunpack.c.h.b16 %v1729
        %v3114 = vunpack.c.l.b16 %v1730
        %v3115 = vunpack.c.h.b16 %v1730
        %v3116 = vunpack.c.l.b16 %v1731
        %v3117 = vunpack.c.h.b16 %v1731
        %v3118 = vunpack.c.l.b16 %v1732
        %v3119 = vunpack.c.h.b16 %v1732
        %v3120 = vunpack.c.l.b16 %v1733
        %v3121 = vunpack.c.h.b16 %v1733
        %v3122 = vunpack.c.l.b16 %v1734
        %v3123 = vunpack.c.h.b16 %v1734
        %v3124 = vunpack.c.l.b16 %v1735
        %v3125 = vunpack.c.h.b16 %v1735
        %v3126 = vunpack.c.l.b16 %v1736
        %v3127 = vunpack.c.h.b16 %v1736
        %v3128 = vunpack.c.l.b16 %v1737
        %v3129 = vunpack.c.h.b16 %v1737
        %v3130 = vunpack.c.l.b16 %v1738
        %v3131 = vunpack.c.h.b16 %v1738
        %v3132 = vunpack.c.l.b16 %v1739
        %v3133 = vunpack.c.h.b16 %v1739
        %v3134 = vunpack.c.l.b16 %v1740
        %v3135 = vunpack.c.h.b16 %v1740
        %v3136 = vunpack.c.l.b16 %v1741
        %v3137 = vunpack.c.h.b16 %v1741
        %v3138 = vunpack.c.l.b16 %v1742
        %v3139 = vunpack.c.h.b16 %v1742
        %v3140 = vunpack.c.l.b16 %v1743
        %v3141 = vunpack.c.h.b16 %v1743
        %v3142 = vunpack.c.l.b16 %v1744
        %v3143 = vunpack.c.h.b16 %v1744
        %v3144 = vunpack.c.l.b16 %v1745
        %v3145 = vunpack.c.h.b16 %v1745
        %v3146 = vunpack.c.l.b16 %v1746
        %v3147 = vunpack.c.h.b16 %v1746
        %v3148 = vunpack.c.l.b16 %v1747
        %v3149 = vunpack.c.h.b16 %v1747
        %v3150 = vunpack.c.l.b16 %v1748
        %v3151 = vunpack.c.h.b16 %v1748
        %v3152 = vunpack.c.l.b16 %v1749
        %v3153 = vunpack.c.h.b16 %v1749
        %v3154 = vunpack.c.l.b16 %v1750
        %v3155 = vunpack.c.h.b16 %v1750
        %v3156 = vunpack.c.l.b16 %v1751
        %v3157 = vunpack.c.h.b16 %v1751
        %v3158 = vunpack.c.l.b16 %v1752
        %v3159 = vunpack.c.h.b16 %v1752
        %v3160 = vunpack.c.l.b16 %v1753
        %v3161 = vunpack.c.h.b16 %v1753
        %v3162 = vunpack.c.l.b16 %v1754
        %v3163 = vunpack.c.h.b16 %v1754
        %v3164 = vunpack.c.l.b16 %v1755
        %v3165 = vunpack.c.h.b16 %v1755
        %v3166 = vunpack.c.l.b16 %v1756
        %v3167 = vunpack.c.h.b16 %v1756
        %v3168 = vunpack.c.l.b16 %v1757
        %v3169 = vunpack.c.h.b16 %v1757
        %v3170 = vunpack.c.l.b16 %v1758
        %v3171 = vunpack.c.h.b16 %v1758
        %v3172 = vunpack.c.l.b16 %v1759
        %v3173 = vunpack.c.h.b16 %v1759
        %v3174 = vunpack.c.l.b16 %v1760
        %v3175 = vunpack.c.h.b16 %v1760
        %v3176 = vunpack.c.l.b16 %v1761
        %v3177 = vunpack.c.h.b16 %v1761
        %v3178 = vunpack.c.l.b16 %v1762
        %v3179 = vunpack.c.h.b16 %v1762
        %v3180 = vunpack.c.l.b16 %v1763
        %v3181 = vunpack.c.h.b16 %v1763
        %v3182 = vunpack.c.l.b16 %v1764
        %v3183 = vunpack.c.h.b16 %v1764
        %v3184 = vunpack.c.l.b16 %v1765
        %v3185 = vunpack.c.h.b16 %v1765
        %v3186 = vunpack.c.l.b16 %v1766
        %v3187 = vunpack.c.h.b16 %v1766
        %v3188 = vunpack.c.l.b16 %v1767
        %v3189 = vunpack.c.h.b16 %v1767
        %v3190 = vunpack.c.l.b16 %v1768
        %v3191 = vunpack.c.h.b16 %v1768
        %v3192 = vunpack.c.l.b16 %v1769
        %v3193 = vunpack.c.h.b16 %v1769
        %v3194 = vunpack.c.l.b16 %v1770
        %v3195 = vunpack.c.h.b16 %v1770
        %v3196 = vunpack.c.l.b16 %v1771
        %v3197 = vunpack.c.h.b16 %v1771
        %v3198 = vunpack.c.l.b16 %v1772
        %v3199 = vunpack.c.h.b16 %v1772
        %v3200 = vunpack.c.l.b16 %v1773
        %v3201 = vunpack.c.h.b16 %v1773
        %v3202 = vunpack.c.l.b16 %v1774
        %v3203 = vunpack.c.h.b16 %v1774
        %v3204 = vunpack.c.l.b16 %v1775
        %v3205 = vunpack.c.h.b16 %v1775
        %v3206 = vunpack.c.l.b16 %v1776
        %v3207 = vunpack.c.h.b16 %v1776
        %v3208 = vunpack.c.l.b16 %v1777
        %v3209 = vunpack.c.h.b16 %v1777
        %v3210 = vunpack.c.l.b16 %v1778
        %v3211 = vunpack.c.h.b16 %v1778
        %v3212 = vunpack.c.l.b16 %v1779
        %v3213 = vunpack.c.h.b16 %v1779
        %v3214 = vunpack.c.l.b16 %v1780
        %v3215 = vunpack.c.h.b16 %v1780
        %v3216 = vunpack.c.l.b16 %v1781
        %v3217 = vunpack.c.h.b16 %v1781
        %v3218 = vunpack.c.l.b16 %v1782
        %v3219 = vunpack.c.h.b16 %v1782
        %v3220 = vunpack.c.l.b16 %v1783
        %v3221 = vunpack.c.h.b16 %v1783
        %v3222 = vunpack.c.l.b16 %v1784
        %v3223 = vunpack.c.h.b16 %v1784
        %v3224 = vunpack.c.l.b16 %v1785
        %v3225 = vunpack.c.h.b16 %v1785
        %v3226 = vunpack.c.l.b16 %v1786
        %v3227 = vunpack.c.h.b16 %v1786
        %v3228 = vunpack.c.l.b16 %v1787
        %v3229 = vunpack.c.h.b16 %v1787
        %v3230 = vunpack.c.l.b16 %v1788
        %v3231 = vunpack.c.h.b16 %v1788
        %v3232 = vunpack.c.l.b16 %v1789
        %v3233 = vunpack.c.h.b16 %v1789
        %v3234 = vunpack.c.l.b16 %v1790
        %v3235 = vunpack.c.h.b16 %v1790
        %v3236 = vunpack.c.l.b16 %v1791
        %v3237 = vunpack.c.h.b16 %v1791
        %v3238 = vunpack.c.l.b16 %v1792
        %v3239 = vunpack.c.h.b16 %v1792
        %v3240 = vunpack.c.l.b16 %v1793
        %v3241 = vunpack.c.h.b16 %v1793
        %v3242 = vunpack.c.l.b16 %v1794
        %v3243 = vunpack.c.h.b16 %v1794
        %v3244 = vunpack.c.l.b16 %v1795
        %v3245 = vunpack.c.h.b16 %v1795
        %v3246 = vunpack.c.l.b16 %v1796
        %v3247 = vunpack.c.h.b16 %v1796
        %v3248 = vunpack.c.l.b16 %v1797
        %v3249 = vunpack.c.h.b16 %v1797
        %v3250 = vunpack.c.l.b16 %v1798
        %v3251 = vunpack.c.h.b16 %v1798
        %v3252 = vunpack.c.l.b16 %v1799
        %v3253 = vunpack.c.h.b16 %v1799
        %v3254 = vunpack.c.l.b16 %v1800
        %v3255 = vunpack.c.h.b16 %v1800
        %v3256 = vunpack.c.l.b16 %v1801
        %v3257 = vunpack.c.h.b16 %v1801
        %v3258 = vunpack.c.l.b16 %v1802
        %v3259 = vunpack.c.h.b16 %v1802
        %v3260 = vunpack.c.l.b16 %v1803
        %v3261 = vunpack.c.h.b16 %v1803
        %v3262 = vunpack.c.l.b16 %v1804
        %v3263 = vunpack.c.h.b16 %v1804
        %v3264 = vunpack.c.l.b16 %v1805
        %v3265 = vunpack.c.h.b16 %v1805
        %v3266 = vunpack.c.l.b16 %v1806
        %v3267 = vunpack.c.h.b16 %v1806
        %v3268 = vunpack.c.l.b16 %v1807
        %v3269 = vunpack.c.h.b16 %v1807
        %v3270 = vunpack.c.l.b16 %v1808
        %v3271 = vunpack.c.h.b16 %v1808
        %v3272 = vunpack.c.l.b16 %v1809
        %v3273 = vunpack.c.h.b16 %v1809
        %v3274 = vunpack.c.l.b16 %v1810
        %v3275 = vunpack.c.h.b16 %v1810
        %v3276 = vunpack.c.l.b16 %v1811
        %v3277 = vunpack.c.h.b16 %v1811
        %v3278 = vunpack.c.l.b16 %v1812
        %v3279 = vunpack.c.h.b16 %v1812
        %v3280 = vunpack.c.l.b16 %v1813
        %v3281 = vunpack.c.h.b16 %v1813
        %v3282 = vunpack.c.l.b16 %v1814
        %v3283 = vunpack.c.h.b16 %v1814
        %v3284 = vunpack.c.l.b16 %v1815
        %v3285 = vunpack.c.h.b16 %v1815
        %v3286 = vunpack.c.l.b16 %v1816
        %v3287 = vunpack.c.h.b16 %v1816
        %v3288 = vunpack.c.l.b16 %v1817
        %v3289 = vunpack.c.h.b16 %v1817
        %v3290 = vunpack.c.l.b16 %v1818
        %v3291 = vunpack.c.h.b16 %v1818
        %v3292 = vunpack.c.l.b16 %v1819
        %v3293 = vunpack.c.h.b16 %v1819
        %v3294 = vunpack.c.l.b16 %v1820
        %v3295 = vunpack.c.h.b16 %v1820
        %v3296 = vunpack.c.l.b16 %v1821
        %v3297 = vunpack.c.h.b16 %v1821
        %v3298 = vunpack.c.l.b16 %v1822
        %v3299 = vunpack.c.h.b16 %v1822
        %v3300 = vunpack.c.l.b16 %v1823
        %v3301 = vunpack.c.h.b16 %v1823
        %v3302 = vunpack.c.l.b16 %v1824
        %v3303 = vunpack.c.h.b16 %v1824
        %v3304 = vunpack.c.l.b16 %v1825
        %v3305 = vunpack.c.h.b16 %v1825
        %v3306 = vunpack.c.l.b16 %v1826
        %v3307 = vunpack.c.h.b16 %v1826
        %v3308 = vunpack.c.l.b16 %v1827
        %v3309 = vunpack.c.h.b16 %v1827
        %v3310 = vunpack.c.l.b16 %v1828
        %v3311 = vunpack.c.h.b16 %v1828
        %v3312 = vunpack.c.l.b16 %v1829
        %v3313 = vunpack.c.h.b16 %v1829
        %v3314 = vunpack.c.l.b16 %v1830
        %v3315 = vunpack.c.h.b16 %v1830
        %v3316 = vunpack.c.l.b16 %v1831
        %v3317 = vunpack.c.h.b16 %v1831
        %v3318 = vunpack.c.l.b16 %v1832
        %v3319 = vunpack.c.h.b16 %v1832
        %v3320 = vunpack.c.l.b16 %v1833
        %v3321 = vunpack.c.h.b16 %v1833
        %v3322 = vunpack.c.l.b16 %v1834
        %v3323 = vunpack.c.h.b16 %v1834
        %v3324 = vunpack.c.l.b16 %v1835
        %v3325 = vunpack.c.h.b16 %v1835
        %v3326 = vunpack.c.l.b16 %v1836
        %v3327 = vunpack.c.h.b16 %v1836
        %v3328 = vunpack.c.l.b16 %v1837
        %v3329 = vunpack.c.h.b16 %v1837
        %v3330 = vunpack.c.l.b16 %v1838
        %v3331 = vunpack.c.h.b16 %v1838
        %v3332 = vunpack.c.l.b16 %v1839
        %v3333 = vunpack.c.h.b16 %v1839
        %v3334 = vunpack.c.l.b16 %v1840
        %v3335 = vunpack.c.h.b16 %v1840
        %v3336 = vunpack.c.l.b16 %v1841
        %v3337 = vunpack.c.h.b16 %v1841
        %v3338 = vunpack.c.l.b16 %v1842
        %v3339 = vunpack.c.h.b16 %v1842
        %v3340 = vunpack.c.l.b16 %v1843
        %v3341 = vunpack.c.h.b16 %v1843
        %v3342 = vunpack.c.l.b16 %v1844
        %v3343 = vunpack.c.h.b16 %v1844
        %v3344 = vunpack.c.l.b16 %v1845
        %v3345 = vunpack.c.h.b16 %v1845
        %v3346 = vunpack.c.l.b16 %v1846
        %v3347 = vunpack.c.h.b16 %v1846
        %v3348 = vunpack.c.l.b16 %v1847
        %v3349 = vunpack.c.h.b16 %v1847
        %v3350 = vunpack.c.l.b16 %v1848
        %v3351 = vunpack.c.h.b16 %v1848
        %v3352 = vunpack.c.l.b16 %v1849
        %v3353 = vunpack.c.h.b16 %v1849
        %v3354 = vunpack.c.l.b16 %v1850
        %v3355 = vunpack.c.h.b16 %v1850
        %v3356 = vunpack.c.l.b16 %v1851
        %v3357 = vunpack.c.h.b16 %v1851
        %v3358 = vunpack.c.l.b16 %v1852
        %v3359 = vunpack.c.h.b16 %v1852
        %v3360 = vunpack.c.l.b16 %v1853
        %v3361 = vunpack.c.h.b16 %v1853
        %v3362 = vunpack.c.l.b16 %v1854
        %v3363 = vunpack.c.h.b16 %v1854
        %v3364 = vunpack.c.l.b16 %v1855
        %v3365 = vunpack.c.h.b16 %v1855
        %v3366 = vunpack.c.l.b16 %v1856
        %v3367 = vunpack.c.h.b16 %v1856
        %v3368 = vunpack.c.l.b16 %v1857
        %v3369 = vunpack.c.h.b16 %v1857
        %v3370 = vunpack.c.l.b16 %v1858
        %v3371 = vunpack.c.h.b16 %v1858
        %v3372 = vunpack.c.l.b16 %v1859
        %v3373 = vunpack.c.h.b16 %v1859
        %v3374 = vunpack.c.l.b16 %v1860
        %v3375 = vunpack.c.h.b16 %v1860
        %v3376 = vunpack.c.l.b16 %v1861
        %v3377 = vunpack.c.h.b16 %v1861
        %v3378 = vunpack.c.l.b16 %v1862
        %v3379 = vunpack.c.h.b16 %v1862
        %v3380 = vunpack.c.l.b16 %v1863
        %v3381 = vunpack.c.h.b16 %v1863
        %v3382 = vunpack.c.l.b16 %v1864
        %v3383 = vunpack.c.h.b16 %v1864
        %v3384 = vunpack.c.l.b16 %v1865
        %v3385 = vunpack.c.h.b16 %v1865
        %v3386 = vunpack.c.l.b16 %v1866
        %v3387 = vunpack.c.h.b16 %v1866
        %v3388 = vunpack.c.l.b16 %v1867
        %v3389 = vunpack.c.h.b16 %v1867
        %v3390 = vunpack.c.l.b16 %v1868
        %v3391 = vunpack.c.h.b16 %v1868
        %v3392 = vunpack.c.l.b16 %v1869
        %v3393 = vunpack.c.h.b16 %v1869
        %v3394 = vunpack.c.l.b16 %v1870
        %v3395 = vunpack.c.h.b16 %v1870
        %v3396 = vunpack.c.l.b16 %v1871
        %v3397 = vunpack.c.h.b16 %v1871
        %v3398 = vunpack.c.l.b16 %v1872
        %v3399 = vunpack.c.h.b16 %v1872
        %v3400 = vunpack.c.l.b16 %v1873
        %v3401 = vunpack.c.h.b16 %v1873
        %v3402 = vunpack.c.l.b16 %v1874
        %v3403 = vunpack.c.h.b16 %v1874
        %v3404 = vunpack.c.l.b16 %v1875
        %v3405 = vunpack.c.h.b16 %v1875
        %v3406 = vunpack.c.l.b16 %v1876
        %v3407 = vunpack.c.h.b16 %v1876
        %v3408 = vunpack.c.l.b16 %v1877
        %v3409 = vunpack.c.h.b16 %v1877
        %v3410 = vunpack.c.l.b16 %v1878
        %v3411 = vunpack.c.h.b16 %v1878
        %v3412 = vunpack.c.l.b16 %v1879
        %v3413 = vunpack.c.h.b16 %v1879
        %v3414 = vunpack.c.l.b16 %v1880
        %v3415 = vunpack.c.h.b16 %v1880
        %v3416 = vunpack.c.l.b16 %v1881
        %v3417 = vunpack.c.h.b16 %v1881
        %v3418 = vpack.c.b16 %v2402, %v2394
        %v3419 = vpack.c.b16 %v2403, %v2395
        %v3420 = vpack.c.b16 %v2404, %v2396
        %v3421 = vpack.c.b16 %v2405, %v2397
        %v3422 = vpack.c.b16 %v2406, %v2398
        %v3423 = vpack.c.b16 %v2407, %v2399
        %v3424 = vpack.c.b16 %v2408, %v2400
        %v3425 = vpack.c.b16 %v2409, %v2401
        %v3426 = vpack.c.b16 %v2418, %v2410
        %v3427 = vpack.c.b16 %v2419, %v2411
        %v3428 = vpack.c.b16 %v2420, %v2412
        %v3429 = vpack.c.b16 %v2421, %v2413
        %v3430 = vpack.c.b16 %v2422, %v2414
        %v3431 = vpack.c.b16 %v2423, %v2415
        %v3432 = vpack.c.b16 %v2424, %v2416
        %v3433 = vpack.c.b16 %v2425, %v2417
        %v3434 = vpack.c.b16 %v2434, %v2426
        %v3435 = vpack.c.b16 %v2435, %v2427
        %v3436 = vpack.c.b16 %v2436, %v2428
        %v3437 = vpack.c.b16 %v2437, %v2429
        %v3438 = vpack.c.b16 %v2438, %v2430
        %v3439 = vpack.c.b16 %v2439, %v2431
        %v3440 = vpack.c.b16 %v2440, %v2432
        %v3441 = vpack.c.b16 %v2441, %v2433
        %v3442 = vpack.c.b16 %v2450, %v2442
        %v3443 = vpack.c.b16 %v2451, %v2443
        %v3444 = vpack.c.b16 %v2452, %v2444
        %v3445 = vpack.c.b16 %v2453, %v2445
        %v3446 = vpack.c.b16 %v2454, %v2446
        %v3447 = vpack.c.b16 %v2455, %v2447
        %v3448 = vpack.c.b16 %v2456, %v2448
        %v3449 = vpack.c.b16 %v2457, %v2449
        %v3450 = vpack.c.b16 %v2466, %v2458
        %v3451 = vpack.c.b16 %v2467, %v2459
        %v3452 = vpack.c.b16 %v2468, %v2460
        %v3453 = vpack.c.b16 %v2469, %v2461
        %v3454 = vpack.c.b16 %v2470, %v2462
        %v3455 = vpack.c.b16 %v2471, %v2463
        %v3456 = vpack.c.b16 %v2472, %v2464
        %v3457 = vpack.c.b16 %v2473, %v2465
        %v3458 = vpack.c.b16 %v2482, %v2474
        %v3459 = vpack.c.b16 %v2483, %v2475
        %v3460 = vpack.c.b16 %v2484, %v2476
        %v3461 = vpack.c.b16 %v2485, %v2477
        %v3462 = vpack.c.b16 %v2486, %v2478
        %v3463 = vpack.c.b16 %v2487, %v2479
        %v3464 = vpack.c.b16 %v2488, %v2480
        %v3465 = vpack.c.b16 %v2489, %v2481
        %v3466 = vpack.c.b16 %v2498, %v2490
        %v3467 = vpack.c.b16 %v2499, %v2491
        %v3468 = vpack.c.b16 %v2500, %v2492
        %v3469 = vpack.c.b16 %v2501, %v2493
        %v3470 = vpack.c.b16 %v2502, %v2494
        %v3471 = vpack.c.b16 %v2503, %v2495
        %v3472 = vpack.c.b16 %v2504, %v2496
        %v3473 = vpack.c.b16 %v2505, %v2497
        %v3474 = vpack.c.b16 %v2514, %v2506
        %v3475 = vpack.c.b16 %v2515, %v2507
        %v3476 = vpack.c.b16 %v2516, %v2508
        %v3477 = vpack.c.b16 %v2517, %v2509
        %v3478 = vpack.c.b16 %v2518, %v2510
        %v3479 = vpack.c.b16 %v2519, %v2511
        %v3480 = vpack.c.b16 %v2520, %v2512
        %v3481 = vpack.c.b16 %v2521, %v2513
        %v3482 = vpack.c.b16 %v2530, %v2522
        %v3483 = vpack.c.b16 %v2531, %v2523
        %v3484 = vpack.c.b16 %v2532, %v2524
        %v3485 = vpack.c.b16 %v2533, %v2525
        %v3486 = vpack.c.b16 %v2534, %v2526
        %v3487 = vpack.c.b16 %v2535, %v2527
        %v3488 = vpack.c.b16 %v2536, %v2528
        %v3489 = vpack.c.b16 %v2537, %v2529
        %v3490 = vpack.c.b16 %v2546, %v2538
        %v3491 = vpack.c.b16 %v2547, %v2539
        %v3492 = vpack.c.b16 %v2548, %v2540
        %v3493 = vpack.c.b16 %v2549, %v2541
        %v3494 = vpack.c.b16 %v2550, %v2542
        %v3495 = vpack.c.b16 %v2551, %v2543
        %v3496 = vpack.c.b16 %v2552, %v2544
        %v3497 = vpack.c.b16 %v2553, %v2545
        %v3498 = vpack.c.b16 %v2562, %v2554
        %v3499 = vpack.c.b16 %v2563, %v2555
        %v3500 = vpack.c.b16 %v2564, %v2556
        %v3501 = vpack.c.b16 %v2565, %v2557
        %v3502 = vpack.c.b16 %v2566, %v2558
        %v3503 = vpack.c.b16 %v2567, %v2559
        %v3504 = vpack.c.b16 %v2568, %v2560
        %v3505 = vpack.c.b16 %v2569, %v2561
        %v3506 = vpack.c.b16 %v2578, %v2570
        %v3507 = vpack.c.b16 %v2579, %v2571
        %v3508 = vpack.c.b16 %v2580, %v2572
        %v3509 = vpack.c.b16 %v2581, %v2573
        %v3510 = vpack.c.b16 %v2582, %v2574
        %v3511 = vpack.c.b16 %v2583, %v2575
        %v3512 = vpack.c.b16 %v2584, %v2576
        %v3513 = vpack.c.b16 %v2585, %v2577
        %v3514 = vpack.c.b16 %v2594, %v2586
        %v3515 = vpack.c.b16 %v2595, %v2587
        %v3516 = vpack.c.b16 %v2596, %v2588
        %v3517 = vpack.c.b16 %v2597, %v2589
        %v3518 = vpack.c.b16 %v2598, %v2590
        %v3519 = vpack.c.b16 %v2599, %v2591
        %v3520 = vpack.c.b16 %v2600, %v2592
        %v3521 = vpack.c.b16 %v2601, %v2593
        %v3522 = vpack.c.b16 %v2610, %v2602
        %v3523 = vpack.c.b16 %v2611, %v2603
        %v3524 = vpack.c.b16 %v2612, %v2604
        %v3525 = vpack.c.b16 %v2613, %v2605
        %v3526 = vpack.c.b16 %v2614, %v2606
        %v3527 = vpack.c.b16 %v2615, %v2607
        %v3528 = vpack.c.b16 %v2616, %v2608
        %v3529 = vpack.c.b16 %v2617, %v2609
        %v3530 = vpack.c.b16 %v2626, %v2618
        %v3531 = vpack.c.b16 %v2627, %v2619
        %v3532 = vpack.c.b16 %v2628, %v2620
        %v3533 = vpack.c.b16 %v2629, %v2621
        %v3534 = vpack.c.b16 %v2630, %v2622
        %v3535 = vpack.c.b16 %v2631, %v2623
        %v3536 = vpack.c.b16 %v2632, %v2624
        %v3537 = vpack.c.b16 %v2633, %v2625
        %v3538 = vpack.c.b16 %v2642, %v2634
        %v3539 = vpack.c.b16 %v2643, %v2635
        %v3540 = vpack.c.b16 %v2644, %v2636
        %v3541 = vpack.c.b16 %v2645, %v2637
        %v3542 = vpack.c.b16 %v2646, %v2638
        %v3543 = vpack.c.b16 %v2647, %v2639
        %v3544 = vpack.c.b16 %v2648, %v2640
        %v3545 = vpack.c.b16 %v2649, %v2641
        %v3546 = vpack.c.b16 %v2658, %v2650
        %v3547 = vpack.c.b16 %v2659, %v2651
        %v3548 = vpack.c.b16 %v2660, %v2652
        %v3549 = vpack.c.b16 %v2661, %v2653
        %v3550 = vpack.c.b16 %v2662, %v2654
        %v3551 = vpack.c.b16 %v2663, %v2655
        %v3552 = vpack.c.b16 %v2664, %v2656
        %v3553 = vpack.c.b16 %v2665, %v2657
        %v3554 = vpack.c.b16 %v2674, %v2666
        %v3555 = vpack.c.b16 %v2675, %v2667
        %v3556 = vpack.c.b16 %v2676, %v2668
        %v3557 = vpack.c.b16 %v2677, %v2669
        %v3558 = vpack.c.b16 %v2678, %v2670
        %v3559 = vpack.c.b16 %v2679, %v2671
        %v3560 = vpack.c.b16 %v2680, %v2672
        %v3561 = vpack.c.b16 %v2681, %v2673
        %v3562 = vpack.c.b16 %v2690, %v2682
        %v3563 = vpack.c.b16 %v2691, %v2683
        %v3564 = vpack.c.b16 %v2692, %v2684
        %v3565 = vpack.c.b16 %v2693, %v2685
        %v3566 = vpack.c.b16 %v2694, %v2686
        %v3567 = vpack.c.b16 %v2695, %v2687
        %v3568 = vpack.c.b16 %v2696, %v2688
        %v3569 = vpack.c.b16 %v2697, %v2689
        %v3570 = vpack.c.b16 %v2706, %v2698
        %v3571 = vpack.c.b16 %v2707, %v2699
        %v3572 = vpack.c.b16 %v2708, %v2700
        %v3573 = vpack.c.b16 %v2709, %v2701
        %v3574 = vpack.c.b16 %v2710, %v2702
        %v3575 = vpack.c.b16 %v2711, %v2703
        %v3576 = vpack.c.b16 %v2712, %v2704
        %v3577 = vpack.c.b16 %v2713, %v2705
        %v3578 = vpack.c.b16 %v2722, %v2714
        %v3579 = vpack.c.b16 %v2723, %v2715
        %v3580 = vpack.c.b16 %v2724, %v2716
        %v3581 = vpack.c.b16 %v2725, %v2717
        %v3582 = vpack.c.b16 %v2726, %v2718
        %v3583 = vpack.c.b16 %v2727, %v2719
        %v3584 = vpack.c.b16 %v2728, %v2720
        %v3585 = vpack.c.b16 %v2729, %v2721
        %v3586 = vpack.c.b16 %v2738, %v2730
        %v3587 = vpack.c.b16 %v2739, %v2731
        %v3588 = vpack.c.b16 %v2740, %v2732
        %v3589 = vpack.c.b16 %v2741, %v2733
        %v3590 = vpack.c.b16 %v2742, %v2734
        %v3591 = vpack.c.b16 %v2743, %v2735
        %v3592 = vpack.c.b16 %v2744, %v2736
        %v3593 = vpack.c.b16 %v2745, %v2737
        %v3594 = vpack.c.b16 %v2754, %v2746
        %v3595 = vpack.c.b16 %v2755, %v2747
        %v3596 = vpack.c.b16 %v2756, %v2748
        %v3597 = vpack.c.b16 %v2757, %v2749
        %v3598 = vpack.c.b16 %v2758, %v2750
        %v3599 = vpack.c.b16 %v2759, %v2751
        %v3600 = vpack.c.b16 %v2760, %v2752
        %v3601 = vpack.c.b16 %v2761, %v2753
        %v3602 = vpack.c.b16 %v2770, %v2762
        %v3603 = vpack.c.b16 %v2771, %v2763
        %v3604 = vpack.c.b16 %v2772, %v2764
        %v3605 = vpack.c.b16 %v2773, %v2765
        %v3606 = vpack.c.b16 %v2774, %v2766
        %v3607 = vpack.c.b16 %v2775, %v2767
        %v3608 = vpack.c.b16 %v2776, %v2768
        %v3609 = vpack.c.b16 %v2777, %v2769
        %v3610 = vpack.c.b16 %v2786, %v2778
        %v3611 = vpack.c.b16 %v2787, %v2779
        %v3612 = vpack.c.b16 %v2788, %v2780
        %v3613 = vpack.c.b16 %v2789, %v2781
        %v3614 = vpack.c.b16 %v2790, %v2782
        %v3615 = vpack.c.b16 %v2791, %v2783
        %v3616 = vpack.c.b16 %v2792, %v2784
        %v3617 = vpack.c.b16 %v2793, %v2785
        %v3618 = vpack.c.b16 %v2802, %v2794
        %v3619 = vpack.c.b16 %v2803, %v2795
        %v3620 = vpack.c.b16 %v2804, %v2796
        %v3621 = vpack.c.b16 %v2805, %v2797
        %v3622 = vpack.c.b16 %v2806, %v2798
        %v3623 = vpack.c.b16 %v2807, %v2799
        %v3624 = vpack.c.b16 %v2808, %v2800
        %v3625 = vpack.c.b16 %v2809, %v2801
        %v3626 = vpack.c.b16 %v2818, %v2810
        %v3627 = vpack.c.b16 %v2819, %v2811
        %v3628 = vpack.c.b16 %v2820, %v2812
        %v3629 = vpack.c.b16 %v2821, %v2813
        %v3630 = vpack.c.b16 %v2822, %v2814
        %v3631 = vpack.c.b16 %v2823, %v2815
        %v3632 = vpack.c.b16 %v2824, %v2816
        %v3633 = vpack.c.b16 %v2825, %v2817
        %v3634 = vpack.c.b16 %v2834, %v2826
        %v3635 = vpack.c.b16 %v2835, %v2827
        %v3636 = vpack.c.b16 %v2836, %v2828
        %v3637 = vpack.c.b16 %v2837, %v2829
        %v3638 = vpack.c.b16 %v2838, %v2830
        %v3639 = vpack.c.b16 %v2839, %v2831
        %v3640 = vpack.c.b16 %v2840, %v2832
        %v3641 = vpack.c.b16 %v2841, %v2833
        %v3642 = vpack.c.b16 %v2850, %v2842
        %v3643 = vpack.c.b16 %v2851, %v2843
        %v3644 = vpack.c.b16 %v2852, %v2844
        %v3645 = vpack.c.b16 %v2853, %v2845
        %v3646 = vpack.c.b16 %v2854, %v2846
        %v3647 = vpack.c.b16 %v2855, %v2847
        %v3648 = vpack.c.b16 %v2856, %v2848
        %v3649 = vpack.c.b16 %v2857, %v2849
        %v3650 = vpack.c.b16 %v2866, %v2858
        %v3651 = vpack.c.b16 %v2867, %v2859
        %v3652 = vpack.c.b16 %v2868, %v2860
        %v3653 = vpack.c.b16 %v2869, %v2861
        %v3654 = vpack.c.b16 %v2870, %v2862
        %v3655 = vpack.c.b16 %v2871, %v2863
        %v3656 = vpack.c.b16 %v2872, %v2864
        %v3657 = vpack.c.b16 %v2873, %v2865
        %v3658 = vpack.c.b16 %v2882, %v2874
        %v3659 = vpack.c.b16 %v2883, %v2875
        %v3660 = vpack.c.b16 %v2884, %v2876
        %v3661 = vpack.c.b16 %v2885, %v2877
        %v3662 = vpack.c.b16 %v2886, %v2878
        %v3663 = vpack.c.b16 %v2887, %v2879
        %v3664 = vpack.c.b16 %v2888, %v2880
        %v3665 = vpack.c.b16 %v2889, %v2881
        %v3666 = vpack.c.b16 %v2898, %v2890
        %v3667 = vpack.c.b16 %v2899, %v2891
        %v3668 = vpack.c.b16 %v2900, %v2892
        %v3669 = vpack.c.b16 %v2901, %v2893
        %v3670 = vpack.c.b16 %v2902, %v2894
        %v3671 = vpack.c.b16 %v2903, %v2895
        %v3672 = vpack.c.b16 %v2904, %v2896
        %v3673 = vpack.c.b16 %v2905, %v2897
        %v3674 = vpack.c.b16 %v2914, %v2906
        %v3675 = vpack.c.b16 %v2915, %v2907
        %v3676 = vpack.c.b16 %v2916, %v2908
        %v3677 = vpack.c.b16 %v2917, %v2909
        %v3678 = vpack.c.b16 %v2918, %v2910
        %v3679 = vpack.c.b16 %v2919, %v2911
        %v3680 = vpack.c.b16 %v2920, %v2912
        %v3681 = vpack.c.b16 %v2921, %v2913
        %v3682 = vpack.c.b16 %v2930, %v2922
        %v3683 = vpack.c.b16 %v2931, %v2923
        %v3684 = vpack.c.b16 %v2932, %v2924
        %v3685 = vpack.c.b16 %v2933, %v2925
        %v3686 = vpack.c.b16 %v2934, %v2926
        %v3687 = vpack.c.b16 %v2935, %v2927
        %v3688 = vpack.c.b16 %v2936, %v2928
        %v3689 = vpack.c.b16 %v2937, %v2929
        %v3690 = vpack.c.b16 %v2946, %v2938
        %v3691 = vpack.c.b16 %v2947, %v2939
        %v3692 = vpack.c.b16 %v2948, %v2940
        %v3693 = vpack.c.b16 %v2949, %v2941
        %v3694 = vpack.c.b16 %v2950, %v2942
        %v3695 = vpack.c.b16 %v2951, %v2943
        %v3696 = vpack.c.b16 %v2952, %v2944
        %v3697 = vpack.c.b16 %v2953, %v2945
        %v3698 = vpack.c.b16 %v2962, %v2954
        %v3699 = vpack.c.b16 %v2963, %v2955
        %v3700 = vpack.c.b16 %v2964, %v2956
        %v3701 = vpack.c.b16 %v2965, %v2957
        %v3702 = vpack.c.b16 %v2966, %v2958
        %v3703 = vpack.c.b16 %v2967, %v2959
        %v3704 = vpack.c.b16 %v2968, %v2960
        %v3705 = vpack.c.b16 %v2969, %v2961
        %v3706 = vpack.c.b16 %v2978, %v2970
        %v3707 = vpack.c.b16 %v2979, %v2971
        %v3708 = vpack.c.b16 %v2980, %v2972
        %v3709 = vpack.c.b16 %v2981, %v2973
        %v3710 = vpack.c.b16 %v2982, %v2974
        %v3711 = vpack.c.b16 %v2983, %v2975
        %v3712 = vpack.c.b16 %v2984, %v2976
        %v3713 = vpack.c.b16 %v2985, %v2977
        %v3714 = vpack.c.b16 %v2994, %v2986
        %v3715 = vpack.c.b16 %v2995, %v2987
        %v3716 = vpack.c.b16 %v2996, %v2988
        %v3717 = vpack.c.b16 %v2997, %v2989
        %v3718 = vpack.c.b16 %v2998, %v2990
        %v3719 = vpack.c.b16 %v2999, %v2991
        %v3720 = vpack.c.b16 %v3000, %v2992
        %v3721 = vpack.c.b16 %v3001, %v2993
        %v3722 = vpack.c.b16 %v3010, %v3002
        %v3723 = vpack.c.b16 %v3011, %v3003
        %v3724 = vpack.c.b16 %v3012, %v3004
        %v3725 = vpack.c.b16 %v3013, %v3005
        %v3726 = vpack.c.b16 %v3014, %v3006
        %v3727 = vpack.c.b16 %v3015, %v3007
        %v3728 = vpack.c.b16 %v3016, %v3008
        %v3729 = vpack.c.b16 %v3017, %v3009
        %v3730 = vpack.c.b16 %v3026, %v3018
        %v3731 = vpack.c.b16 %v3027, %v3019
        %v3732 = vpack.c.b16 %v3028, %v3020
        %v3733 = vpack.c.b16 %v3029, %v3021
        %v3734 = vpack.c.b16 %v3030, %v3022
        %v3735 = vpack.c.b16 %v3031, %v3023
        %v3736 = vpack.c.b16 %v3032, %v3024
        %v3737 = vpack.c.b16 %v3033, %v3025
        %v3738 = vpack.c.b16 %v3042, %v3034
        %v3739 = vpack.c.b16 %v3043, %v3035
        %v3740 = vpack.c.b16 %v3044, %v3036
        %v3741 = vpack.c.b16 %v3045, %v3037
        %v3742 = vpack.c.b16 %v3046, %v3038
        %v3743 = vpack.c.b16 %v3047, %v3039
        %v3744 = vpack.c.b16 %v3048, %v3040
        %v3745 = vpack.c.b16 %v3049, %v3041
        %v3746 = vpack.c.b16 %v3058, %v3050
        %v3747 = vpack.c.b16 %v3059, %v3051
        %v3748 = vpack.c.b16 %v3060, %v3052
        %v3749 = vpack.c.b16 %v3061, %v3053
        %v3750 = vpack.c.b16 %v3062, %v3054
        %v3751 = vpack.c.b16 %v3063, %v3055
        %v3752 = vpack.c.b16 %v3064, %v3056
        %v3753 = vpack.c.b16 %v3065, %v3057
        %v3754 = vpack.c.b16 %v3074, %v3066
        %v3755 = vpack.c.b16 %v3075, %v3067
        %v3756 = vpack.c.b16 %v3076, %v3068
        %v3757 = vpack.c.b16 %v3077, %v3069
        %v3758 = vpack.c.b16 %v3078, %v3070
        %v3759 = vpack.c.b16 %v3079, %v3071
        %v3760 = vpack.c.b16 %v3080, %v3072
        %v3761 = vpack.c.b16 %v3081, %v3073
        %v3762 = vpack.c.b16 %v3090, %v3082
        %v3763 = vpack.c.b16 %v3091, %v3083
        %v3764 = vpack.c.b16 %v3092, %v3084
        %v3765 = vpack.c.b16 %v3093, %v3085
        %v3766 = vpack.c.b16 %v3094, %v3086
        %v3767 = vpack.c.b16 %v3095, %v3087
        %v3768 = vpack.c.b16 %v3096, %v3088
        %v3769 = vpack.c.b16 %v3097, %v3089
        %v3770 = vpack.c.b16 %v3106, %v3098
        %v3771 = vpack.c.b16 %v3107, %v3099
        %v3772 = vpack.c.b16 %v3108, %v3100
        %v3773 = vpack.c.b16 %v3109, %v3101
        %v3774 = vpack.c.b16 %v3110, %v3102
        %v3775 = vpack.c.b16 %v3111, %v3103
        %v3776 = vpack.c.b16 %v3112, %v3104
        %v3777 = vpack.c.b16 %v3113, %v3105
        %v3778 = vpack.c.b16 %v3122, %v3114
        %v3779 = vpack.c.b16 %v3123, %v3115
        %v3780 = vpack.c.b16 %v3124, %v3116
        %v3781 = vpack.c.b16 %v3125, %v3117
        %v3782 = vpack.c.b16 %v3126, %v3118
        %v3783 = vpack.c.b16 %v3127, %v3119
        %v3784 = vpack.c.b16 %v3128, %v3120
        %v3785 = vpack.c.b16 %v3129, %v3121
        %v3786 = vpack.c.b16 %v3138, %v3130
        %v3787 = vpack.c.b16 %v3139, %v3131
        %v3788 = vpack.c.b16 %v3140, %v3132
        %v3789 = vpack.c.b16 %v3141, %v3133
        %v3790 = vpack.c.b16 %v3142, %v3134
        %v3791 = vpack.c.b16 %v3143, %v3135
        %v3792 = vpack.c.b16 %v3144, %v3136
        %v3793 = vpack.c.b16 %v3145, %v3137
        %v3794 = vpack.c.b16 %v3154, %v3146
        %v3795 = vpack.c.b16 %v3155, %v3147
        %v3796 = vpack.c.b16 %v3156, %v3148
        %v3797 = vpack.c.b16 %v3157, %v3149
        %v3798 = vpack.c.b16 %v3158, %v3150
        %v3799 = vpack.c.b16 %v3159, %v3151
        %v3800 = vpack.c.b16 %v3160, %v3152
        %v3801 = vpack.c.b16 %v3161, %v3153
        %v3802 = vpack.c.b16 %v3170, %v3162
        %v3803 = vpack.c.b16 %v3171, %v3163
        %v3804 = vpack.c.b16 %v3172, %v3164
        %v3805 = vpack.c.b16 %v3173, %v3165
        %v3806 = vpack.c.b16 %v3174, %v3166
        %v3807 = vpack.c.b16 %v3175, %v3167
        %v3808 = vpack.c.b16 %v3176, %v3168
        %v3809 = vpack.c.b16 %v3177, %v3169
        %v3810 = vpack.c.b16 %v3186, %v3178
        %v3811 = vpack.c.b16 %v3187, %v3179
        %v3812 = vpack.c.b16 %v3188, %v3180
        %v3813 = vpack.c.b16 %v3189, %v3181
        %v3814 = vpack.c.b16 %v3190, %v3182
        %v3815 = vpack.c.b16 %v3191, %v3183
        %v3816 = vpack.c.b16 %v3192, %v3184
        %v3817 = vpack.c.b16 %v3193, %v3185
        %v3818 = vpack.c.b16 %v3202, %v3194
        %v3819 = vpack.c.b16 %v3203, %v3195
        %v3820 = vpack.c.b16 %v3204, %v3196
        %v3821 = vpack.c.b16 %v3205, %v3197
        %v3822 = vpack.c.b16 %v3206, %v3198
        %v3823 = vpack.c.b16 %v3207, %v3199
        %v3824 = vpack.c.b16 %v3208, %v3200
        %v3825 = vpack.c.b16 %v3209, %v3201
        %v3826 = vpack.c.b16 %v3218, %v3210
        %v3827 = vpack.c.b16 %v3219, %v3211
        %v3828 = vpack.c.b16 %v3220, %v3212
        %v3829 = vpack.c.b16 %v3221, %v3213
        %v3830 = vpack.c.b16 %v3222, %v3214
        %v3831 = vpack.c.b16 %v3223, %v3215
        %v3832 = vpack.c.b16 %v3224, %v3216
        %v3833 = vpack.c.b16 %v3225, %v3217
        %v3834 = vpack.c.b16 %v3234, %v3226
        %v3835 = vpack.c.b16 %v3235, %v3227
        %v3836 = vpack.c.b16 %v3236, %v3228
        %v3837 = vpack.c.b16 %v3237, %v3229
        %v3838 = vpack.c.b16 %v3238, %v3230
        %v3839 = vpack.c.b16 %v3239, %v3231
        %v3840 = vpack.c.b16 %v3240, %v3232
        %v3841 = vpack.c.b16 %v3241, %v3233
        %v3842 = vpack.c.b16 %v3250, %v3242
        %v3843 = vpack.c.b16 %v3251, %v3243
        %v3844 = vpack.c.b16 %v3252, %v3244
        %v3845 = vpack.c.b16 %v3253, %v3245
        %v3846 = vpack.c.b16 %v3254, %v3246
        %v3847 = vpack.c.b16 %v3255, %v3247
        %v3848 = vpack.c.b16 %v3256, %v3248
        %v3849 = vpack.c.b16 %v3257, %v3249
        %v3850 = vpack.c.b16 %v3266, %v3258
        %v3851 = vpack.c.b16 %v3267, %v3259
        %v3852 = vpack.c.b16 %v3268, %v3260
        %v3853 = vpack.c.b16 %v3269, %v3261
        %v3854 = vpack.c.b16 %v3270, %v3262
        %v3855 = vpack.c.b16 %v3271, %v3263
        %v3856 = vpack.c.b16 %v3272, %v3264
        %v3857 = vpack.c.b16 %v3273, %v3265
        %v3858 = vpack.c.b16 %v3282, %v3274
        %v3859 = vpack.c.b16 %v3283, %v3275
        %v3860 = vpack.c.b16 %v3284, %v3276
        %v3861 = vpack.c.b16 %v3285, %v3277
        %v3862 = vpack.c.b16 %v3286, %v3278
        %v3863 = vpack.c.b16 %v3287, %v3279
        %v3864 = vpack.c.b16 %v3288, %v3280
        %v3865 = vpack.c.b16 %v3289, %v3281
        %v3866 = vpack.c.b16 %v3298, %v3290
        %v3867 = vpack.c.b16 %v3299, %v3291
        %v3868 = vpack.c.b16 %v3300, %v3292
        %v3869 = vpack.c.b16 %v3301, %v3293
        %v3870 = vpack.c.b16 %v3302, %v3294
        %v3871 = vpack.c.b16 %v3303, %v3295
        %v3872 = vpack.c.b16 %v3304, %v3296
        %v3873 = vpack.c.b16 %v3305, %v3297
        %v3874 = vpack.c.b16 %v3314, %v3306
        %v3875 = vpack.c.b16 %v3315, %v3307
        %v3876 = vpack.c.b16 %v3316, %v3308
        %v3877 = vpack.c.b16 %v3317, %v3309
        %v3878 = vpack.c.b16 %v3318, %v3310
        %v3879 = vpack.c.b16 %v3319, %v3311
        %v3880 = vpack.c.b16 %v3320, %v3312
        %v3881 = vpack.c.b16 %v3321, %v3313
        %v3882 = vpack.c.b16 %v3330, %v3322
        %v3883 = vpack.c.b16 %v3331, %v3323
        %v3884 = vpack.c.b16 %v3332, %v3324
        %v3885 = vpack.c.b16 %v3333, %v3325
        %v3886 = vpack.c.b16 %v3334, %v3326
        %v3887 = vpack.c.b16 %v3335, %v3327
        %v3888 = vpack.c.b16 %v3336, %v3328
        %v3889 = vpack.c.b16 %v3337, %v3329
        %v3890 = vpack.c.b16 %v3346, %v3338
        %v3891 = vpack.c.b16 %v3347, %v3339
        %v3892 = vpack.c.b16 %v3348, %v3340
        %v3893 = vpack.c.b16 %v3349, %v3341
        %v3894 = vpack.c.b16 %v3350, %v3342
        %v3895 = vpack.c.b16 %v3351, %v3343
        %v3896 = vpack.c.b16 %v3352, %v3344
        %v3897 = vpack.c.b16 %v3353, %v3345
        %v3898 = vpack.c.b16 %v3362, %v3354
        %v3899 = vpack.c.b16 %v3363, %v3355
        %v3900 = vpack.c.b16 %v3364, %v3356
        %v3901 = vpack.c.b16 %v3365, %v3357
        %v3902 = vpack.c.b16 %v3366, %v3358
        %v3903 = vpack.c.b16 %v3367, %v3359
        %v3904 = vpack.c.b16 %v3368, %v3360
        %v3905 = vpack.c.b16 %v3369, %v3361
        %v3906 = vpack.c.b16 %v3378, %v3370
        %v3907 = vpack.c.b16 %v3379, %v3371
        %v3908 = vpack.c.b16 %v3380, %v3372
        %v3909 = vpack.c.b16 %v3381, %v3373
        %v3910 = vpack.c.b16 %v3382, %v3374
        %v3911 = vpack.c.b16 %v3383, %v3375
        %v3912 = vpack.c.b16 %v3384, %v3376
        %v3913 = vpack.c.b16 %v3385, %v3377
        %v3914 = vpack.c.b16 %v3394, %v3386
        %v3915 = vpack.c.b16 %v3395, %v3387
        %v3916 = vpack.c.b16 %v3396, %v3388
        %v3917 = vpack.c.b16 %v3397, %v3389
        %v3918 = vpack.c.b16 %v3398, %v3390
        %v3919 = vpack.c.b16 %v3399, %v3391
        %v3920 = vpack.c.b16 %v3400, %v3392
        %v3921 = vpack.c.b16 %v3401, %v3393
        %v3922 = vpack.c.b16 %v3410, %v3402
        %v3923 = vpack.c.b16 %v3411, %v3403
        %v3924 = vpack.c.b16 %v3412, %v3404
        %v3925 = vpack.c.b16 %v3413, %v3405
        %v3926 = vpack.c.b16 %v3414, %v3406
        %v3927 = vpack.c.b16 %v3415, %v3407
        %v3928 = vpack.c.b16 %v3416, %v3408
        %v3929 = vpack.c.b16 %v3417, %v3409
        %4442 = vmatprep.subr.bf16.mxu0 %v3419
        %4443 = vmatpush1.bf16.msra.mxu0 %v3418
        %4444 = vmatprep.subr.bf16.mxu0 %v3427
        %4445 = vmatpush1.bf16.msra.mxu0 %v3426
        %4446 = vmatprep.subr.bf16.mxu0 %v3435
        %4447 = vmatpush1.bf16.msra.mxu0 %v3434
        %4448 = vmatprep.subr.bf16.mxu0 %v3443
        %4449 = vmatpush1.bf16.msra.mxu0 %v3442
        %4450 = vmatprep.subr.bf16.mxu0 %v3451
        %4451 = vmatpush1.bf16.msra.mxu0 %v3450
        %4452 = vmatprep.subr.bf16.mxu0 %v3459
        %4453 = vmatpush1.bf16.msra.mxu0 %v3458
        %4454 = vmatprep.subr.bf16.mxu0 %v3467
        %4455 = vmatpush1.bf16.msra.mxu0 %v3466
        %4456 = vmatprep.subr.bf16.mxu0 %v3475
        %4457 = vmatpush1.bf16.msra.mxu0 %v3474
        %4458 = vmatprep.subr.bf16.mxu0 %v3483
        %4459 = vmatpush1.bf16.msra.mxu0 %v3482
        %4460 = vmatprep.subr.bf16.mxu0 %v3491
        %4461 = vmatpush1.bf16.msra.mxu0 %v3490
        %4462 = vmatprep.subr.bf16.mxu0 %v3499
        %4463 = vmatpush1.bf16.msra.mxu0 %v3498
        %4464 = vmatprep.subr.bf16.mxu0 %v3507
        %4465 = vmatpush1.bf16.msra.mxu0 %v3506
        %4466 = vmatprep.subr.bf16.mxu0 %v3515
        %4467 = vmatpush1.bf16.msra.mxu0 %v3514
        %4468 = vmatprep.subr.bf16.mxu0 %v3523
        %4469 = vmatpush1.bf16.msra.mxu0 %v3522
        %4470 = vmatprep.subr.bf16.mxu0 %v3531
        %4471 = vmatpush1.bf16.msra.mxu0 %v3530
        %4472 = vmatprep.subr.bf16.mxu0 %v3539
        %4473 = vmatpush1.bf16.msra.mxu0 %v3538
        %4474 = vmatprep.mubr.bf16.mxu0 %v1363
        %4475 = vmatmul.mubr.bf16.gmra.mrb[0].mxu0 %v1362
        %v4476 = vpop.f32.mrb[0].mxu0
        %v4477 = vadd.f32 0.0, %v4476
        %v4478 = vpop.f32.mrb[0].mxu0
        %v4479 = vadd.f32 0.0, %v4478
        %v4480 = vpop.f32.mrb[0].mxu0
        %v4481 = vpop.f32.mrb[0].mxu0
        %4482 = vdwg.mxu0
        %4483 = vmatprep.subr.bf16.mxu0 %v3547
        %4484 = vmatpush1.bf16.msra.mxu0 %v3546
        %4485 = vmatprep.subr.bf16.mxu0 %v3555
        %4486 = vmatpush1.bf16.msra.mxu0 %v3554
        %4487 = vmatprep.subr.bf16.mxu0 %v3563
        %4488 = vmatpush1.bf16.msra.mxu0 %v3562
        %4489 = vmatprep.subr.bf16.mxu0 %v3571
        %4490 = vmatpush1.bf16.msra.mxu0 %v3570
        %4491 = vmatprep.subr.bf16.mxu0 %v3579
        %4492 = vmatpush1.bf16.msra.mxu0 %v3578
        %4493 = vmatprep.subr.bf16.mxu0 %v3587
        %4494 = vmatpush1.bf16.msra.mxu0 %v3586
        %4495 = vmatprep.subr.bf16.mxu0 %v3595
        %4496 = vmatpush1.bf16.msra.mxu0 %v3594
        %4497 = vmatprep.subr.bf16.mxu0 %v3603
        %4498 = vmatpush1.bf16.msra.mxu0 %v3602
        %4499 = vmatprep.subr.bf16.mxu0 %v3611
        %4500 = vmatpush1.bf16.msra.mxu0 %v3610
        %4501 = vmatprep.subr.bf16.mxu0 %v3619
        %4502 = vmatpush1.bf16.msra.mxu0 %v3618
        %4503 = vmatprep.subr.bf16.mxu0 %v3627
        %4504 = vmatpush1.bf16.msra.mxu0 %v3626
        %4505 = vmatprep.subr.bf16.mxu0 %v3635
        %4506 = vmatpush1.bf16.msra.mxu0 %v3634
        %4507 = vmatprep.subr.bf16.mxu0 %v3643
        %4508 = vmatpush1.bf16.msra.mxu0 %v3642
        %4509 = vmatprep.subr.bf16.mxu0 %v3651
        %4510 = vmatpush1.bf16.msra.mxu0 %v3650
        %4511 = vmatprep.subr.bf16.mxu0 %v3659
        %4512 = vmatpush1.bf16.msra.mxu0 %v3658
        %4513 = vmatprep.subr.bf16.mxu0 %v3667
        %4514 = vmatpush1.bf16.msra.mxu0 %v3666
        %4515 = vmatprep.mubr.bf16.mxu0 %v1365
        %4516 = vmatmul.mubr.bf16.gmra.mrb[0].mxu0 %v1364
        %v4517 = vpop.f32.mrb[0].mxu0
        %v4518 = vadd.f32 %v4477, %v4517
        %v4519 = vpop.f32.mrb[0].mxu0
        %v4520 = vadd.f32 %v4479, %v4519
        %v4521 = vpop.f32.mrb[0].mxu0
        %v4522 = vpop.f32.mrb[0].mxu0
        %4523 = vdwg.mxu0
        %4524 = vmatprep.subr.bf16.mxu0 %v3675
        %4525 = vmatpush1.bf16.msra.mxu0 %v3674
        %4526 = vmatprep.subr.bf16.mxu0 %v3683
        %4527 = vmatpush1.bf16.msra.mxu0 %v3682
        %4528 = vmatprep.subr.bf16.mxu0 %v3691
        %4529 = vmatpush1.bf16.msra.mxu0 %v3690
        %4530 = vmatprep.subr.bf16.mxu0 %v3699
        %4531 = vmatpush1.bf16.msra.mxu0 %v3698
        %4532 = vmatprep.subr.bf16.mxu0 %v3707
        %4533 = vmatpush1.bf16.msra.mxu0 %v3706
        %4534 = vmatprep.subr.bf16.mxu0 %v3715
        %4535 = vmatpush1.bf16.msra.mxu0 %v3714
        %4536 = vmatprep.subr.bf16.mxu0 %v3723
        %4537 = vmatpush1.bf16.msra.mxu0 %v3722
        %4538 = vmatprep.subr.bf16.mxu0 %v3731
        %4539 = vmatpush1.bf16.msra.mxu0 %v3730
        %4540 = vmatprep.subr.bf16.mxu0 %v3739
        %4541 = vmatpush1.bf16.msra.mxu0 %v3738
        %4542 = vmatprep.subr.bf16.mxu0 %v3747
        %4543 = vmatpush1.bf16.msra.mxu0 %v3746
        %4544 = vmatprep.subr.bf16.mxu0 %v3755
        %4545 = vmatpush1.bf16.msra.mxu0 %v3754
        %4546 = vmatprep.subr.bf16.mxu0 %v3763
        %4547 = vmatpush1.bf16.msra.mxu0 %v3762
        %4548 = vmatprep.subr.bf16.mxu0 %v3771
        %4549 = vmatpush1.bf16.msra.mxu0 %v3770
        %4550 = vmatprep.subr.bf16.mxu0 %v3779
        %4551 = vmatpush1.bf16.msra.mxu0 %v3778
        %4552 = vmatprep.subr.bf16.mxu0 %v3787
        %4553 = vmatpush1.bf16.msra.mxu0 %v3786
        %4554 = vmatprep.subr.bf16.mxu0 %v3795
        %4555 = vmatpush1.bf16.msra.mxu0 %v3794
        %4556 = vmatprep.mubr.bf16.mxu0 %v1367
        %4557 = vmatmul.mubr.bf16.gmra.mrb[0].mxu0 %v1366
        %v4558 = vpop.f32.mrb[0].mxu0
        %v4559 = vadd.f32 %v4518, %v4558
        %v4560 = vpop.f32.mrb[0].mxu0
        %v4561 = vadd.f32 %v4520, %v4560
        %v4562 = vpop.f32.mrb[0].mxu0
        %v4563 = vpop.f32.mrb[0].mxu0
        %4564 = vdwg.mxu0
        %4565 = vmatprep.subr.bf16.mxu0 %v3803
        %4566 = vmatpush1.bf16.msra.mxu0 %v3802
        %4567 = vmatprep.subr.bf16.mxu0 %v3811
        %4568 = vmatpush1.bf16.msra.mxu0 %v3810
        %4569 = vmatprep.subr.bf16.mxu0 %v3819
        %4570 = vmatpush1.bf16.msra.mxu0 %v3818
        %4571 = vmatprep.subr.bf16.mxu0 %v3827
        %4572 = vmatpush1.bf16.msra.mxu0 %v3826
        %4573 = vmatprep.subr.bf16.mxu0 %v3835
        %4574 = vmatpush1.bf16.msra.mxu0 %v3834
        %4575 = vmatprep.subr.bf16.mxu0 %v3843
        %4576 = vmatpush1.bf16.msra.mxu0 %v3842
        %4577 = vmatprep.subr.bf16.mxu0 %v3851
        %4578 = vmatpush1.bf16.msra.mxu0 %v3850
        %4579 = vmatprep.subr.bf16.mxu0 %v3859
        %4580 = vmatpush1.bf16.msra.mxu0 %v3858
        %4581 = vmatprep.subr.bf16.mxu0 %v3867
        %4582 = vmatpush1.bf16.msra.mxu0 %v3866
        %4583 = vmatprep.subr.bf16.mxu0 %v3875
        %4584 = vmatpush1.bf16.msra.mxu0 %v3874
        %4585 = vmatprep.subr.bf16.mxu0 %v3883
        %4586 = vmatpush1.bf16.msra.mxu0 %v3882
        %4587 = vmatprep.subr.bf16.mxu0 %v3891
        %4588 = vmatpush1.bf16.msra.mxu0 %v3890
        %4589 = vmatprep.subr.bf16.mxu0 %v3899
        %4590 = vmatpush1.bf16.msra.mxu0 %v3898
        %4591 = vmatprep.subr.bf16.mxu0 %v3907
        %4592 = vmatpush1.bf16.msra.mxu0 %v3906
        %4593 = vmatprep.subr.bf16.mxu0 %v3915
        %4594 = vmatpush1.bf16.msra.mxu0 %v3914
        %4595 = vmatprep.subr.bf16.mxu0 %v3923
        %4596 = vmatpush1.bf16.msra.mxu0 %v3922
        %4597 = vmatprep.mubr.bf16.mxu0 %v1369
        %4598 = vmatmul.mubr.bf16.gmra.mrb[0].mxu0 %v1368
        %v4599 = vpop.f32.mrb[0].mxu0
        %v4600 = vadd.f32 %v4559, %v4599
        %v4601 = vpop.f32.mrb[0].mxu0
        %v4602 = vadd.f32 %v4561, %v4601
        %v4603 = vpop.f32.mrb[0].mxu0
        %v4604 = vpop.f32.mrb[0].mxu0
        %4605 = vdwg.mxu0
        %4606 = vmatprep.subr.bf16.mxu0 %v3421
        %4607 = vmatpush1.bf16.msra.mxu0 %v3420
        %4608 = vmatprep.subr.bf16.mxu0 %v3429
        %4609 = vmatpush1.bf16.msra.mxu0 %v3428
        %4610 = vmatprep.subr.bf16.mxu0 %v3437
        %4611 = vmatpush1.bf16.msra.mxu0 %v3436
        %4612 = vmatprep.subr.bf16.mxu0 %v3445
        %4613 = vmatpush1.bf16.msra.mxu0 %v3444
        %4614 = vmatprep.subr.bf16.mxu0 %v3453
        %4615 = vmatpush1.bf16.msra.mxu0 %v3452
        %4616 = vmatprep.subr.bf16.mxu0 %v3461
        %4617 = vmatpush1.bf16.msra.mxu0 %v3460
        %4618 = vmatprep.subr.bf16.mxu0 %v3469
        %4619 = vmatpush1.bf16.msra.mxu0 %v3468
        %4620 = vmatprep.subr.bf16.mxu0 %v3477
        %4621 = vmatpush1.bf16.msra.mxu0 %v3476
        %4622 = vmatprep.subr.bf16.mxu0 %v3485
        %4623 = vmatpush1.bf16.msra.mxu0 %v3484
        %4624 = vmatprep.subr.bf16.mxu0 %v3493
        %4625 = vmatpush1.bf16.msra.mxu0 %v3492
        %4626 = vmatprep.subr.bf16.mxu0 %v3501
        %4627 = vmatpush1.bf16.msra.mxu0 %v3500
        %4628 = vmatprep.subr.bf16.mxu0 %v3509
        %4629 = vmatpush1.bf16.msra.mxu0 %v3508
        %4630 = vmatprep.subr.bf16.mxu0 %v3517
        %4631 = vmatpush1.bf16.msra.mxu0 %v3516
        %4632 = vmatprep.subr.bf16.mxu0 %v3525
        %4633 = vmatpush1.bf16.msra.mxu0 %v3524
        %4634 = vmatprep.subr.bf16.mxu0 %v3533
        %4635 = vmatpush1.bf16.msra.mxu0 %v3532
        %4636 = vmatprep.subr.bf16.mxu0 %v3541
        %4637 = vmatpush1.bf16.msra.mxu0 %v3540
        %4638 = vmatprep.mubr.bf16.mxu0 %v1363
        %4639 = vmatmul.mubr.bf16.gmra.mrb[0].mxu0 %v1362
        %v4640 = vpop.f32.mrb[0].mxu0
        %v4641 = vadd.f32 0.0, %v4640
        %v4642 = vpop.f32.mrb[0].mxu0
        %v4643 = vadd.f32 0.0, %v4642
        %v4644 = vpop.f32.mrb[0].mxu0
        %v4645 = vpop.f32.mrb[0].mxu0
        %4646 = vdwg.mxu0
        %4647 = vmatprep.subr.bf16.mxu0 %v3549
        %4648 = vmatpush1.bf16.msra.mxu0 %v3548
        %4649 = vmatprep.subr.bf16.mxu0 %v3557
        %4650 = vmatpush1.bf16.msra.mxu0 %v3556
        %4651 = vmatprep.subr.bf16.mxu0 %v3565
        %4652 = vmatpush1.bf16.msra.mxu0 %v3564
        %4653 = vmatprep.subr.bf16.mxu0 %v3573
        %4654 = vmatpush1.bf16.msra.mxu0 %v3572
        %4655 = vmatprep.subr.bf16.mxu0 %v3581
        %4656 = vmatpush1.bf16.msra.mxu0 %v3580
        %4657 = vmatprep.subr.bf16.mxu0 %v3589
        %4658 = vmatpush1.bf16.msra.mxu0 %v3588
        %4659 = vmatprep.subr.bf16.mxu0 %v3597
        %4660 = vmatpush1.bf16.msra.mxu0 %v3596
        %4661 = vmatprep.subr.bf16.mxu0 %v3605
        %4662 = vmatpush1.bf16.msra.mxu0 %v3604
        %4663 = vmatprep.subr.bf16.mxu0 %v3613
        %4664 = vmatpush1.bf16.msra.mxu0 %v3612
        %4665 = vmatprep.subr.bf16.mxu0 %v3621
        %4666 = vmatpush1.bf16.msra.mxu0 %v3620
        %4667 = vmatprep.subr.bf16.mxu0 %v3629
        %4668 = vmatpush1.bf16.msra.mxu0 %v3628
        %4669 = vmatprep.subr.bf16.mxu0 %v3637
        %4670 = vmatpush1.bf16.msra.mxu0 %v3636
        %4671 = vmatprep.subr.bf16.mxu0 %v3645
        %4672 = vmatpush1.bf16.msra.mxu0 %v3644
        %4673 = vmatprep.subr.bf16.mxu0 %v3653
        %4674 = vmatpush1.bf16.msra.mxu0 %v3652
        %4675 = vmatprep.subr.bf16.mxu0 %v3661
        %4676 = vmatpush1.bf16.msra.mxu0 %v3660
        %4677 = vmatprep.subr.bf16.mxu0 %v3669
        %4678 = vmatpush1.bf16.msra.mxu0 %v3668
        %4679 = vmatprep.mubr.bf16.mxu0 %v1365
        %4680 = vmatmul.mubr.bf16.gmra.mrb[0].mxu0 %v1364
        %v4681 = vpop.f32.mrb[0].mxu0
        %v4682 = vadd.f32 %v4641, %v4681
        %v4683 = vpop.f32.mrb[0].mxu0
        %v4684 = vadd.f32 %v4643, %v4683
        %v4685 = vpop.f32.mrb[0].mxu0
        %v4686 = vpop.f32.mrb[0].mxu0
        %4687 = vdwg.mxu0
        %4688 = vmatprep.subr.bf16.mxu0 %v3677
        %4689 = vmatpush1.bf16.msra.mxu0 %v3676
        %4690 = vmatprep.subr.bf16.mxu0 %v3685
        %4691 = vmatpush1.bf16.msra.mxu0 %v3684
        %4692 = vmatprep.subr.bf16.mxu0 %v3693
        %4693 = vmatpush1.bf16.msra.mxu0 %v3692
        %4694 = vmatprep.subr.bf16.mxu0 %v3701
        %4695 = vmatpush1.bf16.msra.mxu0 %v3700
        %4696 = vmatprep.subr.bf16.mxu0 %v3709
        %4697 = vmatpush1.bf16.msra.mxu0 %v3708
        %4698 = vmatprep.subr.bf16.mxu0 %v3717
        %4699 = vmatpush1.bf16.msra.mxu0 %v3716
        %4700 = vmatprep.subr.bf16.mxu0 %v3725
        %4701 = vmatpush1.bf16.msra.mxu0 %v3724
        %4702 = vmatprep.subr.bf16.mxu0 %v3733
        %4703 = vmatpush1.bf16.msra.mxu0 %v3732
        %4704 = vmatprep.subr.bf16.mxu0 %v3741
        %4705 = vmatpush1.bf16.msra.mxu0 %v3740
        %4706 = vmatprep.subr.bf16.mxu0 %v3749
        %4707 = vmatpush1.bf16.msra.mxu0 %v3748
        %4708 = vmatprep.subr.bf16.mxu0 %v3757
        %4709 = vmatpush1.bf16.msra.mxu0 %v3756
        %4710 = vmatprep.subr.bf16.mxu0 %v3765
        %4711 = vmatpush1.bf16.msra.mxu0 %v3764
        %4712 = vmatprep.subr.bf16.mxu0 %v3773
        %4713 = vmatpush1.bf16.msra.mxu0 %v3772
        %4714 = vmatprep.subr.bf16.mxu0 %v3781
        %4715 = vmatpush1.bf16.msra.mxu0 %v3780
        %4716 = vmatprep.subr.bf16.mxu0 %v3789
        %4717 = vmatpush1.bf16.msra.mxu0 %v3788
        %4718 = vmatprep.subr.bf16.mxu0 %v3797
        %4719 = vmatpush1.bf16.msra.mxu0 %v3796
        %4720 = vmatprep.mubr.bf16.mxu0 %v1367
        %4721 = vmatmul.mubr.bf16.gmra.mrb[0].mxu0 %v1366
        %v4722 = vpop.f32.mrb[0].mxu0
        %v4723 = vadd.f32 %v4682, %v4722
        %v4724 = vpop.f32.mrb[0].mxu0
        %v4725 = vadd.f32 %v4684, %v4724
        %v4726 = vpop.f32.mrb[0].mxu0
        %v4727 = vpop.f32.mrb[0].mxu0
        %4728 = vdwg.mxu0
        %4729 = vmatprep.subr.bf16.mxu0 %v3805
        %4730 = vmatpush1.bf16.msra.mxu0 %v3804
        %4731 = vmatprep.subr.bf16.mxu0 %v3813
        %4732 = vmatpush1.bf16.msra.mxu0 %v3812
        %4733 = vmatprep.subr.bf16.mxu0 %v3821
        %4734 = vmatpush1.bf16.msra.mxu0 %v3820
        %4735 = vmatprep.subr.bf16.mxu0 %v3829
        %4736 = vmatpush1.bf16.msra.mxu0 %v3828
        %4737 = vmatprep.subr.bf16.mxu0 %v3837
        %4738 = vmatpush1.bf16.msra.mxu0 %v3836
        %4739 = vmatprep.subr.bf16.mxu0 %v3845
        %4740 = vmatpush1.bf16.msra.mxu0 %v3844
        %4741 = vmatprep.subr.bf16.mxu0 %v3853
        %4742 = vmatpush1.bf16.msra.mxu0 %v3852
        %4743 = vmatprep.subr.bf16.mxu0 %v3861
        %4744 = vmatpush1.bf16.msra.mxu0 %v3860
        %4745 = vmatprep.subr.bf16.mxu0 %v3869
        %4746 = vmatpush1.bf16.msra.mxu0 %v3868
        %4747 = vmatprep.subr.bf16.mxu0 %v3877
        %4748 = vmatpush1.bf16.msra.mxu0 %v3876
        %4749 = vmatprep.subr.bf16.mxu0 %v3885
        %4750 = vmatpush1.bf16.msra.mxu0 %v3884
        %4751 = vmatprep.subr.bf16.mxu0 %v3893
        %4752 = vmatpush1.bf16.msra.mxu0 %v3892
        %4753 = vmatprep.subr.bf16.mxu0 %v3901
        %4754 = vmatpush1.bf16.msra.mxu0 %v3900
        %4755 = vmatprep.subr.bf16.mxu0 %v3909
        %4756 = vmatpush1.bf16.msra.mxu0 %v3908
        %4757 = vmatprep.subr.bf16.mxu0 %v3917
        %4758 = vmatpush1.bf16.msra.mxu0 %v3916
        %4759 = vmatprep.subr.bf16.mxu0 %v3925
        %4760 = vmatpush1.bf16.msra.mxu0 %v3924
        %4761 = vmatprep.mubr.bf16.mxu0 %v1369
        %4762 = vmatmul.mubr.bf16.gmra.mrb[0].mxu0 %v1368
        %v4763 = vpop.f32.mrb[0].mxu0
        %v4764 = vadd.f32 %v4723, %v4763
        %v4765 = vpop.f32.mrb[0].mxu0
        %v4766 = vadd.f32 %v4725, %v4765
        %v4767 = vpop.f32.mrb[0].mxu0
        %v4768 = vpop.f32.mrb[0].mxu0
        %4769 = vdwg.mxu0
        %4770 = vmatprep.subr.bf16.mxu0 %v3423
        %4771 = vmatpush1.bf16.msra.mxu0 %v3422
        %4772 = vmatprep.subr.bf16.mxu0 %v3431
        %4773 = vmatpush1.bf16.msra.mxu0 %v3430
        %4774 = vmatprep.subr.bf16.mxu0 %v3439
        %4775 = vmatpush1.bf16.msra.mxu0 %v3438
        %4776 = vmatprep.subr.bf16.mxu0 %v3447
        %4777 = vmatpush1.bf16.msra.mxu0 %v3446
        %4778 = vmatprep.subr.bf16.mxu0 %v3455
        %4779 = vmatpush1.bf16.msra.mxu0 %v3454
        %4780 = vmatprep.subr.bf16.mxu0 %v3463
        %4781 = vmatpush1.bf16.msra.mxu0 %v3462
        %4782 = vmatprep.subr.bf16.mxu0 %v3471
        %4783 = vmatpush1.bf16.msra.mxu0 %v3470
        %4784 = vmatprep.subr.bf16.mxu0 %v3479
        %4785 = vmatpush1.bf16.msra.mxu0 %v3478
        %4786 = vmatprep.subr.bf16.mxu0 %v3487
        %4787 = vmatpush1.bf16.msra.mxu0 %v3486
        %4788 = vmatprep.subr.bf16.mxu0 %v3495
        %4789 = vmatpush1.bf16.msra.mxu0 %v3494
        %4790 = vmatprep.subr.bf16.mxu0 %v3503
        %4791 = vmatpush1.bf16.msra.mxu0 %v3502
        %4792 = vmatprep.subr.bf16.mxu0 %v3511
        %4793 = vmatpush1.bf16.msra.mxu0 %v3510
        %4794 = vmatprep.subr.bf16.mxu0 %v3519
        %4795 = vmatpush1.bf16.msra.mxu0 %v3518
        %4796 = vmatprep.subr.bf16.mxu0 %v3527
        %4797 = vmatpush1.bf16.msra.mxu0 %v3526
        %4798 = vmatprep.subr.bf16.mxu0 %v3535
        %4799 = vmatpush1.bf16.msra.mxu0 %v3534
        %4800 = vmatprep.subr.bf16.mxu0 %v3543
        %4801 = vmatpush1.bf16.msra.mxu0 %v3542
        %4802 = vmatprep.mubr.bf16.mxu0 %v1363
        %4803 = vmatmul.mubr.bf16.gmra.mrb[0].mxu0 %v1362
        %v4804 = vpop.f32.mrb[0].mxu0
        %v4805 = vadd.f32 0.0, %v4804
        %v4806 = vpop.f32.mrb[0].mxu0
        %v4807 = vadd.f32 0.0, %v4806
        %v4808 = vpop.f32.mrb[0].mxu0
        %v4809 = vpop.f32.mrb[0].mxu0
        %4810 = vdwg.mxu0
        %4811 = vmatprep.subr.bf16.mxu0 %v3551
        %4812 = vmatpush1.bf16.msra.mxu0 %v3550
        %4813 = vmatprep.subr.bf16.mxu0 %v3559
        %4814 = vmatpush1.bf16.msra.mxu0 %v3558
        %4815 = vmatprep.subr.bf16.mxu0 %v3567
        %4816 = vmatpush1.bf16.msra.mxu0 %v3566
        %4817 = vmatprep.subr.bf16.mxu0 %v3575
        %4818 = vmatpush1.bf16.msra.mxu0 %v3574
        %4819 = vmatprep.subr.bf16.mxu0 %v3583
        %4820 = vmatpush1.bf16.msra.mxu0 %v3582
        %4821 = vmatprep.subr.bf16.mxu0 %v3591
        %4822 = vmatpush1.bf16.msra.mxu0 %v3590
        %4823 = vmatprep.subr.bf16.mxu0 %v3599
        %4824 = vmatpush1.bf16.msra.mxu0 %v3598
        %4825 = vmatprep.subr.bf16.mxu0 %v3607
        %4826 = vmatpush1.bf16.msra.mxu0 %v3606
        %4827 = vmatprep.subr.bf16.mxu0 %v3615
        %4828 = vmatpush1.bf16.msra.mxu0 %v3614
        %4829 = vmatprep.subr.bf16.mxu0 %v3623
        %4830 = vmatpush1.bf16.msra.mxu0 %v3622
        %4831 = vmatprep.subr.bf16.mxu0 %v3631
        %4832 = vmatpush1.bf16.msra.mxu0 %v3630
        %4833 = vmatprep.subr.bf16.mxu0 %v3639
        %4834 = vmatpush1.bf16.msra.mxu0 %v3638
        %4835 = vmatprep.subr.bf16.mxu0 %v3647
        %4836 = vmatpush1.bf16.msra.mxu0 %v3646
        %4837 = vmatprep.subr.bf16.mxu0 %v3655
        %4838 = vmatpush1.bf16.msra.mxu0 %v3654
        %4839 = vmatprep.subr.bf16.mxu0 %v3663
        %4840 = vmatpush1.bf16.msra.mxu0 %v3662
        %4841 = vmatprep.subr.bf16.mxu0 %v3671
        %4842 = vmatpush1.bf16.msra.mxu0 %v3670
        %4843 = vmatprep.mubr.bf16.mxu0 %v1365
        %4844 = vmatmul.mubr.bf16.gmra.mrb[0].mxu0 %v1364
        %v4845 = vpop.f32.mrb[0].mxu0
        %v4846 = vadd.f32 %v4805, %v4845
        %v4847 = vpop.f32.mrb[0].mxu0
        %v4848 = vadd.f32 %v4807, %v4847
        %v4849 = vpop.f32.mrb[0].mxu0
        %v4850 = vpop.f32.mrb[0].mxu0
        %4851 = vdwg.mxu0
        %4852 = vmatprep.subr.bf16.mxu0 %v3679
        %4853 = vmatpush1.bf16.msra.mxu0 %v3678
        %4854 = vmatprep.subr.bf16.mxu0 %v3687
        %4855 = vmatpush1.bf16.msra.mxu0 %v3686
        %4856 = vmatprep.subr.bf16.mxu0 %v3695
        %4857 = vmatpush1.bf16.msra.mxu0 %v3694
        %4858 = vmatprep.subr.bf16.mxu0 %v3703
        %4859 = vmatpush1.bf16.msra.mxu0 %v3702
        %4860 = vmatprep.subr.bf16.mxu0 %v3711
        %4861 = vmatpush1.bf16.msra.mxu0 %v3710
        %4862 = vmatprep.subr.bf16.mxu0 %v3719
        %4863 = vmatpush1.bf16.msra.mxu0 %v3718
        %4864 = vmatprep.subr.bf16.mxu0 %v3727
        %4865 = vmatpush1.bf16.msra.mxu0 %v3726
        %4866 = vmatprep.subr.bf16.mxu0 %v3735
        %4867 = vmatpush1.bf16.msra.mxu0 %v3734
        %4868 = vmatprep.subr.bf16.mxu0 %v3743
        %4869 = vmatpush1.bf16.msra.mxu0 %v3742
        %4870 = vmatprep.subr.bf16.mxu0 %v3751
        %4871 = vmatpush1.bf16.msra.mxu0 %v3750
        %4872 = vmatprep.subr.bf16.mxu0 %v3759
        %4873 = vmatpush1.bf16.msra.mxu0 %v3758
        %4874 = vmatprep.subr.bf16.mxu0 %v3767
        %4875 = vmatpush1.bf16.msra.mxu0 %v3766
        %4876 = vmatprep.subr.bf16.mxu0 %v3775
        %4877 = vmatpush1.bf16.msra.mxu0 %v3774
        %4878 = vmatprep.subr.bf16.mxu0 %v3783
        %4879 = vmatpush1.bf16.msra.mxu0 %v3782
        %4880 = vmatprep.subr.bf16.mxu0 %v3791
        %4881 = vmatpush1.bf16.msra.mxu0 %v3790
        %4882 = vmatprep.subr.bf16.mxu0 %v3799
        %4883 = vmatpush1.bf16.msra.mxu0 %v3798
        %4884 = vmatprep.mubr.bf16.mxu0 %v1367
        %4885 = vmatmul.mubr.bf16.gmra.mrb[0].mxu0 %v1366
        %v4886 = vpop.f32.mrb[0].mxu0
        %v4887 = vadd.f32 %v4846, %v4886
        %v4888 = vpop.f32.mrb[0].mxu0
        %v4889 = vadd.f32 %v4848, %v4888
        %v4890 = vpop.f32.mrb[0].mxu0
        %v4891 = vpop.f32.mrb[0].mxu0
        %4892 = vdwg.mxu0
        %4893 = vmatprep.subr.bf16.mxu0 %v3807
        %4894 = vmatpush1.bf16.msra.mxu0 %v3806
        %4895 = vmatprep.subr.bf16.mxu0 %v3815
        %4896 = vmatpush1.bf16.msra.mxu0 %v3814
        %4897 = vmatprep.subr.bf16.mxu0 %v3823
        %4898 = vmatpush1.bf16.msra.mxu0 %v3822
        %4899 = vmatprep.subr.bf16.mxu0 %v3831
        %4900 = vmatpush1.bf16.msra.mxu0 %v3830
        %4901 = vmatprep.subr.bf16.mxu0 %v3839
        %4902 = vmatpush1.bf16.msra.mxu0 %v3838
        %4903 = vmatprep.subr.bf16.mxu0 %v3847
        %4904 = vmatpush1.bf16.msra.mxu0 %v3846
        %4905 = vmatprep.subr.bf16.mxu0 %v3855
        %4906 = vmatpush1.bf16.msra.mxu0 %v3854
        %4907 = vmatprep.subr.bf16.mxu0 %v3863
        %4908 = vmatpush1.bf16.msra.mxu0 %v3862
        %4909 = vmatprep.subr.bf16.mxu0 %v3871
        %4910 = vmatpush1.bf16.msra.mxu0 %v3870
        %4911 = vmatprep.subr.bf16.mxu0 %v3879
        %4912 = vmatpush1.bf16.msra.mxu0 %v3878
        %4913 = vmatprep.subr.bf16.mxu0 %v3887
        %4914 = vmatpush1.bf16.msra.mxu0 %v3886
        %4915 = vmatprep.subr.bf16.mxu0 %v3895
        %4916 = vmatpush1.bf16.msra.mxu0 %v3894
        %4917 = vmatprep.subr.bf16.mxu0 %v3903
        %4918 = vmatpush1.bf16.msra.mxu0 %v3902
        %4919 = vmatprep.subr.bf16.mxu0 %v3911
        %4920 = vmatpush1.bf16.msra.mxu0 %v3910
        %4921 = vmatprep.subr.bf16.mxu0 %v3919
        %4922 = vmatpush1.bf16.msra.mxu0 %v3918
        %4923 = vmatprep.subr.bf16.mxu0 %v3927
        %4924 = vmatpush1.bf16.msra.mxu0 %v3926
        %4925 = vmatprep.mubr.bf16.mxu0 %v1369
        %4926 = vmatmul.mubr.bf16.gmra.mrb[0].mxu0 %v1368
        %v4927 = vpop.f32.mrb[0].mxu0
        %v4928 = vadd.f32 %v4887, %v4927
        %v4929 = vpop.f32.mrb[0].mxu0
        %v4930 = vadd.f32 %v4889, %v4929
        %v4931 = vpop.f32.mrb[0].mxu0
        %v4932 = vpop.f32.mrb[0].mxu0
        %4933 = vdwg.mxu0
        %4934 = vmatprep.subr.bf16.mxu0 %v3425
        %4935 = vmatpush1.bf16.msra.mxu0 %v3424
        %4936 = vmatprep.subr.bf16.mxu0 %v3433
        %4937 = vmatpush1.bf16.msra.mxu0 %v3432
        %4938 = vmatprep.subr.bf16.mxu0 %v3441
        %4939 = vmatpush1.bf16.msra.mxu0 %v3440
        %4940 = vmatprep.subr.bf16.mxu0 %v3449
        %4941 = vmatpush1.bf16.msra.mxu0 %v3448
        %4942 = vmatprep.subr.bf16.mxu0 %v3457
        %4943 = vmatpush1.bf16.msra.mxu0 %v3456
        %4944 = vmatprep.subr.bf16.mxu0 %v3465
        %4945 = vmatpush1.bf16.msra.mxu0 %v3464
        %4946 = vmatprep.subr.bf16.mxu0 %v3473
        %4947 = vmatpush1.bf16.msra.mxu0 %v3472
        %4948 = vmatprep.subr.bf16.mxu0 %v3481
        %4949 = vmatpush1.bf16.msra.mxu0 %v3480
        %4950 = vmatprep.subr.bf16.mxu0 %v3489
        %4951 = vmatpush1.bf16.msra.mxu0 %v3488
        %4952 = vmatprep.subr.bf16.mxu0 %v3497
        %4953 = vmatpush1.bf16.msra.mxu0 %v3496
        %4954 = vmatprep.subr.bf16.mxu0 %v3505
        %4955 = vmatpush1.bf16.msra.mxu0 %v3504
        %4956 = vmatprep.subr.bf16.mxu0 %v3513
        %4957 = vmatpush1.bf16.msra.mxu0 %v3512
        %4958 = vmatprep.subr.bf16.mxu0 %v3521
        %4959 = vmatpush1.bf16.msra.mxu0 %v3520
        %4960 = vmatprep.subr.bf16.mxu0 %v3529
        %4961 = vmatpush1.bf16.msra.mxu0 %v3528
        %4962 = vmatprep.subr.bf16.mxu0 %v3537
        %4963 = vmatpush1.bf16.msra.mxu0 %v3536
        %4964 = vmatprep.subr.bf16.mxu0 %v3545
        %4965 = vmatpush1.bf16.msra.mxu0 %v3544
        %4966 = vmatprep.mubr.bf16.mxu0 %v1363
        %4967 = vmatmul.mubr.bf16.gmra.mrb[0].mxu0 %v1362
        %v4968 = vpop.f32.mrb[0].mxu0
        %v4969 = vadd.f32 0.0, %v4968
        %v4970 = vpop.f32.mrb[0].mxu0
        %v4971 = vadd.f32 0.0, %v4970
        %v4972 = vpop.f32.mrb[0].mxu0
        %v4973 = vpop.f32.mrb[0].mxu0
        %4974 = vdwg.mxu0
        %4975 = vmatprep.subr.bf16.mxu0 %v3553
        %4976 = vmatpush1.bf16.msra.mxu0 %v3552
        %4977 = vmatprep.subr.bf16.mxu0 %v3561
        %4978 = vmatpush1.bf16.msra.mxu0 %v3560
        %4979 = vmatprep.subr.bf16.mxu0 %v3569
        %4980 = vmatpush1.bf16.msra.mxu0 %v3568
        %4981 = vmatprep.subr.bf16.mxu0 %v3577
        %4982 = vmatpush1.bf16.msra.mxu0 %v3576
        %4983 = vmatprep.subr.bf16.mxu0 %v3585
        %4984 = vmatpush1.bf16.msra.mxu0 %v3584
        %4985 = vmatprep.subr.bf16.mxu0 %v3593
        %4986 = vmatpush1.bf16.msra.mxu0 %v3592
        %4987 = vmatprep.subr.bf16.mxu0 %v3601
        %4988 = vmatpush1.bf16.msra.mxu0 %v3600
        %4989 = vmatprep.subr.bf16.mxu0 %v3609
        %4990 = vmatpush1.bf16.msra.mxu0 %v3608
        %4991 = vmatprep.subr.bf16.mxu0 %v3617
        %4992 = vmatpush1.bf16.msra.mxu0 %v3616
        %4993 = vmatprep.subr.bf16.mxu0 %v3625
        %4994 = vmatpush1.bf16.msra.mxu0 %v3624
        %4995 = vmatprep.subr.bf16.mxu0 %v3633
        %4996 = vmatpush1.bf16.msra.mxu0 %v3632
        %4997 = vmatprep.subr.bf16.mxu0 %v3641
        %4998 = vmatpush1.bf16.msra.mxu0 %v3640
        %4999 = vmatprep.subr.bf16.mxu0 %v3649
        %5000 = vmatpush1.bf16.msra.mxu0 %v3648
        %5001 = vmatprep.subr.bf16.mxu0 %v3657
        %5002 = vmatpush1.bf16.msra.mxu0 %v3656
        %5003 = vmatprep.subr.bf16.mxu0 %v3665
        %5004 = vmatpush1.bf16.msra.mxu0 %v3664
        %5005 = vmatprep.subr.bf16.mxu0 %v3673
        %5006 = vmatpush1.bf16.msra.mxu0 %v3672
        %5007 = vmatprep.mubr.bf16.mxu0 %v1365
        %5008 = vmatmul.mubr.bf16.gmra.mrb[0].mxu0 %v1364
        %v5009 = vpop.f32.mrb[0].mxu0
        %v5010 = vadd.f32 %v4969, %v5009
        %v5011 = vpop.f32.mrb[0].mxu0
        %v5012 = vadd.f32 %v4971, %v5011
        %v5013 = vpop.f32.mrb[0].mxu0
        %v5014 = vpop.f32.mrb[0].mxu0
        %5015 = vdwg.mxu0
        %5016 = vmatprep.subr.bf16.mxu0 %v3681
        %5017 = vmatpush1.bf16.msra.mxu0 %v3680
        %5018 = vmatprep.subr.bf16.mxu0 %v3689
        %5019 = vmatpush1.bf16.msra.mxu0 %v3688
        %5020 = vmatprep.subr.bf16.mxu0 %v3697
        %5021 = vmatpush1.bf16.msra.mxu0 %v3696
        %5022 = vmatprep.subr.bf16.mxu0 %v3705
        %5023 = vmatpush1.bf16.msra.mxu0 %v3704
        %5024 = vmatprep.subr.bf16.mxu0 %v3713
        %5025 = vmatpush1.bf16.msra.mxu0 %v3712
        %5026 = vmatprep.subr.bf16.mxu0 %v3721
        %5027 = vmatpush1.bf16.msra.mxu0 %v3720
        %5028 = vmatprep.subr.bf16.mxu0 %v3729
        %5029 = vmatpush1.bf16.msra.mxu0 %v3728
        %5030 = vmatprep.subr.bf16.mxu0 %v3737
        %5031 = vmatpush1.bf16.msra.mxu0 %v3736
        %5032 = vmatprep.subr.bf16.mxu0 %v3745
        %5033 = vmatpush1.bf16.msra.mxu0 %v3744
        %5034 = vmatprep.subr.bf16.mxu0 %v3753
        %5035 = vmatpush1.bf16.msra.mxu0 %v3752
        %5036 = vmatprep.subr.bf16.mxu0 %v3761
        %5037 = vmatpush1.bf16.msra.mxu0 %v3760
        %5038 = vmatprep.subr.bf16.mxu0 %v3769
        %5039 = vmatpush1.bf16.msra.mxu0 %v3768
        %5040 = vmatprep.subr.bf16.mxu0 %v3777
        %5041 = vmatpush1.bf16.msra.mxu0 %v3776
        %5042 = vmatprep.subr.bf16.mxu0 %v3785
        %5043 = vmatpush1.bf16.msra.mxu0 %v3784
        %5044 = vmatprep.subr.bf16.mxu0 %v3793
        %5045 = vmatpush1.bf16.msra.mxu0 %v3792
        %5046 = vmatprep.subr.bf16.mxu0 %v3801
        %5047 = vmatpush1.bf16.msra.mxu0 %v3800
        %5048 = vmatprep.mubr.bf16.mxu0 %v1367
        %5049 = vmatmul.mubr.bf16.gmra.mrb[0].mxu0 %v1366
        %v5050 = vpop.f32.mrb[0].mxu0
        %v5051 = vadd.f32 %v5010, %v5050
        %v5052 = vpop.f32.mrb[0].mxu0
        %v5053 = vadd.f32 %v5012, %v5052
        %v5054 = vpop.f32.mrb[0].mxu0
        %v5055 = vpop.f32.mrb[0].mxu0
        %5056 = vdwg.mxu0
        %5057 = vmatprep.subr.bf16.mxu0 %v3809
        %5058 = vmatpush1.bf16.msra.mxu0 %v3808
        %5059 = vmatprep.subr.bf16.mxu0 %v3817
        %5060 = vmatpush1.bf16.msra.mxu0 %v3816
        %5061 = vmatprep.subr.bf16.mxu0 %v3825
        %5062 = vmatpush1.bf16.msra.mxu0 %v3824
        %5063 = vmatprep.subr.bf16.mxu0 %v3833
        %5064 = vmatpush1.bf16.msra.mxu0 %v3832
        %5065 = vmatprep.subr.bf16.mxu0 %v3841
        %5066 = vmatpush1.bf16.msra.mxu0 %v3840
        %5067 = vmatprep.subr.bf16.mxu0 %v3849
        %5068 = vmatpush1.bf16.msra.mxu0 %v3848
        %5069 = vmatprep.subr.bf16.mxu0 %v3857
        %5070 = vmatpush1.bf16.msra.mxu0 %v3856
        %5071 = vmatprep.subr.bf16.mxu0 %v3865
        %5072 = vmatpush1.bf16.msra.mxu0 %v3864
        %5073 = vmatprep.subr.bf16.mxu0 %v3873
        %5074 = vmatpush1.bf16.msra.mxu0 %v3872
        %5075 = vmatprep.subr.bf16.mxu0 %v3881
        %5076 = vmatpush1.bf16.msra.mxu0 %v3880
        %5077 = vmatprep.subr.bf16.mxu0 %v3889
        %5078 = vmatpush1.bf16.msra.mxu0 %v3888
        %5079 = vmatprep.subr.bf16.mxu0 %v3897
        %5080 = vmatpush1.bf16.msra.mxu0 %v3896
        %5081 = vmatprep.subr.bf16.mxu0 %v3905
        %5082 = vmatpush1.bf16.msra.mxu0 %v3904
        %5083 = vmatprep.subr.bf16.mxu0 %v3913
        %5084 = vmatpush1.bf16.msra.mxu0 %v3912
        %5085 = vmatprep.subr.bf16.mxu0 %v3921
        %5086 = vmatpush1.bf16.msra.mxu0 %v3920
        %5087 = vmatprep.subr.bf16.mxu0 %v3929
        %5088 = vmatpush1.bf16.msra.mxu0 %v3928
        %5089 = vmatprep.mubr.bf16.mxu0 %v1369
        %5090 = vmatmul.mubr.bf16.gmra.mrb[0].mxu0 %v1368
        %v5091 = vpop.f32.mrb[0].mxu0
        %v5092 = vadd.f32 %v5051, %v5091
        %v5093 = vpop.f32.mrb[0].mxu0
        %v5094 = vadd.f32 %v5053, %v5093
        %v5095 = vpop.f32.mrb[0].mxu0
        %v5096 = vpop.f32.mrb[0].mxu0
        %5097 = vdwg.mxu0
        %v5098 = vld [vmem:[%s827] sm:$0xff]
        %v5100 = vlaneseq
        %v5101 = vshrl.u32 %v5100, 7
        %v5102 = vsub.s32 0, %v5101
        %v5103 = vrot.slane %v5098, %v5102
        %v5104 = vlaneseq
        %v5105 = vshrl.u32 %v5104, 7
        %v5106 = vsub.s32 1, %v5105
        %v5107 = vrot.slane %v5098, %v5106
        %v5108 = vlaneseq
        %v5109 = vshrl.u32 %v5108, 7
        %v5110 = vsub.s32 2, %v5109
        %v5111 = vrot.slane %v5098, %v5110
        %v5112 = vlaneseq
        %v5113 = vshrl.u32 %v5112, 7
        %v5114 = vsub.s32 3, %v5113
        %v5115 = vrot.slane %v5098, %v5114
        %v5116 = vlaneseq
        %v5117 = vshrl.u32 %v5116, 7
        %v5118 = vsub.s32 4, %v5117
        %v5119 = vrot.slane %v5098, %v5118
        %v5120 = vlaneseq
        %v5121 = vshrl.u32 %v5120, 7
        %v5122 = vsub.s32 5, %v5121
        %v5123 = vrot.slane %v5098, %v5122
        %v5124 = vlaneseq
        %v5125 = vshrl.u32 %v5124, 7
        %v5126 = vsub.s32 6, %v5125
        %v5127 = vrot.slane %v5098, %v5126
        %v5128 = vlaneseq
        %v5129 = vshrl.u32 %v5128, 7
        %v5130 = vsub.s32 7, %v5129
        %v5131 = vrot.slane %v5098, %v5130
        %v5140 = vmul.f32 %v4600, %v5103
        %v5141 = vmul.f32 %v4602, %v5107
        %v5142 = vmul.f32 %v4764, %v5111
        %v5143 = vmul.f32 %v4766, %v5115
        %v5144 = vmul.f32 %v4928, %v5119
        %v5145 = vmul.f32 %v4930, %v5123
        %v5146 = vmul.f32 %v5092, %v5127
        %v5147 = vmul.f32 %v5094, %v5131
        %v5148 = vld [vmem:[%s836] sm:$0xff]
        %v5150 = vlaneseq
        %v5151 = vshrl.u32 %v5150, 7
        %v5152 = vsub.s32 0, %v5151
        %v5153 = vrot.slane %v5148, %v5152
        %v5154 = vlaneseq
        %v5155 = vshrl.u32 %v5154, 7
        %v5156 = vsub.s32 1, %v5155
        %v5157 = vrot.slane %v5148, %v5156
        %v5158 = vlaneseq
        %v5159 = vshrl.u32 %v5158, 7
        %v5160 = vsub.s32 2, %v5159
        %v5161 = vrot.slane %v5148, %v5160
        %v5162 = vlaneseq
        %v5163 = vshrl.u32 %v5162, 7
        %v5164 = vsub.s32 3, %v5163
        %v5165 = vrot.slane %v5148, %v5164
        %v5166 = vlaneseq
        %v5167 = vshrl.u32 %v5166, 7
        %v5168 = vsub.s32 4, %v5167
        %v5169 = vrot.slane %v5148, %v5168
        %v5170 = vlaneseq
        %v5171 = vshrl.u32 %v5170, 7
        %v5172 = vsub.s32 5, %v5171
        %v5173 = vrot.slane %v5148, %v5172
        %v5174 = vlaneseq
        %v5175 = vshrl.u32 %v5174, 7
        %v5176 = vsub.s32 6, %v5175
        %v5177 = vrot.slane %v5148, %v5176
        %v5178 = vlaneseq
        %v5179 = vshrl.u32 %v5178, 7
        %v5180 = vsub.s32 7, %v5179
        %v5181 = vrot.slane %v5148, %v5180
        %v5190 = vadd.f32 %v5140, %v5153
        %v5191 = vadd.f32 %v5141, %v5157
        %v5192 = vadd.f32 %v5142, %v5161
        %v5193 = vadd.f32 %v5143, %v5165
        %v5194 = vadd.f32 %v5144, %v5169
        %v5195 = vadd.f32 %v5145, %v5173
        %v5196 = vadd.f32 %v5146, %v5177
        %v5197 = vadd.f32 %v5147, %v5181
        %v5198 = vmax.f32 %v5190, 0.0
        %v5199 = vmax.f32 %v5191, 0.0
        %v5200 = vmax.f32 %v5192, 0.0
        %v5201 = vmax.f32 %v5193, 0.0
        %v5202 = vmax.f32 %v5194, 0.0
        %v5203 = vmax.f32 %v5195, 0.0
        %v5204 = vmax.f32 %v5196, 0.0
        %v5205 = vmax.f32 %v5197, 0.0
        %v5206 = vpack.c.bf16 %v5198, %v5198
        %v5207 = vpack.c.bf16 %v5199, %v5199
        %v5208 = vpack.c.bf16 %v5200, %v5200
        %v5209 = vpack.c.bf16 %v5201, %v5201
        %v5210 = vpack.c.bf16 %v5202, %v5202
        %v5211 = vpack.c.bf16 %v5203, %v5203
        %v5212 = vpack.c.bf16 %v5204, %v5204
        %v5213 = vpack.c.bf16 %v5205, %v5205
        %v5214 = vld [vmem:[%s845] sm:$0xff]
        %v5215 = vld [vmem:[%s845 + $0x8] sm:$0xff]
        %v5216 = vld [vmem:[%s845 + $0x10] sm:$0xff]
        %v5217 = vld [vmem:[%s845 + $0x18] sm:$0xff]
        %v5218 = vld [vmem:[%s845 + $0x20] sm:$0xff]
        %v5219 = vld [vmem:[%s845 + $0x28] sm:$0xff]
        %v5220 = vld [vmem:[%s845 + $0x30] sm:$0xff]
        %v5221 = vld [vmem:[%s845 + $0x38] sm:$0xff]
        %v5222 = vld [vmem:[%s845 + $0x40] sm:$0xff]
        %v5223 = vld [vmem:[%s845 + $0x48] sm:$0xff]
        %v5224 = vld [vmem:[%s845 + $0x50] sm:$0xff]
        %v5225 = vld [vmem:[%s845 + $0x58] sm:$0xff]
        %v5226 = vld [vmem:[%s845 + $0x60] sm:$0xff]
        %v5227 = vld [vmem:[%s845 + $0x68] sm:$0xff]
        %v5228 = vld [vmem:[%s845 + $0x70] sm:$0xff]
        %v5229 = vld [vmem:[%s845 + $0x78] sm:$0xff]
        %v5230 = vld [vmem:[%s845 + $0x80] sm:$0xff]
        %v5231 = vld [vmem:[%s845 + $0x88] sm:$0xff]
        %v5232 = vld [vmem:[%s845 + $0x90] sm:$0xff]
        %v5233 = vld [vmem:[%s845 + $0x98] sm:$0xff]
        %v5234 = vld [vmem:[%s845 + $0xa0] sm:$0xff]
        %v5235 = vld [vmem:[%s845 + $0xa8] sm:$0xff]
        %v5236 = vld [vmem:[%s845 + $0xb0] sm:$0xff]
        %v5237 = vld [vmem:[%s845 + $0xb8] sm:$0xff]
        %v5238 = vld [vmem:[%s845 + $0xc0] sm:$0xff]
        %v5239 = vld [vmem:[%s845 + $0xc8] sm:$0xff]
        %v5240 = vld [vmem:[%s845 + $0xd0] sm:$0xff]
        %v5241 = vld [vmem:[%s845 + $0xd8] sm:$0xff]
        %v5242 = vld [vmem:[%s845 + $0xe0] sm:$0xff]
        %v5243 = vld [vmem:[%s845 + $0xe8] sm:$0xff]
        %v5244 = vld [vmem:[%s845 + $0xf0] sm:$0xff]
        %v5245 = vld [vmem:[%s845 + $0xf8] sm:$0xff]
        %v5246 = vld [vmem:[%s845 + $0x100] sm:$0xff]
        %v5247 = vld [vmem:[%s845 + $0x108] sm:$0xff]
        %v5248 = vld [vmem:[%s845 + $0x110] sm:$0xff]
        %v5249 = vld [vmem:[%s845 + $0x118] sm:$0xff]
        %v5250 = vld [vmem:[%s845 + $0x120] sm:$0xff]
        %v5251 = vld [vmem:[%s845 + $0x128] sm:$0xff]
        %v5252 = vld [vmem:[%s845 + $0x130] sm:$0xff]
        %v5253 = vld [vmem:[%s845 + $0x138] sm:$0xff]
        %v5254 = vld [vmem:[%s845 + $0x140] sm:$0xff]
        %v5255 = vld [vmem:[%s845 + $0x148] sm:$0xff]
        %v5256 = vld [vmem:[%s845 + $0x150] sm:$0xff]
        %v5257 = vld [vmem:[%s845 + $0x158] sm:$0xff]
        %v5258 = vld [vmem:[%s845 + $0x160] sm:$0xff]
        %v5259 = vld [vmem:[%s845 + $0x168] sm:$0xff]
        %v5260 = vld [vmem:[%s845 + $0x170] sm:$0xff]
        %v5261 = vld [vmem:[%s845 + $0x178] sm:$0xff]
        %v5262 = vld [vmem:[%s845 + $0x180] sm:$0xff]
        %v5263 = vld [vmem:[%s845 + $0x188] sm:$0xff]
        %v5264 = vld [vmem:[%s845 + $0x190] sm:$0xff]
        %v5265 = vld [vmem:[%s845 + $0x198] sm:$0xff]
        %v5266 = vld [vmem:[%s845 + $0x1a0] sm:$0xff]
        %v5267 = vld [vmem:[%s845 + $0x1a8] sm:$0xff]
        %v5268 = vld [vmem:[%s845 + $0x1b0] sm:$0xff]
        %v5269 = vld [vmem:[%s845 + $0x1b8] sm:$0xff]
        %v5270 = vld [vmem:[%s845 + $0x1c0] sm:$0xff]
        %v5271 = vld [vmem:[%s845 + $0x1c8] sm:$0xff]
        %v5272 = vld [vmem:[%s845 + $0x1d0] sm:$0xff]
        %v5273 = vld [vmem:[%s845 + $0x1d8] sm:$0xff]
        %v5274 = vld [vmem:[%s845 + $0x1e0] sm:$0xff]
        %v5275 = vld [vmem:[%s845 + $0x1e8] sm:$0xff]
        %v5276 = vld [vmem:[%s845 + $0x1f0] sm:$0xff]
        %v5277 = vld [vmem:[%s845 + $0x1f8] sm:$0xff]
        %v5278 = vld [vmem:[%s845 + $0x200] sm:$0xff]
        %v5279 = vld [vmem:[%s845 + $0x208] sm:$0xff]
        %v5280 = vld [vmem:[%s845 + $0x210] sm:$0xff]
        %v5281 = vld [vmem:[%s845 + $0x218] sm:$0xff]
        %v5282 = vld [vmem:[%s845 + $0x220] sm:$0xff]
        %v5283 = vld [vmem:[%s845 + $0x228] sm:$0xff]
        %v5284 = vld [vmem:[%s845 + $0x230] sm:$0xff]
        %v5285 = vld [vmem:[%s845 + $0x238] sm:$0xff]
        %v5286 = vld [vmem:[%s845 + $0x240] sm:$0xff]
        %v5287 = vld [vmem:[%s845 + $0x248] sm:$0xff]
        %v5288 = vld [vmem:[%s845 + $0x250] sm:$0xff]
        %v5289 = vld [vmem:[%s845 + $0x258] sm:$0xff]
        %v5290 = vld [vmem:[%s845 + $0x260] sm:$0xff]
        %v5291 = vld [vmem:[%s845 + $0x268] sm:$0xff]
        %v5292 = vld [vmem:[%s845 + $0x270] sm:$0xff]
        %v5293 = vld [vmem:[%s845 + $0x278] sm:$0xff]
        %v5294 = vld [vmem:[%s845 + $0x280] sm:$0xff]
        %v5295 = vld [vmem:[%s845 + $0x288] sm:$0xff]
        %v5296 = vld [vmem:[%s845 + $0x290] sm:$0xff]
        %v5297 = vld [vmem:[%s845 + $0x298] sm:$0xff]
        %v5298 = vld [vmem:[%s845 + $0x2a0] sm:$0xff]
        %v5299 = vld [vmem:[%s845 + $0x2a8] sm:$0xff]
        %v5300 = vld [vmem:[%s845 + $0x2b0] sm:$0xff]
        %v5301 = vld [vmem:[%s845 + $0x2b8] sm:$0xff]
        %v5302 = vld [vmem:[%s845 + $0x2c0] sm:$0xff]
        %v5303 = vld [vmem:[%s845 + $0x2c8] sm:$0xff]
        %v5304 = vld [vmem:[%s845 + $0x2d0] sm:$0xff]
        %v5305 = vld [vmem:[%s845 + $0x2d8] sm:$0xff]
        %v5306 = vld [vmem:[%s845 + $0x2e0] sm:$0xff]
        %v5307 = vld [vmem:[%s845 + $0x2e8] sm:$0xff]
        %v5308 = vld [vmem:[%s845 + $0x2f0] sm:$0xff]
        %v5309 = vld [vmem:[%s845 + $0x2f8] sm:$0xff]
        %v5310 = vld [vmem:[%s845 + $0x300] sm:$0xff]
        %v5311 = vld [vmem:[%s845 + $0x308] sm:$0xff]
        %v5312 = vld [vmem:[%s845 + $0x310] sm:$0xff]
        %v5313 = vld [vmem:[%s845 + $0x318] sm:$0xff]
        %v5314 = vld [vmem:[%s845 + $0x320] sm:$0xff]
        %v5315 = vld [vmem:[%s845 + $0x328] sm:$0xff]
        %v5316 = vld [vmem:[%s845 + $0x330] sm:$0xff]
        %v5317 = vld [vmem:[%s845 + $0x338] sm:$0xff]
        %v5318 = vld [vmem:[%s845 + $0x340] sm:$0xff]
        %v5319 = vld [vmem:[%s845 + $0x348] sm:$0xff]
        %v5320 = vld [vmem:[%s845 + $0x350] sm:$0xff]
        %v5321 = vld [vmem:[%s845 + $0x358] sm:$0xff]
        %v5322 = vld [vmem:[%s845 + $0x360] sm:$0xff]
        %v5323 = vld [vmem:[%s845 + $0x368] sm:$0xff]
        %v5324 = vld [vmem:[%s845 + $0x370] sm:$0xff]
        %v5325 = vld [vmem:[%s845 + $0x378] sm:$0xff]
        %v5326 = vld [vmem:[%s845 + $0x380] sm:$0xff]
        %v5327 = vld [vmem:[%s845 + $0x388] sm:$0xff]
        %v5328 = vld [vmem:[%s845 + $0x390] sm:$0xff]
        %v5329 = vld [vmem:[%s845 + $0x398] sm:$0xff]
        %v5330 = vld [vmem:[%s845 + $0x3a0] sm:$0xff]
        %v5331 = vld [vmem:[%s845 + $0x3a8] sm:$0xff]
        %v5332 = vld [vmem:[%s845 + $0x3b0] sm:$0xff]
        %v5333 = vld [vmem:[%s845 + $0x3b8] sm:$0xff]
        %v5334 = vld [vmem:[%s845 + $0x3c0] sm:$0xff]
        %v5335 = vld [vmem:[%s845 + $0x3c8] sm:$0xff]
        %v5336 = vld [vmem:[%s845 + $0x3d0] sm:$0xff]
        %v5337 = vld [vmem:[%s845 + $0x3d8] sm:$0xff]
        %v5338 = vld [vmem:[%s845 + $0x3e0] sm:$0xff]
        %v5339 = vld [vmem:[%s845 + $0x3e8] sm:$0xff]
        %v5340 = vld [vmem:[%s845 + $0x3f0] sm:$0xff]
        %v5341 = vld [vmem:[%s845 + $0x3f8] sm:$0xff]
        %v5342 = vld [vmem:[%s845 + $0x400] sm:$0xff]
        %v5343 = vld [vmem:[%s845 + $0x408] sm:$0xff]
        %v5344 = vld [vmem:[%s845 + $0x410] sm:$0xff]
        %v5345 = vld [vmem:[%s845 + $0x418] sm:$0xff]
        %v5346 = vld [vmem:[%s845 + $0x420] sm:$0xff]
        %v5347 = vld [vmem:[%s845 + $0x428] sm:$0xff]
        %v5348 = vld [vmem:[%s845 + $0x430] sm:$0xff]
        %v5349 = vld [vmem:[%s845 + $0x438] sm:$0xff]
        %v5350 = vld [vmem:[%s845 + $0x440] sm:$0xff]
        %v5351 = vld [vmem:[%s845 + $0x448] sm:$0xff]
        %v5352 = vld [vmem:[%s845 + $0x450] sm:$0xff]
        %v5353 = vld [vmem:[%s845 + $0x458] sm:$0xff]
        %v5354 = vld [vmem:[%s845 + $0x460] sm:$0xff]
        %v5355 = vld [vmem:[%s845 + $0x468] sm:$0xff]
        %v5356 = vld [vmem:[%s845 + $0x470] sm:$0xff]
        %v5357 = vld [vmem:[%s845 + $0x478] sm:$0xff]
        %v5358 = vld [vmem:[%s845 + $0x480] sm:$0xff]
        %v5359 = vld [vmem:[%s845 + $0x488] sm:$0xff]
        %v5360 = vld [vmem:[%s845 + $0x490] sm:$0xff]
        %v5361 = vld [vmem:[%s845 + $0x498] sm:$0xff]
        %v5362 = vld [vmem:[%s845 + $0x4a0] sm:$0xff]
        %v5363 = vld [vmem:[%s845 + $0x4a8] sm:$0xff]
        %v5364 = vld [vmem:[%s845 + $0x4b0] sm:$0xff]
        %v5365 = vld [vmem:[%s845 + $0x4b8] sm:$0xff]
        %v5366 = vld [vmem:[%s845 + $0x4c0] sm:$0xff]
        %v5367 = vld [vmem:[%s845 + $0x4c8] sm:$0xff]
        %v5368 = vld [vmem:[%s845 + $0x4d0] sm:$0xff]
        %v5369 = vld [vmem:[%s845 + $0x4d8] sm:$0xff]
        %v5370 = vld [vmem:[%s845 + $0x4e0] sm:$0xff]
        %v5371 = vld [vmem:[%s845 + $0x4e8] sm:$0xff]
        %v5372 = vld [vmem:[%s845 + $0x4f0] sm:$0xff]
        %v5373 = vld [vmem:[%s845 + $0x4f8] sm:$0xff]
        %v5374 = vld [vmem:[%s845 + $0x500] sm:$0xff]
        %v5375 = vld [vmem:[%s845 + $0x508] sm:$0xff]
        %v5376 = vld [vmem:[%s845 + $0x510] sm:$0xff]
        %v5377 = vld [vmem:[%s845 + $0x518] sm:$0xff]
        %v5378 = vld [vmem:[%s845 + $0x520] sm:$0xff]
        %v5379 = vld [vmem:[%s845 + $0x528] sm:$0xff]
        %v5380 = vld [vmem:[%s845 + $0x530] sm:$0xff]
        %v5381 = vld [vmem:[%s845 + $0x538] sm:$0xff]
        %v5382 = vld [vmem:[%s845 + $0x540] sm:$0xff]
        %v5383 = vld [vmem:[%s845 + $0x548] sm:$0xff]
        %v5384 = vld [vmem:[%s845 + $0x550] sm:$0xff]
        %v5385 = vld [vmem:[%s845 + $0x558] sm:$0xff]
        %v5386 = vld [vmem:[%s845 + $0x560] sm:$0xff]
        %v5387 = vld [vmem:[%s845 + $0x568] sm:$0xff]
        %v5388 = vld [vmem:[%s845 + $0x570] sm:$0xff]
        %v5389 = vld [vmem:[%s845 + $0x578] sm:$0xff]
        %v5390 = vld [vmem:[%s845 + $0x580] sm:$0xff]
        %v5391 = vld [vmem:[%s845 + $0x588] sm:$0xff]
        %v5392 = vld [vmem:[%s845 + $0x590] sm:$0xff]
        %v5393 = vld [vmem:[%s845 + $0x598] sm:$0xff]
        %v5394 = vld [vmem:[%s845 + $0x5a0] sm:$0xff]
        %v5395 = vld [vmem:[%s845 + $0x5a8] sm:$0xff]
        %v5396 = vld [vmem:[%s845 + $0x5b0] sm:$0xff]
        %v5397 = vld [vmem:[%s845 + $0x5b8] sm:$0xff]
        %v5398 = vld [vmem:[%s845 + $0x5c0] sm:$0xff]
        %v5399 = vld [vmem:[%s845 + $0x5c8] sm:$0xff]
        %v5400 = vld [vmem:[%s845 + $0x5d0] sm:$0xff]
        %v5401 = vld [vmem:[%s845 + $0x5d8] sm:$0xff]
        %v5402 = vld [vmem:[%s845 + $0x5e0] sm:$0xff]
        %v5403 = vld [vmem:[%s845 + $0x5e8] sm:$0xff]
        %v5404 = vld [vmem:[%s845 + $0x5f0] sm:$0xff]
        %v5405 = vld [vmem:[%s845 + $0x5f8] sm:$0xff]
        %v5406 = vld [vmem:[%s845 + $0x600] sm:$0xff]
        %v5407 = vld [vmem:[%s845 + $0x608] sm:$0xff]
        %v5408 = vld [vmem:[%s845 + $0x610] sm:$0xff]
        %v5409 = vld [vmem:[%s845 + $0x618] sm:$0xff]
        %v5410 = vld [vmem:[%s845 + $0x620] sm:$0xff]
        %v5411 = vld [vmem:[%s845 + $0x628] sm:$0xff]
        %v5412 = vld [vmem:[%s845 + $0x630] sm:$0xff]
        %v5413 = vld [vmem:[%s845 + $0x638] sm:$0xff]
        %v5414 = vld [vmem:[%s845 + $0x640] sm:$0xff]
        %v5415 = vld [vmem:[%s845 + $0x648] sm:$0xff]
        %v5416 = vld [vmem:[%s845 + $0x650] sm:$0xff]
        %v5417 = vld [vmem:[%s845 + $0x658] sm:$0xff]
        %v5418 = vld [vmem:[%s845 + $0x660] sm:$0xff]
        %v5419 = vld [vmem:[%s845 + $0x668] sm:$0xff]
        %v5420 = vld [vmem:[%s845 + $0x670] sm:$0xff]
        %v5421 = vld [vmem:[%s845 + $0x678] sm:$0xff]
        %v5422 = vld [vmem:[%s845 + $0x680] sm:$0xff]
        %v5423 = vld [vmem:[%s845 + $0x688] sm:$0xff]
        %v5424 = vld [vmem:[%s845 + $0x690] sm:$0xff]
        %v5425 = vld [vmem:[%s845 + $0x698] sm:$0xff]
        %v5426 = vld [vmem:[%s845 + $0x6a0] sm:$0xff]
        %v5427 = vld [vmem:[%s845 + $0x6a8] sm:$0xff]
        %v5428 = vld [vmem:[%s845 + $0x6b0] sm:$0xff]
        %v5429 = vld [vmem:[%s845 + $0x6b8] sm:$0xff]
        %v5430 = vld [vmem:[%s845 + $0x6c0] sm:$0xff]
        %v5431 = vld [vmem:[%s845 + $0x6c8] sm:$0xff]
        %v5432 = vld [vmem:[%s845 + $0x6d0] sm:$0xff]
        %v5433 = vld [vmem:[%s845 + $0x6d8] sm:$0xff]
        %v5434 = vld [vmem:[%s845 + $0x6e0] sm:$0xff]
        %v5435 = vld [vmem:[%s845 + $0x6e8] sm:$0xff]
        %v5436 = vld [vmem:[%s845 + $0x6f0] sm:$0xff]
        %v5437 = vld [vmem:[%s845 + $0x6f8] sm:$0xff]
        %v5438 = vld [vmem:[%s845 + $0x700] sm:$0xff]
        %v5439 = vld [vmem:[%s845 + $0x708] sm:$0xff]
        %v5440 = vld [vmem:[%s845 + $0x710] sm:$0xff]
        %v5441 = vld [vmem:[%s845 + $0x718] sm:$0xff]
        %v5442 = vld [vmem:[%s845 + $0x720] sm:$0xff]
        %v5443 = vld [vmem:[%s845 + $0x728] sm:$0xff]
        %v5444 = vld [vmem:[%s845 + $0x730] sm:$0xff]
        %v5445 = vld [vmem:[%s845 + $0x738] sm:$0xff]
        %v5446 = vld [vmem:[%s845 + $0x740] sm:$0xff]
        %v5447 = vld [vmem:[%s845 + $0x748] sm:$0xff]
        %v5448 = vld [vmem:[%s845 + $0x750] sm:$0xff]
        %v5449 = vld [vmem:[%s845 + $0x758] sm:$0xff]
        %v5450 = vld [vmem:[%s845 + $0x760] sm:$0xff]
        %v5451 = vld [vmem:[%s845 + $0x768] sm:$0xff]
        %v5452 = vld [vmem:[%s845 + $0x770] sm:$0xff]
        %v5453 = vld [vmem:[%s845 + $0x778] sm:$0xff]
        %v5454 = vld [vmem:[%s845 + $0x780] sm:$0xff]
        %v5455 = vld [vmem:[%s845 + $0x788] sm:$0xff]
        %v5456 = vld [vmem:[%s845 + $0x790] sm:$0xff]
        %v5457 = vld [vmem:[%s845 + $0x798] sm:$0xff]
        %v5458 = vld [vmem:[%s845 + $0x7a0] sm:$0xff]
        %v5459 = vld [vmem:[%s845 + $0x7a8] sm:$0xff]
        %v5460 = vld [vmem:[%s845 + $0x7b0] sm:$0xff]
        %v5461 = vld [vmem:[%s845 + $0x7b8] sm:$0xff]
        %v5462 = vld [vmem:[%s845 + $0x7c0] sm:$0xff]
        %v5463 = vld [vmem:[%s845 + $0x7c8] sm:$0xff]
        %v5464 = vld [vmem:[%s845 + $0x7d0] sm:$0xff]
        %v5465 = vld [vmem:[%s845 + $0x7d8] sm:$0xff]
        %v5466 = vld [vmem:[%s845 + $0x7e0] sm:$0xff]
        %v5467 = vld [vmem:[%s845 + $0x7e8] sm:$0xff]
        %v5468 = vld [vmem:[%s845 + $0x7f0] sm:$0xff]
        %v5469 = vld [vmem:[%s845 + $0x7f8] sm:$0xff]
        %v5470 = vld [vmem:[%s845 + $0x800] sm:$0xff]
        %v5471 = vld [vmem:[%s845 + $0x808] sm:$0xff]
        %v5472 = vld [vmem:[%s845 + $0x810] sm:$0xff]
        %v5473 = vld [vmem:[%s845 + $0x818] sm:$0xff]
        %v5474 = vld [vmem:[%s845 + $0x820] sm:$0xff]
        %v5475 = vld [vmem:[%s845 + $0x828] sm:$0xff]
        %v5476 = vld [vmem:[%s845 + $0x830] sm:$0xff]
        %v5477 = vld [vmem:[%s845 + $0x838] sm:$0xff]
        %v5478 = vld [vmem:[%s845 + $0x840] sm:$0xff]
        %v5479 = vld [vmem:[%s845 + $0x848] sm:$0xff]
        %v5480 = vld [vmem:[%s845 + $0x850] sm:$0xff]
        %v5481 = vld [vmem:[%s845 + $0x858] sm:$0xff]
        %v5482 = vld [vmem:[%s845 + $0x860] sm:$0xff]
        %v5483 = vld [vmem:[%s845 + $0x868] sm:$0xff]
        %v5484 = vld [vmem:[%s845 + $0x870] sm:$0xff]
        %v5485 = vld [vmem:[%s845 + $0x878] sm:$0xff]
        %v5486 = vld [vmem:[%s845 + $0x880] sm:$0xff]
        %v5487 = vld [vmem:[%s845 + $0x888] sm:$0xff]
        %v5488 = vld [vmem:[%s845 + $0x890] sm:$0xff]
        %v5489 = vld [vmem:[%s845 + $0x898] sm:$0xff]
        %v5490 = vld [vmem:[%s845 + $0x8a0] sm:$0xff]
        %v5491 = vld [vmem:[%s845 + $0x8a8] sm:$0xff]
        %v5492 = vld [vmem:[%s845 + $0x8b0] sm:$0xff]
        %v5493 = vld [vmem:[%s845 + $0x8b8] sm:$0xff]
        %v5494 = vld [vmem:[%s845 + $0x8c0] sm:$0xff]
        %v5495 = vld [vmem:[%s845 + $0x8c8] sm:$0xff]
        %v5496 = vld [vmem:[%s845 + $0x8d0] sm:$0xff]
        %v5497 = vld [vmem:[%s845 + $0x8d8] sm:$0xff]
        %v5498 = vld [vmem:[%s845 + $0x8e0] sm:$0xff]
        %v5499 = vld [vmem:[%s845 + $0x8e8] sm:$0xff]
        %v5500 = vld [vmem:[%s845 + $0x8f0] sm:$0xff]
        %v5501 = vld [vmem:[%s845 + $0x8f8] sm:$0xff]
        %v5502 = vld [vmem:[%s845 + $0x900] sm:$0xff]
        %v5503 = vld [vmem:[%s845 + $0x908] sm:$0xff]
        %v5504 = vld [vmem:[%s845 + $0x910] sm:$0xff]
        %v5505 = vld [vmem:[%s845 + $0x918] sm:$0xff]
        %v5506 = vld [vmem:[%s845 + $0x920] sm:$0xff]
        %v5507 = vld [vmem:[%s845 + $0x928] sm:$0xff]
        %v5508 = vld [vmem:[%s845 + $0x930] sm:$0xff]
        %v5509 = vld [vmem:[%s845 + $0x938] sm:$0xff]
        %v5510 = vld [vmem:[%s845 + $0x940] sm:$0xff]
        %v5511 = vld [vmem:[%s845 + $0x948] sm:$0xff]
        %v5512 = vld [vmem:[%s845 + $0x950] sm:$0xff]
        %v5513 = vld [vmem:[%s845 + $0x958] sm:$0xff]
        %v5514 = vld [vmem:[%s845 + $0x960] sm:$0xff]
        %v5515 = vld [vmem:[%s845 + $0x968] sm:$0xff]
        %v5516 = vld [vmem:[%s845 + $0x970] sm:$0xff]
        %v5517 = vld [vmem:[%s845 + $0x978] sm:$0xff]
        %v5518 = vld [vmem:[%s845 + $0x980] sm:$0xff]
        %v5519 = vld [vmem:[%s845 + $0x988] sm:$0xff]
        %v5520 = vld [vmem:[%s845 + $0x990] sm:$0xff]
        %v5521 = vld [vmem:[%s845 + $0x998] sm:$0xff]
        %v5522 = vld [vmem:[%s845 + $0x9a0] sm:$0xff]
        %v5523 = vld [vmem:[%s845 + $0x9a8] sm:$0xff]
        %v5524 = vld [vmem:[%s845 + $0x9b0] sm:$0xff]
        %v5525 = vld [vmem:[%s845 + $0x9b8] sm:$0xff]
        %v5526 = vld [vmem:[%s845 + $0x9c0] sm:$0xff]
        %v5527 = vld [vmem:[%s845 + $0x9c8] sm:$0xff]
        %v5528 = vld [vmem:[%s845 + $0x9d0] sm:$0xff]
        %v5529 = vld [vmem:[%s845 + $0x9d8] sm:$0xff]
        %v5530 = vld [vmem:[%s845 + $0x9e0] sm:$0xff]
        %v5531 = vld [vmem:[%s845 + $0x9e8] sm:$0xff]
        %v5532 = vld [vmem:[%s845 + $0x9f0] sm:$0xff]
        %v5533 = vld [vmem:[%s845 + $0x9f8] sm:$0xff]
        %v5534 = vld [vmem:[%s845 + $0xa00] sm:$0xff]
        %v5535 = vld [vmem:[%s845 + $0xa08] sm:$0xff]
        %v5536 = vld [vmem:[%s845 + $0xa10] sm:$0xff]
        %v5537 = vld [vmem:[%s845 + $0xa18] sm:$0xff]
        %v5538 = vld [vmem:[%s845 + $0xa20] sm:$0xff]
        %v5539 = vld [vmem:[%s845 + $0xa28] sm:$0xff]
        %v5540 = vld [vmem:[%s845 + $0xa30] sm:$0xff]
        %v5541 = vld [vmem:[%s845 + $0xa38] sm:$0xff]
        %v5542 = vld [vmem:[%s845 + $0xa40] sm:$0xff]
        %v5543 = vld [vmem:[%s845 + $0xa48] sm:$0xff]
        %v5544 = vld [vmem:[%s845 + $0xa50] sm:$0xff]
        %v5545 = vld [vmem:[%s845 + $0xa58] sm:$0xff]
        %v5546 = vld [vmem:[%s845 + $0xa60] sm:$0xff]
        %v5547 = vld [vmem:[%s845 + $0xa68] sm:$0xff]
        %v5548 = vld [vmem:[%s845 + $0xa70] sm:$0xff]
        %v5549 = vld [vmem:[%s845 + $0xa78] sm:$0xff]
        %v5550 = vld [vmem:[%s845 + $0xa80] sm:$0xff]
        %v5551 = vld [vmem:[%s845 + $0xa88] sm:$0xff]
        %v5552 = vld [vmem:[%s845 + $0xa90] sm:$0xff]
        %v5553 = vld [vmem:[%s845 + $0xa98] sm:$0xff]
        %v5554 = vld [vmem:[%s845 + $0xaa0] sm:$0xff]
        %v5555 = vld [vmem:[%s845 + $0xaa8] sm:$0xff]
        %v5556 = vld [vmem:[%s845 + $0xab0] sm:$0xff]
        %v5557 = vld [vmem:[%s845 + $0xab8] sm:$0xff]
        %v5558 = vld [vmem:[%s845 + $0xac0] sm:$0xff]
        %v5559 = vld [vmem:[%s845 + $0xac8] sm:$0xff]
        %v5560 = vld [vmem:[%s845 + $0xad0] sm:$0xff]
        %v5561 = vld [vmem:[%s845 + $0xad8] sm:$0xff]
        %v5562 = vld [vmem:[%s845 + $0xae0] sm:$0xff]
        %v5563 = vld [vmem:[%s845 + $0xae8] sm:$0xff]
        %v5564 = vld [vmem:[%s845 + $0xaf0] sm:$0xff]
        %v5565 = vld [vmem:[%s845 + $0xaf8] sm:$0xff]
        %v5566 = vld [vmem:[%s845 + $0xb00] sm:$0xff]
        %v5567 = vld [vmem:[%s845 + $0xb08] sm:$0xff]
        %v5568 = vld [vmem:[%s845 + $0xb10] sm:$0xff]
        %v5569 = vld [vmem:[%s845 + $0xb18] sm:$0xff]
        %v5570 = vld [vmem:[%s845 + $0xb20] sm:$0xff]
        %v5571 = vld [vmem:[%s845 + $0xb28] sm:$0xff]
        %v5572 = vld [vmem:[%s845 + $0xb30] sm:$0xff]
        %v5573 = vld [vmem:[%s845 + $0xb38] sm:$0xff]
        %v5574 = vld [vmem:[%s845 + $0xb40] sm:$0xff]
        %v5575 = vld [vmem:[%s845 + $0xb48] sm:$0xff]
        %v5576 = vld [vmem:[%s845 + $0xb50] sm:$0xff]
        %v5577 = vld [vmem:[%s845 + $0xb58] sm:$0xff]
        %v5578 = vld [vmem:[%s845 + $0xb60] sm:$0xff]
        %v5579 = vld [vmem:[%s845 + $0xb68] sm:$0xff]
        %v5580 = vld [vmem:[%s845 + $0xb70] sm:$0xff]
        %v5581 = vld [vmem:[%s845 + $0xb78] sm:$0xff]
        %v5582 = vld [vmem:[%s845 + $0xb80] sm:$0xff]
        %v5583 = vld [vmem:[%s845 + $0xb88] sm:$0xff]
        %v5584 = vld [vmem:[%s845 + $0xb90] sm:$0xff]
        %v5585 = vld [vmem:[%s845 + $0xb98] sm:$0xff]
        %v5586 = vld [vmem:[%s845 + $0xba0] sm:$0xff]
        %v5587 = vld [vmem:[%s845 + $0xba8] sm:$0xff]
        %v5588 = vld [vmem:[%s845 + $0xbb0] sm:$0xff]
        %v5589 = vld [vmem:[%s845 + $0xbb8] sm:$0xff]
        %v5590 = vld [vmem:[%s845 + $0xbc0] sm:$0xff]
        %v5591 = vld [vmem:[%s845 + $0xbc8] sm:$0xff]
        %v5592 = vld [vmem:[%s845 + $0xbd0] sm:$0xff]
        %v5593 = vld [vmem:[%s845 + $0xbd8] sm:$0xff]
        %v5594 = vld [vmem:[%s845 + $0xbe0] sm:$0xff]
        %v5595 = vld [vmem:[%s845 + $0xbe8] sm:$0xff]
        %v5596 = vld [vmem:[%s845 + $0xbf0] sm:$0xff]
        %v5597 = vld [vmem:[%s845 + $0xbf8] sm:$0xff]
        %v5598 = vld [vmem:[%s845 + $0xc00] sm:$0xff]
        %v5599 = vld [vmem:[%s845 + $0xc08] sm:$0xff]
        %v5600 = vld [vmem:[%s845 + $0xc10] sm:$0xff]
        %v5601 = vld [vmem:[%s845 + $0xc18] sm:$0xff]
        %v5602 = vld [vmem:[%s845 + $0xc20] sm:$0xff]
        %v5603 = vld [vmem:[%s845 + $0xc28] sm:$0xff]
        %v5604 = vld [vmem:[%s845 + $0xc30] sm:$0xff]
        %v5605 = vld [vmem:[%s845 + $0xc38] sm:$0xff]
        %v5606 = vld [vmem:[%s845 + $0xc40] sm:$0xff]
        %v5607 = vld [vmem:[%s845 + $0xc48] sm:$0xff]
        %v5608 = vld [vmem:[%s845 + $0xc50] sm:$0xff]
        %v5609 = vld [vmem:[%s845 + $0xc58] sm:$0xff]
        %v5610 = vld [vmem:[%s845 + $0xc60] sm:$0xff]
        %v5611 = vld [vmem:[%s845 + $0xc68] sm:$0xff]
        %v5612 = vld [vmem:[%s845 + $0xc70] sm:$0xff]
        %v5613 = vld [vmem:[%s845 + $0xc78] sm:$0xff]
        %v5614 = vld [vmem:[%s845 + $0xc80] sm:$0xff]
        %v5615 = vld [vmem:[%s845 + $0xc88] sm:$0xff]
        %v5616 = vld [vmem:[%s845 + $0xc90] sm:$0xff]
        %v5617 = vld [vmem:[%s845 + $0xc98] sm:$0xff]
        %v5618 = vld [vmem:[%s845 + $0xca0] sm:$0xff]
        %v5619 = vld [vmem:[%s845 + $0xca8] sm:$0xff]
        %v5620 = vld [vmem:[%s845 + $0xcb0] sm:$0xff]
        %v5621 = vld [vmem:[%s845 + $0xcb8] sm:$0xff]
        %v5622 = vld [vmem:[%s845 + $0xcc0] sm:$0xff]
        %v5623 = vld [vmem:[%s845 + $0xcc8] sm:$0xff]
        %v5624 = vld [vmem:[%s845 + $0xcd0] sm:$0xff]
        %v5625 = vld [vmem:[%s845 + $0xcd8] sm:$0xff]
        %v5626 = vld [vmem:[%s845 + $0xce0] sm:$0xff]
        %v5627 = vld [vmem:[%s845 + $0xce8] sm:$0xff]
        %v5628 = vld [vmem:[%s845 + $0xcf0] sm:$0xff]
        %v5629 = vld [vmem:[%s845 + $0xcf8] sm:$0xff]
        %v5630 = vld [vmem:[%s845 + $0xd00] sm:$0xff]
        %v5631 = vld [vmem:[%s845 + $0xd08] sm:$0xff]
        %v5632 = vld [vmem:[%s845 + $0xd10] sm:$0xff]
        %v5633 = vld [vmem:[%s845 + $0xd18] sm:$0xff]
        %v5634 = vld [vmem:[%s845 + $0xd20] sm:$0xff]
        %v5635 = vld [vmem:[%s845 + $0xd28] sm:$0xff]
        %v5636 = vld [vmem:[%s845 + $0xd30] sm:$0xff]
        %v5637 = vld [vmem:[%s845 + $0xd38] sm:$0xff]
        %v5638 = vld [vmem:[%s845 + $0xd40] sm:$0xff]
        %v5639 = vld [vmem:[%s845 + $0xd48] sm:$0xff]
        %v5640 = vld [vmem:[%s845 + $0xd50] sm:$0xff]
        %v5641 = vld [vmem:[%s845 + $0xd58] sm:$0xff]
        %v5642 = vld [vmem:[%s845 + $0xd60] sm:$0xff]
        %v5643 = vld [vmem:[%s845 + $0xd68] sm:$0xff]
        %v5644 = vld [vmem:[%s845 + $0xd70] sm:$0xff]
        %v5645 = vld [vmem:[%s845 + $0xd78] sm:$0xff]
        %v5646 = vld [vmem:[%s845 + $0xd80] sm:$0xff]
        %v5647 = vld [vmem:[%s845 + $0xd88] sm:$0xff]
        %v5648 = vld [vmem:[%s845 + $0xd90] sm:$0xff]
        %v5649 = vld [vmem:[%s845 + $0xd98] sm:$0xff]
        %v5650 = vld [vmem:[%s845 + $0xda0] sm:$0xff]
        %v5651 = vld [vmem:[%s845 + $0xda8] sm:$0xff]
        %v5652 = vld [vmem:[%s845 + $0xdb0] sm:$0xff]
        %v5653 = vld [vmem:[%s845 + $0xdb8] sm:$0xff]
        %v5654 = vld [vmem:[%s845 + $0xdc0] sm:$0xff]
        %v5655 = vld [vmem:[%s845 + $0xdc8] sm:$0xff]
        %v5656 = vld [vmem:[%s845 + $0xdd0] sm:$0xff]
        %v5657 = vld [vmem:[%s845 + $0xdd8] sm:$0xff]
        %v5658 = vld [vmem:[%s845 + $0xde0] sm:$0xff]
        %v5659 = vld [vmem:[%s845 + $0xde8] sm:$0xff]
        %v5660 = vld [vmem:[%s845 + $0xdf0] sm:$0xff]
        %v5661 = vld [vmem:[%s845 + $0xdf8] sm:$0xff]
        %v5662 = vld [vmem:[%s845 + $0xe00] sm:$0xff]
        %v5663 = vld [vmem:[%s845 + $0xe08] sm:$0xff]
        %v5664 = vld [vmem:[%s845 + $0xe10] sm:$0xff]
        %v5665 = vld [vmem:[%s845 + $0xe18] sm:$0xff]
        %v5666 = vld [vmem:[%s845 + $0xe20] sm:$0xff]
        %v5667 = vld [vmem:[%s845 + $0xe28] sm:$0xff]
        %v5668 = vld [vmem:[%s845 + $0xe30] sm:$0xff]
        %v5669 = vld [vmem:[%s845 + $0xe38] sm:$0xff]
        %v5670 = vld [vmem:[%s845 + $0xe40] sm:$0xff]
        %v5671 = vld [vmem:[%s845 + $0xe48] sm:$0xff]
        %v5672 = vld [vmem:[%s845 + $0xe50] sm:$0xff]
        %v5673 = vld [vmem:[%s845 + $0xe58] sm:$0xff]
        %v5674 = vld [vmem:[%s845 + $0xe60] sm:$0xff]
        %v5675 = vld [vmem:[%s845 + $0xe68] sm:$0xff]
        %v5676 = vld [vmem:[%s845 + $0xe70] sm:$0xff]
        %v5677 = vld [vmem:[%s845 + $0xe78] sm:$0xff]
        %v5678 = vld [vmem:[%s845 + $0xe80] sm:$0xff]
        %v5679 = vld [vmem:[%s845 + $0xe88] sm:$0xff]
        %v5680 = vld [vmem:[%s845 + $0xe90] sm:$0xff]
        %v5681 = vld [vmem:[%s845 + $0xe98] sm:$0xff]
        %v5682 = vld [vmem:[%s845 + $0xea0] sm:$0xff]
        %v5683 = vld [vmem:[%s845 + $0xea8] sm:$0xff]
        %v5684 = vld [vmem:[%s845 + $0xeb0] sm:$0xff]
        %v5685 = vld [vmem:[%s845 + $0xeb8] sm:$0xff]
        %v5686 = vld [vmem:[%s845 + $0xec0] sm:$0xff]
        %v5687 = vld [vmem:[%s845 + $0xec8] sm:$0xff]
        %v5688 = vld [vmem:[%s845 + $0xed0] sm:$0xff]
        %v5689 = vld [vmem:[%s845 + $0xed8] sm:$0xff]
        %v5690 = vld [vmem:[%s845 + $0xee0] sm:$0xff]
        %v5691 = vld [vmem:[%s845 + $0xee8] sm:$0xff]
        %v5692 = vld [vmem:[%s845 + $0xef0] sm:$0xff]
        %v5693 = vld [vmem:[%s845 + $0xef8] sm:$0xff]
        %v5694 = vld [vmem:[%s845 + $0xf00] sm:$0xff]
        %v5695 = vld [vmem:[%s845 + $0xf08] sm:$0xff]
        %v5696 = vld [vmem:[%s845 + $0xf10] sm:$0xff]
        %v5697 = vld [vmem:[%s845 + $0xf18] sm:$0xff]
        %v5698 = vld [vmem:[%s845 + $0xf20] sm:$0xff]
        %v5699 = vld [vmem:[%s845 + $0xf28] sm:$0xff]
        %v5700 = vld [vmem:[%s845 + $0xf30] sm:$0xff]
        %v5701 = vld [vmem:[%s845 + $0xf38] sm:$0xff]
        %v5702 = vld [vmem:[%s845 + $0xf40] sm:$0xff]
        %v5703 = vld [vmem:[%s845 + $0xf48] sm:$0xff]
        %v5704 = vld [vmem:[%s845 + $0xf50] sm:$0xff]
        %v5705 = vld [vmem:[%s845 + $0xf58] sm:$0xff]
        %v5706 = vld [vmem:[%s845 + $0xf60] sm:$0xff]
        %v5707 = vld [vmem:[%s845 + $0xf68] sm:$0xff]
        %v5708 = vld [vmem:[%s845 + $0xf70] sm:$0xff]
        %v5709 = vld [vmem:[%s845 + $0xf78] sm:$0xff]
        %v5710 = vld [vmem:[%s845 + $0xf80] sm:$0xff]
        %v5711 = vld [vmem:[%s845 + $0xf88] sm:$0xff]
        %v5712 = vld [vmem:[%s845 + $0xf90] sm:$0xff]
        %v5713 = vld [vmem:[%s845 + $0xf98] sm:$0xff]
        %v5714 = vld [vmem:[%s845 + $0xfa0] sm:$0xff]
        %v5715 = vld [vmem:[%s845 + $0xfa8] sm:$0xff]
        %v5716 = vld [vmem:[%s845 + $0xfb0] sm:$0xff]
        %v5717 = vld [vmem:[%s845 + $0xfb8] sm:$0xff]
        %v5718 = vld [vmem:[%s845 + $0xfc0] sm:$0xff]
        %v5719 = vld [vmem:[%s845 + $0xfc8] sm:$0xff]
        %v5720 = vld [vmem:[%s845 + $0xfd0] sm:$0xff]
        %v5721 = vld [vmem:[%s845 + $0xfd8] sm:$0xff]
        %v5722 = vld [vmem:[%s845 + $0xfe0] sm:$0xff]
        %v5723 = vld [vmem:[%s845 + $0xfe8] sm:$0xff]
        %v5724 = vld [vmem:[%s845 + $0xff0] sm:$0xff]
        %v5725 = vld [vmem:[%s845 + $0xff8] sm:$0xff]
        %v6238 = vunpack.c.l.b16 %v5214
        %v6239 = vunpack.c.h.b16 %v5214
        %v6240 = vunpack.c.l.b16 %v5215
        %v6241 = vunpack.c.h.b16 %v5215
        %v6242 = vunpack.c.l.b16 %v5216
        %v6243 = vunpack.c.h.b16 %v5216
        %v6244 = vunpack.c.l.b16 %v5217
        %v6245 = vunpack.c.h.b16 %v5217
        %v6246 = vunpack.c.l.b16 %v5218
        %v6247 = vunpack.c.h.b16 %v5218
        %v6248 = vunpack.c.l.b16 %v5219
        %v6249 = vunpack.c.h.b16 %v5219
        %v6250 = vunpack.c.l.b16 %v5220
        %v6251 = vunpack.c.h.b16 %v5220
        %v6252 = vunpack.c.l.b16 %v5221
        %v6253 = vunpack.c.h.b16 %v5221
        %v6254 = vunpack.c.l.b16 %v5222
        %v6255 = vunpack.c.h.b16 %v5222
        %v6256 = vunpack.c.l.b16 %v5223
        %v6257 = vunpack.c.h.b16 %v5223
        %v6258 = vunpack.c.l.b16 %v5224
        %v6259 = vunpack.c.h.b16 %v5224
        %v6260 = vunpack.c.l.b16 %v5225
        %v6261 = vunpack.c.h.b16 %v5225
        %v6262 = vunpack.c.l.b16 %v5226
        %v6263 = vunpack.c.h.b16 %v5226
        %v6264 = vunpack.c.l.b16 %v5227
        %v6265 = vunpack.c.h.b16 %v5227
        %v6266 = vunpack.c.l.b16 %v5228
        %v6267 = vunpack.c.h.b16 %v5228
        %v6268 = vunpack.c.l.b16 %v5229
        %v6269 = vunpack.c.h.b16 %v5229
        %v6270 = vunpack.c.l.b16 %v5230
        %v6271 = vunpack.c.h.b16 %v5230
        %v6272 = vunpack.c.l.b16 %v5231
        %v6273 = vunpack.c.h.b16 %v5231
        %v6274 = vunpack.c.l.b16 %v5232
        %v6275 = vunpack.c.h.b16 %v5232
        %v6276 = vunpack.c.l.b16 %v5233
        %v6277 = vunpack.c.h.b16 %v5233
        %v6278 = vunpack.c.l.b16 %v5234
        %v6279 = vunpack.c.h.b16 %v5234
        %v6280 = vunpack.c.l.b16 %v5235
        %v6281 = vunpack.c.h.b16 %v5235
        %v6282 = vunpack.c.l.b16 %v5236
        %v6283 = vunpack.c.h.b16 %v5236
        %v6284 = vunpack.c.l.b16 %v5237
        %v6285 = vunpack.c.h.b16 %v5237
        %v6286 = vunpack.c.l.b16 %v5238
        %v6287 = vunpack.c.h.b16 %v5238
        %v6288 = vunpack.c.l.b16 %v5239
        %v6289 = vunpack.c.h.b16 %v5239
        %v6290 = vunpack.c.l.b16 %v5240
        %v6291 = vunpack.c.h.b16 %v5240
        %v6292 = vunpack.c.l.b16 %v5241
        %v6293 = vunpack.c.h.b16 %v5241
        %v6294 = vunpack.c.l.b16 %v5242
        %v6295 = vunpack.c.h.b16 %v5242
        %v6296 = vunpack.c.l.b16 %v5243
        %v6297 = vunpack.c.h.b16 %v5243
        %v6298 = vunpack.c.l.b16 %v5244
        %v6299 = vunpack.c.h.b16 %v5244
        %v6300 = vunpack.c.l.b16 %v5245
        %v6301 = vunpack.c.h.b16 %v5245
        %v6302 = vunpack.c.l.b16 %v5246
        %v6303 = vunpack.c.h.b16 %v5246
        %v6304 = vunpack.c.l.b16 %v5247
        %v6305 = vunpack.c.h.b16 %v5247
        %v6306 = vunpack.c.l.b16 %v5248
        %v6307 = vunpack.c.h.b16 %v5248
        %v6308 = vunpack.c.l.b16 %v5249
        %v6309 = vunpack.c.h.b16 %v5249
        %v6310 = vunpack.c.l.b16 %v5250
        %v6311 = vunpack.c.h.b16 %v5250
        %v6312 = vunpack.c.l.b16 %v5251
        %v6313 = vunpack.c.h.b16 %v5251
        %v6314 = vunpack.c.l.b16 %v5252
        %v6315 = vunpack.c.h.b16 %v5252
        %v6316 = vunpack.c.l.b16 %v5253
        %v6317 = vunpack.c.h.b16 %v5253
        %v6318 = vunpack.c.l.b16 %v5254
        %v6319 = vunpack.c.h.b16 %v5254
        %v6320 = vunpack.c.l.b16 %v5255
        %v6321 = vunpack.c.h.b16 %v5255
        %v6322 = vunpack.c.l.b16 %v5256
        %v6323 = vunpack.c.h.b16 %v5256
        %v6324 = vunpack.c.l.b16 %v5257
        %v6325 = vunpack.c.h.b16 %v5257
        %v6326 = vunpack.c.l.b16 %v5258
        %v6327 = vunpack.c.h.b16 %v5258
        %v6328 = vunpack.c.l.b16 %v5259
        %v6329 = vunpack.c.h.b16 %v5259
        %v6330 = vunpack.c.l.b16 %v5260
        %v6331 = vunpack.c.h.b16 %v5260
        %v6332 = vunpack.c.l.b16 %v5261
        %v6333 = vunpack.c.h.b16 %v5261
        %v6334 = vunpack.c.l.b16 %v5262
        %v6335 = vunpack.c.h.b16 %v5262
        %v6336 = vunpack.c.l.b16 %v5263
        %v6337 = vunpack.c.h.b16 %v5263
        %v6338 = vunpack.c.l.b16 %v5264
        %v6339 = vunpack.c.h.b16 %v5264
        %v6340 = vunpack.c.l.b16 %v5265
        %v6341 = vunpack.c.h.b16 %v5265
        %v6342 = vunpack.c.l.b16 %v5266
        %v6343 = vunpack.c.h.b16 %v5266
        %v6344 = vunpack.c.l.b16 %v5267
        %v6345 = vunpack.c.h.b16 %v5267
        %v6346 = vunpack.c.l.b16 %v5268
        %v6347 = vunpack.c.h.b16 %v5268
        %v6348 = vunpack.c.l.b16 %v5269
        %v6349 = vunpack.c.h.b16 %v5269
        %v6350 = vunpack.c.l.b16 %v5270
        %v6351 = vunpack.c.h.b16 %v5270
        %v6352 = vunpack.c.l.b16 %v5271
        %v6353 = vunpack.c.h.b16 %v5271
        %v6354 = vunpack.c.l.b16 %v5272
        %v6355 = vunpack.c.h.b16 %v5272
        %v6356 = vunpack.c.l.b16 %v5273
        %v6357 = vunpack.c.h.b16 %v5273
        %v6358 = vunpack.c.l.b16 %v5274
        %v6359 = vunpack.c.h.b16 %v5274
        %v6360 = vunpack.c.l.b16 %v5275
        %v6361 = vunpack.c.h.b16 %v5275
        %v6362 = vunpack.c.l.b16 %v5276
        %v6363 = vunpack.c.h.b16 %v5276
        %v6364 = vunpack.c.l.b16 %v5277
        %v6365 = vunpack.c.h.b16 %v5277
        %v6366 = vunpack.c.l.b16 %v5278
        %v6367 = vunpack.c.h.b16 %v5278
        %v6368 = vunpack.c.l.b16 %v5279
        %v6369 = vunpack.c.h.b16 %v5279
        %v6370 = vunpack.c.l.b16 %v5280
        %v6371 = vunpack.c.h.b16 %v5280
        %v6372 = vunpack.c.l.b16 %v5281
        %v6373 = vunpack.c.h.b16 %v5281
        %v6374 = vunpack.c.l.b16 %v5282
        %v6375 = vunpack.c.h.b16 %v5282
        %v6376 = vunpack.c.l.b16 %v5283
        %v6377 = vunpack.c.h.b16 %v5283
        %v6378 = vunpack.c.l.b16 %v5284
        %v6379 = vunpack.c.h.b16 %v5284
        %v6380 = vunpack.c.l.b16 %v5285
        %v6381 = vunpack.c.h.b16 %v5285
        %v6382 = vunpack.c.l.b16 %v5286
        %v6383 = vunpack.c.h.b16 %v5286
        %v6384 = vunpack.c.l.b16 %v5287
        %v6385 = vunpack.c.h.b16 %v5287
        %v6386 = vunpack.c.l.b16 %v5288
        %v6387 = vunpack.c.h.b16 %v5288
        %v6388 = vunpack.c.l.b16 %v5289
        %v6389 = vunpack.c.h.b16 %v5289
        %v6390 = vunpack.c.l.b16 %v5290
        %v6391 = vunpack.c.h.b16 %v5290
        %v6392 = vunpack.c.l.b16 %v5291
        %v6393 = vunpack.c.h.b16 %v5291
        %v6394 = vunpack.c.l.b16 %v5292
        %v6395 = vunpack.c.h.b16 %v5292
        %v6396 = vunpack.c.l.b16 %v5293
        %v6397 = vunpack.c.h.b16 %v5293
        %v6398 = vunpack.c.l.b16 %v5294
        %v6399 = vunpack.c.h.b16 %v5294
        %v6400 = vunpack.c.l.b16 %v5295
        %v6401 = vunpack.c.h.b16 %v5295
        %v6402 = vunpack.c.l.b16 %v5296
        %v6403 = vunpack.c.h.b16 %v5296
        %v6404 = vunpack.c.l.b16 %v5297
        %v6405 = vunpack.c.h.b16 %v5297
        %v6406 = vunpack.c.l.b16 %v5298
        %v6407 = vunpack.c.h.b16 %v5298
        %v6408 = vunpack.c.l.b16 %v5299
        %v6409 = vunpack.c.h.b16 %v5299
        %v6410 = vunpack.c.l.b16 %v5300
        %v6411 = vunpack.c.h.b16 %v5300
        %v6412 = vunpack.c.l.b16 %v5301
        %v6413 = vunpack.c.h.b16 %v5301
        %v6414 = vunpack.c.l.b16 %v5302
        %v6415 = vunpack.c.h.b16 %v5302
        %v6416 = vunpack.c.l.b16 %v5303
        %v6417 = vunpack.c.h.b16 %v5303
        %v6418 = vunpack.c.l.b16 %v5304
        %v6419 = vunpack.c.h.b16 %v5304
        %v6420 = vunpack.c.l.b16 %v5305
        %v6421 = vunpack.c.h.b16 %v5305
        %v6422 = vunpack.c.l.b16 %v5306
        %v6423 = vunpack.c.h.b16 %v5306
        %v6424 = vunpack.c.l.b16 %v5307
        %v6425 = vunpack.c.h.b16 %v5307
        %v6426 = vunpack.c.l.b16 %v5308
        %v6427 = vunpack.c.h.b16 %v5308
        %v6428 = vunpack.c.l.b16 %v5309
        %v6429 = vunpack.c.h.b16 %v5309
        %v6430 = vunpack.c.l.b16 %v5310
        %v6431 = vunpack.c.h.b16 %v5310
        %v6432 = vunpack.c.l.b16 %v5311
        %v6433 = vunpack.c.h.b16 %v5311
        %v6434 = vunpack.c.l.b16 %v5312
        %v6435 = vunpack.c.h.b16 %v5312
        %v6436 = vunpack.c.l.b16 %v5313
        %v6437 = vunpack.c.h.b16 %v5313
        %v6438 = vunpack.c.l.b16 %v5314
        %v6439 = vunpack.c.h.b16 %v5314
        %v6440 = vunpack.c.l.b16 %v5315
        %v6441 = vunpack.c.h.b16 %v5315
        %v6442 = vunpack.c.l.b16 %v5316
        %v6443 = vunpack.c.h.b16 %v5316
        %v6444 = vunpack.c.l.b16 %v5317
        %v6445 = vunpack.c.h.b16 %v5317
        %v6446 = vunpack.c.l.b16 %v5318
        %v6447 = vunpack.c.h.b16 %v5318
        %v6448 = vunpack.c.l.b16 %v5319
        %v6449 = vunpack.c.h.b16 %v5319
        %v6450 = vunpack.c.l.b16 %v5320
        %v6451 = vunpack.c.h.b16 %v5320
        %v6452 = vunpack.c.l.b16 %v5321
        %v6453 = vunpack.c.h.b16 %v5321
        %v6454 = vunpack.c.l.b16 %v5322
        %v6455 = vunpack.c.h.b16 %v5322
        %v6456 = vunpack.c.l.b16 %v5323
        %v6457 = vunpack.c.h.b16 %v5323
        %v6458 = vunpack.c.l.b16 %v5324
        %v6459 = vunpack.c.h.b16 %v5324
        %v6460 = vunpack.c.l.b16 %v5325
        %v6461 = vunpack.c.h.b16 %v5325
        %v6462 = vunpack.c.l.b16 %v5326
        %v6463 = vunpack.c.h.b16 %v5326
        %v6464 = vunpack.c.l.b16 %v5327
        %v6465 = vunpack.c.h.b16 %v5327
        %v6466 = vunpack.c.l.b16 %v5328
        %v6467 = vunpack.c.h.b16 %v5328
        %v6468 = vunpack.c.l.b16 %v5329
        %v6469 = vunpack.c.h.b16 %v5329
        %v6470 = vunpack.c.l.b16 %v5330
        %v6471 = vunpack.c.h.b16 %v5330
        %v6472 = vunpack.c.l.b16 %v5331
        %v6473 = vunpack.c.h.b16 %v5331
        %v6474 = vunpack.c.l.b16 %v5332
        %v6475 = vunpack.c.h.b16 %v5332
        %v6476 = vunpack.c.l.b16 %v5333
        %v6477 = vunpack.c.h.b16 %v5333
        %v6478 = vunpack.c.l.b16 %v5334
        %v6479 = vunpack.c.h.b16 %v5334
        %v6480 = vunpack.c.l.b16 %v5335
        %v6481 = vunpack.c.h.b16 %v5335
        %v6482 = vunpack.c.l.b16 %v5336
        %v6483 = vunpack.c.h.b16 %v5336
        %v6484 = vunpack.c.l.b16 %v5337
        %v6485 = vunpack.c.h.b16 %v5337
        %v6486 = vunpack.c.l.b16 %v5338
        %v6487 = vunpack.c.h.b16 %v5338
        %v6488 = vunpack.c.l.b16 %v5339
        %v6489 = vunpack.c.h.b16 %v5339
        %v6490 = vunpack.c.l.b16 %v5340
        %v6491 = vunpack.c.h.b16 %v5340
        %v6492 = vunpack.c.l.b16 %v5341
        %v6493 = vunpack.c.h.b16 %v5341
        %v6494 = vunpack.c.l.b16 %v5342
        %v6495 = vunpack.c.h.b16 %v5342
        %v6496 = vunpack.c.l.b16 %v5343
        %v6497 = vunpack.c.h.b16 %v5343
        %v6498 = vunpack.c.l.b16 %v5344
        %v6499 = vunpack.c.h.b16 %v5344
        %v6500 = vunpack.c.l.b16 %v5345
        %v6501 = vunpack.c.h.b16 %v5345
        %v6502 = vunpack.c.l.b16 %v5346
        %v6503 = vunpack.c.h.b16 %v5346
        %v6504 = vunpack.c.l.b16 %v5347
        %v6505 = vunpack.c.h.b16 %v5347
        %v6506 = vunpack.c.l.b16 %v5348
        %v6507 = vunpack.c.h.b16 %v5348
        %v6508 = vunpack.c.l.b16 %v5349
        %v6509 = vunpack.c.h.b16 %v5349
        %v6510 = vunpack.c.l.b16 %v5350
        %v6511 = vunpack.c.h.b16 %v5350
        %v6512 = vunpack.c.l.b16 %v5351
        %v6513 = vunpack.c.h.b16 %v5351
        %v6514 = vunpack.c.l.b16 %v5352
        %v6515 = vunpack.c.h.b16 %v5352
        %v6516 = vunpack.c.l.b16 %v5353
        %v6517 = vunpack.c.h.b16 %v5353
        %v6518 = vunpack.c.l.b16 %v5354
        %v6519 = vunpack.c.h.b16 %v5354
        %v6520 = vunpack.c.l.b16 %v5355
        %v6521 = vunpack.c.h.b16 %v5355
        %v6522 = vunpack.c.l.b16 %v5356
        %v6523 = vunpack.c.h.b16 %v5356
        %v6524 = vunpack.c.l.b16 %v5357
        %v6525 = vunpack.c.h.b16 %v5357
        %v6526 = vunpack.c.l.b16 %v5358
        %v6527 = vunpack.c.h.b16 %v5358
        %v6528 = vunpack.c.l.b16 %v5359
        %v6529 = vunpack.c.h.b16 %v5359
        %v6530 = vunpack.c.l.b16 %v5360
        %v6531 = vunpack.c.h.b16 %v5360
        %v6532 = vunpack.c.l.b16 %v5361
        %v6533 = vunpack.c.h.b16 %v5361
        %v6534 = vunpack.c.l.b16 %v5362
        %v6535 = vunpack.c.h.b16 %v5362
        %v6536 = vunpack.c.l.b16 %v5363
        %v6537 = vunpack.c.h.b16 %v5363
        %v6538 = vunpack.c.l.b16 %v5364
        %v6539 = vunpack.c.h.b16 %v5364
        %v6540 = vunpack.c.l.b16 %v5365
        %v6541 = vunpack.c.h.b16 %v5365
        %v6542 = vunpack.c.l.b16 %v5366
        %v6543 = vunpack.c.h.b16 %v5366
        %v6544 = vunpack.c.l.b16 %v5367
        %v6545 = vunpack.c.h.b16 %v5367
        %v6546 = vunpack.c.l.b16 %v5368
        %v6547 = vunpack.c.h.b16 %v5368
        %v6548 = vunpack.c.l.b16 %v5369
        %v6549 = vunpack.c.h.b16 %v5369
        %v6550 = vunpack.c.l.b16 %v5370
        %v6551 = vunpack.c.h.b16 %v5370
        %v6552 = vunpack.c.l.b16 %v5371
        %v6553 = vunpack.c.h.b16 %v5371
        %v6554 = vunpack.c.l.b16 %v5372
        %v6555 = vunpack.c.h.b16 %v5372
        %v6556 = vunpack.c.l.b16 %v5373
        %v6557 = vunpack.c.h.b16 %v5373
        %v6558 = vunpack.c.l.b16 %v5374
        %v6559 = vunpack.c.h.b16 %v5374
        %v6560 = vunpack.c.l.b16 %v5375
        %v6561 = vunpack.c.h.b16 %v5375
        %v6562 = vunpack.c.l.b16 %v5376
        %v6563 = vunpack.c.h.b16 %v5376
        %v6564 = vunpack.c.l.b16 %v5377
        %v6565 = vunpack.c.h.b16 %v5377
        %v6566 = vunpack.c.l.b16 %v5378
        %v6567 = vunpack.c.h.b16 %v5378
        %v6568 = vunpack.c.l.b16 %v5379
        %v6569 = vunpack.c.h.b16 %v5379
        %v6570 = vunpack.c.l.b16 %v5380
        %v6571 = vunpack.c.h.b16 %v5380
        %v6572 = vunpack.c.l.b16 %v5381
        %v6573 = vunpack.c.h.b16 %v5381
        %v6574 = vunpack.c.l.b16 %v5382
        %v6575 = vunpack.c.h.b16 %v5382
        %v6576 = vunpack.c.l.b16 %v5383
        %v6577 = vunpack.c.h.b16 %v5383
        %v6578 = vunpack.c.l.b16 %v5384
        %v6579 = vunpack.c.h.b16 %v5384
        %v6580 = vunpack.c.l.b16 %v5385
        %v6581 = vunpack.c.h.b16 %v5385
        %v6582 = vunpack.c.l.b16 %v5386
        %v6583 = vunpack.c.h.b16 %v5386
        %v6584 = vunpack.c.l.b16 %v5387
        %v6585 = vunpack.c.h.b16 %v5387
        %v6586 = vunpack.c.l.b16 %v5388
        %v6587 = vunpack.c.h.b16 %v5388
        %v6588 = vunpack.c.l.b16 %v5389
        %v6589 = vunpack.c.h.b16 %v5389
        %v6590 = vunpack.c.l.b16 %v5390
        %v6591 = vunpack.c.h.b16 %v5390
        %v6592 = vunpack.c.l.b16 %v5391
        %v6593 = vunpack.c.h.b16 %v5391
        %v6594 = vunpack.c.l.b16 %v5392
        %v6595 = vunpack.c.h.b16 %v5392
        %v6596 = vunpack.c.l.b16 %v5393
        %v6597 = vunpack.c.h.b16 %v5393
        %v6598 = vunpack.c.l.b16 %v5394
        %v6599 = vunpack.c.h.b16 %v5394
        %v6600 = vunpack.c.l.b16 %v5395
        %v6601 = vunpack.c.h.b16 %v5395
        %v6602 = vunpack.c.l.b16 %v5396
        %v6603 = vunpack.c.h.b16 %v5396
        %v6604 = vunpack.c.l.b16 %v5397
        %v6605 = vunpack.c.h.b16 %v5397
        %v6606 = vunpack.c.l.b16 %v5398
        %v6607 = vunpack.c.h.b16 %v5398
        %v6608 = vunpack.c.l.b16 %v5399
        %v6609 = vunpack.c.h.b16 %v5399
        %v6610 = vunpack.c.l.b16 %v5400
        %v6611 = vunpack.c.h.b16 %v5400
        %v6612 = vunpack.c.l.b16 %v5401
        %v6613 = vunpack.c.h.b16 %v5401
        %v6614 = vunpack.c.l.b16 %v5402
        %v6615 = vunpack.c.h.b16 %v5402
        %v6616 = vunpack.c.l.b16 %v5403
        %v6617 = vunpack.c.h.b16 %v5403
        %v6618 = vunpack.c.l.b16 %v5404
        %v6619 = vunpack.c.h.b16 %v5404
        %v6620 = vunpack.c.l.b16 %v5405
        %v6621 = vunpack.c.h.b16 %v5405
        %v6622 = vunpack.c.l.b16 %v5406
        %v6623 = vunpack.c.h.b16 %v5406
        %v6624 = vunpack.c.l.b16 %v5407
        %v6625 = vunpack.c.h.b16 %v5407
        %v6626 = vunpack.c.l.b16 %v5408
        %v6627 = vunpack.c.h.b16 %v5408
        %v6628 = vunpack.c.l.b16 %v5409
        %v6629 = vunpack.c.h.b16 %v5409
        %v6630 = vunpack.c.l.b16 %v5410
        %v6631 = vunpack.c.h.b16 %v5410
        %v6632 = vunpack.c.l.b16 %v5411
        %v6633 = vunpack.c.h.b16 %v5411
        %v6634 = vunpack.c.l.b16 %v5412
        %v6635 = vunpack.c.h.b16 %v5412
        %v6636 = vunpack.c.l.b16 %v5413
        %v6637 = vunpack.c.h.b16 %v5413
        %v6638 = vunpack.c.l.b16 %v5414
        %v6639 = vunpack.c.h.b16 %v5414
        %v6640 = vunpack.c.l.b16 %v5415
        %v6641 = vunpack.c.h.b16 %v5415
        %v6642 = vunpack.c.l.b16 %v5416
        %v6643 = vunpack.c.h.b16 %v5416
        %v6644 = vunpack.c.l.b16 %v5417
        %v6645 = vunpack.c.h.b16 %v5417
        %v6646 = vunpack.c.l.b16 %v5418
        %v6647 = vunpack.c.h.b16 %v5418
        %v6648 = vunpack.c.l.b16 %v5419
        %v6649 = vunpack.c.h.b16 %v5419
        %v6650 = vunpack.c.l.b16 %v5420
        %v6651 = vunpack.c.h.b16 %v5420
        %v6652 = vunpack.c.l.b16 %v5421
        %v6653 = vunpack.c.h.b16 %v5421
        %v6654 = vunpack.c.l.b16 %v5422
        %v6655 = vunpack.c.h.b16 %v5422
        %v6656 = vunpack.c.l.b16 %v5423
        %v6657 = vunpack.c.h.b16 %v5423
        %v6658 = vunpack.c.l.b16 %v5424
        %v6659 = vunpack.c.h.b16 %v5424
        %v6660 = vunpack.c.l.b16 %v5425
        %v6661 = vunpack.c.h.b16 %v5425
        %v6662 = vunpack.c.l.b16 %v5426
        %v6663 = vunpack.c.h.b16 %v5426
        %v6664 = vunpack.c.l.b16 %v5427
        %v6665 = vunpack.c.h.b16 %v5427
        %v6666 = vunpack.c.l.b16 %v5428
        %v6667 = vunpack.c.h.b16 %v5428
        %v6668 = vunpack.c.l.b16 %v5429
        %v6669 = vunpack.c.h.b16 %v5429
        %v6670 = vunpack.c.l.b16 %v5430
        %v6671 = vunpack.c.h.b16 %v5430
        %v6672 = vunpack.c.l.b16 %v5431
        %v6673 = vunpack.c.h.b16 %v5431
        %v6674 = vunpack.c.l.b16 %v5432
        %v6675 = vunpack.c.h.b16 %v5432
        %v6676 = vunpack.c.l.b16 %v5433
        %v6677 = vunpack.c.h.b16 %v5433
        %v6678 = vunpack.c.l.b16 %v5434
        %v6679 = vunpack.c.h.b16 %v5434
        %v6680 = vunpack.c.l.b16 %v5435
        %v6681 = vunpack.c.h.b16 %v5435
        %v6682 = vunpack.c.l.b16 %v5436
        %v6683 = vunpack.c.h.b16 %v5436
        %v6684 = vunpack.c.l.b16 %v5437
        %v6685 = vunpack.c.h.b16 %v5437
        %v6686 = vunpack.c.l.b16 %v5438
        %v6687 = vunpack.c.h.b16 %v5438
        %v6688 = vunpack.c.l.b16 %v5439
        %v6689 = vunpack.c.h.b16 %v5439
        %v6690 = vunpack.c.l.b16 %v5440
        %v6691 = vunpack.c.h.b16 %v5440
        %v6692 = vunpack.c.l.b16 %v5441
        %v6693 = vunpack.c.h.b16 %v5441
        %v6694 = vunpack.c.l.b16 %v5442
        %v6695 = vunpack.c.h.b16 %v5442
        %v6696 = vunpack.c.l.b16 %v5443
        %v6697 = vunpack.c.h.b16 %v5443
        %v6698 = vunpack.c.l.b16 %v5444
        %v6699 = vunpack.c.h.b16 %v5444
        %v6700 = vunpack.c.l.b16 %v5445
        %v6701 = vunpack.c.h.b16 %v5445
        %v6702 = vunpack.c.l.b16 %v5446
        %v6703 = vunpack.c.h.b16 %v5446
        %v6704 = vunpack.c.l.b16 %v5447
        %v6705 = vunpack.c.h.b16 %v5447
        %v6706 = vunpack.c.l.b16 %v5448
        %v6707 = vunpack.c.h.b16 %v5448
        %v6708 = vunpack.c.l.b16 %v5449
        %v6709 = vunpack.c.h.b16 %v5449
        %v6710 = vunpack.c.l.b16 %v5450
        %v6711 = vunpack.c.h.b16 %v5450
        %v6712 = vunpack.c.l.b16 %v5451
        %v6713 = vunpack.c.h.b16 %v5451
        %v6714 = vunpack.c.l.b16 %v5452
        %v6715 = vunpack.c.h.b16 %v5452
        %v6716 = vunpack.c.l.b16 %v5453
        %v6717 = vunpack.c.h.b16 %v5453
        %v6718 = vunpack.c.l.b16 %v5454
        %v6719 = vunpack.c.h.b16 %v5454
        %v6720 = vunpack.c.l.b16 %v5455
        %v6721 = vunpack.c.h.b16 %v5455
        %v6722 = vunpack.c.l.b16 %v5456
        %v6723 = vunpack.c.h.b16 %v5456
        %v6724 = vunpack.c.l.b16 %v5457
        %v6725 = vunpack.c.h.b16 %v5457
        %v6726 = vunpack.c.l.b16 %v5458
        %v6727 = vunpack.c.h.b16 %v5458
        %v6728 = vunpack.c.l.b16 %v5459
        %v6729 = vunpack.c.h.b16 %v5459
        %v6730 = vunpack.c.l.b16 %v5460
        %v6731 = vunpack.c.h.b16 %v5460
        %v6732 = vunpack.c.l.b16 %v5461
        %v6733 = vunpack.c.h.b16 %v5461
        %v6734 = vunpack.c.l.b16 %v5462
        %v6735 = vunpack.c.h.b16 %v5462
        %v6736 = vunpack.c.l.b16 %v5463
        %v6737 = vunpack.c.h.b16 %v5463
        %v6738 = vunpack.c.l.b16 %v5464
        %v6739 = vunpack.c.h.b16 %v5464
        %v6740 = vunpack.c.l.b16 %v5465
        %v6741 = vunpack.c.h.b16 %v5465
        %v6742 = vunpack.c.l.b16 %v5466
        %v6743 = vunpack.c.h.b16 %v5466
        %v6744 = vunpack.c.l.b16 %v5467
        %v6745 = vunpack.c.h.b16 %v5467
        %v6746 = vunpack.c.l.b16 %v5468
        %v6747 = vunpack.c.h.b16 %v5468
        %v6748 = vunpack.c.l.b16 %v5469
        %v6749 = vunpack.c.h.b16 %v5469
        %v6750 = vunpack.c.l.b16 %v5470
        %v6751 = vunpack.c.h.b16 %v5470
        %v6752 = vunpack.c.l.b16 %v5471
        %v6753 = vunpack.c.h.b16 %v5471
        %v6754 = vunpack.c.l.b16 %v5472
        %v6755 = vunpack.c.h.b16 %v5472
        %v6756 = vunpack.c.l.b16 %v5473
        %v6757 = vunpack.c.h.b16 %v5473
        %v6758 = vunpack.c.l.b16 %v5474
        %v6759 = vunpack.c.h.b16 %v5474
        %v6760 = vunpack.c.l.b16 %v5475
        %v6761 = vunpack.c.h.b16 %v5475
        %v6762 = vunpack.c.l.b16 %v5476
        %v6763 = vunpack.c.h.b16 %v5476
        %v6764 = vunpack.c.l.b16 %v5477
        %v6765 = vunpack.c.h.b16 %v5477
        %v6766 = vunpack.c.l.b16 %v5478
        %v6767 = vunpack.c.h.b16 %v5478
        %v6768 = vunpack.c.l.b16 %v5479
        %v6769 = vunpack.c.h.b16 %v5479
        %v6770 = vunpack.c.l.b16 %v5480
        %v6771 = vunpack.c.h.b16 %v5480
        %v6772 = vunpack.c.l.b16 %v5481
        %v6773 = vunpack.c.h.b16 %v5481
        %v6774 = vunpack.c.l.b16 %v5482
        %v6775 = vunpack.c.h.b16 %v5482
        %v6776 = vunpack.c.l.b16 %v5483
        %v6777 = vunpack.c.h.b16 %v5483
        %v6778 = vunpack.c.l.b16 %v5484
        %v6779 = vunpack.c.h.b16 %v5484
        %v6780 = vunpack.c.l.b16 %v5485
        %v6781 = vunpack.c.h.b16 %v5485
        %v6782 = vunpack.c.l.b16 %v5486
        %v6783 = vunpack.c.h.b16 %v5486
        %v6784 = vunpack.c.l.b16 %v5487
        %v6785 = vunpack.c.h.b16 %v5487
        %v6786 = vunpack.c.l.b16 %v5488
        %v6787 = vunpack.c.h.b16 %v5488
        %v6788 = vunpack.c.l.b16 %v5489
        %v6789 = vunpack.c.h.b16 %v5489
        %v6790 = vunpack.c.l.b16 %v5490
        %v6791 = vunpack.c.h.b16 %v5490
        %v6792 = vunpack.c.l.b16 %v5491
        %v6793 = vunpack.c.h.b16 %v5491
        %v6794 = vunpack.c.l.b16 %v5492
        %v6795 = vunpack.c.h.b16 %v5492
        %v6796 = vunpack.c.l.b16 %v5493
        %v6797 = vunpack.c.h.b16 %v5493
        %v6798 = vunpack.c.l.b16 %v5494
        %v6799 = vunpack.c.h.b16 %v5494
        %v6800 = vunpack.c.l.b16 %v5495
        %v6801 = vunpack.c.h.b16 %v5495
        %v6802 = vunpack.c.l.b16 %v5496
        %v6803 = vunpack.c.h.b16 %v5496
        %v6804 = vunpack.c.l.b16 %v5497
        %v6805 = vunpack.c.h.b16 %v5497
        %v6806 = vunpack.c.l.b16 %v5498
        %v6807 = vunpack.c.h.b16 %v5498
        %v6808 = vunpack.c.l.b16 %v5499
        %v6809 = vunpack.c.h.b16 %v5499
        %v6810 = vunpack.c.l.b16 %v5500
        %v6811 = vunpack.c.h.b16 %v5500
        %v6812 = vunpack.c.l.b16 %v5501
        %v6813 = vunpack.c.h.b16 %v5501
        %v6814 = vunpack.c.l.b16 %v5502
        %v6815 = vunpack.c.h.b16 %v5502
        %v6816 = vunpack.c.l.b16 %v5503
        %v6817 = vunpack.c.h.b16 %v5503
        %v6818 = vunpack.c.l.b16 %v5504
        %v6819 = vunpack.c.h.b16 %v5504
        %v6820 = vunpack.c.l.b16 %v5505
        %v6821 = vunpack.c.h.b16 %v5505
        %v6822 = vunpack.c.l.b16 %v5506
        %v6823 = vunpack.c.h.b16 %v5506
        %v6824 = vunpack.c.l.b16 %v5507
        %v6825 = vunpack.c.h.b16 %v5507
        %v6826 = vunpack.c.l.b16 %v5508
        %v6827 = vunpack.c.h.b16 %v5508
        %v6828 = vunpack.c.l.b16 %v5509
        %v6829 = vunpack.c.h.b16 %v5509
        %v6830 = vunpack.c.l.b16 %v5510
        %v6831 = vunpack.c.h.b16 %v5510
        %v6832 = vunpack.c.l.b16 %v5511
        %v6833 = vunpack.c.h.b16 %v5511
        %v6834 = vunpack.c.l.b16 %v5512
        %v6835 = vunpack.c.h.b16 %v5512
        %v6836 = vunpack.c.l.b16 %v5513
        %v6837 = vunpack.c.h.b16 %v5513
        %v6838 = vunpack.c.l.b16 %v5514
        %v6839 = vunpack.c.h.b16 %v5514
        %v6840 = vunpack.c.l.b16 %v5515
        %v6841 = vunpack.c.h.b16 %v5515
        %v6842 = vunpack.c.l.b16 %v5516
        %v6843 = vunpack.c.h.b16 %v5516
        %v6844 = vunpack.c.l.b16 %v5517
        %v6845 = vunpack.c.h.b16 %v5517
        %v6846 = vunpack.c.l.b16 %v5518
        %v6847 = vunpack.c.h.b16 %v5518
        %v6848 = vunpack.c.l.b16 %v5519
        %v6849 = vunpack.c.h.b16 %v5519
        %v6850 = vunpack.c.l.b16 %v5520
        %v6851 = vunpack.c.h.b16 %v5520
        %v6852 = vunpack.c.l.b16 %v5521
        %v6853 = vunpack.c.h.b16 %v5521
        %v6854 = vunpack.c.l.b16 %v5522
        %v6855 = vunpack.c.h.b16 %v5522
        %v6856 = vunpack.c.l.b16 %v5523
        %v6857 = vunpack.c.h.b16 %v5523
        %v6858 = vunpack.c.l.b16 %v5524
        %v6859 = vunpack.c.h.b16 %v5524
        %v6860 = vunpack.c.l.b16 %v5525
        %v6861 = vunpack.c.h.b16 %v5525
        %v6862 = vunpack.c.l.b16 %v5526
        %v6863 = vunpack.c.h.b16 %v5526
        %v6864 = vunpack.c.l.b16 %v5527
        %v6865 = vunpack.c.h.b16 %v5527
        %v6866 = vunpack.c.l.b16 %v5528
        %v6867 = vunpack.c.h.b16 %v5528
        %v6868 = vunpack.c.l.b16 %v5529
        %v6869 = vunpack.c.h.b16 %v5529
        %v6870 = vunpack.c.l.b16 %v5530
        %v6871 = vunpack.c.h.b16 %v5530
        %v6872 = vunpack.c.l.b16 %v5531
        %v6873 = vunpack.c.h.b16 %v5531
        %v6874 = vunpack.c.l.b16 %v5532
        %v6875 = vunpack.c.h.b16 %v5532
        %v6876 = vunpack.c.l.b16 %v5533
        %v6877 = vunpack.c.h.b16 %v5533
        %v6878 = vunpack.c.l.b16 %v5534
        %v6879 = vunpack.c.h.b16 %v5534
        %v6880 = vunpack.c.l.b16 %v5535
        %v6881 = vunpack.c.h.b16 %v5535
        %v6882 = vunpack.c.l.b16 %v5536
        %v6883 = vunpack.c.h.b16 %v5536
        %v6884 = vunpack.c.l.b16 %v5537
        %v6885 = vunpack.c.h.b16 %v5537
        %v6886 = vunpack.c.l.b16 %v5538
        %v6887 = vunpack.c.h.b16 %v5538
        %v6888 = vunpack.c.l.b16 %v5539
        %v6889 = vunpack.c.h.b16 %v5539
        %v6890 = vunpack.c.l.b16 %v5540
        %v6891 = vunpack.c.h.b16 %v5540
        %v6892 = vunpack.c.l.b16 %v5541
        %v6893 = vunpack.c.h.b16 %v5541
        %v6894 = vunpack.c.l.b16 %v5542
        %v6895 = vunpack.c.h.b16 %v5542
        %v6896 = vunpack.c.l.b16 %v5543
        %v6897 = vunpack.c.h.b16 %v5543
        %v6898 = vunpack.c.l.b16 %v5544
        %v6899 = vunpack.c.h.b16 %v5544
        %v6900 = vunpack.c.l.b16 %v5545
        %v6901 = vunpack.c.h.b16 %v5545
        %v6902 = vunpack.c.l.b16 %v5546
        %v6903 = vunpack.c.h.b16 %v5546
        %v6904 = vunpack.c.l.b16 %v5547
        %v6905 = vunpack.c.h.b16 %v5547
        %v6906 = vunpack.c.l.b16 %v5548
        %v6907 = vunpack.c.h.b16 %v5548
        %v6908 = vunpack.c.l.b16 %v5549
        %v6909 = vunpack.c.h.b16 %v5549
        %v6910 = vunpack.c.l.b16 %v5550
        %v6911 = vunpack.c.h.b16 %v5550
        %v6912 = vunpack.c.l.b16 %v5551
        %v6913 = vunpack.c.h.b16 %v5551
        %v6914 = vunpack.c.l.b16 %v5552
        %v6915 = vunpack.c.h.b16 %v5552
        %v6916 = vunpack.c.l.b16 %v5553
        %v6917 = vunpack.c.h.b16 %v5553
        %v6918 = vunpack.c.l.b16 %v5554
        %v6919 = vunpack.c.h.b16 %v5554
        %v6920 = vunpack.c.l.b16 %v5555
        %v6921 = vunpack.c.h.b16 %v5555
        %v6922 = vunpack.c.l.b16 %v5556
        %v6923 = vunpack.c.h.b16 %v5556
        %v6924 = vunpack.c.l.b16 %v5557
        %v6925 = vunpack.c.h.b16 %v5557
        %v6926 = vunpack.c.l.b16 %v5558
        %v6927 = vunpack.c.h.b16 %v5558
        %v6928 = vunpack.c.l.b16 %v5559
        %v6929 = vunpack.c.h.b16 %v5559
        %v6930 = vunpack.c.l.b16 %v5560
        %v6931 = vunpack.c.h.b16 %v5560
        %v6932 = vunpack.c.l.b16 %v5561
        %v6933 = vunpack.c.h.b16 %v5561
        %v6934 = vunpack.c.l.b16 %v5562
        %v6935 = vunpack.c.h.b16 %v5562
        %v6936 = vunpack.c.l.b16 %v5563
        %v6937 = vunpack.c.h.b16 %v5563
        %v6938 = vunpack.c.l.b16 %v5564
        %v6939 = vunpack.c.h.b16 %v5564
        %v6940 = vunpack.c.l.b16 %v5565
        %v6941 = vunpack.c.h.b16 %v5565
        %v6942 = vunpack.c.l.b16 %v5566
        %v6943 = vunpack.c.h.b16 %v5566
        %v6944 = vunpack.c.l.b16 %v5567
        %v6945 = vunpack.c.h.b16 %v5567
        %v6946 = vunpack.c.l.b16 %v5568
        %v6947 = vunpack.c.h.b16 %v5568
        %v6948 = vunpack.c.l.b16 %v5569
        %v6949 = vunpack.c.h.b16 %v5569
        %v6950 = vunpack.c.l.b16 %v5570
        %v6951 = vunpack.c.h.b16 %v5570
        %v6952 = vunpack.c.l.b16 %v5571
        %v6953 = vunpack.c.h.b16 %v5571
        %v6954 = vunpack.c.l.b16 %v5572
        %v6955 = vunpack.c.h.b16 %v5572
        %v6956 = vunpack.c.l.b16 %v5573
        %v6957 = vunpack.c.h.b16 %v5573
        %v6958 = vunpack.c.l.b16 %v5574
        %v6959 = vunpack.c.h.b16 %v5574
        %v6960 = vunpack.c.l.b16 %v5575
        %v6961 = vunpack.c.h.b16 %v5575
        %v6962 = vunpack.c.l.b16 %v5576
        %v6963 = vunpack.c.h.b16 %v5576
        %v6964 = vunpack.c.l.b16 %v5577
        %v6965 = vunpack.c.h.b16 %v5577
        %v6966 = vunpack.c.l.b16 %v5578
        %v6967 = vunpack.c.h.b16 %v5578
        %v6968 = vunpack.c.l.b16 %v5579
        %v6969 = vunpack.c.h.b16 %v5579
        %v6970 = vunpack.c.l.b16 %v5580
        %v6971 = vunpack.c.h.b16 %v5580
        %v6972 = vunpack.c.l.b16 %v5581
        %v6973 = vunpack.c.h.b16 %v5581
        %v6974 = vunpack.c.l.b16 %v5582
        %v6975 = vunpack.c.h.b16 %v5582
        %v6976 = vunpack.c.l.b16 %v5583
        %v6977 = vunpack.c.h.b16 %v5583
        %v6978 = vunpack.c.l.b16 %v5584
        %v6979 = vunpack.c.h.b16 %v5584
        %v6980 = vunpack.c.l.b16 %v5585
        %v6981 = vunpack.c.h.b16 %v5585
        %v6982 = vunpack.c.l.b16 %v5586
        %v6983 = vunpack.c.h.b16 %v5586
        %v6984 = vunpack.c.l.b16 %v5587
        %v6985 = vunpack.c.h.b16 %v5587
        %v6986 = vunpack.c.l.b16 %v5588
        %v6987 = vunpack.c.h.b16 %v5588
        %v6988 = vunpack.c.l.b16 %v5589
        %v6989 = vunpack.c.h.b16 %v5589
        %v6990 = vunpack.c.l.b16 %v5590
        %v6991 = vunpack.c.h.b16 %v5590
        %v6992 = vunpack.c.l.b16 %v5591
        %v6993 = vunpack.c.h.b16 %v5591
        %v6994 = vunpack.c.l.b16 %v5592
        %v6995 = vunpack.c.h.b16 %v5592
        %v6996 = vunpack.c.l.b16 %v5593
        %v6997 = vunpack.c.h.b16 %v5593
        %v6998 = vunpack.c.l.b16 %v5594
        %v6999 = vunpack.c.h.b16 %v5594
        %v7000 = vunpack.c.l.b16 %v5595
        %v7001 = vunpack.c.h.b16 %v5595
        %v7002 = vunpack.c.l.b16 %v5596
        %v7003 = vunpack.c.h.b16 %v5596
        %v7004 = vunpack.c.l.b16 %v5597
        %v7005 = vunpack.c.h.b16 %v5597
        %v7006 = vunpack.c.l.b16 %v5598
        %v7007 = vunpack.c.h.b16 %v5598
        %v7008 = vunpack.c.l.b16 %v5599
        %v7009 = vunpack.c.h.b16 %v5599
        %v7010 = vunpack.c.l.b16 %v5600
        %v7011 = vunpack.c.h.b16 %v5600
        %v7012 = vunpack.c.l.b16 %v5601
        %v7013 = vunpack.c.h.b16 %v5601
        %v7014 = vunpack.c.l.b16 %v5602
        %v7015 = vunpack.c.h.b16 %v5602
        %v7016 = vunpack.c.l.b16 %v5603
        %v7017 = vunpack.c.h.b16 %v5603
        %v7018 = vunpack.c.l.b16 %v5604
        %v7019 = vunpack.c.h.b16 %v5604
        %v7020 = vunpack.c.l.b16 %v5605
        %v7021 = vunpack.c.h.b16 %v5605
        %v7022 = vunpack.c.l.b16 %v5606
        %v7023 = vunpack.c.h.b16 %v5606
        %v7024 = vunpack.c.l.b16 %v5607
        %v7025 = vunpack.c.h.b16 %v5607
        %v7026 = vunpack.c.l.b16 %v5608
        %v7027 = vunpack.c.h.b16 %v5608
        %v7028 = vunpack.c.l.b16 %v5609
        %v7029 = vunpack.c.h.b16 %v5609
        %v7030 = vunpack.c.l.b16 %v5610
        %v7031 = vunpack.c.h.b16 %v5610
        %v7032 = vunpack.c.l.b16 %v5611
        %v7033 = vunpack.c.h.b16 %v5611
        %v7034 = vunpack.c.l.b16 %v5612
        %v7035 = vunpack.c.h.b16 %v5612
        %v7036 = vunpack.c.l.b16 %v5613
        %v7037 = vunpack.c.h.b16 %v5613
        %v7038 = vunpack.c.l.b16 %v5614
        %v7039 = vunpack.c.h.b16 %v5614
        %v7040 = vunpack.c.l.b16 %v5615
        %v7041 = vunpack.c.h.b16 %v5615
        %v7042 = vunpack.c.l.b16 %v5616
        %v7043 = vunpack.c.h.b16 %v5616
        %v7044 = vunpack.c.l.b16 %v5617
        %v7045 = vunpack.c.h.b16 %v5617
        %v7046 = vunpack.c.l.b16 %v5618
        %v7047 = vunpack.c.h.b16 %v5618
        %v7048 = vunpack.c.l.b16 %v5619
        %v7049 = vunpack.c.h.b16 %v5619
        %v7050 = vunpack.c.l.b16 %v5620
        %v7051 = vunpack.c.h.b16 %v5620
        %v7052 = vunpack.c.l.b16 %v5621
        %v7053 = vunpack.c.h.b16 %v5621
        %v7054 = vunpack.c.l.b16 %v5622
        %v7055 = vunpack.c.h.b16 %v5622
        %v7056 = vunpack.c.l.b16 %v5623
        %v7057 = vunpack.c.h.b16 %v5623
        %v7058 = vunpack.c.l.b16 %v5624
        %v7059 = vunpack.c.h.b16 %v5624
        %v7060 = vunpack.c.l.b16 %v5625
        %v7061 = vunpack.c.h.b16 %v5625
        %v7062 = vunpack.c.l.b16 %v5626
        %v7063 = vunpack.c.h.b16 %v5626
        %v7064 = vunpack.c.l.b16 %v5627
        %v7065 = vunpack.c.h.b16 %v5627
        %v7066 = vunpack.c.l.b16 %v5628
        %v7067 = vunpack.c.h.b16 %v5628
        %v7068 = vunpack.c.l.b16 %v5629
        %v7069 = vunpack.c.h.b16 %v5629
        %v7070 = vunpack.c.l.b16 %v5630
        %v7071 = vunpack.c.h.b16 %v5630
        %v7072 = vunpack.c.l.b16 %v5631
        %v7073 = vunpack.c.h.b16 %v5631
        %v7074 = vunpack.c.l.b16 %v5632
        %v7075 = vunpack.c.h.b16 %v5632
        %v7076 = vunpack.c.l.b16 %v5633
        %v7077 = vunpack.c.h.b16 %v5633
        %v7078 = vunpack.c.l.b16 %v5634
        %v7079 = vunpack.c.h.b16 %v5634
        %v7080 = vunpack.c.l.b16 %v5635
        %v7081 = vunpack.c.h.b16 %v5635
        %v7082 = vunpack.c.l.b16 %v5636
        %v7083 = vunpack.c.h.b16 %v5636
        %v7084 = vunpack.c.l.b16 %v5637
        %v7085 = vunpack.c.h.b16 %v5637
        %v7086 = vunpack.c.l.b16 %v5638
        %v7087 = vunpack.c.h.b16 %v5638
        %v7088 = vunpack.c.l.b16 %v5639
        %v7089 = vunpack.c.h.b16 %v5639
        %v7090 = vunpack.c.l.b16 %v5640
        %v7091 = vunpack.c.h.b16 %v5640
        %v7092 = vunpack.c.l.b16 %v5641
        %v7093 = vunpack.c.h.b16 %v5641
        %v7094 = vunpack.c.l.b16 %v5642
        %v7095 = vunpack.c.h.b16 %v5642
        %v7096 = vunpack.c.l.b16 %v5643
        %v7097 = vunpack.c.h.b16 %v5643
        %v7098 = vunpack.c.l.b16 %v5644
        %v7099 = vunpack.c.h.b16 %v5644
        %v7100 = vunpack.c.l.b16 %v5645
        %v7101 = vunpack.c.h.b16 %v5645
        %v7102 = vunpack.c.l.b16 %v5646
        %v7103 = vunpack.c.h.b16 %v5646
        %v7104 = vunpack.c.l.b16 %v5647
        %v7105 = vunpack.c.h.b16 %v5647
        %v7106 = vunpack.c.l.b16 %v5648
        %v7107 = vunpack.c.h.b16 %v5648
        %v7108 = vunpack.c.l.b16 %v5649
        %v7109 = vunpack.c.h.b16 %v5649
        %v7110 = vunpack.c.l.b16 %v5650
        %v7111 = vunpack.c.h.b16 %v5650
        %v7112 = vunpack.c.l.b16 %v5651
        %v7113 = vunpack.c.h.b16 %v5651
        %v7114 = vunpack.c.l.b16 %v5652
        %v7115 = vunpack.c.h.b16 %v5652
        %v7116 = vunpack.c.l.b16 %v5653
        %v7117 = vunpack.c.h.b16 %v5653
        %v7118 = vunpack.c.l.b16 %v5654
        %v7119 = vunpack.c.h.b16 %v5654
        %v7120 = vunpack.c.l.b16 %v5655
        %v7121 = vunpack.c.h.b16 %v5655
        %v7122 = vunpack.c.l.b16 %v5656
        %v7123 = vunpack.c.h.b16 %v5656
        %v7124 = vunpack.c.l.b16 %v5657
        %v7125 = vunpack.c.h.b16 %v5657
        %v7126 = vunpack.c.l.b16 %v5658
        %v7127 = vunpack.c.h.b16 %v5658
        %v7128 = vunpack.c.l.b16 %v5659
        %v7129 = vunpack.c.h.b16 %v5659
        %v7130 = vunpack.c.l.b16 %v5660
        %v7131 = vunpack.c.h.b16 %v5660
        %v7132 = vunpack.c.l.b16 %v5661
        %v7133 = vunpack.c.h.b16 %v5661
        %v7134 = vunpack.c.l.b16 %v5662
        %v7135 = vunpack.c.h.b16 %v5662
        %v7136 = vunpack.c.l.b16 %v5663
        %v7137 = vunpack.c.h.b16 %v5663
        %v7138 = vunpack.c.l.b16 %v5664
        %v7139 = vunpack.c.h.b16 %v5664
        %v7140 = vunpack.c.l.b16 %v5665
        %v7141 = vunpack.c.h.b16 %v5665
        %v7142 = vunpack.c.l.b16 %v5666
        %v7143 = vunpack.c.h.b16 %v5666
        %v7144 = vunpack.c.l.b16 %v5667
        %v7145 = vunpack.c.h.b16 %v5667
        %v7146 = vunpack.c.l.b16 %v5668
        %v7147 = vunpack.c.h.b16 %v5668
        %v7148 = vunpack.c.l.b16 %v5669
        %v7149 = vunpack.c.h.b16 %v5669
        %v7150 = vunpack.c.l.b16 %v5670
        %v7151 = vunpack.c.h.b16 %v5670
        %v7152 = vunpack.c.l.b16 %v5671
        %v7153 = vunpack.c.h.b16 %v5671
        %v7154 = vunpack.c.l.b16 %v5672
        %v7155 = vunpack.c.h.b16 %v5672
        %v7156 = vunpack.c.l.b16 %v5673
        %v7157 = vunpack.c.h.b16 %v5673
        %v7158 = vunpack.c.l.b16 %v5674
        %v7159 = vunpack.c.h.b16 %v5674
        %v7160 = vunpack.c.l.b16 %v5675
        %v7161 = vunpack.c.h.b16 %v5675
        %v7162 = vunpack.c.l.b16 %v5676
        %v7163 = vunpack.c.h.b16 %v5676
        %v7164 = vunpack.c.l.b16 %v5677
        %v7165 = vunpack.c.h.b16 %v5677
        %v7166 = vunpack.c.l.b16 %v5678
        %v7167 = vunpack.c.h.b16 %v5678
        %v7168 = vunpack.c.l.b16 %v5679
        %v7169 = vunpack.c.h.b16 %v5679
        %v7170 = vunpack.c.l.b16 %v5680
        %v7171 = vunpack.c.h.b16 %v5680
        %v7172 = vunpack.c.l.b16 %v5681
        %v7173 = vunpack.c.h.b16 %v5681
        %v7174 = vunpack.c.l.b16 %v5682
        %v7175 = vunpack.c.h.b16 %v5682
        %v7176 = vunpack.c.l.b16 %v5683
        %v7177 = vunpack.c.h.b16 %v5683
        %v7178 = vunpack.c.l.b16 %v5684
        %v7179 = vunpack.c.h.b16 %v5684
        %v7180 = vunpack.c.l.b16 %v5685
        %v7181 = vunpack.c.h.b16 %v5685
        %v7182 = vunpack.c.l.b16 %v5686
        %v7183 = vunpack.c.h.b16 %v5686
        %v7184 = vunpack.c.l.b16 %v5687
        %v7185 = vunpack.c.h.b16 %v5687
        %v7186 = vunpack.c.l.b16 %v5688
        %v7187 = vunpack.c.h.b16 %v5688
        %v7188 = vunpack.c.l.b16 %v5689
        %v7189 = vunpack.c.h.b16 %v5689
        %v7190 = vunpack.c.l.b16 %v5690
        %v7191 = vunpack.c.h.b16 %v5690
        %v7192 = vunpack.c.l.b16 %v5691
        %v7193 = vunpack.c.h.b16 %v5691
        %v7194 = vunpack.c.l.b16 %v5692
        %v7195 = vunpack.c.h.b16 %v5692
        %v7196 = vunpack.c.l.b16 %v5693
        %v7197 = vunpack.c.h.b16 %v5693
        %v7198 = vunpack.c.l.b16 %v5694
        %v7199 = vunpack.c.h.b16 %v5694
        %v7200 = vunpack.c.l.b16 %v5695
        %v7201 = vunpack.c.h.b16 %v5695
        %v7202 = vunpack.c.l.b16 %v5696
        %v7203 = vunpack.c.h.b16 %v5696
        %v7204 = vunpack.c.l.b16 %v5697
        %v7205 = vunpack.c.h.b16 %v5697
        %v7206 = vunpack.c.l.b16 %v5698
        %v7207 = vunpack.c.h.b16 %v5698
        %v7208 = vunpack.c.l.b16 %v5699
        %v7209 = vunpack.c.h.b16 %v5699
        %v7210 = vunpack.c.l.b16 %v5700
        %v7211 = vunpack.c.h.b16 %v5700
        %v7212 = vunpack.c.l.b16 %v5701
        %v7213 = vunpack.c.h.b16 %v5701
        %v7214 = vunpack.c.l.b16 %v5702
        %v7215 = vunpack.c.h.b16 %v5702
        %v7216 = vunpack.c.l.b16 %v5703
        %v7217 = vunpack.c.h.b16 %v5703
        %v7218 = vunpack.c.l.b16 %v5704
        %v7219 = vunpack.c.h.b16 %v5704
        %v7220 = vunpack.c.l.b16 %v5705
        %v7221 = vunpack.c.h.b16 %v5705
        %v7222 = vunpack.c.l.b16 %v5706
        %v7223 = vunpack.c.h.b16 %v5706
        %v7224 = vunpack.c.l.b16 %v5707
        %v7225 = vunpack.c.h.b16 %v5707
        %v7226 = vunpack.c.l.b16 %v5708
        %v7227 = vunpack.c.h.b16 %v5708
        %v7228 = vunpack.c.l.b16 %v5709
        %v7229 = vunpack.c.h.b16 %v5709
        %v7230 = vunpack.c.l.b16 %v5710
        %v7231 = vunpack.c.h.b16 %v5710
        %v7232 = vunpack.c.l.b16 %v5711
        %v7233 = vunpack.c.h.b16 %v5711
        %v7234 = vunpack.c.l.b16 %v5712
        %v7235 = vunpack.c.h.b16 %v5712
        %v7236 = vunpack.c.l.b16 %v5713
        %v7237 = vunpack.c.h.b16 %v5713
        %v7238 = vunpack.c.l.b16 %v5714
        %v7239 = vunpack.c.h.b16 %v5714
        %v7240 = vunpack.c.l.b16 %v5715
        %v7241 = vunpack.c.h.b16 %v5715
        %v7242 = vunpack.c.l.b16 %v5716
        %v7243 = vunpack.c.h.b16 %v5716
        %v7244 = vunpack.c.l.b16 %v5717
        %v7245 = vunpack.c.h.b16 %v5717
        %v7246 = vunpack.c.l.b16 %v5718
        %v7247 = vunpack.c.h.b16 %v5718
        %v7248 = vunpack.c.l.b16 %v5719
        %v7249 = vunpack.c.h.b16 %v5719
        %v7250 = vunpack.c.l.b16 %v5720
        %v7251 = vunpack.c.h.b16 %v5720
        %v7252 = vunpack.c.l.b16 %v5721
        %v7253 = vunpack.c.h.b16 %v5721
        %v7254 = vunpack.c.l.b16 %v5722
        %v7255 = vunpack.c.h.b16 %v5722
        %v7256 = vunpack.c.l.b16 %v5723
        %v7257 = vunpack.c.h.b16 %v5723
        %v7258 = vunpack.c.l.b16 %v5724
        %v7259 = vunpack.c.h.b16 %v5724
        %v7260 = vunpack.c.l.b16 %v5725
        %v7261 = vunpack.c.h.b16 %v5725
        %v7262 = vpack.c.b16 %v6246, %v6238
        %v7263 = vpack.c.b16 %v6247, %v6239
        %v7264 = vpack.c.b16 %v6248, %v6240
        %v7265 = vpack.c.b16 %v6249, %v6241
        %v7266 = vpack.c.b16 %v6250, %v6242
        %v7267 = vpack.c.b16 %v6251, %v6243
        %v7268 = vpack.c.b16 %v6252, %v6244
        %v7269 = vpack.c.b16 %v6253, %v6245
        %v7270 = vpack.c.b16 %v6262, %v6254
        %v7271 = vpack.c.b16 %v6263, %v6255
        %v7272 = vpack.c.b16 %v6264, %v6256
        %v7273 = vpack.c.b16 %v6265, %v6257
        %v7274 = vpack.c.b16 %v6266, %v6258
        %v7275 = vpack.c.b16 %v6267, %v6259
        %v7276 = vpack.c.b16 %v6268, %v6260
        %v7277 = vpack.c.b16 %v6269, %v6261
        %v7278 = vpack.c.b16 %v6278, %v6270
        %v7279 = vpack.c.b16 %v6279, %v6271
        %v7280 = vpack.c.b16 %v6280, %v6272
        %v7281 = vpack.c.b16 %v6281, %v6273
        %v7282 = vpack.c.b16 %v6282, %v6274
        %v7283 = vpack.c.b16 %v6283, %v6275
        %v7284 = vpack.c.b16 %v6284, %v6276
        %v7285 = vpack.c.b16 %v6285, %v6277
        %v7286 = vpack.c.b16 %v6294, %v6286
        %v7287 = vpack.c.b16 %v6295, %v6287
        %v7288 = vpack.c.b16 %v6296, %v6288
        %v7289 = vpack.c.b16 %v6297, %v6289
        %v7290 = vpack.c.b16 %v6298, %v6290
        %v7291 = vpack.c.b16 %v6299, %v6291
        %v7292 = vpack.c.b16 %v6300, %v6292
        %v7293 = vpack.c.b16 %v6301, %v6293
        %v7294 = vpack.c.b16 %v6310, %v6302
        %v7295 = vpack.c.b16 %v6311, %v6303
        %v7296 = vpack.c.b16 %v6312, %v6304
        %v7297 = vpack.c.b16 %v6313, %v6305
        %v7298 = vpack.c.b16 %v6314, %v6306
        %v7299 = vpack.c.b16 %v6315, %v6307
        %v7300 = vpack.c.b16 %v6316, %v6308
        %v7301 = vpack.c.b16 %v6317, %v6309
        %v7302 = vpack.c.b16 %v6326, %v6318
        %v7303 = vpack.c.b16 %v6327, %v6319
        %v7304 = vpack.c.b16 %v6328, %v6320
        %v7305 = vpack.c.b16 %v6329, %v6321
        %v7306 = vpack.c.b16 %v6330, %v6322
        %v7307 = vpack.c.b16 %v6331, %v6323
        %v7308 = vpack.c.b16 %v6332, %v6324
        %v7309 = vpack.c.b16 %v6333, %v6325
        %v7310 = vpack.c.b16 %v6342, %v6334
        %v7311 = vpack.c.b16 %v6343, %v6335
        %v7312 = vpack.c.b16 %v6344, %v6336
        %v7313 = vpack.c.b16 %v6345, %v6337
        %v7314 = vpack.c.b16 %v6346, %v6338
        %v7315 = vpack.c.b16 %v6347, %v6339
        %v7316 = vpack.c.b16 %v6348, %v6340
        %v7317 = vpack.c.b16 %v6349, %v6341
        %v7318 = vpack.c.b16 %v6358, %v6350
        %v7319 = vpack.c.b16 %v6359, %v6351
        %v7320 = vpack.c.b16 %v6360, %v6352
        %v7321 = vpack.c.b16 %v6361, %v6353
        %v7322 = vpack.c.b16 %v6362, %v6354
        %v7323 = vpack.c.b16 %v6363, %v6355
        %v7324 = vpack.c.b16 %v6364, %v6356
        %v7325 = vpack.c.b16 %v6365, %v6357
        %v7326 = vpack.c.b16 %v6374, %v6366
        %v7327 = vpack.c.b16 %v6375, %v6367
        %v7328 = vpack.c.b16 %v6376, %v6368
        %v7329 = vpack.c.b16 %v6377, %v6369
        %v7330 = vpack.c.b16 %v6378, %v6370
        %v7331 = vpack.c.b16 %v6379, %v6371
        %v7332 = vpack.c.b16 %v6380, %v6372
        %v7333 = vpack.c.b16 %v6381, %v6373
        %v7334 = vpack.c.b16 %v6390, %v6382
        %v7335 = vpack.c.b16 %v6391, %v6383
        %v7336 = vpack.c.b16 %v6392, %v6384
        %v7337 = vpack.c.b16 %v6393, %v6385
        %v7338 = vpack.c.b16 %v6394, %v6386
        %v7339 = vpack.c.b16 %v6395, %v6387
        %v7340 = vpack.c.b16 %v6396, %v6388
        %v7341 = vpack.c.b16 %v6397, %v6389
        %v7342 = vpack.c.b16 %v6406, %v6398
        %v7343 = vpack.c.b16 %v6407, %v6399
        %v7344 = vpack.c.b16 %v6408, %v6400
        %v7345 = vpack.c.b16 %v6409, %v6401
        %v7346 = vpack.c.b16 %v6410, %v6402
        %v7347 = vpack.c.b16 %v6411, %v6403
        %v7348 = vpack.c.b16 %v6412, %v6404
        %v7349 = vpack.c.b16 %v6413, %v6405
        %v7350 = vpack.c.b16 %v6422, %v6414
        %v7351 = vpack.c.b16 %v6423, %v6415
        %v7352 = vpack.c.b16 %v6424, %v6416
        %v7353 = vpack.c.b16 %v6425, %v6417
        %v7354 = vpack.c.b16 %v6426, %v6418
        %v7355 = vpack.c.b16 %v6427, %v6419
        %v7356 = vpack.c.b16 %v6428, %v6420
        %v7357 = vpack.c.b16 %v6429, %v6421
        %v7358 = vpack.c.b16 %v6438, %v6430
        %v7359 = vpack.c.b16 %v6439, %v6431
        %v7360 = vpack.c.b16 %v6440, %v6432
        %v7361 = vpack.c.b16 %v6441, %v6433
        %v7362 = vpack.c.b16 %v6442, %v6434
        %v7363 = vpack.c.b16 %v6443, %v6435
        %v7364 = vpack.c.b16 %v6444, %v6436
        %v7365 = vpack.c.b16 %v6445, %v6437
        %v7366 = vpack.c.b16 %v6454, %v6446
        %v7367 = vpack.c.b16 %v6455, %v6447
        %v7368 = vpack.c.b16 %v6456, %v6448
        %v7369 = vpack.c.b16 %v6457, %v6449
        %v7370 = vpack.c.b16 %v6458, %v6450
        %v7371 = vpack.c.b16 %v6459, %v6451
        %v7372 = vpack.c.b16 %v6460, %v6452
        %v7373 = vpack.c.b16 %v6461, %v6453
        %v7374 = vpack.c.b16 %v6470, %v6462
        %v7375 = vpack.c.b16 %v6471, %v6463
        %v7376 = vpack.c.b16 %v6472, %v6464
        %v7377 = vpack.c.b16 %v6473, %v6465
        %v7378 = vpack.c.b16 %v6474, %v6466
        %v7379 = vpack.c.b16 %v6475, %v6467
        %v7380 = vpack.c.b16 %v6476, %v6468
        %v7381 = vpack.c.b16 %v6477, %v6469
        %v7382 = vpack.c.b16 %v6486, %v6478
        %v7383 = vpack.c.b16 %v6487, %v6479
        %v7384 = vpack.c.b16 %v6488, %v6480
        %v7385 = vpack.c.b16 %v6489, %v6481
        %v7386 = vpack.c.b16 %v6490, %v6482
        %v7387 = vpack.c.b16 %v6491, %v6483
        %v7388 = vpack.c.b16 %v6492, %v6484
        %v7389 = vpack.c.b16 %v6493, %v6485
        %v7390 = vpack.c.b16 %v6502, %v6494
        %v7391 = vpack.c.b16 %v6503, %v6495
        %v7392 = vpack.c.b16 %v6504, %v6496
        %v7393 = vpack.c.b16 %v6505, %v6497
        %v7394 = vpack.c.b16 %v6506, %v6498
        %v7395 = vpack.c.b16 %v6507, %v6499
        %v7396 = vpack.c.b16 %v6508, %v6500
        %v7397 = vpack.c.b16 %v6509, %v6501
        %v7398 = vpack.c.b16 %v6518, %v6510
        %v7399 = vpack.c.b16 %v6519, %v6511
        %v7400 = vpack.c.b16 %v6520, %v6512
        %v7401 = vpack.c.b16 %v6521, %v6513
        %v7402 = vpack.c.b16 %v6522, %v6514
        %v7403 = vpack.c.b16 %v6523, %v6515
        %v7404 = vpack.c.b16 %v6524, %v6516
        %v7405 = vpack.c.b16 %v6525, %v6517
        %v7406 = vpack.c.b16 %v6534, %v6526
        %v7407 = vpack.c.b16 %v6535, %v6527
        %v7408 = vpack.c.b16 %v6536, %v6528
        %v7409 = vpack.c.b16 %v6537, %v6529
        %v7410 = vpack.c.b16 %v6538, %v6530
        %v7411 = vpack.c.b16 %v6539, %v6531
        %v7412 = vpack.c.b16 %v6540, %v6532
        %v7413 = vpack.c.b16 %v6541, %v6533
        %v7414 = vpack.c.b16 %v6550, %v6542
        %v7415 = vpack.c.b16 %v6551, %v6543
        %v7416 = vpack.c.b16 %v6552, %v6544
        %v7417 = vpack.c.b16 %v6553, %v6545
        %v7418 = vpack.c.b16 %v6554, %v6546
        %v7419 = vpack.c.b16 %v6555, %v6547
        %v7420 = vpack.c.b16 %v6556, %v6548
        %v7421 = vpack.c.b16 %v6557, %v6549
        %v7422 = vpack.c.b16 %v6566, %v6558
        %v7423 = vpack.c.b16 %v6567, %v6559
        %v7424 = vpack.c.b16 %v6568, %v6560
        %v7425 = vpack.c.b16 %v6569, %v6561
        %v7426 = vpack.c.b16 %v6570, %v6562
        %v7427 = vpack.c.b16 %v6571, %v6563
        %v7428 = vpack.c.b16 %v6572, %v6564
        %v7429 = vpack.c.b16 %v6573, %v6565
        %v7430 = vpack.c.b16 %v6582, %v6574
        %v7431 = vpack.c.b16 %v6583, %v6575
        %v7432 = vpack.c.b16 %v6584, %v6576
        %v7433 = vpack.c.b16 %v6585, %v6577
        %v7434 = vpack.c.b16 %v6586, %v6578
        %v7435 = vpack.c.b16 %v6587, %v6579
        %v7436 = vpack.c.b16 %v6588, %v6580
        %v7437 = vpack.c.b16 %v6589, %v6581
        %v7438 = vpack.c.b16 %v6598, %v6590
        %v7439 = vpack.c.b16 %v6599, %v6591
        %v7440 = vpack.c.b16 %v6600, %v6592
        %v7441 = vpack.c.b16 %v6601, %v6593
        %v7442 = vpack.c.b16 %v6602, %v6594
        %v7443 = vpack.c.b16 %v6603, %v6595
        %v7444 = vpack.c.b16 %v6604, %v6596
        %v7445 = vpack.c.b16 %v6605, %v6597
        %v7446 = vpack.c.b16 %v6614, %v6606
        %v7447 = vpack.c.b16 %v6615, %v6607
        %v7448 = vpack.c.b16 %v6616, %v6608
        %v7449 = vpack.c.b16 %v6617, %v6609
        %v7450 = vpack.c.b16 %v6618, %v6610
        %v7451 = vpack.c.b16 %v6619, %v6611
        %v7452 = vpack.c.b16 %v6620, %v6612
        %v7453 = vpack.c.b16 %v6621, %v6613
        %v7454 = vpack.c.b16 %v6630, %v6622
        %v7455 = vpack.c.b16 %v6631, %v6623
        %v7456 = vpack.c.b16 %v6632, %v6624
        %v7457 = vpack.c.b16 %v6633, %v6625
        %v7458 = vpack.c.b16 %v6634, %v6626
        %v7459 = vpack.c.b16 %v6635, %v6627
        %v7460 = vpack.c.b16 %v6636, %v6628
        %v7461 = vpack.c.b16 %v6637, %v6629
        %v7462 = vpack.c.b16 %v6646, %v6638
        %v7463 = vpack.c.b16 %v6647, %v6639
        %v7464 = vpack.c.b16 %v6648, %v6640
        %v7465 = vpack.c.b16 %v6649, %v6641
        %v7466 = vpack.c.b16 %v6650, %v6642
        %v7467 = vpack.c.b16 %v6651, %v6643
        %v7468 = vpack.c.b16 %v6652, %v6644
        %v7469 = vpack.c.b16 %v6653, %v6645
        %v7470 = vpack.c.b16 %v6662, %v6654
        %v7471 = vpack.c.b16 %v6663, %v6655
        %v7472 = vpack.c.b16 %v6664, %v6656
        %v7473 = vpack.c.b16 %v6665, %v6657
        %v7474 = vpack.c.b16 %v6666, %v6658
        %v7475 = vpack.c.b16 %v6667, %v6659
        %v7476 = vpack.c.b16 %v6668, %v6660
        %v7477 = vpack.c.b16 %v6669, %v6661
        %v7478 = vpack.c.b16 %v6678, %v6670
        %v7479 = vpack.c.b16 %v6679, %v6671
        %v7480 = vpack.c.b16 %v6680, %v6672
        %v7481 = vpack.c.b16 %v6681, %v6673
        %v7482 = vpack.c.b16 %v6682, %v6674
        %v7483 = vpack.c.b16 %v6683, %v6675
        %v7484 = vpack.c.b16 %v6684, %v6676
        %v7485 = vpack.c.b16 %v6685, %v6677
        %v7486 = vpack.c.b16 %v6694, %v6686
        %v7487 = vpack.c.b16 %v6695, %v6687
        %v7488 = vpack.c.b16 %v6696, %v6688
        %v7489 = vpack.c.b16 %v6697, %v6689
        %v7490 = vpack.c.b16 %v6698, %v6690
        %v7491 = vpack.c.b16 %v6699, %v6691
        %v7492 = vpack.c.b16 %v6700, %v6692
        %v7493 = vpack.c.b16 %v6701, %v6693
        %v7494 = vpack.c.b16 %v6710, %v6702
        %v7495 = vpack.c.b16 %v6711, %v6703
        %v7496 = vpack.c.b16 %v6712, %v6704
        %v7497 = vpack.c.b16 %v6713, %v6705
        %v7498 = vpack.c.b16 %v6714, %v6706
        %v7499 = vpack.c.b16 %v6715, %v6707
        %v7500 = vpack.c.b16 %v6716, %v6708
        %v7501 = vpack.c.b16 %v6717, %v6709
        %v7502 = vpack.c.b16 %v6726, %v6718
        %v7503 = vpack.c.b16 %v6727, %v6719
        %v7504 = vpack.c.b16 %v6728, %v6720
        %v7505 = vpack.c.b16 %v6729, %v6721
        %v7506 = vpack.c.b16 %v6730, %v6722
        %v7507 = vpack.c.b16 %v6731, %v6723
        %v7508 = vpack.c.b16 %v6732, %v6724
        %v7509 = vpack.c.b16 %v6733, %v6725
        %v7510 = vpack.c.b16 %v6742, %v6734
        %v7511 = vpack.c.b16 %v6743, %v6735
        %v7512 = vpack.c.b16 %v6744, %v6736
        %v7513 = vpack.c.b16 %v6745, %v6737
        %v7514 = vpack.c.b16 %v6746, %v6738
        %v7515 = vpack.c.b16 %v6747, %v6739
        %v7516 = vpack.c.b16 %v6748, %v6740
        %v7517 = vpack.c.b16 %v6749, %v6741
        %v7518 = vpack.c.b16 %v6758, %v6750
        %v7519 = vpack.c.b16 %v6759, %v6751
        %v7520 = vpack.c.b16 %v6760, %v6752
        %v7521 = vpack.c.b16 %v6761, %v6753
        %v7522 = vpack.c.b16 %v6762, %v6754
        %v7523 = vpack.c.b16 %v6763, %v6755
        %v7524 = vpack.c.b16 %v6764, %v6756
        %v7525 = vpack.c.b16 %v6765, %v6757
        %v7526 = vpack.c.b16 %v6774, %v6766
        %v7527 = vpack.c.b16 %v6775, %v6767
        %v7528 = vpack.c.b16 %v6776, %v6768
        %v7529 = vpack.c.b16 %v6777, %v6769
        %v7530 = vpack.c.b16 %v6778, %v6770
        %v7531 = vpack.c.b16 %v6779, %v6771
        %v7532 = vpack.c.b16 %v6780, %v6772
        %v7533 = vpack.c.b16 %v6781, %v6773
        %v7534 = vpack.c.b16 %v6790, %v6782
        %v7535 = vpack.c.b16 %v6791, %v6783
        %v7536 = vpack.c.b16 %v6792, %v6784
        %v7537 = vpack.c.b16 %v6793, %v6785
        %v7538 = vpack.c.b16 %v6794, %v6786
        %v7539 = vpack.c.b16 %v6795, %v6787
        %v7540 = vpack.c.b16 %v6796, %v6788
        %v7541 = vpack.c.b16 %v6797, %v6789
        %v7542 = vpack.c.b16 %v6806, %v6798
        %v7543 = vpack.c.b16 %v6807, %v6799
        %v7544 = vpack.c.b16 %v6808, %v6800
        %v7545 = vpack.c.b16 %v6809, %v6801
        %v7546 = vpack.c.b16 %v6810, %v6802
        %v7547 = vpack.c.b16 %v6811, %v6803
        %v7548 = vpack.c.b16 %v6812, %v6804
        %v7549 = vpack.c.b16 %v6813, %v6805
        %v7550 = vpack.c.b16 %v6822, %v6814
        %v7551 = vpack.c.b16 %v6823, %v6815
        %v7552 = vpack.c.b16 %v6824, %v6816
        %v7553 = vpack.c.b16 %v6825, %v6817
        %v7554 = vpack.c.b16 %v6826, %v6818
        %v7555 = vpack.c.b16 %v6827, %v6819
        %v7556 = vpack.c.b16 %v6828, %v6820
        %v7557 = vpack.c.b16 %v6829, %v6821
        %v7558 = vpack.c.b16 %v6838, %v6830
        %v7559 = vpack.c.b16 %v6839, %v6831
        %v7560 = vpack.c.b16 %v6840, %v6832
        %v7561 = vpack.c.b16 %v6841, %v6833
        %v7562 = vpack.c.b16 %v6842, %v6834
        %v7563 = vpack.c.b16 %v6843, %v6835
        %v7564 = vpack.c.b16 %v6844, %v6836
        %v7565 = vpack.c.b16 %v6845, %v6837
        %v7566 = vpack.c.b16 %v6854, %v6846
        %v7567 = vpack.c.b16 %v6855, %v6847
        %v7568 = vpack.c.b16 %v6856, %v6848
        %v7569 = vpack.c.b16 %v6857, %v6849
        %v7570 = vpack.c.b16 %v6858, %v6850
        %v7571 = vpack.c.b16 %v6859, %v6851
        %v7572 = vpack.c.b16 %v6860, %v6852
        %v7573 = vpack.c.b16 %v6861, %v6853
        %v7574 = vpack.c.b16 %v6870, %v6862
        %v7575 = vpack.c.b16 %v6871, %v6863
        %v7576 = vpack.c.b16 %v6872, %v6864
        %v7577 = vpack.c.b16 %v6873, %v6865
        %v7578 = vpack.c.b16 %v6874, %v6866
        %v7579 = vpack.c.b16 %v6875, %v6867
        %v7580 = vpack.c.b16 %v6876, %v6868
        %v7581 = vpack.c.b16 %v6877, %v6869
        %v7582 = vpack.c.b16 %v6886, %v6878
        %v7583 = vpack.c.b16 %v6887, %v6879
        %v7584 = vpack.c.b16 %v6888, %v6880
        %v7585 = vpack.c.b16 %v6889, %v6881
        %v7586 = vpack.c.b16 %v6890, %v6882
        %v7587 = vpack.c.b16 %v6891, %v6883
        %v7588 = vpack.c.b16 %v6892, %v6884
        %v7589 = vpack.c.b16 %v6893, %v6885
        %v7590 = vpack.c.b16 %v6902, %v6894
        %v7591 = vpack.c.b16 %v6903, %v6895
        %v7592 = vpack.c.b16 %v6904, %v6896
        %v7593 = vpack.c.b16 %v6905, %v6897
        %v7594 = vpack.c.b16 %v6906, %v6898
        %v7595 = vpack.c.b16 %v6907, %v6899
        %v7596 = vpack.c.b16 %v6908, %v6900
        %v7597 = vpack.c.b16 %v6909, %v6901
        %v7598 = vpack.c.b16 %v6918, %v6910
        %v7599 = vpack.c.b16 %v6919, %v6911
        %v7600 = vpack.c.b16 %v6920, %v6912
        %v7601 = vpack.c.b16 %v6921, %v6913
        %v7602 = vpack.c.b16 %v6922, %v6914
        %v7603 = vpack.c.b16 %v6923, %v6915
        %v7604 = vpack.c.b16 %v6924, %v6916
        %v7605 = vpack.c.b16 %v6925, %v6917
        %v7606 = vpack.c.b16 %v6934, %v6926
        %v7607 = vpack.c.b16 %v6935, %v6927
        %v7608 = vpack.c.b16 %v6936, %v6928
        %v7609 = vpack.c.b16 %v6937, %v6929
        %v7610 = vpack.c.b16 %v6938, %v6930
        %v7611 = vpack.c.b16 %v6939, %v6931
        %v7612 = vpack.c.b16 %v6940, %v6932
        %v7613 = vpack.c.b16 %v6941, %v6933
        %v7614 = vpack.c.b16 %v6950, %v6942
        %v7615 = vpack.c.b16 %v6951, %v6943
        %v7616 = vpack.c.b16 %v6952, %v6944
        %v7617 = vpack.c.b16 %v6953, %v6945
        %v7618 = vpack.c.b16 %v6954, %v6946
        %v7619 = vpack.c.b16 %v6955, %v6947
        %v7620 = vpack.c.b16 %v6956, %v6948
        %v7621 = vpack.c.b16 %v6957, %v6949
        %v7622 = vpack.c.b16 %v6966, %v6958
        %v7623 = vpack.c.b16 %v6967, %v6959
        %v7624 = vpack.c.b16 %v6968, %v6960
        %v7625 = vpack.c.b16 %v6969, %v6961
        %v7626 = vpack.c.b16 %v6970, %v6962
        %v7627 = vpack.c.b16 %v6971, %v6963
        %v7628 = vpack.c.b16 %v6972, %v6964
        %v7629 = vpack.c.b16 %v6973, %v6965
        %v7630 = vpack.c.b16 %v6982, %v6974
        %v7631 = vpack.c.b16 %v6983, %v6975
        %v7632 = vpack.c.b16 %v6984, %v6976
        %v7633 = vpack.c.b16 %v6985, %v6977
        %v7634 = vpack.c.b16 %v6986, %v6978
        %v7635 = vpack.c.b16 %v6987, %v6979
        %v7636 = vpack.c.b16 %v6988, %v6980
        %v7637 = vpack.c.b16 %v6989, %v6981
        %v7638 = vpack.c.b16 %v6998, %v6990
        %v7639 = vpack.c.b16 %v6999, %v6991
        %v7640 = vpack.c.b16 %v7000, %v6992
        %v7641 = vpack.c.b16 %v7001, %v6993
        %v7642 = vpack.c.b16 %v7002, %v6994
        %v7643 = vpack.c.b16 %v7003, %v6995
        %v7644 = vpack.c.b16 %v7004, %v6996
        %v7645 = vpack.c.b16 %v7005, %v6997
        %v7646 = vpack.c.b16 %v7014, %v7006
        %v7647 = vpack.c.b16 %v7015, %v7007
        %v7648 = vpack.c.b16 %v7016, %v7008
        %v7649 = vpack.c.b16 %v7017, %v7009
        %v7650 = vpack.c.b16 %v7018, %v7010
        %v7651 = vpack.c.b16 %v7019, %v7011
        %v7652 = vpack.c.b16 %v7020, %v7012
        %v7653 = vpack.c.b16 %v7021, %v7013
        %v7654 = vpack.c.b16 %v7030, %v7022
        %v7655 = vpack.c.b16 %v7031, %v7023
        %v7656 = vpack.c.b16 %v7032, %v7024
        %v7657 = vpack.c.b16 %v7033, %v7025
        %v7658 = vpack.c.b16 %v7034, %v7026
        %v7659 = vpack.c.b16 %v7035, %v7027
        %v7660 = vpack.c.b16 %v7036, %v7028
        %v7661 = vpack.c.b16 %v7037, %v7029
        %v7662 = vpack.c.b16 %v7046, %v7038
        %v7663 = vpack.c.b16 %v7047, %v7039
        %v7664 = vpack.c.b16 %v7048, %v7040
        %v7665 = vpack.c.b16 %v7049, %v7041
        %v7666 = vpack.c.b16 %v7050, %v7042
        %v7667 = vpack.c.b16 %v7051, %v7043
        %v7668 = vpack.c.b16 %v7052, %v7044
        %v7669 = vpack.c.b16 %v7053, %v7045
        %v7670 = vpack.c.b16 %v7062, %v7054
        %v7671 = vpack.c.b16 %v7063, %v7055
        %v7672 = vpack.c.b16 %v7064, %v7056
        %v7673 = vpack.c.b16 %v7065, %v7057
        %v7674 = vpack.c.b16 %v7066, %v7058
        %v7675 = vpack.c.b16 %v7067, %v7059
        %v7676 = vpack.c.b16 %v7068, %v7060
        %v7677 = vpack.c.b16 %v7069, %v7061
        %v7678 = vpack.c.b16 %v7078, %v7070
        %v7679 = vpack.c.b16 %v7079, %v7071
        %v7680 = vpack.c.b16 %v7080, %v7072
        %v7681 = vpack.c.b16 %v7081, %v7073
        %v7682 = vpack.c.b16 %v7082, %v7074
        %v7683 = vpack.c.b16 %v7083, %v7075
        %v7684 = vpack.c.b16 %v7084, %v7076
        %v7685 = vpack.c.b16 %v7085, %v7077
        %v7686 = vpack.c.b16 %v7094, %v7086
        %v7687 = vpack.c.b16 %v7095, %v7087
        %v7688 = vpack.c.b16 %v7096, %v7088
        %v7689 = vpack.c.b16 %v7097, %v7089
        %v7690 = vpack.c.b16 %v7098, %v7090
        %v7691 = vpack.c.b16 %v7099, %v7091
        %v7692 = vpack.c.b16 %v7100, %v7092
        %v7693 = vpack.c.b16 %v7101, %v7093
        %v7694 = vpack.c.b16 %v7110, %v7102
        %v7695 = vpack.c.b16 %v7111, %v7103
        %v7696 = vpack.c.b16 %v7112, %v7104
        %v7697 = vpack.c.b16 %v7113, %v7105
        %v7698 = vpack.c.b16 %v7114, %v7106
        %v7699 = vpack.c.b16 %v7115, %v7107
        %v7700 = vpack.c.b16 %v7116, %v7108
        %v7701 = vpack.c.b16 %v7117, %v7109
        %v7702 = vpack.c.b16 %v7126, %v7118
        %v7703 = vpack.c.b16 %v7127, %v7119
        %v7704 = vpack.c.b16 %v7128, %v7120
        %v7705 = vpack.c.b16 %v7129, %v7121
        %v7706 = vpack.c.b16 %v7130, %v7122
        %v7707 = vpack.c.b16 %v7131, %v7123
        %v7708 = vpack.c.b16 %v7132, %v7124
        %v7709 = vpack.c.b16 %v7133, %v7125
        %v7710 = vpack.c.b16 %v7142, %v7134
        %v7711 = vpack.c.b16 %v7143, %v7135
        %v7712 = vpack.c.b16 %v7144, %v7136
        %v7713 = vpack.c.b16 %v7145, %v7137
        %v7714 = vpack.c.b16 %v7146, %v7138
        %v7715 = vpack.c.b16 %v7147, %v7139
        %v7716 = vpack.c.b16 %v7148, %v7140
        %v7717 = vpack.c.b16 %v7149, %v7141
        %v7718 = vpack.c.b16 %v7158, %v7150
        %v7719 = vpack.c.b16 %v7159, %v7151
        %v7720 = vpack.c.b16 %v7160, %v7152
        %v7721 = vpack.c.b16 %v7161, %v7153
        %v7722 = vpack.c.b16 %v7162, %v7154
        %v7723 = vpack.c.b16 %v7163, %v7155
        %v7724 = vpack.c.b16 %v7164, %v7156
        %v7725 = vpack.c.b16 %v7165, %v7157
        %v7726 = vpack.c.b16 %v7174, %v7166
        %v7727 = vpack.c.b16 %v7175, %v7167
        %v7728 = vpack.c.b16 %v7176, %v7168
        %v7729 = vpack.c.b16 %v7177, %v7169
        %v7730 = vpack.c.b16 %v7178, %v7170
        %v7731 = vpack.c.b16 %v7179, %v7171
        %v7732 = vpack.c.b16 %v7180, %v7172
        %v7733 = vpack.c.b16 %v7181, %v7173
        %v7734 = vpack.c.b16 %v7190, %v7182
        %v7735 = vpack.c.b16 %v7191, %v7183
        %v7736 = vpack.c.b16 %v7192, %v7184
        %v7737 = vpack.c.b16 %v7193, %v7185
        %v7738 = vpack.c.b16 %v7194, %v7186
        %v7739 = vpack.c.b16 %v7195, %v7187
        %v7740 = vpack.c.b16 %v7196, %v7188
        %v7741 = vpack.c.b16 %v7197, %v7189
        %v7742 = vpack.c.b16 %v7206, %v7198
        %v7743 = vpack.c.b16 %v7207, %v7199
        %v7744 = vpack.c.b16 %v7208, %v7200
        %v7745 = vpack.c.b16 %v7209, %v7201
        %v7746 = vpack.c.b16 %v7210, %v7202
        %v7747 = vpack.c.b16 %v7211, %v7203
        %v7748 = vpack.c.b16 %v7212, %v7204
        %v7749 = vpack.c.b16 %v7213, %v7205
        %v7750 = vpack.c.b16 %v7222, %v7214
        %v7751 = vpack.c.b16 %v7223, %v7215
        %v7752 = vpack.c.b16 %v7224, %v7216
        %v7753 = vpack.c.b16 %v7225, %v7217
        %v7754 = vpack.c.b16 %v7226, %v7218
        %v7755 = vpack.c.b16 %v7227, %v7219
        %v7756 = vpack.c.b16 %v7228, %v7220
        %v7757 = vpack.c.b16 %v7229, %v7221
        %v7758 = vpack.c.b16 %v7238, %v7230
        %v7759 = vpack.c.b16 %v7239, %v7231
        %v7760 = vpack.c.b16 %v7240, %v7232
        %v7761 = vpack.c.b16 %v7241, %v7233
        %v7762 = vpack.c.b16 %v7242, %v7234
        %v7763 = vpack.c.b16 %v7243, %v7235
        %v7764 = vpack.c.b16 %v7244, %v7236
        %v7765 = vpack.c.b16 %v7245, %v7237
        %v7766 = vpack.c.b16 %v7254, %v7246
        %v7767 = vpack.c.b16 %v7255, %v7247
        %v7768 = vpack.c.b16 %v7256, %v7248
        %v7769 = vpack.c.b16 %v7257, %v7249
        %v7770 = vpack.c.b16 %v7258, %v7250
        %v7771 = vpack.c.b16 %v7259, %v7251
        %v7772 = vpack.c.b16 %v7260, %v7252
        %v7773 = vpack.c.b16 %v7261, %v7253
        %8286 = vmatprep.subr.bf16.mxu0 %v7263
        %8287 = vmatpush1.bf16.msra.mxu0 %v7262
        %8288 = vmatprep.subr.bf16.mxu0 %v7271
        %8289 = vmatpush1.bf16.msra.mxu0 %v7270
        %8290 = vmatprep.subr.bf16.mxu0 %v7279
        %8291 = vmatpush1.bf16.msra.mxu0 %v7278
        %8292 = vmatprep.subr.bf16.mxu0 %v7287
        %8293 = vmatpush1.bf16.msra.mxu0 %v7286
        %8294 = vmatprep.subr.bf16.mxu0 %v7295
        %8295 = vmatpush1.bf16.msra.mxu0 %v7294
        %8296 = vmatprep.subr.bf16.mxu0 %v7303
        %8297 = vmatpush1.bf16.msra.mxu0 %v7302
        %8298 = vmatprep.subr.bf16.mxu0 %v7311
        %8299 = vmatpush1.bf16.msra.mxu0 %v7310
        %8300 = vmatprep.subr.bf16.mxu0 %v7319
        %8301 = vmatpush1.bf16.msra.mxu0 %v7318
        %8302 = vmatprep.subr.bf16.mxu0 %v7327
        %8303 = vmatpush1.bf16.msra.mxu0 %v7326
        %8304 = vmatprep.subr.bf16.mxu0 %v7335
        %8305 = vmatpush1.bf16.msra.mxu0 %v7334
        %8306 = vmatprep.subr.bf16.mxu0 %v7343
        %8307 = vmatpush1.bf16.msra.mxu0 %v7342
        %8308 = vmatprep.subr.bf16.mxu0 %v7351
        %8309 = vmatpush1.bf16.msra.mxu0 %v7350
        %8310 = vmatprep.subr.bf16.mxu0 %v7359
        %8311 = vmatpush1.bf16.msra.mxu0 %v7358
        %8312 = vmatprep.subr.bf16.mxu0 %v7367
        %8313 = vmatpush1.bf16.msra.mxu0 %v7366
        %8314 = vmatprep.subr.bf16.mxu0 %v7375
        %8315 = vmatpush1.bf16.msra.mxu0 %v7374
        %8316 = vmatprep.subr.bf16.mxu0 %v7383
        %8317 = vmatpush1.bf16.msra.mxu0 %v7382
        %8318 = vmatprep.mubr.bf16.mxu0 %v5207
        %8319 = vmatmul.mubr.bf16.gmra.mrb[0].mxu0 %v5206
        %v8320 = vpop.f32.mrb[0].mxu0
        %v8321 = vadd.f32 0.0, %v8320
        %v8322 = vpop.f32.mrb[0].mxu0
        %v8323 = vadd.f32 0.0, %v8322
        %v8324 = vpop.f32.mrb[0].mxu0
        %v8325 = vpop.f32.mrb[0].mxu0
        %8326 = vdwg.mxu0
        %8327 = vmatprep.subr.bf16.mxu0 %v7391
        %8328 = vmatpush1.bf16.msra.mxu0 %v7390
        %8329 = vmatprep.subr.bf16.mxu0 %v7399
        %8330 = vmatpush1.bf16.msra.mxu0 %v7398
        %8331 = vmatprep.subr.bf16.mxu0 %v7407
        %8332 = vmatpush1.bf16.msra.mxu0 %v7406
        %8333 = vmatprep.subr.bf16.mxu0 %v7415
        %8334 = vmatpush1.bf16.msra.mxu0 %v7414
        %8335 = vmatprep.subr.bf16.mxu0 %v7423
        %8336 = vmatpush1.bf16.msra.mxu0 %v7422
        %8337 = vmatprep.subr.bf16.mxu0 %v7431
        %8338 = vmatpush1.bf16.msra.mxu0 %v7430
        %8339 = vmatprep.subr.bf16.mxu0 %v7439
        %8340 = vmatpush1.bf16.msra.mxu0 %v7438
        %8341 = vmatprep.subr.bf16.mxu0 %v7447
        %8342 = vmatpush1.bf16.msra.mxu0 %v7446
        %8343 = vmatprep.subr.bf16.mxu0 %v7455
        %8344 = vmatpush1.bf16.msra.mxu0 %v7454
        %8345 = vmatprep.subr.bf16.mxu0 %v7463
        %8346 = vmatpush1.bf16.msra.mxu0 %v7462
        %8347 = vmatprep.subr.bf16.mxu0 %v7471
        %8348 = vmatpush1.bf16.msra.mxu0 %v7470
        %8349 = vmatprep.subr.bf16.mxu0 %v7479
        %8350 = vmatpush1.bf16.msra.mxu0 %v7478
        %8351 = vmatprep.subr.bf16.mxu0 %v7487
        %8352 = vmatpush1.bf16.msra.mxu0 %v7486
        %8353 = vmatprep.subr.bf16.mxu0 %v7495
        %8354 = vmatpush1.bf16.msra.mxu0 %v7494
        %8355 = vmatprep.subr.bf16.mxu0 %v7503
        %8356 = vmatpush1.bf16.msra.mxu0 %v7502
        %8357 = vmatprep.subr.bf16.mxu0 %v7511
        %8358 = vmatpush1.bf16.msra.mxu0 %v7510
        %8359 = vmatprep.mubr.bf16.mxu0 %v5209
        %8360 = vmatmul.mubr.bf16.gmra.mrb[0].mxu0 %v5208
        %v8361 = vpop.f32.mrb[0].mxu0
        %v8362 = vadd.f32 %v8321, %v8361
        %v8363 = vpop.f32.mrb[0].mxu0
        %v8364 = vadd.f32 %v8323, %v8363
        %v8365 = vpop.f32.mrb[0].mxu0
        %v8366 = vpop.f32.mrb[0].mxu0
        %8367 = vdwg.mxu0
        %8368 = vmatprep.subr.bf16.mxu0 %v7519
        %8369 = vmatpush1.bf16.msra.mxu0 %v7518
        %8370 = vmatprep.subr.bf16.mxu0 %v7527
        %8371 = vmatpush1.bf16.msra.mxu0 %v7526
        %8372 = vmatprep.subr.bf16.mxu0 %v7535
        %8373 = vmatpush1.bf16.msra.mxu0 %v7534
        %8374 = vmatprep.subr.bf16.mxu0 %v7543
        %8375 = vmatpush1.bf16.msra.mxu0 %v7542
        %8376 = vmatprep.subr.bf16.mxu0 %v7551
        %8377 = vmatpush1.bf16.msra.mxu0 %v7550
        %8378 = vmatprep.subr.bf16.mxu0 %v7559
        %8379 = vmatpush1.bf16.msra.mxu0 %v7558
        %8380 = vmatprep.subr.bf16.mxu0 %v7567
        %8381 = vmatpush1.bf16.msra.mxu0 %v7566
        %8382 = vmatprep.subr.bf16.mxu0 %v7575
        %8383 = vmatpush1.bf16.msra.mxu0 %v7574
        %8384 = vmatprep.subr.bf16.mxu0 %v7583
        %8385 = vmatpush1.bf16.msra.mxu0 %v7582
        %8386 = vmatprep.subr.bf16.mxu0 %v7591
        %8387 = vmatpush1.bf16.msra.mxu0 %v7590
        %8388 = vmatprep.subr.bf16.mxu0 %v7599
        %8389 = vmatpush1.bf16.msra.mxu0 %v7598
        %8390 = vmatprep.subr.bf16.mxu0 %v7607
        %8391 = vmatpush1.bf16.msra.mxu0 %v7606
        %8392 = vmatprep.subr.bf16.mxu0 %v7615
        %8393 = vmatpush1.bf16.msra.mxu0 %v7614
        %8394 = vmatprep.subr.bf16.mxu0 %v7623
        %8395 = vmatpush1.bf16.msra.mxu0 %v7622
        %8396 = vmatprep.subr.bf16.mxu0 %v7631
        %8397 = vmatpush1.bf16.msra.mxu0 %v7630
        %8398 = vmatprep.subr.bf16.mxu0 %v7639
        %8399 = vmatpush1.bf16.msra.mxu0 %v7638
        %8400 = vmatprep.mubr.bf16.mxu0 %v5211
        %8401 = vmatmul.mubr.bf16.gmra.mrb[0].mxu0 %v5210
        %v8402 = vpop.f32.mrb[0].mxu0
        %v8403 = vadd.f32 %v8362, %v8402
        %v8404 = vpop.f32.mrb[0].mxu0
        %v8405 = vadd.f32 %v8364, %v8404
        %v8406 = vpop.f32.mrb[0].mxu0
        %v8407 = vpop.f32.mrb[0].mxu0
        %8408 = vdwg.mxu0
        %8409 = vmatprep.subr.bf16.mxu0 %v7647
        %8410 = vmatpush1.bf16.msra.mxu0 %v7646
        %8411 = vmatprep.subr.bf16.mxu0 %v7655
        %8412 = vmatpush1.bf16.msra.mxu0 %v7654
        %8413 = vmatprep.subr.bf16.mxu0 %v7663
        %8414 = vmatpush1.bf16.msra.mxu0 %v7662
        %8415 = vmatprep.subr.bf16.mxu0 %v7671
        %8416 = vmatpush1.bf16.msra.mxu0 %v7670
        %8417 = vmatprep.subr.bf16.mxu0 %v7679
        %8418 = vmatpush1.bf16.msra.mxu0 %v7678
        %8419 = vmatprep.subr.bf16.mxu0 %v7687
        %8420 = vmatpush1.bf16.msra.mxu0 %v7686
        %8421 = vmatprep.subr.bf16.mxu0 %v7695
        %8422 = vmatpush1.bf16.msra.mxu0 %v7694
        %8423 = vmatprep.subr.bf16.mxu0 %v7703
        %8424 = vmatpush1.bf16.msra.mxu0 %v7702
        %8425 = vmatprep.subr.bf16.mxu0 %v7711
        %8426 = vmatpush1.bf16.msra.mxu0 %v7710
        %8427 = vmatprep.subr.bf16.mxu0 %v7719
        %8428 = vmatpush1.bf16.msra.mxu0 %v7718
        %8429 = vmatprep.subr.bf16.mxu0 %v7727
        %8430 = vmatpush1.bf16.msra.mxu0 %v7726
        %8431 = vmatprep.subr.bf16.mxu0 %v7735
        %8432 = vmatpush1.bf16.msra.mxu0 %v7734
        %8433 = vmatprep.subr.bf16.mxu0 %v7743
        %8434 = vmatpush1.bf16.msra.mxu0 %v7742
        %8435 = vmatprep.subr.bf16.mxu0 %v7751
        %8436 = vmatpush1.bf16.msra.mxu0 %v7750
        %8437 = vmatprep.subr.bf16.mxu0 %v7759
        %8438 = vmatpush1.bf16.msra.mxu0 %v7758
        %8439 = vmatprep.subr.bf16.mxu0 %v7767
        %8440 = vmatpush1.bf16.msra.mxu0 %v7766
        %8441 = vmatprep.mubr.bf16.mxu0 %v5213
        %8442 = vmatmul.mubr.bf16.gmra.mrb[0].mxu0 %v5212
        %v8443 = vpop.f32.mrb[0].mxu0
        %v8444 = vadd.f32 %v8403, %v8443
        %v8445 = vpop.f32.mrb[0].mxu0
        %v8446 = vadd.f32 %v8405, %v8445
        %v8447 = vpop.f32.mrb[0].mxu0
        %v8448 = vpop.f32.mrb[0].mxu0
        %8449 = vdwg.mxu0
        %8450 = vmatprep.subr.bf16.mxu0 %v7265
        %8451 = vmatpush1.bf16.msra.mxu0 %v7264
        %8452 = vmatprep.subr.bf16.mxu0 %v7273
        %8453 = vmatpush1.bf16.msra.mxu0 %v7272
        %8454 = vmatprep.subr.bf16.mxu0 %v7281
        %8455 = vmatpush1.bf16.msra.mxu0 %v7280
        %8456 = vmatprep.subr.bf16.mxu0 %v7289
        %8457 = vmatpush1.bf16.msra.mxu0 %v7288
        %8458 = vmatprep.subr.bf16.mxu0 %v7297
        %8459 = vmatpush1.bf16.msra.mxu0 %v7296
        %8460 = vmatprep.subr.bf16.mxu0 %v7305
        %8461 = vmatpush1.bf16.msra.mxu0 %v7304
        %8462 = vmatprep.subr.bf16.mxu0 %v7313
        %8463 = vmatpush1.bf16.msra.mxu0 %v7312
        %8464 = vmatprep.subr.bf16.mxu0 %v7321
        %8465 = vmatpush1.bf16.msra.mxu0 %v7320
        %8466 = vmatprep.subr.bf16.mxu0 %v7329
        %8467 = vmatpush1.bf16.msra.mxu0 %v7328
        %8468 = vmatprep.subr.bf16.mxu0 %v7337
        %8469 = vmatpush1.bf16.msra.mxu0 %v7336
        %8470 = vmatprep.subr.bf16.mxu0 %v7345
        %8471 = vmatpush1.bf16.msra.mxu0 %v7344
        %8472 = vmatprep.subr.bf16.mxu0 %v7353
        %8473 = vmatpush1.bf16.msra.mxu0 %v7352
        %8474 = vmatprep.subr.bf16.mxu0 %v7361
        %8475 = vmatpush1.bf16.msra.mxu0 %v7360
        %8476 = vmatprep.subr.bf16.mxu0 %v7369
        %8477 = vmatpush1.bf16.msra.mxu0 %v7368
        %8478 = vmatprep.subr.bf16.mxu0 %v7377
        %8479 = vmatpush1.bf16.msra.mxu0 %v7376
        %8480 = vmatprep.subr.bf16.mxu0 %v7385
        %8481 = vmatpush1.bf16.msra.mxu0 %v7384
        %8482 = vmatprep.mubr.bf16.mxu0 %v5207
        %8483 = vmatmul.mubr.bf16.gmra.mrb[0].mxu0 %v5206
        %v8484 = vpop.f32.mrb[0].mxu0
        %v8485 = vadd.f32 0.0, %v8484
        %v8486 = vpop.f32.mrb[0].mxu0
        %v8487 = vadd.f32 0.0, %v8486
        %v8488 = vpop.f32.mrb[0].mxu0
        %v8489 = vpop.f32.mrb[0].mxu0
        %8490 = vdwg.mxu0
        %8491 = vmatprep.subr.bf16.mxu0 %v7393
        %8492 = vmatpush1.bf16.msra.mxu0 %v7392
        %8493 = vmatprep.subr.bf16.mxu0 %v7401
        %8494 = vmatpush1.bf16.msra.mxu0 %v7400
        %8495 = vmatprep.subr.bf16.mxu0 %v7409
        %8496 = vmatpush1.bf16.msra.mxu0 %v7408
        %8497 = vmatprep.subr.bf16.mxu0 %v7417
        %8498 = vmatpush1.bf16.msra.mxu0 %v7416
        %8499 = vmatprep.subr.bf16.mxu0 %v7425
        %8500 = vmatpush1.bf16.msra.mxu0 %v7424
        %8501 = vmatprep.subr.bf16.mxu0 %v7433
        %8502 = vmatpush1.bf16.msra.mxu0 %v7432
        %8503 = vmatprep.subr.bf16.mxu0 %v7441
        %8504 = vmatpush1.bf16.msra.mxu0 %v7440
        %8505 = vmatprep.subr.bf16.mxu0 %v7449
        %8506 = vmatpush1.bf16.msra.mxu0 %v7448
        %8507 = vmatprep.subr.bf16.mxu0 %v7457
        %8508 = vmatpush1.bf16.msra.mxu0 %v7456
        %8509 = vmatprep.subr.bf16.mxu0 %v7465
        %8510 = vmatpush1.bf16.msra.mxu0 %v7464
        %8511 = vmatprep.subr.bf16.mxu0 %v7473
        %8512 = vmatpush1.bf16.msra.mxu0 %v7472
        %8513 = vmatprep.subr.bf16.mxu0 %v7481
        %8514 = vmatpush1.bf16.msra.mxu0 %v7480
        %8515 = vmatprep.subr.bf16.mxu0 %v7489
        %8516 = vmatpush1.bf16.msra.mxu0 %v7488
        %8517 = vmatprep.subr.bf16.mxu0 %v7497
        %8518 = vmatpush1.bf16.msra.mxu0 %v7496
        %8519 = vmatprep.subr.bf16.mxu0 %v7505
        %8520 = vmatpush1.bf16.msra.mxu0 %v7504
        %8521 = vmatprep.subr.bf16.mxu0 %v7513
        %8522 = vmatpush1.bf16.msra.mxu0 %v7512
        %8523 = vmatprep.mubr.bf16.mxu0 %v5209
        %8524 = vmatmul.mubr.bf16.gmra.mrb[0].mxu0 %v5208
        %v8525 = vpop.f32.mrb[0].mxu0
        %v8526 = vadd.f32 %v8485, %v8525
        %v8527 = vpop.f32.mrb[0].mxu0
        %v8528 = vadd.f32 %v8487, %v8527
        %v8529 = vpop.f32.mrb[0].mxu0
        %v8530 = vpop.f32.mrb[0].mxu0
        %8531 = vdwg.mxu0
        %8532 = vmatprep.subr.bf16.mxu0 %v7521
        %8533 = vmatpush1.bf16.msra.mxu0 %v7520
        %8534 = vmatprep.subr.bf16.mxu0 %v7529
        %8535 = vmatpush1.bf16.msra.mxu0 %v7528
        %8536 = vmatprep.subr.bf16.mxu0 %v7537
        %8537 = vmatpush1.bf16.msra.mxu0 %v7536
        %8538 = vmatprep.subr.bf16.mxu0 %v7545
        %8539 = vmatpush1.bf16.msra.mxu0 %v7544
        %8540 = vmatprep.subr.bf16.mxu0 %v7553
        %8541 = vmatpush1.bf16.msra.mxu0 %v7552
        %8542 = vmatprep.subr.bf16.mxu0 %v7561
        %8543 = vmatpush1.bf16.msra.mxu0 %v7560
        %8544 = vmatprep.subr.bf16.mxu0 %v7569
        %8545 = vmatpush1.bf16.msra.mxu0 %v7568
        %8546 = vmatprep.subr.bf16.mxu0 %v7577
        %8547 = vmatpush1.bf16.msra.mxu0 %v7576
        %8548 = vmatprep.subr.bf16.mxu0 %v7585
        %8549 = vmatpush1.bf16.msra.mxu0 %v7584
        %8550 = vmatprep.subr.bf16.mxu0 %v7593
        %8551 = vmatpush1.bf16.msra.mxu0 %v7592
        %8552 = vmatprep.subr.bf16.mxu0 %v7601
        %8553 = vmatpush1.bf16.msra.mxu0 %v7600
        %8554 = vmatprep.subr.bf16.mxu0 %v7609
        %8555 = vmatpush1.bf16.msra.mxu0 %v7608
        %8556 = vmatprep.subr.bf16.mxu0 %v7617
        %8557 = vmatpush1.bf16.msra.mxu0 %v7616
        %8558 = vmatprep.subr.bf16.mxu0 %v7625
        %8559 = vmatpush1.bf16.msra.mxu0 %v7624
        %8560 = vmatprep.subr.bf16.mxu0 %v7633
        %8561 = vmatpush1.bf16.msra.mxu0 %v7632
        %8562 = vmatprep.subr.bf16.mxu0 %v7641
        %8563 = vmatpush1.bf16.msra.mxu0 %v7640
        %8564 = vmatprep.mubr.bf16.mxu0 %v5211
        %8565 = vmatmul.mubr.bf16.gmra.mrb[0].mxu0 %v5210
        %v8566 = vpop.f32.mrb[0].mxu0
        %v8567 = vadd.f32 %v8526, %v8566
        %v8568 = vpop.f32.mrb[0].mxu0
        %v8569 = vadd.f32 %v8528, %v8568
        %v8570 = vpop.f32.mrb[0].mxu0
        %v8571 = vpop.f32.mrb[0].mxu0
        %8572 = vdwg.mxu0
        %8573 = vmatprep.subr.bf16.mxu0 %v7649
        %8574 = vmatpush1.bf16.msra.mxu0 %v7648
        %8575 = vmatprep.subr.bf16.mxu0 %v7657
        %8576 = vmatpush1.bf16.msra.mxu0 %v7656
        %8577 = vmatprep.subr.bf16.mxu0 %v7665
        %8578 = vmatpush1.bf16.msra.mxu0 %v7664
        %8579 = vmatprep.subr.bf16.mxu0 %v7673
        %8580 = vmatpush1.bf16.msra.mxu0 %v7672
        %8581 = vmatprep.subr.bf16.mxu0 %v7681
        %8582 = vmatpush1.bf16.msra.mxu0 %v7680
        %8583 = vmatprep.subr.bf16.mxu0 %v7689
        %8584 = vmatpush1.bf16.msra.mxu0 %v7688
        %8585 = vmatprep.subr.bf16.mxu0 %v7697
        %8586 = vmatpush1.bf16.msra.mxu0 %v7696
        %8587 = vmatprep.subr.bf16.mxu0 %v7705
        %8588 = vmatpush1.bf16.msra.mxu0 %v7704
        %8589 = vmatprep.subr.bf16.mxu0 %v7713
        %8590 = vmatpush1.bf16.msra.mxu0 %v7712
        %8591 = vmatprep.subr.bf16.mxu0 %v7721
        %8592 = vmatpush1.bf16.msra.mxu0 %v7720
        %8593 = vmatprep.subr.bf16.mxu0 %v7729
        %8594 = vmatpush1.bf16.msra.mxu0 %v7728
        %8595 = vmatprep.subr.bf16.mxu0 %v7737
        %8596 = vmatpush1.bf16.msra.mxu0 %v7736
        %8597 = vmatprep.subr.bf16.mxu0 %v7745
        %8598 = vmatpush1.bf16.msra.mxu0 %v7744
        %8599 = vmatprep.subr.bf16.mxu0 %v7753
        %8600 = vmatpush1.bf16.msra.mxu0 %v7752
        %8601 = vmatprep.subr.bf16.mxu0 %v7761
        %8602 = vmatpush1.bf16.msra.mxu0 %v7760
        %8603 = vmatprep.subr.bf16.mxu0 %v7769
        %8604 = vmatpush1.bf16.msra.mxu0 %v7768
        %8605 = vmatprep.mubr.bf16.mxu0 %v5213
        %8606 = vmatmul.mubr.bf16.gmra.mrb[0].mxu0 %v5212
        %v8607 = vpop.f32.mrb[0].mxu0
        %v8608 = vadd.f32 %v8567, %v8607
        %v8609 = vpop.f32.mrb[0].mxu0
        %v8610 = vadd.f32 %v8569, %v8609
        %v8611 = vpop.f32.mrb[0].mxu0
        %v8612 = vpop.f32.mrb[0].mxu0
        %8613 = vdwg.mxu0
        %8614 = vmatprep.subr.bf16.mxu0 %v7267
        %8615 = vmatpush1.bf16.msra.mxu0 %v7266
        %8616 = vmatprep.subr.bf16.mxu0 %v7275
        %8617 = vmatpush1.bf16.msra.mxu0 %v7274
        %8618 = vmatprep.subr.bf16.mxu0 %v7283
        %8619 = vmatpush1.bf16.msra.mxu0 %v7282
        %8620 = vmatprep.subr.bf16.mxu0 %v7291
        %8621 = vmatpush1.bf16.msra.mxu0 %v7290
        %8622 = vmatprep.subr.bf16.mxu0 %v7299
        %8623 = vmatpush1.bf16.msra.mxu0 %v7298
        %8624 = vmatprep.subr.bf16.mxu0 %v7307
        %8625 = vmatpush1.bf16.msra.mxu0 %v7306
        %8626 = vmatprep.subr.bf16.mxu0 %v7315
        %8627 = vmatpush1.bf16.msra.mxu0 %v7314
        %8628 = vmatprep.subr.bf16.mxu0 %v7323
        %8629 = vmatpush1.bf16.msra.mxu0 %v7322
        %8630 = vmatprep.subr.bf16.mxu0 %v7331
        %8631 = vmatpush1.bf16.msra.mxu0 %v7330
        %8632 = vmatprep.subr.bf16.mxu0 %v7339
        %8633 = vmatpush1.bf16.msra.mxu0 %v7338
        %8634 = vmatprep.subr.bf16.mxu0 %v7347
        %8635 = vmatpush1.bf16.msra.mxu0 %v7346
        %8636 = vmatprep.subr.bf16.mxu0 %v7355
        %8637 = vmatpush1.bf16.msra.mxu0 %v7354
        %8638 = vmatprep.subr.bf16.mxu0 %v7363
        %8639 = vmatpush1.bf16.msra.mxu0 %v7362
        %8640 = vmatprep.subr.bf16.mxu0 %v7371
        %8641 = vmatpush1.bf16.msra.mxu0 %v7370
        %8642 = vmatprep.subr.bf16.mxu0 %v7379
        %8643 = vmatpush1.bf16.msra.mxu0 %v7378
        %8644 = vmatprep.subr.bf16.mxu0 %v7387
        %8645 = vmatpush1.bf16.msra.mxu0 %v7386
        %8646 = vmatprep.mubr.bf16.mxu0 %v5207
        %8647 = vmatmul.mubr.bf16.gmra.mrb[0].mxu0 %v5206
        %v8648 = vpop.f32.mrb[0].mxu0
        %v8649 = vadd.f32 0.0, %v8648
        %v8650 = vpop.f32.mrb[0].mxu0
        %v8651 = vadd.f32 0.0, %v8650
        %v8652 = vpop.f32.mrb[0].mxu0
        %v8653 = vpop.f32.mrb[0].mxu0
        %8654 = vdwg.mxu0
        %8655 = vmatprep.subr.bf16.mxu0 %v7395
        %8656 = vmatpush1.bf16.msra.mxu0 %v7394
        %8657 = vmatprep.subr.bf16.mxu0 %v7403
        %8658 = vmatpush1.bf16.msra.mxu0 %v7402
        %8659 = vmatprep.subr.bf16.mxu0 %v7411
        %8660 = vmatpush1.bf16.msra.mxu0 %v7410
        %8661 = vmatprep.subr.bf16.mxu0 %v7419
        %8662 = vmatpush1.bf16.msra.mxu0 %v7418
        %8663 = vmatprep.subr.bf16.mxu0 %v7427
        %8664 = vmatpush1.bf16.msra.mxu0 %v7426
        %8665 = vmatprep.subr.bf16.mxu0 %v7435
        %8666 = vmatpush1.bf16.msra.mxu0 %v7434
        %8667 = vmatprep.subr.bf16.mxu0 %v7443
        %8668 = vmatpush1.bf16.msra.mxu0 %v7442
        %8669 = vmatprep.subr.bf16.mxu0 %v7451
        %8670 = vmatpush1.bf16.msra.mxu0 %v7450
        %8671 = vmatprep.subr.bf16.mxu0 %v7459
        %8672 = vmatpush1.bf16.msra.mxu0 %v7458
        %8673 = vmatprep.subr.bf16.mxu0 %v7467
        %8674 = vmatpush1.bf16.msra.mxu0 %v7466
        %8675 = vmatprep.subr.bf16.mxu0 %v7475
        %8676 = vmatpush1.bf16.msra.mxu0 %v7474
        %8677 = vmatprep.subr.bf16.mxu0 %v7483
        %8678 = vmatpush1.bf16.msra.mxu0 %v7482
        %8679 = vmatprep.subr.bf16.mxu0 %v7491
        %8680 = vmatpush1.bf16.msra.mxu0 %v7490
        %8681 = vmatprep.subr.bf16.mxu0 %v7499
        %8682 = vmatpush1.bf16.msra.mxu0 %v7498
        %8683 = vmatprep.subr.bf16.mxu0 %v7507
        %8684 = vmatpush1.bf16.msra.mxu0 %v7506
        %8685 = vmatprep.subr.bf16.mxu0 %v7515
        %8686 = vmatpush1.bf16.msra.mxu0 %v7514
        %8687 = vmatprep.mubr.bf16.mxu0 %v5209
        %8688 = vmatmul.mubr.bf16.gmra.mrb[0].mxu0 %v5208
        %v8689 = vpop.f32.mrb[0].mxu0
        %v8690 = vadd.f32 %v8649, %v8689
        %v8691 = vpop.f32.mrb[0].mxu0
        %v8692 = vadd.f32 %v8651, %v8691
        %v8693 = vpop.f32.mrb[0].mxu0
        %v8694 = vpop.f32.mrb[0].mxu0
        %8695 = vdwg.mxu0
        %8696 = vmatprep.subr.bf16.mxu0 %v7523
        %8697 = vmatpush1.bf16.msra.mxu0 %v7522
        %8698 = vmatprep.subr.bf16.mxu0 %v7531
        %8699 = vmatpush1.bf16.msra.mxu0 %v7530
        %8700 = vmatprep.subr.bf16.mxu0 %v7539
        %8701 = vmatpush1.bf16.msra.mxu0 %v7538
        %8702 = vmatprep.subr.bf16.mxu0 %v7547
        %8703 = vmatpush1.bf16.msra.mxu0 %v7546
        %8704 = vmatprep.subr.bf16.mxu0 %v7555
        %8705 = vmatpush1.bf16.msra.mxu0 %v7554
        %8706 = vmatprep.subr.bf16.mxu0 %v7563
        %8707 = vmatpush1.bf16.msra.mxu0 %v7562
        %8708 = vmatprep.subr.bf16.mxu0 %v7571
        %8709 = vmatpush1.bf16.msra.mxu0 %v7570
        %8710 = vmatprep.subr.bf16.mxu0 %v7579
        %8711 = vmatpush1.bf16.msra.mxu0 %v7578
        %8712 = vmatprep.subr.bf16.mxu0 %v7587
        %8713 = vmatpush1.bf16.msra.mxu0 %v7586
        %8714 = vmatprep.subr.bf16.mxu0 %v7595
        %8715 = vmatpush1.bf16.msra.mxu0 %v7594
        %8716 = vmatprep.subr.bf16.mxu0 %v7603
        %8717 = vmatpush1.bf16.msra.mxu0 %v7602
        %8718 = vmatprep.subr.bf16.mxu0 %v7611
        %8719 = vmatpush1.bf16.msra.mxu0 %v7610
        %8720 = vmatprep.subr.bf16.mxu0 %v7619
        %8721 = vmatpush1.bf16.msra.mxu0 %v7618
        %8722 = vmatprep.subr.bf16.mxu0 %v7627
        %8723 = vmatpush1.bf16.msra.mxu0 %v7626
        %8724 = vmatprep.subr.bf16.mxu0 %v7635
        %8725 = vmatpush1.bf16.msra.mxu0 %v7634
        %8726 = vmatprep.subr.bf16.mxu0 %v7643
        %8727 = vmatpush1.bf16.msra.mxu0 %v7642
        %8728 = vmatprep.mubr.bf16.mxu0 %v5211
        %8729 = vmatmul.mubr.bf16.gmra.mrb[0].mxu0 %v5210
        %v8730 = vpop.f32.mrb[0].mxu0
        %v8731 = vadd.f32 %v8690, %v8730
        %v8732 = vpop.f32.mrb[0].mxu0
        %v8733 = vadd.f32 %v8692, %v8732
        %v8734 = vpop.f32.mrb[0].mxu0
        %v8735 = vpop.f32.mrb[0].mxu0
        %8736 = vdwg.mxu0
        %8737 = vmatprep.subr.bf16.mxu0 %v7651
        %8738 = vmatpush1.bf16.msra.mxu0 %v7650
        %8739 = vmatprep.subr.bf16.mxu0 %v7659
        %8740 = vmatpush1.bf16.msra.mxu0 %v7658
        %8741 = vmatprep.subr.bf16.mxu0 %v7667
        %8742 = vmatpush1.bf16.msra.mxu0 %v7666
        %8743 = vmatprep.subr.bf16.mxu0 %v7675
        %8744 = vmatpush1.bf16.msra.mxu0 %v7674
        %8745 = vmatprep.subr.bf16.mxu0 %v7683
        %8746 = vmatpush1.bf16.msra.mxu0 %v7682
        %8747 = vmatprep.subr.bf16.mxu0 %v7691
        %8748 = vmatpush1.bf16.msra.mxu0 %v7690
        %8749 = vmatprep.subr.bf16.mxu0 %v7699
        %8750 = vmatpush1.bf16.msra.mxu0 %v7698
        %8751 = vmatprep.subr.bf16.mxu0 %v7707
        %8752 = vmatpush1.bf16.msra.mxu0 %v7706
        %8753 = vmatprep.subr.bf16.mxu0 %v7715
        %8754 = vmatpush1.bf16.msra.mxu0 %v7714
        %8755 = vmatprep.subr.bf16.mxu0 %v7723
        %8756 = vmatpush1.bf16.msra.mxu0 %v7722
        %8757 = vmatprep.subr.bf16.mxu0 %v7731
        %8758 = vmatpush1.bf16.msra.mxu0 %v7730
        %8759 = vmatprep.subr.bf16.mxu0 %v7739
        %8760 = vmatpush1.bf16.msra.mxu0 %v7738
        %8761 = vmatprep.subr.bf16.mxu0 %v7747
        %8762 = vmatpush1.bf16.msra.mxu0 %v7746
        %8763 = vmatprep.subr.bf16.mxu0 %v7755
        %8764 = vmatpush1.bf16.msra.mxu0 %v7754
        %8765 = vmatprep.subr.bf16.mxu0 %v7763
        %8766 = vmatpush1.bf16.msra.mxu0 %v7762
        %8767 = vmatprep.subr.bf16.mxu0 %v7771
        %8768 = vmatpush1.bf16.msra.mxu0 %v7770
        %8769 = vmatprep.mubr.bf16.mxu0 %v5213
        %8770 = vmatmul.mubr.bf16.gmra.mrb[0].mxu0 %v5212
        %v8771 = vpop.f32.mrb[0].mxu0
        %v8772 = vadd.f32 %v8731, %v8771
        %v8773 = vpop.f32.mrb[0].mxu0
        %v8774 = vadd.f32 %v8733, %v8773
        %v8775 = vpop.f32.mrb[0].mxu0
        %v8776 = vpop.f32.mrb[0].mxu0
        %8777 = vdwg.mxu0
        %8778 = vmatprep.subr.bf16.mxu0 %v7269
        %8779 = vmatpush1.bf16.msra.mxu0 %v7268
        %8780 = vmatprep.subr.bf16.mxu0 %v7277
        %8781 = vmatpush1.bf16.msra.mxu0 %v7276
        %8782 = vmatprep.subr.bf16.mxu0 %v7285
        %8783 = vmatpush1.bf16.msra.mxu0 %v7284
        %8784 = vmatprep.subr.bf16.mxu0 %v7293
        %8785 = vmatpush1.bf16.msra.mxu0 %v7292
        %8786 = vmatprep.subr.bf16.mxu0 %v7301
        %8787 = vmatpush1.bf16.msra.mxu0 %v7300
        %8788 = vmatprep.subr.bf16.mxu0 %v7309
        %8789 = vmatpush1.bf16.msra.mxu0 %v7308
        %8790 = vmatprep.subr.bf16.mxu0 %v7317
        %8791 = vmatpush1.bf16.msra.mxu0 %v7316
        %8792 = vmatprep.subr.bf16.mxu0 %v7325
        %8793 = vmatpush1.bf16.msra.mxu0 %v7324
        %8794 = vmatprep.subr.bf16.mxu0 %v7333
        %8795 = vmatpush1.bf16.msra.mxu0 %v7332
        %8796 = vmatprep.subr.bf16.mxu0 %v7341
        %8797 = vmatpush1.bf16.msra.mxu0 %v7340
        %8798 = vmatprep.subr.bf16.mxu0 %v7349
        %8799 = vmatpush1.bf16.msra.mxu0 %v7348
        %8800 = vmatprep.subr.bf16.mxu0 %v7357
        %8801 = vmatpush1.bf16.msra.mxu0 %v7356
        %8802 = vmatprep.subr.bf16.mxu0 %v7365
        %8803 = vmatpush1.bf16.msra.mxu0 %v7364
        %8804 = vmatprep.subr.bf16.mxu0 %v7373
        %8805 = vmatpush1.bf16.msra.mxu0 %v7372
        %8806 = vmatprep.subr.bf16.mxu0 %v7381
        %8807 = vmatpush1.bf16.msra.mxu0 %v7380
        %8808 = vmatprep.subr.bf16.mxu0 %v7389
        %8809 = vmatpush1.bf16.msra.mxu0 %v7388
        %8810 = vmatprep.mubr.bf16.mxu0 %v5207
        %8811 = vmatmul.mubr.bf16.gmra.mrb[0].mxu0 %v5206
        %v8812 = vpop.f32.mrb[0].mxu0
        %v8813 = vadd.f32 0.0, %v8812
        %v8814 = vpop.f32.mrb[0].mxu0
        %v8815 = vadd.f32 0.0, %v8814
        %v8816 = vpop.f32.mrb[0].mxu0
        %v8817 = vpop.f32.mrb[0].mxu0
        %8818 = vdwg.mxu0
        %8819 = vmatprep.subr.bf16.mxu0 %v7397
        %8820 = vmatpush1.bf16.msra.mxu0 %v7396
        %8821 = vmatprep.subr.bf16.mxu0 %v7405
        %8822 = vmatpush1.bf16.msra.mxu0 %v7404
        %8823 = vmatprep.subr.bf16.mxu0 %v7413
        %8824 = vmatpush1.bf16.msra.mxu0 %v7412
        %8825 = vmatprep.subr.bf16.mxu0 %v7421
        %8826 = vmatpush1.bf16.msra.mxu0 %v7420
        %8827 = vmatprep.subr.bf16.mxu0 %v7429
        %8828 = vmatpush1.bf16.msra.mxu0 %v7428
        %8829 = vmatprep.subr.bf16.mxu0 %v7437
        %8830 = vmatpush1.bf16.msra.mxu0 %v7436
        %8831 = vmatprep.subr.bf16.mxu0 %v7445
        %8832 = vmatpush1.bf16.msra.mxu0 %v7444
        %8833 = vmatprep.subr.bf16.mxu0 %v7453
        %8834 = vmatpush1.bf16.msra.mxu0 %v7452
        %8835 = vmatprep.subr.bf16.mxu0 %v7461
        %8836 = vmatpush1.bf16.msra.mxu0 %v7460
        %8837 = vmatprep.subr.bf16.mxu0 %v7469
        %8838 = vmatpush1.bf16.msra.mxu0 %v7468
        %8839 = vmatprep.subr.bf16.mxu0 %v7477
        %8840 = vmatpush1.bf16.msra.mxu0 %v7476
        %8841 = vmatprep.subr.bf16.mxu0 %v7485
        %8842 = vmatpush1.bf16.msra.mxu0 %v7484
        %8843 = vmatprep.subr.bf16.mxu0 %v7493
        %8844 = vmatpush1.bf16.msra.mxu0 %v7492
        %8845 = vmatprep.subr.bf16.mxu0 %v7501
        %8846 = vmatpush1.bf16.msra.mxu0 %v7500
        %8847 = vmatprep.subr.bf16.mxu0 %v7509
        %8848 = vmatpush1.bf16.msra.mxu0 %v7508
        %8849 = vmatprep.subr.bf16.mxu0 %v7517
        %8850 = vmatpush1.bf16.msra.mxu0 %v7516
        %8851 = vmatprep.mubr.bf16.mxu0 %v5209
        %8852 = vmatmul.mubr.bf16.gmra.mrb[0].mxu0 %v5208
        %v8853 = vpop.f32.mrb[0].mxu0
        %v8854 = vadd.f32 %v8813, %v8853
        %v8855 = vpop.f32.mrb[0].mxu0
        %v8856 = vadd.f32 %v8815, %v8855
        %v8857 = vpop.f32.mrb[0].mxu0
        %v8858 = vpop.f32.mrb[0].mxu0
        %8859 = vdwg.mxu0
        %8860 = vmatprep.subr.bf16.mxu0 %v7525
        %8861 = vmatpush1.bf16.msra.mxu0 %v7524
        %8862 = vmatprep.subr.bf16.mxu0 %v7533
        %8863 = vmatpush1.bf16.msra.mxu0 %v7532
        %8864 = vmatprep.subr.bf16.mxu0 %v7541
        %8865 = vmatpush1.bf16.msra.mxu0 %v7540
        %8866 = vmatprep.subr.bf16.mxu0 %v7549
        %8867 = vmatpush1.bf16.msra.mxu0 %v7548
        %8868 = vmatprep.subr.bf16.mxu0 %v7557
        %8869 = vmatpush1.bf16.msra.mxu0 %v7556
        %8870 = vmatprep.subr.bf16.mxu0 %v7565
        %8871 = vmatpush1.bf16.msra.mxu0 %v7564
        %8872 = vmatprep.subr.bf16.mxu0 %v7573
        %8873 = vmatpush1.bf16.msra.mxu0 %v7572
        %8874 = vmatprep.subr.bf16.mxu0 %v7581
        %8875 = vmatpush1.bf16.msra.mxu0 %v7580
        %8876 = vmatprep.subr.bf16.mxu0 %v7589
        %8877 = vmatpush1.bf16.msra.mxu0 %v7588
        %8878 = vmatprep.subr.bf16.mxu0 %v7597
        %8879 = vmatpush1.bf16.msra.mxu0 %v7596
        %8880 = vmatprep.subr.bf16.mxu0 %v7605
        %8881 = vmatpush1.bf16.msra.mxu0 %v7604
        %8882 = vmatprep.subr.bf16.mxu0 %v7613
        %8883 = vmatpush1.bf16.msra.mxu0 %v7612
        %8884 = vmatprep.subr.bf16.mxu0 %v7621
        %8885 = vmatpush1.bf16.msra.mxu0 %v7620
        %8886 = vmatprep.subr.bf16.mxu0 %v7629
        %8887 = vmatpush1.bf16.msra.mxu0 %v7628
        %8888 = vmatprep.subr.bf16.mxu0 %v7637
        %8889 = vmatpush1.bf16.msra.mxu0 %v7636
        %8890 = vmatprep.subr.bf16.mxu0 %v7645
        %8891 = vmatpush1.bf16.msra.mxu0 %v7644
        %8892 = vmatprep.mubr.bf16.mxu0 %v5211
        %8893 = vmatmul.mubr.bf16.gmra.mrb[0].mxu0 %v5210
        %v8894 = vpop.f32.mrb[0].mxu0
        %v8895 = vadd.f32 %v8854, %v8894
        %v8896 = vpop.f32.mrb[0].mxu0
        %v8897 = vadd.f32 %v8856, %v8896
        %v8898 = vpop.f32.mrb[0].mxu0
        %v8899 = vpop.f32.mrb[0].mxu0
        %8900 = vdwg.mxu0
        %8901 = vmatprep.subr.bf16.mxu0 %v7653
        %8902 = vmatpush1.bf16.msra.mxu0 %v7652
        %8903 = vmatprep.subr.bf16.mxu0 %v7661
        %8904 = vmatpush1.bf16.msra.mxu0 %v7660
        %8905 = vmatprep.subr.bf16.mxu0 %v7669
        %8906 = vmatpush1.bf16.msra.mxu0 %v7668
        %8907 = vmatprep.subr.bf16.mxu0 %v7677
        %8908 = vmatpush1.bf16.msra.mxu0 %v7676
        %8909 = vmatprep.subr.bf16.mxu0 %v7685
        %8910 = vmatpush1.bf16.msra.mxu0 %v7684
        %8911 = vmatprep.subr.bf16.mxu0 %v7693
        %8912 = vmatpush1.bf16.msra.mxu0 %v7692
        %8913 = vmatprep.subr.bf16.mxu0 %v7701
        %8914 = vmatpush1.bf16.msra.mxu0 %v7700
        %8915 = vmatprep.subr.bf16.mxu0 %v7709
        %8916 = vmatpush1.bf16.msra.mxu0 %v7708
        %8917 = vmatprep.subr.bf16.mxu0 %v7717
        %8918 = vmatpush1.bf16.msra.mxu0 %v7716
        %8919 = vmatprep.subr.bf16.mxu0 %v7725
        %8920 = vmatpush1.bf16.msra.mxu0 %v7724
        %8921 = vmatprep.subr.bf16.mxu0 %v7733
        %8922 = vmatpush1.bf16.msra.mxu0 %v7732
        %8923 = vmatprep.subr.bf16.mxu0 %v7741
        %8924 = vmatpush1.bf16.msra.mxu0 %v7740
        %8925 = vmatprep.subr.bf16.mxu0 %v7749
        %8926 = vmatpush1.bf16.msra.mxu0 %v7748
        %8927 = vmatprep.subr.bf16.mxu0 %v7757
        %8928 = vmatpush1.bf16.msra.mxu0 %v7756
        %8929 = vmatprep.subr.bf16.mxu0 %v7765
        %8930 = vmatpush1.bf16.msra.mxu0 %v7764
        %8931 = vmatprep.subr.bf16.mxu0 %v7773
        %8932 = vmatpush1.bf16.msra.mxu0 %v7772
        %8933 = vmatprep.mubr.bf16.mxu0 %v5213
        %8934 = vmatmul.mubr.bf16.gmra.mrb[0].mxu0 %v5212
        %v8935 = vpop.f32.mrb[0].mxu0
        %v8936 = vadd.f32 %v8895, %v8935
        %v8937 = vpop.f32.mrb[0].mxu0
        %v8938 = vadd.f32 %v8897, %v8937
        %v8939 = vpop.f32.mrb[0].mxu0
        %v8940 = vpop.f32.mrb[0].mxu0
        %8941 = vdwg.mxu0
        %v8942 = vld [vmem:[%s854] sm:$0xff]
        %v8944 = vlaneseq
        %v8945 = vshrl.u32 %v8944, 7
        %v8946 = vsub.s32 0, %v8945
        %v8947 = vrot.slane %v8942, %v8946
        %v8948 = vlaneseq
        %v8949 = vshrl.u32 %v8948, 7
        %v8950 = vsub.s32 1, %v8949
        %v8951 = vrot.slane %v8942, %v8950
        %v8952 = vlaneseq
        %v8953 = vshrl.u32 %v8952, 7
        %v8954 = vsub.s32 2, %v8953
        %v8955 = vrot.slane %v8942, %v8954
        %v8956 = vlaneseq
        %v8957 = vshrl.u32 %v8956, 7
        %v8958 = vsub.s32 3, %v8957
        %v8959 = vrot.slane %v8942, %v8958
        %v8960 = vlaneseq
        %v8961 = vshrl.u32 %v8960, 7
        %v8962 = vsub.s32 4, %v8961
        %v8963 = vrot.slane %v8942, %v8962
        %v8964 = vlaneseq
        %v8965 = vshrl.u32 %v8964, 7
        %v8966 = vsub.s32 5, %v8965
        %v8967 = vrot.slane %v8942, %v8966
        %v8968 = vlaneseq
        %v8969 = vshrl.u32 %v8968, 7
        %v8970 = vsub.s32 6, %v8969
        %v8971 = vrot.slane %v8942, %v8970
        %v8972 = vlaneseq
        %v8973 = vshrl.u32 %v8972, 7
        %v8974 = vsub.s32 7, %v8973
        %v8975 = vrot.slane %v8942, %v8974
        %v8984 = vmul.f32 %v8444, %v8947
        %v8985 = vmul.f32 %v8446, %v8951
        %v8986 = vmul.f32 %v8608, %v8955
        %v8987 = vmul.f32 %v8610, %v8959
        %v8988 = vmul.f32 %v8772, %v8963
        %v8989 = vmul.f32 %v8774, %v8967
        %v8990 = vmul.f32 %v8936, %v8971
        %v8991 = vmul.f32 %v8938, %v8975
        %v8992 = vld [vmem:[%s863] sm:$0xff]
        %v8994 = vlaneseq
        %v8995 = vshrl.u32 %v8994, 7
        %v8996 = vsub.s32 0, %v8995
        %v8997 = vrot.slane %v8992, %v8996
        %v8998 = vlaneseq
        %v8999 = vshrl.u32 %v8998, 7
        %v9000 = vsub.s32 1, %v8999
        %v9001 = vrot.slane %v8992, %v9000
        %v9002 = vlaneseq
        %v9003 = vshrl.u32 %v9002, 7
        %v9004 = vsub.s32 2, %v9003
        %v9005 = vrot.slane %v8992, %v9004
        %v9006 = vlaneseq
        %v9007 = vshrl.u32 %v9006, 7
        %v9008 = vsub.s32 3, %v9007
        %v9009 = vrot.slane %v8992, %v9008
        %v9010 = vlaneseq
        %v9011 = vshrl.u32 %v9010, 7
        %v9012 = vsub.s32 4, %v9011
        %v9013 = vrot.slane %v8992, %v9012
        %v9014 = vlaneseq
        %v9015 = vshrl.u32 %v9014, 7
        %v9016 = vsub.s32 5, %v9015
        %v9017 = vrot.slane %v8992, %v9016
        %v9018 = vlaneseq
        %v9019 = vshrl.u32 %v9018, 7
        %v9020 = vsub.s32 6, %v9019
        %v9021 = vrot.slane %v8992, %v9020
        %v9022 = vlaneseq
        %v9023 = vshrl.u32 %v9022, 7
        %v9024 = vsub.s32 7, %v9023
        %v9025 = vrot.slane %v8992, %v9024
        %v9034 = vadd.f32 %v8984, %v8997
        %v9035 = vadd.f32 %v8985, %v9001
        %v9036 = vadd.f32 %v8986, %v9005
        %v9037 = vadd.f32 %v8987, %v9009
        %v9038 = vadd.f32 %v8988, %v9013
        %v9039 = vadd.f32 %v8989, %v9017
        %v9040 = vadd.f32 %v8990, %v9021
        %v9041 = vadd.f32 %v8991, %v9025
        %v9042 = vmax.f32 %v9034, 0.0
        %v9043 = vmax.f32 %v9035, 0.0
        %v9044 = vmax.f32 %v9036, 0.0
        %v9045 = vmax.f32 %v9037, 0.0
        %v9046 = vmax.f32 %v9038, 0.0
        %v9047 = vmax.f32 %v9039, 0.0
        %v9048 = vmax.f32 %v9040, 0.0
        %v9049 = vmax.f32 %v9041, 0.0
        %v9050 = vpack.c.bf16 %v9042, %v9042
        %v9051 = vpack.c.bf16 %v9043, %v9043
        %v9052 = vpack.c.bf16 %v9044, %v9044
        %v9053 = vpack.c.bf16 %v9045, %v9045
        %v9054 = vpack.c.bf16 %v9046, %v9046
        %v9055 = vpack.c.bf16 %v9047, %v9047
        %v9056 = vpack.c.bf16 %v9048, %v9048
        %v9057 = vpack.c.bf16 %v9049, %v9049
        %v9058 = vld [vmem:[%s872] sm:$0xf]
        %v9059 = vld [vmem:[%s872 + $0x4] sm:$0xf]
        %v9060 = vld [vmem:[%s872 + $0x8] sm:$0xf]
        %v9061 = vld [vmem:[%s872 + $0xc] sm:$0xf]
        %v9062 = vld [vmem:[%s872 + $0x10] sm:$0xf]
        %v9063 = vld [vmem:[%s872 + $0x14] sm:$0xf]
        %v9064 = vld [vmem:[%s872 + $0x18] sm:$0xf]
        %v9065 = vld [vmem:[%s872 + $0x1c] sm:$0xf]
        %v9066 = vld [vmem:[%s872 + $0x20] sm:$0xf]
        %v9067 = vld [vmem:[%s872 + $0x24] sm:$0xf]
        %v9068 = vld [vmem:[%s872 + $0x28] sm:$0xf]
        %v9069 = vld [vmem:[%s872 + $0x2c] sm:$0xf]
        %v9070 = vld [vmem:[%s872 + $0x30] sm:$0xf]
        %v9071 = vld [vmem:[%s872 + $0x34] sm:$0xf]
        %v9072 = vld [vmem:[%s872 + $0x38] sm:$0xf]
        %v9073 = vld [vmem:[%s872 + $0x3c] sm:$0xf]
        %v9074 = vld [vmem:[%s872 + $0x40] sm:$0xf]
        %v9075 = vld [vmem:[%s872 + $0x44] sm:$0xf]
        %v9076 = vld [vmem:[%s872 + $0x48] sm:$0xf]
        %v9077 = vld [vmem:[%s872 + $0x4c] sm:$0xf]
        %v9078 = vld [vmem:[%s872 + $0x50] sm:$0xf]
        %v9079 = vld [vmem:[%s872 + $0x54] sm:$0xf]
        %v9080 = vld [vmem:[%s872 + $0x58] sm:$0xf]
        %v9081 = vld [vmem:[%s872 + $0x5c] sm:$0xf]
        %v9082 = vld [vmem:[%s872 + $0x60] sm:$0xf]
        %v9083 = vld [vmem:[%s872 + $0x64] sm:$0xf]
        %v9084 = vld [vmem:[%s872 + $0x68] sm:$0xf]
        %v9085 = vld [vmem:[%s872 + $0x6c] sm:$0xf]
        %v9086 = vld [vmem:[%s872 + $0x70] sm:$0xf]
        %v9087 = vld [vmem:[%s872 + $0x74] sm:$0xf]
        %v9088 = vld [vmem:[%s872 + $0x78] sm:$0xf]
        %v9089 = vld [vmem:[%s872 + $0x7c] sm:$0xf]
        %v9090 = vld [vmem:[%s872 + $0x80] sm:$0xf]
        %v9091 = vld [vmem:[%s872 + $0x84] sm:$0xf]
        %v9092 = vld [vmem:[%s872 + $0x88] sm:$0xf]
        %v9093 = vld [vmem:[%s872 + $0x8c] sm:$0xf]
        %v9094 = vld [vmem:[%s872 + $0x90] sm:$0xf]
        %v9095 = vld [vmem:[%s872 + $0x94] sm:$0xf]
        %v9096 = vld [vmem:[%s872 + $0x98] sm:$0xf]
        %v9097 = vld [vmem:[%s872 + $0x9c] sm:$0xf]
        %v9098 = vld [vmem:[%s872 + $0xa0] sm:$0xf]
        %v9099 = vld [vmem:[%s872 + $0xa4] sm:$0xf]
        %v9100 = vld [vmem:[%s872 + $0xa8] sm:$0xf]
        %v9101 = vld [vmem:[%s872 + $0xac] sm:$0xf]
        %v9102 = vld [vmem:[%s872 + $0xb0] sm:$0xf]
        %v9103 = vld [vmem:[%s872 + $0xb4] sm:$0xf]
        %v9104 = vld [vmem:[%s872 + $0xb8] sm:$0xf]
        %v9105 = vld [vmem:[%s872 + $0xbc] sm:$0xf]
        %v9106 = vld [vmem:[%s872 + $0xc0] sm:$0xf]
        %v9107 = vld [vmem:[%s872 + $0xc4] sm:$0xf]
        %v9108 = vld [vmem:[%s872 + $0xc8] sm:$0xf]
        %v9109 = vld [vmem:[%s872 + $0xcc] sm:$0xf]
        %v9110 = vld [vmem:[%s872 + $0xd0] sm:$0xf]
        %v9111 = vld [vmem:[%s872 + $0xd4] sm:$0xf]
        %v9112 = vld [vmem:[%s872 + $0xd8] sm:$0xf]
        %v9113 = vld [vmem:[%s872 + $0xdc] sm:$0xf]
        %v9114 = vld [vmem:[%s872 + $0xe0] sm:$0xf]
        %v9115 = vld [vmem:[%s872 + $0xe4] sm:$0xf]
        %v9116 = vld [vmem:[%s872 + $0xe8] sm:$0xf]
        %v9117 = vld [vmem:[%s872 + $0xec] sm:$0xf]
        %v9118 = vld [vmem:[%s872 + $0xf0] sm:$0xf]
        %v9119 = vld [vmem:[%s872 + $0xf4] sm:$0xf]
        %v9120 = vld [vmem:[%s872 + $0xf8] sm:$0xf]
        %v9121 = vld [vmem:[%s872 + $0xfc] sm:$0xf]
        %v9122 = vld [vmem:[%s872 + $0x100] sm:$0xf]
        %v9123 = vld [vmem:[%s872 + $0x104] sm:$0xf]
        %v9124 = vld [vmem:[%s872 + $0x108] sm:$0xf]
        %v9125 = vld [vmem:[%s872 + $0x10c] sm:$0xf]
        %v9126 = vld [vmem:[%s872 + $0x110] sm:$0xf]
        %v9127 = vld [vmem:[%s872 + $0x114] sm:$0xf]
        %v9128 = vld [vmem:[%s872 + $0x118] sm:$0xf]
        %v9129 = vld [vmem:[%s872 + $0x11c] sm:$0xf]
        %v9130 = vld [vmem:[%s872 + $0x120] sm:$0xf]
        %v9131 = vld [vmem:[%s872 + $0x124] sm:$0xf]
        %v9132 = vld [vmem:[%s872 + $0x128] sm:$0xf]
        %v9133 = vld [vmem:[%s872 + $0x12c] sm:$0xf]
        %v9134 = vld [vmem:[%s872 + $0x130] sm:$0xf]
        %v9135 = vld [vmem:[%s872 + $0x134] sm:$0xf]
        %v9136 = vld [vmem:[%s872 + $0x138] sm:$0xf]
        %v9137 = vld [vmem:[%s872 + $0x13c] sm:$0xf]
        %v9138 = vld [vmem:[%s872 + $0x140] sm:$0xf]
        %v9139 = vld [vmem:[%s872 + $0x144] sm:$0xf]
        %v9140 = vld [vmem:[%s872 + $0x148] sm:$0xf]
        %v9141 = vld [vmem:[%s872 + $0x14c] sm:$0xf]
        %v9142 = vld [vmem:[%s872 + $0x150] sm:$0xf]
        %v9143 = vld [vmem:[%s872 + $0x154] sm:$0xf]
        %v9144 = vld [vmem:[%s872 + $0x158] sm:$0xf]
        %v9145 = vld [vmem:[%s872 + $0x15c] sm:$0xf]
        %v9146 = vld [vmem:[%s872 + $0x160] sm:$0xf]
        %v9147 = vld [vmem:[%s872 + $0x164] sm:$0xf]
        %v9148 = vld [vmem:[%s872 + $0x168] sm:$0xf]
        %v9149 = vld [vmem:[%s872 + $0x16c] sm:$0xf]
        %v9150 = vld [vmem:[%s872 + $0x170] sm:$0xf]
        %v9151 = vld [vmem:[%s872 + $0x174] sm:$0xf]
        %v9152 = vld [vmem:[%s872 + $0x178] sm:$0xf]
        %v9153 = vld [vmem:[%s872 + $0x17c] sm:$0xf]
        %v9154 = vld [vmem:[%s872 + $0x180] sm:$0xf]
        %v9155 = vld [vmem:[%s872 + $0x184] sm:$0xf]
        %v9156 = vld [vmem:[%s872 + $0x188] sm:$0xf]
        %v9157 = vld [vmem:[%s872 + $0x18c] sm:$0xf]
        %v9158 = vld [vmem:[%s872 + $0x190] sm:$0xf]
        %v9159 = vld [vmem:[%s872 + $0x194] sm:$0xf]
        %v9160 = vld [vmem:[%s872 + $0x198] sm:$0xf]
        %v9161 = vld [vmem:[%s872 + $0x19c] sm:$0xf]
        %v9162 = vld [vmem:[%s872 + $0x1a0] sm:$0xf]
        %v9163 = vld [vmem:[%s872 + $0x1a4] sm:$0xf]
        %v9164 = vld [vmem:[%s872 + $0x1a8] sm:$0xf]
        %v9165 = vld [vmem:[%s872 + $0x1ac] sm:$0xf]
        %v9166 = vld [vmem:[%s872 + $0x1b0] sm:$0xf]
        %v9167 = vld [vmem:[%s872 + $0x1b4] sm:$0xf]
        %v9168 = vld [vmem:[%s872 + $0x1b8] sm:$0xf]
        %v9169 = vld [vmem:[%s872 + $0x1bc] sm:$0xf]
        %v9170 = vld [vmem:[%s872 + $0x1c0] sm:$0xf]
        %v9171 = vld [vmem:[%s872 + $0x1c4] sm:$0xf]
        %v9172 = vld [vmem:[%s872 + $0x1c8] sm:$0xf]
        %v9173 = vld [vmem:[%s872 + $0x1cc] sm:$0xf]
        %v9174 = vld [vmem:[%s872 + $0x1d0] sm:$0xf]
        %v9175 = vld [vmem:[%s872 + $0x1d4] sm:$0xf]
        %v9176 = vld [vmem:[%s872 + $0x1d8] sm:$0xf]
        %v9177 = vld [vmem:[%s872 + $0x1dc] sm:$0xf]
        %v9178 = vld [vmem:[%s872 + $0x1e0] sm:$0xf]
        %v9179 = vld [vmem:[%s872 + $0x1e4] sm:$0xf]
        %v9180 = vld [vmem:[%s872 + $0x1e8] sm:$0xf]
        %v9181 = vld [vmem:[%s872 + $0x1ec] sm:$0xf]
        %v9182 = vld [vmem:[%s872 + $0x1f0] sm:$0xf]
        %v9183 = vld [vmem:[%s872 + $0x1f4] sm:$0xf]
        %v9184 = vld [vmem:[%s872 + $0x1f8] sm:$0xf]
        %v9185 = vld [vmem:[%s872 + $0x1fc] sm:$0xf]
        %v9314 = vunpack.c.l.b16 %v9058
        %v9315 = vunpack.c.l.b16 %v9059
        %v9316 = vunpack.c.l.b16 %v9060
        %v9317 = vunpack.c.l.b16 %v9061
        %v9318 = vunpack.c.l.b16 %v9062
        %v9319 = vunpack.c.l.b16 %v9063
        %v9320 = vunpack.c.l.b16 %v9064
        %v9321 = vunpack.c.l.b16 %v9065
        %v9322 = vunpack.c.l.b16 %v9066
        %v9323 = vunpack.c.l.b16 %v9067
        %v9324 = vunpack.c.l.b16 %v9068
        %v9325 = vunpack.c.l.b16 %v9069
        %v9326 = vunpack.c.l.b16 %v9070
        %v9327 = vunpack.c.l.b16 %v9071
        %v9328 = vunpack.c.l.b16 %v9072
        %v9329 = vunpack.c.l.b16 %v9073
        %v9330 = vunpack.c.l.b16 %v9074
        %v9331 = vunpack.c.l.b16 %v9075
        %v9332 = vunpack.c.l.b16 %v9076
        %v9333 = vunpack.c.l.b16 %v9077
        %v9334 = vunpack.c.l.b16 %v9078
        %v9335 = vunpack.c.l.b16 %v9079
        %v9336 = vunpack.c.l.b16 %v9080
        %v9337 = vunpack.c.l.b16 %v9081
        %v9338 = vunpack.c.l.b16 %v9082
        %v9339 = vunpack.c.l.b16 %v9083
        %v9340 = vunpack.c.l.b16 %v9084
        %v9341 = vunpack.c.l.b16 %v9085
        %v9342 = vunpack.c.l.b16 %v9086
        %v9343 = vunpack.c.l.b16 %v9087
        %v9344 = vunpack.c.l.b16 %v9088
        %v9345 = vunpack.c.l.b16 %v9089
        %v9346 = vunpack.c.l.b16 %v9090
        %v9347 = vunpack.c.l.b16 %v9091
        %v9348 = vunpack.c.l.b16 %v9092
        %v9349 = vunpack.c.l.b16 %v9093
        %v9350 = vunpack.c.l.b16 %v9094
        %v9351 = vunpack.c.l.b16 %v9095
        %v9352 = vunpack.c.l.b16 %v9096
        %v9353 = vunpack.c.l.b16 %v9097
        %v9354 = vunpack.c.l.b16 %v9098
        %v9355 = vunpack.c.l.b16 %v9099
        %v9356 = vunpack.c.l.b16 %v9100
        %v9357 = vunpack.c.l.b16 %v9101
        %v9358 = vunpack.c.l.b16 %v9102
        %v9359 = vunpack.c.l.b16 %v9103
        %v9360 = vunpack.c.l.b16 %v9104
        %v9361 = vunpack.c.l.b16 %v9105
        %v9362 = vunpack.c.l.b16 %v9106
        %v9363 = vunpack.c.l.b16 %v9107
        %v9364 = vunpack.c.l.b16 %v9108
        %v9365 = vunpack.c.l.b16 %v9109
        %v9366 = vunpack.c.l.b16 %v9110
        %v9367 = vunpack.c.l.b16 %v9111
        %v9368 = vunpack.c.l.b16 %v9112
        %v9369 = vunpack.c.l.b16 %v9113
        %v9370 = vunpack.c.l.b16 %v9114
        %v9371 = vunpack.c.l.b16 %v9115
        %v9372 = vunpack.c.l.b16 %v9116
        %v9373 = vunpack.c.l.b16 %v9117
        %v9374 = vunpack.c.l.b16 %v9118
        %v9375 = vunpack.c.l.b16 %v9119
        %v9376 = vunpack.c.l.b16 %v9120
        %v9377 = vunpack.c.l.b16 %v9121
        %v9378 = vunpack.c.l.b16 %v9122
        %v9379 = vunpack.c.l.b16 %v9123
        %v9380 = vunpack.c.l.b16 %v9124
        %v9381 = vunpack.c.l.b16 %v9125
        %v9382 = vunpack.c.l.b16 %v9126
        %v9383 = vunpack.c.l.b16 %v9127
        %v9384 = vunpack.c.l.b16 %v9128
        %v9385 = vunpack.c.l.b16 %v9129
        %v9386 = vunpack.c.l.b16 %v9130
        %v9387 = vunpack.c.l.b16 %v9131
        %v9388 = vunpack.c.l.b16 %v9132
        %v9389 = vunpack.c.l.b16 %v9133
        %v9390 = vunpack.c.l.b16 %v9134
        %v9391 = vunpack.c.l.b16 %v9135
        %v9392 = vunpack.c.l.b16 %v9136
        %v9393 = vunpack.c.l.b16 %v9137
        %v9394 = vunpack.c.l.b16 %v9138
        %v9395 = vunpack.c.l.b16 %v9139
        %v9396 = vunpack.c.l.b16 %v9140
        %v9397 = vunpack.c.l.b16 %v9141
        %v9398 = vunpack.c.l.b16 %v9142
        %v9399 = vunpack.c.l.b16 %v9143
        %v9400 = vunpack.c.l.b16 %v9144
        %v9401 = vunpack.c.l.b16 %v9145
        %v9402 = vunpack.c.l.b16 %v9146
        %v9403 = vunpack.c.l.b16 %v9147
        %v9404 = vunpack.c.l.b16 %v9148
        %v9405 = vunpack.c.l.b16 %v9149
        %v9406 = vunpack.c.l.b16 %v9150
        %v9407 = vunpack.c.l.b16 %v9151
        %v9408 = vunpack.c.l.b16 %v9152
        %v9409 = vunpack.c.l.b16 %v9153
        %v9410 = vunpack.c.l.b16 %v9154
        %v9411 = vunpack.c.l.b16 %v9155
        %v9412 = vunpack.c.l.b16 %v9156
        %v9413 = vunpack.c.l.b16 %v9157
        %v9414 = vunpack.c.l.b16 %v9158
        %v9415 = vunpack.c.l.b16 %v9159
        %v9416 = vunpack.c.l.b16 %v9160
        %v9417 = vunpack.c.l.b16 %v9161
        %v9418 = vunpack.c.l.b16 %v9162
        %v9419 = vunpack.c.l.b16 %v9163
        %v9420 = vunpack.c.l.b16 %v9164
        %v9421 = vunpack.c.l.b16 %v9165
        %v9422 = vunpack.c.l.b16 %v9166
        %v9423 = vunpack.c.l.b16 %v9167
        %v9424 = vunpack.c.l.b16 %v9168
        %v9425 = vunpack.c.l.b16 %v9169
        %v9426 = vunpack.c.l.b16 %v9170
        %v9427 = vunpack.c.l.b16 %v9171
        %v9428 = vunpack.c.l.b16 %v9172
        %v9429 = vunpack.c.l.b16 %v9173
        %v9430 = vunpack.c.l.b16 %v9174
        %v9431 = vunpack.c.l.b16 %v9175
        %v9432 = vunpack.c.l.b16 %v9176
        %v9433 = vunpack.c.l.b16 %v9177
        %v9434 = vunpack.c.l.b16 %v9178
        %v9435 = vunpack.c.l.b16 %v9179
        %v9436 = vunpack.c.l.b16 %v9180
        %v9437 = vunpack.c.l.b16 %v9181
        %v9438 = vunpack.c.l.b16 %v9182
        %v9439 = vunpack.c.l.b16 %v9183
        %v9440 = vunpack.c.l.b16 %v9184
        %v9441 = vunpack.c.l.b16 %v9185
        %v9442 = vpack.c.b16 %v9315, %v9314
        %v9443 = vpack.c.b16 %v9317, %v9316
        %v9444 = vpack.c.b16 %v9319, %v9318
        %v9445 = vpack.c.b16 %v9321, %v9320
        %v9446 = vpack.c.b16 %v9323, %v9322
        %v9447 = vpack.c.b16 %v9325, %v9324
        %v9448 = vpack.c.b16 %v9327, %v9326
        %v9449 = vpack.c.b16 %v9329, %v9328
        %v9450 = vpack.c.b16 %v9331, %v9330
        %v9451 = vpack.c.b16 %v9333, %v9332
        %v9452 = vpack.c.b16 %v9335, %v9334
        %v9453 = vpack.c.b16 %v9337, %v9336
        %v9454 = vpack.c.b16 %v9339, %v9338
        %v9455 = vpack.c.b16 %v9341, %v9340
        %v9456 = vpack.c.b16 %v9343, %v9342
        %v9457 = vpack.c.b16 %v9345, %v9344
        %v9458 = vpack.c.b16 %v9347, %v9346
        %v9459 = vpack.c.b16 %v9349, %v9348
        %v9460 = vpack.c.b16 %v9351, %v9350
        %v9461 = vpack.c.b16 %v9353, %v9352
        %v9462 = vpack.c.b16 %v9355, %v9354
        %v9463 = vpack.c.b16 %v9357, %v9356
        %v9464 = vpack.c.b16 %v9359, %v9358
        %v9465 = vpack.c.b16 %v9361, %v9360
        %v9466 = vpack.c.b16 %v9363, %v9362
        %v9467 = vpack.c.b16 %v9365, %v9364
        %v9468 = vpack.c.b16 %v9367, %v9366
        %v9469 = vpack.c.b16 %v9369, %v9368
        %v9470 = vpack.c.b16 %v9371, %v9370
        %v9471 = vpack.c.b16 %v9373, %v9372
        %v9472 = vpack.c.b16 %v9375, %v9374
        %v9473 = vpack.c.b16 %v9377, %v9376
        %v9474 = vpack.c.b16 %v9379, %v9378
        %v9475 = vpack.c.b16 %v9381, %v9380
        %v9476 = vpack.c.b16 %v9383, %v9382
        %v9477 = vpack.c.b16 %v9385, %v9384
        %v9478 = vpack.c.b16 %v9387, %v9386
        %v9479 = vpack.c.b16 %v9389, %v9388
        %v9480 = vpack.c.b16 %v9391, %v9390
        %v9481 = vpack.c.b16 %v9393, %v9392
        %v9482 = vpack.c.b16 %v9395, %v9394
        %v9483 = vpack.c.b16 %v9397, %v9396
        %v9484 = vpack.c.b16 %v9399, %v9398
        %v9485 = vpack.c.b16 %v9401, %v9400
        %v9486 = vpack.c.b16 %v9403, %v9402
        %v9487 = vpack.c.b16 %v9405, %v9404
        %v9488 = vpack.c.b16 %v9407, %v9406
        %v9489 = vpack.c.b16 %v9409, %v9408
        %v9490 = vpack.c.b16 %v9411, %v9410
        %v9491 = vpack.c.b16 %v9413, %v9412
        %v9492 = vpack.c.b16 %v9415, %v9414
        %v9493 = vpack.c.b16 %v9417, %v9416
        %v9494 = vpack.c.b16 %v9419, %v9418
        %v9495 = vpack.c.b16 %v9421, %v9420
        %v9496 = vpack.c.b16 %v9423, %v9422
        %v9497 = vpack.c.b16 %v9425, %v9424
        %v9498 = vpack.c.b16 %v9427, %v9426
        %v9499 = vpack.c.b16 %v9429, %v9428
        %v9500 = vpack.c.b16 %v9431, %v9430
        %v9501 = vpack.c.b16 %v9433, %v9432
        %v9502 = vpack.c.b16 %v9435, %v9434
        %v9503 = vpack.c.b16 %v9437, %v9436
        %v9504 = vpack.c.b16 %v9439, %v9438
        %v9505 = vpack.c.b16 %v9441, %v9440
        %9570 = vmatprep.subr.bf16.mxu0 0
        %9571 = vmatpush1.bf16.msra.mxu0 %v9442
        %9572 = vmatprep.subr.bf16.mxu0 0
        %9573 = vmatpush1.bf16.msra.mxu0 %v9443
        %9574 = vmatprep.subr.bf16.mxu0 0
        %9575 = vmatpush1.bf16.msra.mxu0 %v9444
        %9576 = vmatprep.subr.bf16.mxu0 0
        %9577 = vmatpush1.bf16.msra.mxu0 %v9445
        %9578 = vmatprep.subr.bf16.mxu0 0
        %9579 = vmatpush1.bf16.msra.mxu0 %v9446
        %9580 = vmatprep.subr.bf16.mxu0 0
        %9581 = vmatpush1.bf16.msra.mxu0 %v9447
        %9582 = vmatprep.subr.bf16.mxu0 0
        %9583 = vmatpush1.bf16.msra.mxu0 %v9448
        %9584 = vmatprep.subr.bf16.mxu0 0
        %9585 = vmatpush1.bf16.msra.mxu0 %v9449
        %9586 = vmatprep.subr.bf16.mxu0 0
        %9587 = vmatpush1.bf16.msra.mxu0 %v9450
        %9588 = vmatprep.subr.bf16.mxu0 0
        %9589 = vmatpush1.bf16.msra.mxu0 %v9451
        %9590 = vmatprep.subr.bf16.mxu0 0
        %9591 = vmatpush1.bf16.msra.mxu0 %v9452
        %9592 = vmatprep.subr.bf16.mxu0 0
        %9593 = vmatpush1.bf16.msra.mxu0 %v9453
        %9594 = vmatprep.subr.bf16.mxu0 0
        %9595 = vmatpush1.bf16.msra.mxu0 %v9454
        %9596 = vmatprep.subr.bf16.mxu0 0
        %9597 = vmatpush1.bf16.msra.mxu0 %v9455
        %9598 = vmatprep.subr.bf16.mxu0 0
        %9599 = vmatpush1.bf16.msra.mxu0 %v9456
        %9600 = vmatprep.subr.bf16.mxu0 0
        %9601 = vmatpush1.bf16.msra.mxu0 %v9457
        %9602 = vmatprep.mubr.bf16.mxu0 %v9051
        %9603 = vmatmul.mubr.bf16.gmra.mrb[0].mxu0 %v9050
        %v9604 = vpop.f32.mrb[0].mxu0
        %v9605 = vadd.f32 0.0, %v9604
        %v9606 = vpop.f32.mrb[0].mxu0
        %v9607 = vpop.f32.mrb[0].mxu0
        %v9608 = vpop.f32.mrb[0].mxu0
        %9609 = vdwg.mxu0
        %9610 = vmatprep.subr.bf16.mxu0 0
        %9611 = vmatpush1.bf16.msra.mxu0 %v9458
        %9612 = vmatprep.subr.bf16.mxu0 0
        %9613 = vmatpush1.bf16.msra.mxu0 %v9459
        %9614 = vmatprep.subr.bf16.mxu0 0
        %9615 = vmatpush1.bf16.msra.mxu0 %v9460
        %9616 = vmatprep.subr.bf16.mxu0 0
        %9617 = vmatpush1.bf16.msra.mxu0 %v9461
        %9618 = vmatprep.subr.bf16.mxu0 0
        %9619 = vmatpush1.bf16.msra.mxu0 %v9462
        %9620 = vmatprep.subr.bf16.mxu0 0
        %9621 = vmatpush1.bf16.msra.mxu0 %v9463
        %9622 = vmatprep.subr.bf16.mxu0 0
        %9623 = vmatpush1.bf16.msra.mxu0 %v9464
        %9624 = vmatprep.subr.bf16.mxu0 0
        %9625 = vmatpush1.bf16.msra.mxu0 %v9465
        %9626 = vmatprep.subr.bf16.mxu0 0
        %9627 = vmatpush1.bf16.msra.mxu0 %v9466
        %9628 = vmatprep.subr.bf16.mxu0 0
        %9629 = vmatpush1.bf16.msra.mxu0 %v9467
        %9630 = vmatprep.subr.bf16.mxu0 0
        %9631 = vmatpush1.bf16.msra.mxu0 %v9468
        %9632 = vmatprep.subr.bf16.mxu0 0
        %9633 = vmatpush1.bf16.msra.mxu0 %v9469
        %9634 = vmatprep.subr.bf16.mxu0 0
        %9635 = vmatpush1.bf16.msra.mxu0 %v9470
        %9636 = vmatprep.subr.bf16.mxu0 0
        %9637 = vmatpush1.bf16.msra.mxu0 %v9471
        %9638 = vmatprep.subr.bf16.mxu0 0
        %9639 = vmatpush1.bf16.msra.mxu0 %v9472
        %9640 = vmatprep.subr.bf16.mxu0 0
        %9641 = vmatpush1.bf16.msra.mxu0 %v9473
        %9642 = vmatprep.mubr.bf16.mxu0 %v9053
        %9643 = vmatmul.mubr.bf16.gmra.mrb[0].mxu0 %v9052
        %v9644 = vpop.f32.mrb[0].mxu0
        %v9645 = vadd.f32 %v9605, %v9644
        %v9646 = vpop.f32.mrb[0].mxu0
        %v9647 = vpop.f32.mrb[0].mxu0
        %v9648 = vpop.f32.mrb[0].mxu0
        %9649 = vdwg.mxu0
        %9650 = vmatprep.subr.bf16.mxu0 0
        %9651 = vmatpush1.bf16.msra.mxu0 %v9474
        %9652 = vmatprep.subr.bf16.mxu0 0
        %9653 = vmatpush1.bf16.msra.mxu0 %v9475
        %9654 = vmatprep.subr.bf16.mxu0 0
        %9655 = vmatpush1.bf16.msra.mxu0 %v9476
        %9656 = vmatprep.subr.bf16.mxu0 0
        %9657 = vmatpush1.bf16.msra.mxu0 %v9477
        %9658 = vmatprep.subr.bf16.mxu0 0
        %9659 = vmatpush1.bf16.msra.mxu0 %v9478
        %9660 = vmatprep.subr.bf16.mxu0 0
        %9661 = vmatpush1.bf16.msra.mxu0 %v9479
        %9662 = vmatprep.subr.bf16.mxu0 0
        %9663 = vmatpush1.bf16.msra.mxu0 %v9480
        %9664 = vmatprep.subr.bf16.mxu0 0
        %9665 = vmatpush1.bf16.msra.mxu0 %v9481
        %9666 = vmatprep.subr.bf16.mxu0 0
        %9667 = vmatpush1.bf16.msra.mxu0 %v9482
        %9668 = vmatprep.subr.bf16.mxu0 0
        %9669 = vmatpush1.bf16.msra.mxu0 %v9483
        %9670 = vmatprep.subr.bf16.mxu0 0
        %9671 = vmatpush1.bf16.msra.mxu0 %v9484
        %9672 = vmatprep.subr.bf16.mxu0 0
        %9673 = vmatpush1.bf16.msra.mxu0 %v9485
        %9674 = vmatprep.subr.bf16.mxu0 0
        %9675 = vmatpush1.bf16.msra.mxu0 %v9486
        %9676 = vmatprep.subr.bf16.mxu0 0
        %9677 = vmatpush1.bf16.msra.mxu0 %v9487
        %9678 = vmatprep.subr.bf16.mxu0 0
        %9679 = vmatpush1.bf16.msra.mxu0 %v9488
        %9680 = vmatprep.subr.bf16.mxu0 0
        %9681 = vmatpush1.bf16.msra.mxu0 %v9489
        %9682 = vmatprep.mubr.bf16.mxu0 %v9055
        %9683 = vmatmul.mubr.bf16.gmra.mrb[0].mxu0 %v9054
        %v9684 = vpop.f32.mrb[0].mxu0
        %v9685 = vadd.f32 %v9645, %v9684
        %v9686 = vpop.f32.mrb[0].mxu0
        %v9687 = vpop.f32.mrb[0].mxu0
        %v9688 = vpop.f32.mrb[0].mxu0
        %9689 = vdwg.mxu0
        %9690 = vmatprep.subr.bf16.mxu0 0
        %9691 = vmatpush1.bf16.msra.mxu0 %v9490
        %9692 = vmatprep.subr.bf16.mxu0 0
        %9693 = vmatpush1.bf16.msra.mxu0 %v9491
        %9694 = vmatprep.subr.bf16.mxu0 0
        %9695 = vmatpush1.bf16.msra.mxu0 %v9492
        %9696 = vmatprep.subr.bf16.mxu0 0
        %9697 = vmatpush1.bf16.msra.mxu0 %v9493
        %9698 = vmatprep.subr.bf16.mxu0 0
        %9699 = vmatpush1.bf16.msra.mxu0 %v9494
        %9700 = vmatprep.subr.bf16.mxu0 0
        %9701 = vmatpush1.bf16.msra.mxu0 %v9495
        %9702 = vmatprep.subr.bf16.mxu0 0
        %9703 = vmatpush1.bf16.msra.mxu0 %v9496
        %9704 = vmatprep.subr.bf16.mxu0 0
        %9705 = vmatpush1.bf16.msra.mxu0 %v9497
        %9706 = vmatprep.subr.bf16.mxu0 0
        %9707 = vmatpush1.bf16.msra.mxu0 %v9498
        %9708 = vmatprep.subr.bf16.mxu0 0
        %9709 = vmatpush1.bf16.msra.mxu0 %v9499
        %9710 = vmatprep.subr.bf16.mxu0 0
        %9711 = vmatpush1.bf16.msra.mxu0 %v9500
        %9712 = vmatprep.subr.bf16.mxu0 0
        %9713 = vmatpush1.bf16.msra.mxu0 %v9501
        %9714 = vmatprep.subr.bf16.mxu0 0
        %9715 = vmatpush1.bf16.msra.mxu0 %v9502
        %9716 = vmatprep.subr.bf16.mxu0 0
        %9717 = vmatpush1.bf16.msra.mxu0 %v9503
        %9718 = vmatprep.subr.bf16.mxu0 0
        %9719 = vmatpush1.bf16.msra.mxu0 %v9504
        %9720 = vmatprep.subr.bf16.mxu0 0
        %9721 = vmatpush1.bf16.msra.mxu0 %v9505
        %9722 = vmatprep.mubr.bf16.mxu0 %v9057
        %9723 = vmatmul.mubr.bf16.gmra.mrb[0].mxu0 %v9056
        %v9724 = vpop.f32.mrb[0].mxu0
        %v9725 = vadd.f32 %v9685, %v9724
        %v9726 = vpop.f32.mrb[0].mxu0
        %v9727 = vpop.f32.mrb[0].mxu0
        %v9728 = vpop.f32.mrb[0].mxu0
        %9729 = vdwg.mxu0
        %v9730 = vld [vmem:[%s880] sm:$0x1]
        %v9732 = vlaneseq
        %v9733 = vshrl.u32 %v9732, 7
        %v9734 = vsub.s32 0, %v9733
        %v9735 = vrot.slane %v9730, %v9734
        %v9737 = vmul.f32 %v9725, %v9735
        %v9738 = vld [vmem:[%s888] sm:$0x1]
        %v9740 = vlaneseq
        %v9741 = vshrl.u32 %v9740, 7
        %v9742 = vsub.s32 0, %v9741
        %v9743 = vrot.slane %v9738, %v9742
        %v9745 = vadd.f32 %v9737, %v9743
        %v9746 = vmax.f32 %v9745, 0.0
        %9747 = vst [vmem:[%s1027] sm:$0xff] %v9746
        %v9748 = vmul.f32 %v9746, %v9746
        %v9749 = vpack.c.bf16 %v9746, %v9746
        %v9750 = vpack.c.bf16 %v9748, %v9748
        %v9751 = vld [vmem:[#allocation21] sm:$0xf]
        %v9752 = vld [vmem:[#allocation21 + $0x4] sm:$0xf]
        %v9753 = vld [vmem:[#allocation21 + $0x8] sm:$0xf]
        %v9754 = vld [vmem:[#allocation21 + $0xc] sm:$0xf]
        %v9755 = vld [vmem:[#allocation21 + $0x10] sm:$0xf]
        %v9756 = vld [vmem:[#allocation21 + $0x14] sm:$0xf]
        %v9757 = vld [vmem:[#allocation21 + $0x18] sm:$0xf]
        %v9758 = vld [vmem:[#allocation21 + $0x1c] sm:$0xf]
        %v9759 = vld [vmem:[#allocation21 + $0x20] sm:$0xf]
        %v9760 = vld [vmem:[#allocation21 + $0x24] sm:$0xf]
        %v9761 = vld [vmem:[#allocation21 + $0x28] sm:$0xf]
        %v9762 = vld [vmem:[#allocation21 + $0x2c] sm:$0xf]
        %v9763 = vld [vmem:[#allocation21 + $0x30] sm:$0xf]
        %v9764 = vld [vmem:[#allocation21 + $0x34] sm:$0xf]
        %v9765 = vld [vmem:[#allocation21 + $0x38] sm:$0xf]
        %v9766 = vld [vmem:[#allocation21 + $0x3c] sm:$0xf]
        %v9767 = vld [vmem:[#allocation21 + $0x40] sm:$0xf]
        %v9768 = vld [vmem:[#allocation21 + $0x44] sm:$0xf]
        %v9769 = vld [vmem:[#allocation21 + $0x48] sm:$0xf]
        %v9770 = vld [vmem:[#allocation21 + $0x4c] sm:$0xf]
        %v9771 = vld [vmem:[#allocation21 + $0x50] sm:$0xf]
        %v9772 = vld [vmem:[#allocation21 + $0x54] sm:$0xf]
        %v9773 = vld [vmem:[#allocation21 + $0x58] sm:$0xf]
        %v9774 = vld [vmem:[#allocation21 + $0x5c] sm:$0xf]
        %v9775 = vld [vmem:[#allocation21 + $0x60] sm:$0xf]
        %v9776 = vld [vmem:[#allocation21 + $0x64] sm:$0xf]
        %v9777 = vld [vmem:[#allocation21 + $0x68] sm:$0xf]
        %v9778 = vld [vmem:[#allocation21 + $0x6c] sm:$0xf]
        %v9779 = vld [vmem:[#allocation21 + $0x70] sm:$0xf]
        %v9780 = vld [vmem:[#allocation21 + $0x74] sm:$0xf]
        %v9781 = vld [vmem:[#allocation21 + $0x78] sm:$0xf]
        %v9782 = vld [vmem:[#allocation21 + $0x7c] sm:$0xf]
        %v9783 = vld [vmem:[#allocation22] sm:$0x1]
        %v9785 = vlaneseq
        %v9786 = vshrl.u32 %v9785, 7
        %v9787 = vsub.s32 0, %v9786
        %v9788 = vrot.slane %v9783, %v9787
        %v9822 = vunpack.c.l.b16 %v9751
        %v9823 = vunpack.c.l.b16 %v9752
        %v9824 = vunpack.c.l.b16 %v9753
        %v9825 = vunpack.c.l.b16 %v9754
        %v9826 = vunpack.c.l.b16 %v9755
        %v9827 = vunpack.c.l.b16 %v9756
        %v9828 = vunpack.c.l.b16 %v9757
        %v9829 = vunpack.c.l.b16 %v9758
        %v9830 = vunpack.c.l.b16 %v9759
        %v9831 = vunpack.c.l.b16 %v9760
        %v9832 = vunpack.c.l.b16 %v9761
        %v9833 = vunpack.c.l.b16 %v9762
        %v9834 = vunpack.c.l.b16 %v9763
        %v9835 = vunpack.c.l.b16 %v9764
        %v9836 = vunpack.c.l.b16 %v9765
        %v9837 = vunpack.c.l.b16 %v9766
        %v9838 = vunpack.c.l.b16 %v9767
        %v9839 = vunpack.c.l.b16 %v9768
        %v9840 = vunpack.c.l.b16 %v9769
        %v9841 = vunpack.c.l.b16 %v9770
        %v9842 = vunpack.c.l.b16 %v9771
        %v9843 = vunpack.c.l.b16 %v9772
        %v9844 = vunpack.c.l.b16 %v9773
        %v9845 = vunpack.c.l.b16 %v9774
        %v9846 = vunpack.c.l.b16 %v9775
        %v9847 = vunpack.c.l.b16 %v9776
        %v9848 = vunpack.c.l.b16 %v9777
        %v9849 = vunpack.c.l.b16 %v9778
        %v9850 = vunpack.c.l.b16 %v9779
        %v9851 = vunpack.c.l.b16 %v9780
        %v9852 = vunpack.c.l.b16 %v9781
        %v9853 = vunpack.c.l.b16 %v9782
        %v9854 = vpack.c.b16 %v9823, %v9822
        %v9855 = vpack.c.b16 %v9825, %v9824
        %v9856 = vpack.c.b16 %v9827, %v9826
        %v9857 = vpack.c.b16 %v9829, %v9828
        %v9858 = vpack.c.b16 %v9831, %v9830
        %v9859 = vpack.c.b16 %v9833, %v9832
        %v9860 = vpack.c.b16 %v9835, %v9834
        %v9861 = vpack.c.b16 %v9837, %v9836
        %v9862 = vpack.c.b16 %v9839, %v9838
        %v9863 = vpack.c.b16 %v9841, %v9840
        %v9864 = vpack.c.b16 %v9843, %v9842
        %v9865 = vpack.c.b16 %v9845, %v9844
        %v9866 = vpack.c.b16 %v9847, %v9846
        %v9867 = vpack.c.b16 %v9849, %v9848
        %v9868 = vpack.c.b16 %v9851, %v9850
        %v9869 = vpack.c.b16 %v9853, %v9852
        %9886 = vmatprep.subr.bf16.mxu0 0
        %9887 = vmatpush1.bf16.msra.mxu0 %v9854
        %9888 = vmatprep.subr.bf16.mxu0 0
        %9889 = vmatpush1.bf16.msra.mxu0 %v9855
        %9890 = vmatprep.subr.bf16.mxu0 0
        %9891 = vmatpush1.bf16.msra.mxu0 %v9856
        %9892 = vmatprep.subr.bf16.mxu0 0
        %9893 = vmatpush1.bf16.msra.mxu0 %v9857
        %9894 = vmatprep.subr.bf16.mxu0 0
        %9895 = vmatpush1.bf16.msra.mxu0 %v9858
        %9896 = vmatprep.subr.bf16.mxu0 0
        %9897 = vmatpush1.bf16.msra.mxu0 %v9859
        %9898 = vmatprep.subr.bf16.mxu0 0
        %9899 = vmatpush1.bf16.msra.mxu0 %v9860
        %9900 = vmatprep.subr.bf16.mxu0 0
        %9901 = vmatpush1.bf16.msra.mxu0 %v9861
        %9902 = vmatprep.subr.bf16.mxu0 0
        %9903 = vmatpush1.bf16.msra.mxu0 %v9862
        %9904 = vmatprep.subr.bf16.mxu0 0
        %9905 = vmatpush1.bf16.msra.mxu0 %v9863
        %9906 = vmatprep.subr.bf16.mxu0 0
        %9907 = vmatpush1.bf16.msra.mxu0 %v9864
        %9908 = vmatprep.subr.bf16.mxu0 0
        %9909 = vmatpush1.bf16.msra.mxu0 %v9865
        %9910 = vmatprep.subr.bf16.mxu0 0
        %9911 = vmatpush1.bf16.msra.mxu0 %v9866
        %9912 = vmatprep.subr.bf16.mxu0 0
        %9913 = vmatpush1.bf16.msra.mxu0 %v9867
        %9914 = vmatprep.subr.bf16.mxu0 0
        %9915 = vmatpush1.bf16.msra.mxu0 %v9868
        %9916 = vmatprep.subr.bf16.mxu0 0
        %9917 = vmatpush1.bf16.msra.mxu0 %v9869
        %9918 = vmatprep.mubr.bf16.mxu0 %v9750
        %9919 = vmatmul.mubr.bf16.gmra.mrb[0].mxu0 %v9749
        %v9920 = vpop.f32.mrb[0].mxu0
        %v9921 = vadd.f32 %v9788, %v9920
        %v9922 = vpop.f32.mrb[0].mxu0
        %v9923 = vpop.f32.mrb[0].mxu0
        %v9924 = vpop.f32.mrb[0].mxu0
        %9925 = vdwg.mxu0
        %9926 = vmax.xlane.f32.xlu0 %v9921
        %v9927 = vpop.xlane.xlu0 %9926
        %v9928 = vsub.f32 %v9921, %v9927
        %v9929 = vmul.f32 %v9928, 1.442695
        %v9930 = vpow.pop %v9929
        %9931 = vadd.xlane.f32.xlu0 %v9930
        %v9932 = vpop.xlane.xlu0 %9931
        %v9933 = vrcp.pop %v9932
        %v9934 = vmul.f32 %v9930, %v9933
        %v9935 = vlog2.pop %v9932
        %v9936 = vmul.f32 %v9935, 0.6931472
        %v9937 = vadd.f32 %v9927, %v9936
        %v9938 = vlaneseq
        %v9939 = vand.u32 %v9938, 127
        %vm9940 = vcmp.eq.s32.totalorder %v9939, 127
        %v9941 = vsel %vm9940, %v9937, %v9934
        %9942 = vst [vmem:[%s1034] sm:$0xff] %v9941
        %p9943 = scmp.lt.s32.totalorder %s54, 1
        %s9944 = scalar_select %p9943, %s54, 1
        %p9945 = scmp.lt.s32.totalorder %s55, 0
        %s9946 = scalar_select %p9945, %s55, 0
        %s9947 = sadd.s32 %s9946, %s9944
        %s9948 = smul.addr %s9947, 8
        %s9949 = scalar_lea.vmem %s15, %s9948
        %p9950 = scmp.lt.s32.totalorder %s54, 1
        %s9951 = scalar_select %p9950, %s54, 1
        %p9952 = scmp.lt.s32.totalorder %s55, 0
        %s9953 = scalar_select %p9952, %s55, 0
        %s9954 = sadd.s32 %s9953, %s9951
        %s9955 = smul.addr %s9954, 8
        %s9956 = scalar_lea.vmem %s16, %s9955
        // Predicated region
        $region137: #{mvcln_forward.1} parent=79 // pred_check
          %p9957 = pneg %p464
        $region138: #{mvcln_forward.1} parent=79 // pred_check_branch
          %9959 = sbr.rel (%p9957) target = $region140
        $region139: #{mvcln_forward.1} parent=79 // pred_region
          _
        $region140: #{mvcln_forward.1} parent=79 // pred_fallthru
          _
        // Predicated region
        $region141: #{mvcln_forward.1} parent=79 // pred_check
          %p9960 = pneg %p492
        $region142: #{mvcln_forward.1} parent=79 // pred_check_branch
          %9962 = sbr.rel (%p9960) target = $region144
        $region143: #{mvcln_forward.1} parent=79 // pred_region
          _
        $region144: #{mvcln_forward.1} parent=79 // pred_fallthru
          _
      $region80: #{mvcln_forward.1} parent=5 // pred_fallthru
        _
      %p9963 = scmp.le.s32.totalorder 2, %s45
      // Predicated region
      $region145: #{mvcln_forward.1} parent=5 // pred_check
        %p9964 = pneg %p9963
      $region146: #{mvcln_forward.1} parent=5 // pred_check_branch
        %9966 = sbr.rel (%p9964) target = $region148
      $region147: #{mvcln_forward.1} parent=5 // pred_region
        %s9967 = ssub.s32 %s45, 2
        // Predicated region
        $region149: #{mvcln_forward.1} parent=147 // pred_check
          %p9968 = pneg %p470
        $region150: #{mvcln_forward.1} parent=147 // pred_check_branch
          %9970 = sbr.rel (%p9968) target = $region152
        $region151: #{mvcln_forward.1} parent=147 // pred_region
          %p9971 = scmp.lt.s32.totalorder %s56, 1
          %s9972 = scalar_select %p9971, %s56, 1
          %p9973 = scmp.lt.s32.totalorder %s57, 0
          %s9974 = scalar_select %p9973, %s57, 0
          %s9975 = sadd.s32 %s9974, %s9972
          %s9976 = smul.addr %s9975, 8
          %s9977 = scalar_lea.vmem %s15, %s9976
        $region152: #{mvcln_forward.1} parent=147 // pred_fallthru
          _
        // Predicated region
        $region153: #{mvcln_forward.1} parent=147 // pred_check
          %p9978 = pneg %p498
        $region154: #{mvcln_forward.1} parent=147 // pred_check_branch
          %9980 = sbr.rel (%p9978) target = $region156
        $region155: #{mvcln_forward.1} parent=147 // pred_region
          %p9981 = scmp.lt.s32.totalorder %s56, 1
          %s9982 = scalar_select %p9981, %s56, 1
          %p9983 = scmp.lt.s32.totalorder %s57, 0
          %s9984 = scalar_select %p9983, %s57, 0
          %s9985 = sadd.s32 %s9984, %s9982
          %s9986 = smul.addr %s9985, 8
          %s9987 = scalar_lea.vmem %s16, %s9986
        $region156: #{mvcln_forward.1} parent=147 // pred_fallthru
          _
      $region148: #{mvcln_forward.1} parent=5 // pred_fallthru
        _
    $region6: #{mvcln_forward.1} parent=1 // loop_footer
      %s49 = sadd.s32 1, %s45
    $region7: #{mvcln_forward.1} parent=1 // loop_footer_branch
      %44 = sbr.rel target = $region3
    $region8: #{mvcln_forward.1} parent=1 // loop_exit
      _
    %9988 = vsyncpa [#allocation3], 1
    %s9989 = scalar_lea.sflag [#allocation3], 1
    %9990 = vsyncpa %s9989, 1
    %9991 = vsyncpa [#allocation5], 1
    %s9992 = scalar_lea.sflag [#allocation5], 1
    %9993 = vsyncpa %s9992, 1
    %9994 = vsyncpa [#allocation8], 1
    %s9995 = scalar_lea.sflag [#allocation8], 1
    %9996 = vsyncpa %s9995, 1
    %9997 = vsyncpa [#allocation11], 1
    %s9998 = scalar_lea.sflag [#allocation11], 1
    %9999 = vsyncpa %s9998, 1
    %10000 = vsyncpa [#allocation14], 1
    %s10001 = scalar_lea.sflag [#allocation14], 1
    %10002 = vsyncpa %s10001, 1
    %10003 = vsyncpa [#allocation17], 1
    %s10004 = scalar_lea.sflag [#allocation17], 1
    %10005 = vsyncpa %s10004, 1
    %10006 = vsyncpa [#allocation20], 1
    %s10007 = scalar_lea.sflag [#allocation20], 1
    %10008 = vsyncpa %s10007, 1
    %10009 = vsyncpa [#allocation23], 1

</llo_original>
